<compile_context>
chip_gen: v5e
topology: v5e:2x2
jax: 0.10.0
libtpu: 0.0.40
codegen_flags: <defaults>
</compile_context>

<pallas_src>
import numpy as np
import jax
import jax.numpy as jnp
from jax.experimental import pallas as pl
from jax.experimental.pallas import tpu as pltpu

# ----- module hyper-parameters (defaults of NeRF) -----------------------------
D = 8
W = 256
INPUT_CH = 3
INPUT_CH_VIEWS = 3
OUTPUT_CH = 4
SKIPS = (4,)
SKIP_LAYER = SKIPS[0] + 1        # layer that consumes torch.cat([input_pts, h])
USE_VIEWDIRS = False             # -> output_linear path; views are ignored
# TODO(synk): use_viewdirs=True branch (views_linears / feature / alpha / rgb
# heads) is not implemented; the default config does not exercise it.

IN_PAD = 8                       # packed input lanes (pts in lanes 0-2)
OUT_PAD = 128                    # lane-dense output block (rgba in lanes 0-3)
TILE_DEFAULT = 512               # batch rows per grid step


# ----------------------------- kernel ----------------------------------------
def _nerf_kernel(x_ref, w_first_ref, w_skip_ref, w_rest_ref, b_ref,
                 w_out_ref, b_out_ref, out_ref):
    x = x_ref[...]                                   # (TILE, IN_PAD) f32

    # layer 0 (fan_in = 3): VPU broadcast-FMA in f32 (MXU would multiply zeros)
    pre = b_ref[0:1, :]                              # (1, W) f32
    for k in range(INPUT_CH):
        pre = pre + x[:, k:k + 1] * w_first_ref[k:k + 1, :]
    h = jnp.maximum(pre, 0.0)                        # (TILE, W) f32

    # layers 1 .. D-1: bf16 MXU matmuls, f32 accumulation / bias / ReLU
    for i in range(D - 1):
        layer = i + 1
        pre = (jnp.dot(h.astype(jnp.bfloat16), w_rest_ref[i],
                       preferred_element_type=jnp.float32)
               + b_ref[layer:layer + 1, :])
        if layer == SKIP_LAYER:
            # this layer consumes torch.cat([input_pts, h], -1); the 3 pts rows
            # of its weight were split out into w_skip -> 3 more VPU FMAs.
            for k in range(INPUT_CH):
                pre = pre + x[:, k:k + 1] * w_skip_ref[k:k + 1, :]
        h = jnp.maximum(pre, 0.0)

    # output_linear(W, 4), columns zero-padded to 128 lanes
    out_ref[...] = (jnp.dot(h.astype(jnp.bfloat16), w_out_ref[...],
                            preferred_element_type=jnp.float32)
                    + b_out_ref[...])


def _full_spec(arr):
    nd = arr.ndim
    return pl.BlockSpec(arr.shape, lambda i, _nd=nd: (0,) * _nd)


def _run_kernel(x_packed, weights, tile):
    n_pad = x_packed.shape[0]
    grid = (n_pad // tile,)

    flops_per_row = 2 * (INPUT_CH * W                 # layer 0
                         + (D - 1) * W * W            # tower
                         + INPUT_CH * W               # skip rows
                         + W * OUTPUT_CH)             # output head
    bytes_accessed = int(x_packed.size * x_packed.dtype.itemsize
                         + n_pad * OUT_PAD * 4
                         + sum(int(w.size) * w.dtype.itemsize for w in weights))

    fn = pl.pallas_call(
        _nerf_kernel,
        out_shape=jax.ShapeDtypeStruct((n_pad, OUT_PAD), jnp.float32),
        grid_spec=pltpu.PrefetchScalarGridSpec(
            num_scalar_prefetch=0,
            grid=grid,
            in_specs=[pl.BlockSpec((tile, IN_PAD), lambda i: (i, 0))]
                     + [_full_spec(w) for w in weights],
            out_specs=pl.BlockSpec((tile, OUT_PAD), lambda i: (i, 0))),
        compiler_params=pltpu.CompilerParams(
            dimension_semantics=("parallel",),
            vmem_limit_bytes=32 << 20),
        cost_estimate=pl.CostEstimate(flops=n_pad * flops_per_row,
                                      transcendentals=0,
                                      bytes_accessed=bytes_accessed),
    )
    return fn(x_packed, *weights)


# ------------------------- parameters ----------------------------------------
def _linear(key, fan_in, fan_out):
    # PyTorch nn.Linear default init, stored transposed as (fan_in, fan_out).
    bound = 1.0 / np.sqrt(fan_in)
    kw, kb = jax.random.split(key)
    w = jax.random.uniform(kw, (fan_in, fan_out), jnp.float32, -bound, bound)
    b = jax.random.uniform(kb, (fan_out,), jnp.float32, -bound, bound)
    return w, b


def init_params(key):
    keys = jax.random.split(key, D + 1)
    ws, bs = [], []
    w, b = _linear(keys[0], INPUT_CH, W)
    ws.append(w); bs.append(b)
    for i in range(D - 1):
        fan_in = W + (INPUT_CH if i in SKIPS else 0)
        w, b = _linear(keys[i + 1], fan_in, W)
        ws.append(w); bs.append(b)
    out_w, out_b = _linear(keys[D], W, OUTPUT_CH)
    return dict(ws=ws, bs=bs, out_w=out_w, out_b=out_b)


def pack_params(raw):
    """Pad / split / cast raw weights into the layout the kernel expects."""
    ws, bs = raw["ws"], raw["bs"]

    # layer-0 weight and the pts rows of the skip layer stay f32 (VPU FMA path)
    w_first = jnp.zeros((IN_PAD, W), jnp.float32).at[:INPUT_CH].set(ws[0])
    w_rest, w_skip = [], None
    for j in range(1, D):
        wj = ws[j]
        if j == SKIP_LAYER:
            w_skip = jnp.zeros((IN_PAD, W), jnp.float32).at[:INPUT_CH].set(
                wj[:INPUT_CH])
            w_rest.append(wj[INPUT_CH:])             # h rows -> (W, W)
        else:
            w_rest.append(wj)
    w_rest = jnp.stack(w_rest).astype(jnp.bfloat16)  # (D-1, W, W) bf16 (MXU)
    b = jnp.stack(bs)                                # (D, W) f32

    w_out = jnp.zeros((W, OUT_PAD), jnp.float32).at[:, :OUTPUT_CH].set(
        raw["out_w"]).astype(jnp.bfloat16)           # (W, 128) bf16
    b_out = jnp.zeros((1, OUT_PAD), jnp.float32).at[:, :OUTPUT_CH].set(
        raw["out_b"][None, :])                       # (1, 128) f32
    return (w_first, w_skip, w_rest, b, w_out, b_out)


# --------------------------- forward wrapper ----------------------------------
def nerf_forward(x, weights, tile=None):
    x = jnp.asarray(x, jnp.float32)
    n = x.shape[0]
    input_pts = x[:, :INPUT_CH]
    _input_views = x[:, INPUT_CH:INPUT_CH + INPUT_CH_VIEWS]  # unused (use_viewdirs=False)

    if tile is None:
        tile = TILE_DEFAULT
        while tile > 128 and pl.cdiv(n, tile) < 2:   # keep >= 2 grid steps
            tile //= 2
    n_pad = pl.cdiv(n, tile) * tile

    x_packed = jnp.zeros((n_pad, IN_PAD), jnp.float32).at[:n, :INPUT_CH].set(input_pts)
    out_p = _run_kernel(x_packed, weights, tile)
    return out_p[:n, :OUTPUT_CH]


# --------------------------- plain-JAX reference ------------------------------
def reference_forward(x, raw):
    x = jnp.asarray(x, jnp.float32)
    pts = x[:, :INPUT_CH]
    hi = jax.lax.Precision.HIGHEST
    h = pts
    for i in range(D):
        h = jnp.maximum(jnp.dot(h, raw["ws"][i], precision=hi) + raw["bs"][i], 0.0)
        if i in SKIPS:
            h = jnp.concatenate([pts, h], axis=-1)
    return jnp.dot(h, raw["out_w"], precision=hi) + raw["out_b"]


# ------------------------------------ main ------------------------------------
if __name__ == "__main__":
    key = jax.random.PRNGKey(0)
    k_param, k_x = jax.random.split(key)

    raw = init_params(k_param)
    weights = pack_params(raw)

    N = 1000                                          # non-multiple of TILE on purpose
    x = jax.random.normal(k_x, (N, INPUT_CH + INPUT_CH_VIEWS), jnp.float32)

    out = nerf_forward(x, weights)
    jax.block_until_ready(out)
    assert out.shape == (N, OUTPUT_CH)

    out_ref = np.asarray(reference_forward(x, raw))
    out_np = np.asarray(out)
    atol = max(2e-2 * float(np.max(np.abs(out_ref))), 1e-6)
    np.testing.assert_allclose(out_np, out_ref, rtol=2e-2, atol=atol)

    print("KERNEL_OK")
</pallas_src>

<mosaic_0001>
module attributes {stable_mosaic.version = 11 : i64} {
  func.func @_nerf_kernel(%arg0: i32, %arg1: memref<512x8xf32, #tpu.memory_space<vmem>>, %arg2: memref<8x256xf32, #tpu.memory_space<vmem>>, %arg3: memref<8x256xf32, #tpu.memory_space<vmem>>, %arg4: memref<7x256x256xbf16, #tpu.memory_space<vmem>>, %arg5: memref<8x256xf32, #tpu.memory_space<vmem>>, %arg6: memref<256x128xbf16, #tpu.memory_space<vmem>>, %arg7: memref<1x128xf32, #tpu.memory_space<vmem>>, %arg8: memref<512x128xf32, #tpu.memory_space<vmem>>) attributes {dimension_semantics = [#tpu.dimension_semantics<parallel>], iteration_bounds = array<i64: 2>, scalar_prefetch = 0 : i64, scratch_operands = 0 : i64, tpu.core_type = #tpu.core_type<tc>, window_params = [{transform_indices = @transform_0, window_bounds = array<i64: 512, 8>}, {pipeline_mode = #tpu.pipeline_mode<synchronous>, transform_indices = @transform_1, window_bounds = array<i64: 8, 256>}, {pipeline_mode = #tpu.pipeline_mode<synchronous>, transform_indices = @transform_2, window_bounds = array<i64: 8, 256>}, {pipeline_mode = #tpu.pipeline_mode<synchronous>, transform_indices = @transform_3, window_bounds = array<i64: 7, 256, 256>}, {pipeline_mode = #tpu.pipeline_mode<synchronous>, transform_indices = @transform_4, window_bounds = array<i64: 8, 256>}, {pipeline_mode = #tpu.pipeline_mode<synchronous>, transform_indices = @transform_5, window_bounds = array<i64: 256, 128>}, {pipeline_mode = #tpu.pipeline_mode<synchronous>, transform_indices = @transform_6, window_bounds = array<i64: 1, 128>}, {transform_indices = @transform_7, window_bounds = array<i64: 512, 128>}]} {
    %c0 = arith.constant 0 : index
    %c0_0 = arith.constant 0 : index
    %0 = vector.load %arg1[%c0, %c0_0] : memref<512x8xf32, #tpu.memory_space<vmem>>, vector<512x8xf32>
    %c0_1 = arith.constant 0 : index
    %c0_2 = arith.constant 0 : index
    %1 = vector.load %arg5[%c0_1, %c0_2] : memref<8x256xf32, #tpu.memory_space<vmem>>, vector<1x256xf32>
    %2 = vector.extract_strided_slice %0 {offsets = [0, 0], sizes = [512, 1], strides = [1, 1]} : vector<512x8xf32> to vector<512x1xf32>
    %c0_3 = arith.constant 0 : index
    %c0_4 = arith.constant 0 : index
    %3 = vector.load %arg2[%c0_3, %c0_4] : memref<8x256xf32, #tpu.memory_space<vmem>>, vector<1x256xf32>
    %4 = vector.broadcast %2 : vector<512x1xf32> to vector<512x256xf32>
    %5 = vector.broadcast %3 : vector<1x256xf32> to vector<512x256xf32>
    %6 = arith.mulf %4, %5 : vector<512x256xf32>
    %7 = vector.broadcast %1 : vector<1x256xf32> to vector<512x256xf32>
    %8 = arith.addf %7, %6 : vector<512x256xf32>
    %9 = vector.extract_strided_slice %0 {offsets = [0, 1], sizes = [512, 1], strides = [1, 1]} : vector<512x8xf32> to vector<512x1xf32>
    %c1 = arith.constant 1 : index
    %c0_5 = arith.constant 0 : index
    %10 = vector.load %arg2[%c1, %c0_5] : memref<8x256xf32, #tpu.memory_space<vmem>>, vector<1x256xf32>
    %11 = vector.broadcast %9 : vector<512x1xf32> to vector<512x256xf32>
    %12 = vector.broadcast %10 : vector<1x256xf32> to vector<512x256xf32>
    %13 = arith.mulf %11, %12 : vector<512x256xf32>
    %14 = arith.addf %8, %13 : vector<512x256xf32>
    %15 = vector.extract_strided_slice %0 {offsets = [0, 2], sizes = [512, 1], strides = [1, 1]} : vector<512x8xf32> to vector<512x1xf32>
    %c2 = arith.constant 2 : index
    %c0_6 = arith.constant 0 : index
    %16 = vector.load %arg2[%c2, %c0_6] : memref<8x256xf32, #tpu.memory_space<vmem>>, vector<1x256xf32>
    %17 = vector.broadcast %15 : vector<512x1xf32> to vector<512x256xf32>
    %18 = vector.broadcast %16 : vector<1x256xf32> to vector<512x256xf32>
    %19 = arith.mulf %17, %18 : vector<512x256xf32>
    %20 = arith.addf %14, %19 : vector<512x256xf32>
    %cst = arith.constant 0.000000e+00 : f32
    %21 = vector.broadcast %cst : f32 to vector<512x256xf32>
    %22 = arith.maximumf %20, %21 : vector<512x256xf32>
    %23 = arith.truncf %22 : vector<512x256xf32> to vector<512x256xbf16>
    %c0_7 = arith.constant 0 : index
    %c0_8 = arith.constant 0 : index
    %c0_9 = arith.constant 0 : index
    %24 = vector.load %arg4[%c0_7, %c0_8, %c0_9] : memref<7x256x256xbf16, #tpu.memory_space<vmem>>, vector<1x256x256xbf16>
    %25 = vector.shape_cast %24 : vector<1x256x256xbf16> to vector<256x256xbf16>
    %cst_10 = arith.constant dense<0.000000e+00> : vector<512x256xf32>
    %26 = tpu.matmul %23, %25, %cst_10 {dimension_numbers = #tpu.dot_dimension_numbers<[1], [0], [0], [1], [0, 0, 1, 1], [], []>} : vector<512x256xbf16>, vector<256x256xbf16>, vector<512x256xf32> -> vector<512x256xf32>
    %c1_11 = arith.constant 1 : index
    %c0_12 = arith.constant 0 : index
    %27 = vector.load %arg5[%c1_11, %c0_12] : memref<8x256xf32, #tpu.memory_space<vmem>>, vector<1x256xf32>
    %28 = vector.broadcast %27 : vector<1x256xf32> to vector<512x256xf32>
    %29 = arith.addf %26, %28 : vector<512x256xf32>
    %cst_13 = arith.constant 0.000000e+00 : f32
    %30 = vector.broadcast %cst_13 : f32 to vector<512x256xf32>
    %31 = arith.maximumf %29, %30 : vector<512x256xf32>
    %32 = arith.truncf %31 : vector<512x256xf32> to vector<512x256xbf16>
    %c1_14 = arith.constant 1 : index
    %c0_15 = arith.constant 0 : index
    %c0_16 = arith.constant 0 : index
    %33 = vector.load %arg4[%c1_14, %c0_15, %c0_16] : memref<7x256x256xbf16, #tpu.memory_space<vmem>>, vector<1x256x256xbf16>
    %34 = vector.shape_cast %33 : vector<1x256x256xbf16> to vector<256x256xbf16>
    %cst_17 = arith.constant dense<0.000000e+00> : vector<512x256xf32>
    %35 = tpu.matmul %32, %34, %cst_17 {dimension_numbers = #tpu.dot_dimension_numbers<[1], [0], [0], [1], [0, 0, 1, 1], [], []>} : vector<512x256xbf16>, vector<256x256xbf16>, vector<512x256xf32> -> vector<512x256xf32>
    %c2_18 = arith.constant 2 : index
    %c0_19 = arith.constant 0 : index
    %36 = vector.load %arg5[%c2_18, %c0_19] : memref<8x256xf32, #tpu.memory_space<vmem>>, vector<1x256xf32>
    %37 = vector.broadcast %36 : vector<1x256xf32> to vector<512x256xf32>
    %38 = arith.addf %35, %37 : vector<512x256xf32>
    %cst_20 = arith.constant 0.000000e+00 : f32
    %39 = vector.broadcast %cst_20 : f32 to vector<512x256xf32>
    %40 = arith.maximumf %38, %39 : vector<512x256xf32>
    %41 = arith.truncf %40 : vector<512x256xf32> to vector<512x256xbf16>
    %c2_21 = arith.constant 2 : index
    %c0_22 = arith.constant 0 : index
    %c0_23 = arith.constant 0 : index
    %42 = vector.load %arg4[%c2_21, %c0_22, %c0_23] : memref<7x256x256xbf16, #tpu.memory_space<vmem>>, vector<1x256x256xbf16>
    %43 = vector.shape_cast %42 : vector<1x256x256xbf16> to vector<256x256xbf16>
    %cst_24 = arith.constant dense<0.000000e+00> : vector<512x256xf32>
    %44 = tpu.matmul %41, %43, %cst_24 {dimension_numbers = #tpu.dot_dimension_numbers<[1], [0], [0], [1], [0, 0, 1, 1], [], []>} : vector<512x256xbf16>, vector<256x256xbf16>, vector<512x256xf32> -> vector<512x256xf32>
    %c3 = arith.constant 3 : index
    %c0_25 = arith.constant 0 : index
    %45 = vector.load %arg5[%c3, %c0_25] : memref<8x256xf32, #tpu.memory_space<vmem>>, vector<1x256xf32>
    %46 = vector.broadcast %45 : vector<1x256xf32> to vector<512x256xf32>
    %47 = arith.addf %44, %46 : vector<512x256xf32>
    %cst_26 = arith.constant 0.000000e+00 : f32
    %48 = vector.broadcast %cst_26 : f32 to vector<512x256xf32>
    %49 = arith.maximumf %47, %48 : vector<512x256xf32>
    %50 = arith.truncf %49 : vector<512x256xf32> to vector<512x256xbf16>
    %c3_27 = arith.constant 3 : index
    %c0_28 = arith.constant 0 : index
    %c0_29 = arith.constant 0 : index
    %51 = vector.load %arg4[%c3_27, %c0_28, %c0_29] : memref<7x256x256xbf16, #tpu.memory_space<vmem>>, vector<1x256x256xbf16>
    %52 = vector.shape_cast %51 : vector<1x256x256xbf16> to vector<256x256xbf16>
    %cst_30 = arith.constant dense<0.000000e+00> : vector<512x256xf32>
    %53 = tpu.matmul %50, %52, %cst_30 {dimension_numbers = #tpu.dot_dimension_numbers<[1], [0], [0], [1], [0, 0, 1, 1], [], []>} : vector<512x256xbf16>, vector<256x256xbf16>, vector<512x256xf32> -> vector<512x256xf32>
    %c4 = arith.constant 4 : index
    %c0_31 = arith.constant 0 : index
    %54 = vector.load %arg5[%c4, %c0_31] : memref<8x256xf32, #tpu.memory_space<vmem>>, vector<1x256xf32>
    %55 = vector.broadcast %54 : vector<1x256xf32> to vector<512x256xf32>
    %56 = arith.addf %53, %55 : vector<512x256xf32>
    %cst_32 = arith.constant 0.000000e+00 : f32
    %57 = vector.broadcast %cst_32 : f32 to vector<512x256xf32>
    %58 = arith.maximumf %56, %57 : vector<512x256xf32>
    %59 = arith.truncf %58 : vector<512x256xf32> to vector<512x256xbf16>
    %c4_33 = arith.constant 4 : index
    %c0_34 = arith.constant 0 : index
    %c0_35 = arith.constant 0 : index
    %60 = vector.load %arg4[%c4_33, %c0_34, %c0_35] : memref<7x256x256xbf16, #tpu.memory_space<vmem>>, vector<1x256x256xbf16>
    %61 = vector.shape_cast %60 : vector<1x256x256xbf16> to vector<256x256xbf16>
    %cst_36 = arith.constant dense<0.000000e+00> : vector<512x256xf32>
    %62 = tpu.matmul %59, %61, %cst_36 {dimension_numbers = #tpu.dot_dimension_numbers<[1], [0], [0], [1], [0, 0, 1, 1], [], []>} : vector<512x256xbf16>, vector<256x256xbf16>, vector<512x256xf32> -> vector<512x256xf32>
    %c5 = arith.constant 5 : index
    %c0_37 = arith.constant 0 : index
    %63 = vector.load %arg5[%c5, %c0_37] : memref<8x256xf32, #tpu.memory_space<vmem>>, vector<1x256xf32>
    %64 = vector.broadcast %63 : vector<1x256xf32> to vector<512x256xf32>
    %65 = arith.addf %62, %64 : vector<512x256xf32>
    %66 = vector.extract_strided_slice %0 {offsets = [0, 0], sizes = [512, 1], strides = [1, 1]} : vector<512x8xf32> to vector<512x1xf32>
    %c0_38 = arith.constant 0 : index
    %c0_39 = arith.constant 0 : index
    %67 = vector.load %arg3[%c0_38, %c0_39] : memref<8x256xf32, #tpu.memory_space<vmem>>, vector<1x256xf32>
    %68 = vector.broadcast %66 : vector<512x1xf32> to vector<512x256xf32>
    %69 = vector.broadcast %67 : vector<1x256xf32> to vector<512x256xf32>
    %70 = arith.mulf %68, %69 : vector<512x256xf32>
    %71 = arith.addf %65, %70 : vector<512x256xf32>
    %72 = vector.extract_strided_slice %0 {offsets = [0, 1], sizes = [512, 1], strides = [1, 1]} : vector<512x8xf32> to vector<512x1xf32>
    %c1_40 = arith.constant 1 : index
    %c0_41 = arith.constant 0 : index
    %73 = vector.load %arg3[%c1_40, %c0_41] : memref<8x256xf32, #tpu.memory_space<vmem>>, vector<1x256xf32>
    %74 = vector.broadcast %72 : vector<512x1xf32> to vector<512x256xf32>
    %75 = vector.broadcast %73 : vector<1x256xf32> to vector<512x256xf32>
    %76 = arith.mulf %74, %75 : vector<512x256xf32>
    %77 = arith.addf %71, %76 : vector<512x256xf32>
    %78 = vector.extract_strided_slice %0 {offsets = [0, 2], sizes = [512, 1], strides = [1, 1]} : vector<512x8xf32> to vector<512x1xf32>
    %c2_42 = arith.constant 2 : index
    %c0_43 = arith.constant 0 : index
    %79 = vector.load %arg3[%c2_42, %c0_43] : memref<8x256xf32, #tpu.memory_space<vmem>>, vector<1x256xf32>
    %80 = vector.broadcast %78 : vector<512x1xf32> to vector<512x256xf32>
    %81 = vector.broadcast %79 : vector<1x256xf32> to vector<512x256xf32>
    %82 = arith.mulf %80, %81 : vector<512x256xf32>
    %83 = arith.addf %77, %82 : vector<512x256xf32>
    %cst_44 = arith.constant 0.000000e+00 : f32
    %84 = vector.broadcast %cst_44 : f32 to vector<512x256xf32>
    %85 = arith.maximumf %83, %84 : vector<512x256xf32>
    %86 = arith.truncf %85 : vector<512x256xf32> to vector<512x256xbf16>
    %c5_45 = arith.constant 5 : index
    %c0_46 = arith.constant 0 : index
    %c0_47 = arith.constant 0 : index
    %87 = vector.load %arg4[%c5_45, %c0_46, %c0_47] : memref<7x256x256xbf16, #tpu.memory_space<vmem>>, vector<1x256x256xbf16>
    %88 = vector.shape_cast %87 : vector<1x256x256xbf16> to vector<256x256xbf16>
    %cst_48 = arith.constant dense<0.000000e+00> : vector<512x256xf32>
    %89 = tpu.matmul %86, %88, %cst_48 {dimension_numbers = #tpu.dot_dimension_numbers<[1], [0], [0], [1], [0, 0, 1, 1], [], []>} : vector<512x256xbf16>, vector<256x256xbf16>, vector<512x256xf32> -> vector<512x256xf32>
    %c6 = arith.constant 6 : index
    %c0_49 = arith.constant 0 : index
    %90 = vector.load %arg5[%c6, %c0_49] : memref<8x256xf32, #tpu.memory_space<vmem>>, vector<1x256xf32>
    %91 = vector.broadcast %90 : vector<1x256xf32> to vector<512x256xf32>
    %92 = arith.addf %89, %91 : vector<512x256xf32>
    %cst_50 = arith.constant 0.000000e+00 : f32
    %93 = vector.broadcast %cst_50 : f32 to vector<512x256xf32>
    %94 = arith.maximumf %92, %93 : vector<512x256xf32>
    %95 = arith.truncf %94 : vector<512x256xf32> to vector<512x256xbf16>
    %c6_51 = arith.constant 6 : index
    %c0_52 = arith.constant 0 : index
    %c0_53 = arith.constant 0 : index
    %96 = vector.load %arg4[%c6_51, %c0_52, %c0_53] : memref<7x256x256xbf16, #tpu.memory_space<vmem>>, vector<1x256x256xbf16>
    %97 = vector.shape_cast %96 : vector<1x256x256xbf16> to vector<256x256xbf16>
    %cst_54 = arith.constant dense<0.000000e+00> : vector<512x256xf32>
    %98 = tpu.matmul %95, %97, %cst_54 {dimension_numbers = #tpu.dot_dimension_numbers<[1], [0], [0], [1], [0, 0, 1, 1], [], []>} : vector<512x256xbf16>, vector<256x256xbf16>, vector<512x256xf32> -> vector<512x256xf32>
    %c7 = arith.constant 7 : index
    %c0_55 = arith.constant 0 : index
    %99 = vector.load %arg5[%c7, %c0_55] : memref<8x256xf32, #tpu.memory_space<vmem>>, vector<1x256xf32>
    %100 = vector.broadcast %99 : vector<1x256xf32> to vector<512x256xf32>
    %101 = arith.addf %98, %100 : vector<512x256xf32>
    %cst_56 = arith.constant 0.000000e+00 : f32
    %102 = vector.broadcast %cst_56 : f32 to vector<512x256xf32>
    %103 = arith.maximumf %101, %102 : vector<512x256xf32>
    %104 = arith.truncf %103 : vector<512x256xf32> to vector<512x256xbf16>
    %c0_57 = arith.constant 0 : index
    %c0_58 = arith.constant 0 : index
    %105 = vector.load %arg6[%c0_57, %c0_58] : memref<256x128xbf16, #tpu.memory_space<vmem>>, vector<256x128xbf16>
    %cst_59 = arith.constant dense<0.000000e+00> : vector<512x128xf32>
    %106 = tpu.matmul %104, %105, %cst_59 {dimension_numbers = #tpu.dot_dimension_numbers<[1], [0], [0], [1], [0, 0, 1, 1], [], []>} : vector<512x256xbf16>, vector<256x128xbf16>, vector<512x128xf32> -> vector<512x128xf32>
    %c0_60 = arith.constant 0 : index
    %c0_61 = arith.constant 0 : index
    %107 = vector.load %arg7[%c0_60, %c0_61] : memref<1x128xf32, #tpu.memory_space<vmem>>, vector<1x128xf32>
    %108 = vector.broadcast %107 : vector<1x128xf32> to vector<512x128xf32>
    %109 = arith.addf %106, %108 : vector<512x128xf32>
    %c0_62 = arith.constant 0 : index
    %c0_63 = arith.constant 0 : index
    %110 = vector.load %arg8[%c0_62, %c0_63] : memref<512x128xf32, #tpu.memory_space<vmem>>, vector<512x128xf32>
    tpu.vector_store %arg8[%c0_62, %c0_63], %109 {strides = array<i32>} : memref<512x128xf32, #tpu.memory_space<vmem>>, vector<512x128xf32>,
    return
  }
  func.func @transform_0(%arg0: i32) -> (i32, i32) {
    %c0_i32 = arith.constant 0 : i32
    %c0_i32_0 = arith.constant 0 : i32
    return %arg0, %c0_i32 : i32, i32
  }
  func.func @transform_1(%arg0: i32) -> (i32, i32) {
    %c0_i32 = arith.constant 0 : i32
    %c0_i32_0 = arith.constant 0 : i32
    %c0_i32_1 = arith.constant 0 : i32
    return %c0_i32, %c0_i32_0 : i32, i32
  }
  func.func @transform_2(%arg0: i32) -> (i32, i32) {
    %c0_i32 = arith.constant 0 : i32
    %c0_i32_0 = arith.constant 0 : i32
    %c0_i32_1 = arith.constant 0 : i32
    return %c0_i32, %c0_i32_0 : i32, i32
  }
  func.func @transform_3(%arg0: i32) -> (i32, i32, i32) {
    %c0_i32 = arith.constant 0 : i32
    %c0_i32_0 = arith.constant 0 : i32
    %c0_i32_1 = arith.constant 0 : i32
    %c0_i32_2 = arith.constant 0 : i32
    return %c0_i32, %c0_i32_0, %c0_i32_1 : i32, i32, i32
  }
  func.func @transform_4(%arg0: i32) -> (i32, i32) {
    %c0_i32 = arith.constant 0 : i32
    %c0_i32_0 = arith.constant 0 : i32
    %c0_i32_1 = arith.constant 0 : i32
    return %c0_i32, %c0_i32_0 : i32, i32
  }
  func.func @transform_5(%arg0: i32) -> (i32, i32) {
    %c0_i32 = arith.constant 0 : i32
    %c0_i32_0 = arith.constant 0 : i32
    %c0_i32_1 = arith.constant 0 : i32
    return %c0_i32, %c0_i32_0 : i32, i32
  }
  func.func @transform_6(%arg0: i32) -> (i32, i32) {
    %c0_i32 = arith.constant 0 : i32
    %c0_i32_0 = arith.constant 0 : i32
    %c0_i32_1 = arith.constant 0 : i32
    return %c0_i32, %c0_i32_0 : i32, i32
  }
  func.func @transform_7(%arg0: i32) -> (i32, i32) {
    %c0_i32 = arith.constant 0 : i32
    %c0_i32_0 = arith.constant 0 : i32
    return %arg0, %c0_i32 : i32, i32
  }
}

</mosaic_0001>

<llo_original>
// kernel: tpu_custom_call.1
$region0: #{tpu_custom_call.1}
  #allocation0 [shape = 'u32[]', space=smem, size = 0x4, offset = 0x4, fixed_abs, tag = 'smem constant byte address 0x4 - core index']
  #allocation1 [shape = 'u32[72,128]{1,0:T(1,128)}', space=vmem, size = 0x9000, scoped, tag = 'internal scratch']
  %s0 = inlined_call_operand.vmem [shape: f32[1024,8], index: 0, kind: input, shape index: {}]
  %s1 = inlined_call_operand.vmem [shape: f32[8,256], index: 1, kind: input, shape index: {}]
  %s2 = inlined_call_operand.vmem [shape: f32[8,256], index: 2, kind: input, shape index: {}]
  %s3 = inlined_call_operand.hbm [shape: bf16[7,256,256], index: 3, kind: input, shape index: {}]
  %s4 = inlined_call_operand.vmem [shape: f32[8,256], index: 4, kind: input, shape index: {}]
  %s5 = inlined_call_operand.vmem [shape: bf16[256,128], index: 5, kind: input, shape index: {}]
  %s6 = inlined_call_operand.vmem [shape: f32[1,128], index: 6, kind: input, shape index: {}]
  %s7 = inlined_call_operand.hbm [shape: f32[1024,128], index: 7, kind: output, shape index: {}]
  %s8 = sld [smem:[#allocation0]]
  $region65: #{tpu_custom_call.1} parent=0
    _
  %s10 = ssub.s32 1, %s8
  %s11 = scalar_select 0, %s10, %s8
  $region1: #{tpu_custom_call.1} parent=0
    #allocation2 [shape = 'u8[917504]{0}', space=vmem, size = 0xe0000, scoped, tag = 'input window, operand 3, single buffered']
    #allocation3 [shape = 's32[2]{0}', space=sflag, size = 0x8, scoped, tag = 'scoped memory for tpu_custom_call.1']
    #allocation4 [shape = 's32[2]{0}', space=sflag, size = 0x8, scoped, tag = 'scoped memory for tpu_custom_call.1']
    #allocation5 [shape = 'u8[524288]{0}', space=vmem, size = 0x80000, scoped, tag = 'output window, operand 0']
    %12 = vsyncpa [#allocation3], 0
    %13 = vsyncpa [#allocation4], 0
    %s14 = scalar_lea.sflag [#allocation4], 1
    %15 = vsyncpa %s14, 0
    loop: start=0, step=1, limit=4
    $region2: #{tpu_custom_call.1} parent=1 // loop_pre_header
      _
    $region3: #{tpu_custom_call.1} parent=1 // loop_header
      %s17 = sphi 0, %s21
      %p18 = scmp.ge.s32.totalorder %s17, 4
      %s27 = sphi 0, %s29
      %s30 = sphi 0, %s27
      %s31 = sphi 0, %s30
      %s47 = sphi 0, %s31
      %s51 = sphi 0, %s51
      %s53 = sphi 0, %s51
      %s54 = sphi 0, %s53
      %s68 = sphi 0, %s54
      %s72 = sphi 0, %s72
      %s74 = sphi 0, %s72
      %s75 = sphi 0, %s74
      %s89 = sphi 0, %s75
      %s93 = sphi 0, %s93
      %s95 = sphi 0, %s93
      %s96 = sphi 0, %s95
      %s110 = sphi 0, %s96
      %s114 = sphi 0, %s114
      %s116 = sphi 0, %s114
      %s117 = sphi 0, %s116
      %s131 = sphi 0, %s117
      %s135 = sphi 0, %s135
      %s137 = sphi 0, %s135
      %s138 = sphi 0, %s137
      %s152 = sphi 0, %s138
      %s156 = sphi 0, %s156
      %s158 = sphi 0, %s156
      %s159 = sphi 0, %s158
      %s173 = sphi 0, %s159
      %s179 = sphi 0, %s181
      %s182 = sphi 0, %s179
      %s183 = sphi 0, %s182
      %s199 = sphi 0, %s183
    $region4: #{tpu_custom_call.1} parent=1 // loop_header_branch
      %20 = sbr.rel (%p18) target = $region8
    $region5: #{tpu_custom_call.1} parent=1 // loop_body
      %s22 = ssub.s32 %s17, 1
      %s23 = ssub.s32 %s17, 2
      %s24 = sadd.s32 %s17, 1
      %s25 = ssub.s32 %s17, %s24
      %p26 = scmp.eq.s32.totalorder %s25, 0
      %s28 = sadd.s32 %s27, 1
      %s29 = scalar_select %p26, %s27, %s28
      %p32 = pneg %p26
      %p33 = scmp.eq.s32.totalorder %s17, 1
      %p34 = por %p32, %p33
      %p35 = scmp.ne.s32.totalorder %s27, %s30
      %p36 = scmp.eq.s32.totalorder %s17, 0
      %p37 = por %p35, %p36
      %p38 = scmp.ne.s32.totalorder %s27, %s30
      %p39 = scmp.eq.s32.totalorder %s22, 1
      %p40 = por %p38, %p39
      %p41 = scmp.ne.s32.totalorder %s30, %s31
      %p42 = scmp.eq.s32.totalorder %s22, 0
      %p43 = por %p41, %p42
      %p44 = scmp.ne.s32.totalorder %s30, %s31
      %p45 = scmp.eq.s32.totalorder %s23, 1
      %p46 = por %p44, %p45
      %p48 = scmp.ne.s32.totalorder %s31, %s47
      %p49 = scmp.eq.s32.totalorder %s23, 0
      %p50 = por %p48, %p49
      %s52 = sadd.s32 %s51, 1
      %p55 = scmp.eq.s32.totalorder %s17, 1
      %p56 = scmp.ne.s32.totalorder %s51, %s53
      %p57 = scmp.eq.s32.totalorder %s17, 0
      %p58 = por %p56, %p57
      %p59 = scmp.ne.s32.totalorder %s51, %s53
      %p60 = scmp.eq.s32.totalorder %s22, 1
      %p61 = por %p59, %p60
      %p62 = scmp.ne.s32.totalorder %s53, %s54
      %p63 = scmp.eq.s32.totalorder %s22, 0
      %p64 = por %p62, %p63
      %p65 = scmp.ne.s32.totalorder %s53, %s54
      %p66 = scmp.eq.s32.totalorder %s23, 1
      %p67 = por %p65, %p66
      %p69 = scmp.ne.s32.totalorder %s54, %s68
      %p70 = scmp.eq.s32.totalorder %s23, 0
      %p71 = por %p69, %p70
      %s73 = sadd.s32 %s72, 1
      %p76 = scmp.eq.s32.totalorder %s17, 1
      %p77 = scmp.ne.s32.totalorder %s72, %s74
      %p78 = scmp.eq.s32.totalorder %s17, 0
      %p79 = por %p77, %p78
      %p80 = scmp.ne.s32.totalorder %s72, %s74
      %p81 = scmp.eq.s32.totalorder %s22, 1
      %p82 = por %p80, %p81
      %p83 = scmp.ne.s32.totalorder %s74, %s75
      %p84 = scmp.eq.s32.totalorder %s22, 0
      %p85 = por %p83, %p84
      %p86 = scmp.ne.s32.totalorder %s74, %s75
      %p87 = scmp.eq.s32.totalorder %s23, 1
      %p88 = por %p86, %p87
      %p90 = scmp.ne.s32.totalorder %s75, %s89
      %p91 = scmp.eq.s32.totalorder %s23, 0
      %p92 = por %p90, %p91
      %s94 = sadd.s32 %s93, 1
      %p97 = scmp.eq.s32.totalorder %s17, 1
      %p98 = scmp.ne.s32.totalorder %s93, %s95
      %p99 = scmp.eq.s32.totalorder %s17, 0
      %p100 = por %p98, %p99
      %p101 = scmp.ne.s32.totalorder %s93, %s95
      %p102 = scmp.eq.s32.totalorder %s22, 1
      %p103 = por %p101, %p102
      %p104 = scmp.ne.s32.totalorder %s95, %s96
      %p105 = scmp.eq.s32.totalorder %s22, 0
      %p106 = por %p104, %p105
      %p107 = scmp.ne.s32.totalorder %s95, %s96
      %p108 = scmp.eq.s32.totalorder %s23, 1
      %p109 = por %p107, %p108
      %p111 = scmp.ne.s32.totalorder %s96, %s110
      %p112 = scmp.eq.s32.totalorder %s23, 0
      %p113 = por %p111, %p112
      %s115 = sadd.s32 %s114, 1
      %p118 = scmp.eq.s32.totalorder %s17, 1
      %p119 = scmp.ne.s32.totalorder %s114, %s116
      %p120 = scmp.eq.s32.totalorder %s17, 0
      %p121 = por %p119, %p120
      %p122 = scmp.ne.s32.totalorder %s114, %s116
      %p123 = scmp.eq.s32.totalorder %s22, 1
      %p124 = por %p122, %p123
      %p125 = scmp.ne.s32.totalorder %s116, %s117
      %p126 = scmp.eq.s32.totalorder %s22, 0
      %p127 = por %p125, %p126
      %p128 = scmp.ne.s32.totalorder %s116, %s117
      %p129 = scmp.eq.s32.totalorder %s23, 1
      %p130 = por %p128, %p129
      %p132 = scmp.ne.s32.totalorder %s117, %s131
      %p133 = scmp.eq.s32.totalorder %s23, 0
      %p134 = por %p132, %p133
      %s136 = sadd.s32 %s135, 1
      %p139 = scmp.eq.s32.totalorder %s17, 1
      %p140 = scmp.ne.s32.totalorder %s135, %s137
      %p141 = scmp.eq.s32.totalorder %s17, 0
      %p142 = por %p140, %p141
      %p143 = scmp.ne.s32.totalorder %s135, %s137
      %p144 = scmp.eq.s32.totalorder %s22, 1
      %p145 = por %p143, %p144
      %p146 = scmp.ne.s32.totalorder %s137, %s138
      %p147 = scmp.eq.s32.totalorder %s22, 0
      %p148 = por %p146, %p147
      %p149 = scmp.ne.s32.totalorder %s137, %s138
      %p150 = scmp.eq.s32.totalorder %s23, 1
      %p151 = por %p149, %p150
      %p153 = scmp.ne.s32.totalorder %s138, %s152
      %p154 = scmp.eq.s32.totalorder %s23, 0
      %p155 = por %p153, %p154
      %s157 = sadd.s32 %s156, 1
      %p160 = scmp.eq.s32.totalorder %s17, 1
      %p161 = scmp.ne.s32.totalorder %s156, %s158
      %p162 = scmp.eq.s32.totalorder %s17, 0
      %p163 = por %p161, %p162
      %p164 = scmp.ne.s32.totalorder %s156, %s158
      %p165 = scmp.eq.s32.totalorder %s22, 1
      %p166 = por %p164, %p165
      %p167 = scmp.ne.s32.totalorder %s158, %s159
      %p168 = scmp.eq.s32.totalorder %s22, 0
      %p169 = por %p167, %p168
      %p170 = scmp.ne.s32.totalorder %s158, %s159
      %p171 = scmp.eq.s32.totalorder %s23, 1
      %p172 = por %p170, %p171
      %p174 = scmp.ne.s32.totalorder %s159, %s173
      %p175 = scmp.eq.s32.totalorder %s23, 0
      %p176 = por %p174, %p175
      %s177 = ssub.s32 %s17, %s24
      %p178 = scmp.eq.s32.totalorder %s177, 0
      %s180 = sadd.s32 %s179, 1
      %s181 = scalar_select %p178, %s179, %s180
      %p184 = pneg %p178
      %p185 = scmp.eq.s32.totalorder %s17, 1
      %p186 = por %p184, %p185
      %p187 = scmp.ne.s32.totalorder %s179, %s182
      %p188 = scmp.eq.s32.totalorder %s17, 0
      %p189 = por %p187, %p188
      %p190 = scmp.ne.s32.totalorder %s179, %s182
      %p191 = scmp.eq.s32.totalorder %s22, 1
      %p192 = por %p190, %p191
      %p193 = scmp.ne.s32.totalorder %s182, %s183
      %p194 = scmp.eq.s32.totalorder %s22, 0
      %p195 = por %p193, %p194
      %p196 = scmp.ne.s32.totalorder %s182, %s183
      %p197 = scmp.eq.s32.totalorder %s23, 1
      %p198 = por %p196, %p197
      %p200 = scmp.ne.s32.totalorder %s183, %s199
      %p201 = scmp.eq.s32.totalorder %s23, 0
      %p202 = por %p200, %p201
      %p203 = scmp.le.s32.totalorder 1, %s17
      %p204 = scmp.lt.s32.totalorder %s17, 3
      %p205 = pnand %p203, %p204
      %p206 = pneg %p205
      // Predicated region
      $region9: #{tpu_custom_call.1} parent=5 // pred_check
        _
      $region10: #{tpu_custom_call.1} parent=5 // pred_check_branch
        %208 = sbr.rel (%p205) target = $region12
      $region11: #{tpu_custom_call.1} parent=5 // pred_region
        %s209 = ssub.s32 %s17, 1
        // Predicated region
        $region13: #{tpu_custom_call.1} parent=11 // pred_check
          %p210 = pneg %p64
        $region14: #{tpu_custom_call.1} parent=11 // pred_check_branch
          %212 = sbr.rel (%p210) target = $region16
        $region15: #{tpu_custom_call.1} parent=11 // pred_region
          _
        $region16: #{tpu_custom_call.1} parent=11 // pred_fallthru
          _
        // Predicated region
        $region17: #{tpu_custom_call.1} parent=11 // pred_check
          %p213 = pneg %p85
        $region18: #{tpu_custom_call.1} parent=11 // pred_check_branch
          %215 = sbr.rel (%p213) target = $region20
        $region19: #{tpu_custom_call.1} parent=11 // pred_region
          _
        $region20: #{tpu_custom_call.1} parent=11 // pred_fallthru
          _
        // Predicated region
        $region21: #{tpu_custom_call.1} parent=11 // pred_check
          %p216 = pneg %p106
        $region22: #{tpu_custom_call.1} parent=11 // pred_check_branch
          %218 = sbr.rel (%p216) target = $region24
        $region23: #{tpu_custom_call.1} parent=11 // pred_region
          %220 = vsyncadd [#allocation3], 0
          %s221 = sshll.u32 %s3, 4
          %s222 = int_to_ptr.hbm [resolvable:$true] %s221
          %s223 = sshll.u32 [#allocation2], 4
          %s224 = int_to_ptr.vmem [resolvable:$true] %s223
          %229 = dma.hbm_to_vmem [thread:$0]  %s222, 28672, %s224, [#allocation3], 128, 128, 8
        $region24: #{tpu_custom_call.1} parent=11 // pred_fallthru
          _
        // Predicated region
        $region25: #{tpu_custom_call.1} parent=11 // pred_check
          %p230 = pneg %p127
        $region26: #{tpu_custom_call.1} parent=11 // pred_check_branch
          %232 = sbr.rel (%p230) target = $region28
        $region27: #{tpu_custom_call.1} parent=11 // pred_region
          _
        $region28: #{tpu_custom_call.1} parent=11 // pred_fallthru
          _
        // Predicated region
        $region29: #{tpu_custom_call.1} parent=11 // pred_check
          %p233 = pneg %p148
        $region30: #{tpu_custom_call.1} parent=11 // pred_check_branch
          %235 = sbr.rel (%p233) target = $region32
        $region31: #{tpu_custom_call.1} parent=11 // pred_region
          _
        $region32: #{tpu_custom_call.1} parent=11 // pred_fallthru
          _
        // Predicated region
        $region33: #{tpu_custom_call.1} parent=11 // pred_check
          %p236 = pneg %p169
        $region34: #{tpu_custom_call.1} parent=11 // pred_check_branch
          %238 = sbr.rel (%p236) target = $region36
        $region35: #{tpu_custom_call.1} parent=11 // pred_region
          _
        $region36: #{tpu_custom_call.1} parent=11 // pred_fallthru
          _
      $region12: #{tpu_custom_call.1} parent=5 // pred_fallthru
        _
      %p239 = scmp.lt.s32.totalorder %s17, 2
      // Predicated region
      $region37: #{tpu_custom_call.1} parent=5 // pred_check
        %p240 = pneg %p239
      $region38: #{tpu_custom_call.1} parent=5 // pred_check_branch
        %242 = sbr.rel (%p240) target = $region40
      $region39: #{tpu_custom_call.1} parent=5 // pred_region
        // Predicated region
        $region41: #{tpu_custom_call.1} parent=39 // pred_check
          %p243 = pneg %p37
        $region42: #{tpu_custom_call.1} parent=39 // pred_check_branch
          %245 = sbr.rel (%p243) target = $region44
        $region43: #{tpu_custom_call.1} parent=39 // pred_region
          %s246 = smul.u32 64, %s17
          %p247 = scmp.lt.s32.totalorder %s246, 127
          %s248 = scalar_select %p247, %s246, 127
          %s249 = smul.addr %s248, 8
          %s250 = scalar_lea.vmem %s0, %s249
          %s251 = smul.u32 64, %s17
        $region44: #{tpu_custom_call.1} parent=39 // pred_fallthru
          _
      $region40: #{tpu_custom_call.1} parent=5 // pred_fallthru
        _
      %p252 = scmp.le.s32.totalorder 1, %s17
      %p253 = scmp.lt.s32.totalorder %s17, 3
      %p254 = pnand %p252, %p253
      %p255 = pneg %p254
      // Predicated region
      $region45: #{tpu_custom_call.1} parent=5 // pred_check
        _
      $region46: #{tpu_custom_call.1} parent=5 // pred_check_branch
        %257 = sbr.rel (%p254) target = $region48
      $region47: #{tpu_custom_call.1} parent=5 // pred_region
        %s258 = ssub.s32 %s17, 1
        // Predicated region
        $region49: #{tpu_custom_call.1} parent=47 // pred_check
          %p259 = pneg %p106
        $region50: #{tpu_custom_call.1} parent=47 // pred_check_branch
          %261 = sbr.rel (%p259) target = $region52
        $region51: #{tpu_custom_call.1} parent=47 // pred_region
          %263 = dma.done [#allocation3], 28672
        $region52: #{tpu_custom_call.1} parent=47 // pred_fallthru
          _
        %s264 = smul.u32 64, %s22
        %p265 = scmp.lt.s32.totalorder %s264, 127
        %s266 = scalar_select %p265, %s264, 127
        %s267 = smul.addr %s266, 8
        %s268 = scalar_lea.vmem %s0, %s267
        %p269 = pneg %p43
        %p270 = pneg %p40
        %p271 = pneg %p64
        %p272 = pneg %p61
        %p273 = pneg %p85
        %p274 = pneg %p82
        %p275 = pneg %p106
        %p276 = pneg %p103
        %p277 = pneg %p127
        %p278 = pneg %p124
        %p279 = pneg %p148
        %p280 = pneg %p145
        %p281 = pneg %p169
        %p282 = pneg %p166
        %p283 = pneg %p195
        %p284 = pneg %p192
        %s285 = sand.u32 %s182, 1
        %s286 = scalar_lea.sflag [#allocation4], %s285
        %s287 = sand.u32 %s182, 1
        %s288 = smul.addr %s287, 512
        %s289 = scalar_lea.vmem [#allocation5], %s288
        %s290 = smul.u32 64, %s22
        %p291 = scmp.lt.s32.totalorder %s290, 127
        %s292 = scalar_select %p291, %s290, 127
        %s293 = smul.addr %s292, 8
        %s294 = scalar_lea.vmem %s0, %s293
        %s295 = smul.u32 64, %s22
        %s296 = smul.u32 64, %s22
        %v297 = vld [vmem:[%s294] sm:$0xff]
        %v298 = vld [vmem:[%s294 + $0x8] sm:$0xff]
        %v299 = vld [vmem:[%s294 + $0x10] sm:$0xff]
        %v300 = vld [vmem:[%s294 + $0x18] sm:$0xff]
        %v301 = vld [vmem:[%s294 + $0x20] sm:$0xff]
        %v302 = vld [vmem:[%s294 + $0x28] sm:$0xff]
        %v303 = vld [vmem:[%s294 + $0x30] sm:$0xff]
        %v304 = vld [vmem:[%s294 + $0x38] sm:$0xff]
        %v305 = vld [vmem:[%s294 + $0x40] sm:$0xff]
        %v306 = vld [vmem:[%s294 + $0x48] sm:$0xff]
        %v307 = vld [vmem:[%s294 + $0x50] sm:$0xff]
        %v308 = vld [vmem:[%s294 + $0x58] sm:$0xff]
        %v309 = vld [vmem:[%s294 + $0x60] sm:$0xff]
        %v310 = vld [vmem:[%s294 + $0x68] sm:$0xff]
        %v311 = vld [vmem:[%s294 + $0x70] sm:$0xff]
        %v312 = vld [vmem:[%s294 + $0x78] sm:$0xff]
        %v313 = vld [vmem:[%s294 + $0x80] sm:$0xff]
        %v314 = vld [vmem:[%s294 + $0x88] sm:$0xff]
        %v315 = vld [vmem:[%s294 + $0x90] sm:$0xff]
        %v316 = vld [vmem:[%s294 + $0x98] sm:$0xff]
        %v317 = vld [vmem:[%s294 + $0xa0] sm:$0xff]
        %v318 = vld [vmem:[%s294 + $0xa8] sm:$0xff]
        %v319 = vld [vmem:[%s294 + $0xb0] sm:$0xff]
        %v320 = vld [vmem:[%s294 + $0xb8] sm:$0xff]
        %v321 = vld [vmem:[%s294 + $0xc0] sm:$0xff]
        %v322 = vld [vmem:[%s294 + $0xc8] sm:$0xff]
        %v323 = vld [vmem:[%s294 + $0xd0] sm:$0xff]
        %v324 = vld [vmem:[%s294 + $0xd8] sm:$0xff]
        %v325 = vld [vmem:[%s294 + $0xe0] sm:$0xff]
        %v326 = vld [vmem:[%s294 + $0xe8] sm:$0xff]
        %v327 = vld [vmem:[%s294 + $0xf0] sm:$0xff]
        %v328 = vld [vmem:[%s294 + $0xf8] sm:$0xff]
        %v329 = vld [vmem:[%s294 + $0x100] sm:$0xff]
        %v330 = vld [vmem:[%s294 + $0x108] sm:$0xff]
        %v331 = vld [vmem:[%s294 + $0x110] sm:$0xff]
        %v332 = vld [vmem:[%s294 + $0x118] sm:$0xff]
        %v333 = vld [vmem:[%s294 + $0x120] sm:$0xff]
        %v334 = vld [vmem:[%s294 + $0x128] sm:$0xff]
        %v335 = vld [vmem:[%s294 + $0x130] sm:$0xff]
        %v336 = vld [vmem:[%s294 + $0x138] sm:$0xff]
        %v337 = vld [vmem:[%s294 + $0x140] sm:$0xff]
        %v338 = vld [vmem:[%s294 + $0x148] sm:$0xff]
        %v339 = vld [vmem:[%s294 + $0x150] sm:$0xff]
        %v340 = vld [vmem:[%s294 + $0x158] sm:$0xff]
        %v341 = vld [vmem:[%s294 + $0x160] sm:$0xff]
        %v342 = vld [vmem:[%s294 + $0x168] sm:$0xff]
        %v343 = vld [vmem:[%s294 + $0x170] sm:$0xff]
        %v344 = vld [vmem:[%s294 + $0x178] sm:$0xff]
        %v345 = vld [vmem:[%s294 + $0x180] sm:$0xff]
        %v346 = vld [vmem:[%s294 + $0x188] sm:$0xff]
        %v347 = vld [vmem:[%s294 + $0x190] sm:$0xff]
        %v348 = vld [vmem:[%s294 + $0x198] sm:$0xff]
        %v349 = vld [vmem:[%s294 + $0x1a0] sm:$0xff]
        %v350 = vld [vmem:[%s294 + $0x1a8] sm:$0xff]
        %v351 = vld [vmem:[%s294 + $0x1b0] sm:$0xff]
        %v352 = vld [vmem:[%s294 + $0x1b8] sm:$0xff]
        %v353 = vld [vmem:[%s294 + $0x1c0] sm:$0xff]
        %v354 = vld [vmem:[%s294 + $0x1c8] sm:$0xff]
        %v355 = vld [vmem:[%s294 + $0x1d0] sm:$0xff]
        %v356 = vld [vmem:[%s294 + $0x1d8] sm:$0xff]
        %v357 = vld [vmem:[%s294 + $0x1e0] sm:$0xff]
        %v358 = vld [vmem:[%s294 + $0x1e8] sm:$0xff]
        %v359 = vld [vmem:[%s294 + $0x1f0] sm:$0xff]
        %v360 = vld [vmem:[%s294 + $0x1f8] sm:$0xff]
        %v361 = vld [vmem:[%s4] ss:$8 sm:$0x3]
        %v362 = vld [vmem:[%s1] ss:$8 sm:$0x3]
        %364 = vset.pattern.permute.xlu0 0
        %365 = vperm.xlu0 %364, %v297
        %v366 = vpop.permute.xlu0 %365
        %369 = vset.pattern.permute.xlu0 0
        %370 = vperm.xlu0 %369, %v298
        %v371 = vpop.permute.xlu0 %370
        %374 = vset.pattern.permute.xlu0 0
        %375 = vperm.xlu0 %374, %v299
        %v376 = vpop.permute.xlu0 %375
        %379 = vset.pattern.permute.xlu0 0
        %380 = vperm.xlu0 %379, %v300
        %v381 = vpop.permute.xlu0 %380
        %384 = vset.pattern.permute.xlu0 0
        %385 = vperm.xlu0 %384, %v301
        %v386 = vpop.permute.xlu0 %385
        %389 = vset.pattern.permute.xlu0 0
        %390 = vperm.xlu0 %389, %v302
        %v391 = vpop.permute.xlu0 %390
        %394 = vset.pattern.permute.xlu0 0
        %395 = vperm.xlu0 %394, %v303
        %v396 = vpop.permute.xlu0 %395
        %399 = vset.pattern.permute.xlu0 0
        %400 = vperm.xlu0 %399, %v304
        %v401 = vpop.permute.xlu0 %400
        %404 = vset.pattern.permute.xlu0 0
        %405 = vperm.xlu0 %404, %v305
        %v406 = vpop.permute.xlu0 %405
        %409 = vset.pattern.permute.xlu0 0
        %410 = vperm.xlu0 %409, %v306
        %v411 = vpop.permute.xlu0 %410
        %414 = vset.pattern.permute.xlu0 0
        %415 = vperm.xlu0 %414, %v307
        %v416 = vpop.permute.xlu0 %415
        %419 = vset.pattern.permute.xlu0 0
        %420 = vperm.xlu0 %419, %v308
        %v421 = vpop.permute.xlu0 %420
        %424 = vset.pattern.permute.xlu0 0
        %425 = vperm.xlu0 %424, %v309
        %v426 = vpop.permute.xlu0 %425
        %429 = vset.pattern.permute.xlu0 0
        %430 = vperm.xlu0 %429, %v310
        %v431 = vpop.permute.xlu0 %430
        %434 = vset.pattern.permute.xlu0 0
        %435 = vperm.xlu0 %434, %v311
        %v436 = vpop.permute.xlu0 %435
        %439 = vset.pattern.permute.xlu0 0
        %440 = vperm.xlu0 %439, %v312
        %v441 = vpop.permute.xlu0 %440
        %444 = vset.pattern.permute.xlu0 0
        %445 = vperm.xlu0 %444, %v313
        %v446 = vpop.permute.xlu0 %445
        %449 = vset.pattern.permute.xlu0 0
        %450 = vperm.xlu0 %449, %v314
        %v451 = vpop.permute.xlu0 %450
        %454 = vset.pattern.permute.xlu0 0
        %455 = vperm.xlu0 %454, %v315
        %v456 = vpop.permute.xlu0 %455
        %459 = vset.pattern.permute.xlu0 0
        %460 = vperm.xlu0 %459, %v316
        %v461 = vpop.permute.xlu0 %460
        %464 = vset.pattern.permute.xlu0 0
        %465 = vperm.xlu0 %464, %v317
        %v466 = vpop.permute.xlu0 %465
        %469 = vset.pattern.permute.xlu0 0
        %470 = vperm.xlu0 %469, %v318
        %v471 = vpop.permute.xlu0 %470
        %474 = vset.pattern.permute.xlu0 0
        %475 = vperm.xlu0 %474, %v319
        %v476 = vpop.permute.xlu0 %475
        %479 = vset.pattern.permute.xlu0 0
        %480 = vperm.xlu0 %479, %v320
        %v481 = vpop.permute.xlu0 %480
        %484 = vset.pattern.permute.xlu0 0
        %485 = vperm.xlu0 %484, %v321
        %v486 = vpop.permute.xlu0 %485
        %489 = vset.pattern.permute.xlu0 0
        %490 = vperm.xlu0 %489, %v322
        %v491 = vpop.permute.xlu0 %490
        %494 = vset.pattern.permute.xlu0 0
        %495 = vperm.xlu0 %494, %v323
        %v496 = vpop.permute.xlu0 %495
        %499 = vset.pattern.permute.xlu0 0
        %500 = vperm.xlu0 %499, %v324
        %v501 = vpop.permute.xlu0 %500
        %504 = vset.pattern.permute.xlu0 0
        %505 = vperm.xlu0 %504, %v325
        %v506 = vpop.permute.xlu0 %505
        %509 = vset.pattern.permute.xlu0 0
        %510 = vperm.xlu0 %509, %v326
        %v511 = vpop.permute.xlu0 %510
        %514 = vset.pattern.permute.xlu0 0
        %515 = vperm.xlu0 %514, %v327
        %v516 = vpop.permute.xlu0 %515
        %519 = vset.pattern.permute.xlu0 0
        %520 = vperm.xlu0 %519, %v328
        %v521 = vpop.permute.xlu0 %520
        %524 = vset.pattern.permute.xlu0 0
        %525 = vperm.xlu0 %524, %v329
        %v526 = vpop.permute.xlu0 %525
        %529 = vset.pattern.permute.xlu0 0
        %530 = vperm.xlu0 %529, %v330
        %v531 = vpop.permute.xlu0 %530
        %534 = vset.pattern.permute.xlu0 0
        %535 = vperm.xlu0 %534, %v331
        %v536 = vpop.permute.xlu0 %535
        %539 = vset.pattern.permute.xlu0 0
        %540 = vperm.xlu0 %539, %v332
        %v541 = vpop.permute.xlu0 %540
        %544 = vset.pattern.permute.xlu0 0
        %545 = vperm.xlu0 %544, %v333
        %v546 = vpop.permute.xlu0 %545
        %549 = vset.pattern.permute.xlu0 0
        %550 = vperm.xlu0 %549, %v334
        %v551 = vpop.permute.xlu0 %550
        %554 = vset.pattern.permute.xlu0 0
        %555 = vperm.xlu0 %554, %v335
        %v556 = vpop.permute.xlu0 %555
        %559 = vset.pattern.permute.xlu0 0
        %560 = vperm.xlu0 %559, %v336
        %v561 = vpop.permute.xlu0 %560
        %564 = vset.pattern.permute.xlu0 0
        %565 = vperm.xlu0 %564, %v337
        %v566 = vpop.permute.xlu0 %565
        %569 = vset.pattern.permute.xlu0 0
        %570 = vperm.xlu0 %569, %v338
        %v571 = vpop.permute.xlu0 %570
        %574 = vset.pattern.permute.xlu0 0
        %575 = vperm.xlu0 %574, %v339
        %v576 = vpop.permute.xlu0 %575
        %579 = vset.pattern.permute.xlu0 0
        %580 = vperm.xlu0 %579, %v340
        %v581 = vpop.permute.xlu0 %580
        %584 = vset.pattern.permute.xlu0 0
        %585 = vperm.xlu0 %584, %v341
        %v586 = vpop.permute.xlu0 %585
        %589 = vset.pattern.permute.xlu0 0
        %590 = vperm.xlu0 %589, %v342
        %v591 = vpop.permute.xlu0 %590
        %594 = vset.pattern.permute.xlu0 0
        %595 = vperm.xlu0 %594, %v343
        %v596 = vpop.permute.xlu0 %595
        %599 = vset.pattern.permute.xlu0 0
        %600 = vperm.xlu0 %599, %v344
        %v601 = vpop.permute.xlu0 %600
        %604 = vset.pattern.permute.xlu0 0
        %605 = vperm.xlu0 %604, %v345
        %v606 = vpop.permute.xlu0 %605
        %609 = vset.pattern.permute.xlu0 0
        %610 = vperm.xlu0 %609, %v346
        %v611 = vpop.permute.xlu0 %610
        %614 = vset.pattern.permute.xlu0 0
        %615 = vperm.xlu0 %614, %v347
        %v616 = vpop.permute.xlu0 %615
        %619 = vset.pattern.permute.xlu0 0
        %620 = vperm.xlu0 %619, %v348
        %v621 = vpop.permute.xlu0 %620
        %624 = vset.pattern.permute.xlu0 0
        %625 = vperm.xlu0 %624, %v349
        %v626 = vpop.permute.xlu0 %625
        %629 = vset.pattern.permute.xlu0 0
        %630 = vperm.xlu0 %629, %v350
        %v631 = vpop.permute.xlu0 %630
        %634 = vset.pattern.permute.xlu0 0
        %635 = vperm.xlu0 %634, %v351
        %v636 = vpop.permute.xlu0 %635
        %639 = vset.pattern.permute.xlu0 0
        %640 = vperm.xlu0 %639, %v352
        %v641 = vpop.permute.xlu0 %640
        %644 = vset.pattern.permute.xlu0 0
        %645 = vperm.xlu0 %644, %v353
        %v646 = vpop.permute.xlu0 %645
        %649 = vset.pattern.permute.xlu0 0
        %650 = vperm.xlu0 %649, %v354
        %v651 = vpop.permute.xlu0 %650
        %654 = vset.pattern.permute.xlu0 0
        %655 = vperm.xlu0 %654, %v355
        %v656 = vpop.permute.xlu0 %655
        %659 = vset.pattern.permute.xlu0 0
        %660 = vperm.xlu0 %659, %v356
        %v661 = vpop.permute.xlu0 %660
        %664 = vset.pattern.permute.xlu0 0
        %665 = vperm.xlu0 %664, %v357
        %v666 = vpop.permute.xlu0 %665
        %669 = vset.pattern.permute.xlu0 0
        %670 = vperm.xlu0 %669, %v358
        %v671 = vpop.permute.xlu0 %670
        %674 = vset.pattern.permute.xlu0 0
        %675 = vperm.xlu0 %674, %v359
        %v676 = vpop.permute.xlu0 %675
        %679 = vset.pattern.permute.xlu0 0
        %680 = vperm.xlu0 %679, %v360
        %v681 = vpop.permute.xlu0 %680
        %v684 = vperm.slane %v362, 0
        %v685 = vperm.slane %v362, 1
        %v688 = vmul.f32 %v366, %v684
        %v689 = vmul.f32 %v366, %v685
        %v690 = vmul.f32 %v371, %v684
        %v691 = vmul.f32 %v371, %v685
        %v692 = vmul.f32 %v376, %v684
        %v693 = vmul.f32 %v376, %v685
        %v694 = vmul.f32 %v381, %v684
        %v695 = vmul.f32 %v381, %v685
        %v696 = vmul.f32 %v386, %v684
        %v697 = vmul.f32 %v386, %v685
        %v698 = vmul.f32 %v391, %v684
        %v699 = vmul.f32 %v391, %v685
        %v700 = vmul.f32 %v396, %v684
        %v701 = vmul.f32 %v396, %v685
        %v702 = vmul.f32 %v401, %v684
        %v703 = vmul.f32 %v401, %v685
        %v704 = vmul.f32 %v406, %v684
        %v705 = vmul.f32 %v406, %v685
        %v706 = vmul.f32 %v411, %v684
        %v707 = vmul.f32 %v411, %v685
        %v708 = vmul.f32 %v416, %v684
        %v709 = vmul.f32 %v416, %v685
        %v710 = vmul.f32 %v421, %v684
        %v711 = vmul.f32 %v421, %v685
        %v712 = vmul.f32 %v426, %v684
        %v713 = vmul.f32 %v426, %v685
        %v714 = vmul.f32 %v431, %v684
        %v715 = vmul.f32 %v431, %v685
        %v716 = vmul.f32 %v436, %v684
        %v717 = vmul.f32 %v436, %v685
        %v718 = vmul.f32 %v441, %v684
        %v719 = vmul.f32 %v441, %v685
        %v720 = vmul.f32 %v446, %v684
        %v721 = vmul.f32 %v446, %v685
        %v722 = vmul.f32 %v451, %v684
        %v723 = vmul.f32 %v451, %v685
        %v724 = vmul.f32 %v456, %v684
        %v725 = vmul.f32 %v456, %v685
        %v726 = vmul.f32 %v461, %v684
        %v727 = vmul.f32 %v461, %v685
        %v728 = vmul.f32 %v466, %v684
        %v729 = vmul.f32 %v466, %v685
        %v730 = vmul.f32 %v471, %v684
        %v731 = vmul.f32 %v471, %v685
        %v732 = vmul.f32 %v476, %v684
        %v733 = vmul.f32 %v476, %v685
        %v734 = vmul.f32 %v481, %v684
        %v735 = vmul.f32 %v481, %v685
        %v736 = vmul.f32 %v486, %v684
        %v737 = vmul.f32 %v486, %v685
        %v738 = vmul.f32 %v491, %v684
        %v739 = vmul.f32 %v491, %v685
        %v740 = vmul.f32 %v496, %v684
        %v741 = vmul.f32 %v496, %v685
        %v742 = vmul.f32 %v501, %v684
        %v743 = vmul.f32 %v501, %v685
        %v744 = vmul.f32 %v506, %v684
        %v745 = vmul.f32 %v506, %v685
        %v746 = vmul.f32 %v511, %v684
        %v747 = vmul.f32 %v511, %v685
        %v748 = vmul.f32 %v516, %v684
        %v749 = vmul.f32 %v516, %v685
        %v750 = vmul.f32 %v521, %v684
        %v751 = vmul.f32 %v521, %v685
        %v752 = vmul.f32 %v526, %v684
        %v753 = vmul.f32 %v526, %v685
        %v754 = vmul.f32 %v531, %v684
        %v755 = vmul.f32 %v531, %v685
        %v756 = vmul.f32 %v536, %v684
        %v757 = vmul.f32 %v536, %v685
        %v758 = vmul.f32 %v541, %v684
        %v759 = vmul.f32 %v541, %v685
        %v760 = vmul.f32 %v546, %v684
        %v761 = vmul.f32 %v546, %v685
        %v762 = vmul.f32 %v551, %v684
        %v763 = vmul.f32 %v551, %v685
        %v764 = vmul.f32 %v556, %v684
        %v765 = vmul.f32 %v556, %v685
        %v766 = vmul.f32 %v561, %v684
        %v767 = vmul.f32 %v561, %v685
        %v768 = vmul.f32 %v566, %v684
        %v769 = vmul.f32 %v566, %v685
        %v770 = vmul.f32 %v571, %v684
        %v771 = vmul.f32 %v571, %v685
        %v772 = vmul.f32 %v576, %v684
        %v773 = vmul.f32 %v576, %v685
        %v774 = vmul.f32 %v581, %v684
        %v775 = vmul.f32 %v581, %v685
        %v776 = vmul.f32 %v586, %v684
        %v777 = vmul.f32 %v586, %v685
        %v778 = vmul.f32 %v591, %v684
        %v779 = vmul.f32 %v591, %v685
        %v780 = vmul.f32 %v596, %v684
        %v781 = vmul.f32 %v596, %v685
        %v782 = vmul.f32 %v601, %v684
        %v783 = vmul.f32 %v601, %v685
        %v784 = vmul.f32 %v606, %v684
        %v785 = vmul.f32 %v606, %v685
        %v786 = vmul.f32 %v611, %v684
        %v787 = vmul.f32 %v611, %v685
        %v788 = vmul.f32 %v616, %v684
        %v789 = vmul.f32 %v616, %v685
        %v790 = vmul.f32 %v621, %v684
        %v791 = vmul.f32 %v621, %v685
        %v792 = vmul.f32 %v626, %v684
        %v793 = vmul.f32 %v626, %v685
        %v794 = vmul.f32 %v631, %v684
        %v795 = vmul.f32 %v631, %v685
        %v796 = vmul.f32 %v636, %v684
        %v797 = vmul.f32 %v636, %v685
        %v798 = vmul.f32 %v641, %v684
        %v799 = vmul.f32 %v641, %v685
        %v800 = vmul.f32 %v646, %v684
        %v801 = vmul.f32 %v646, %v685
        %v802 = vmul.f32 %v651, %v684
        %v803 = vmul.f32 %v651, %v685
        %v804 = vmul.f32 %v656, %v684
        %v805 = vmul.f32 %v656, %v685
        %v806 = vmul.f32 %v661, %v684
        %v807 = vmul.f32 %v661, %v685
        %v808 = vmul.f32 %v666, %v684
        %v809 = vmul.f32 %v666, %v685
        %v810 = vmul.f32 %v671, %v684
        %v811 = vmul.f32 %v671, %v685
        %v812 = vmul.f32 %v676, %v684
        %v813 = vmul.f32 %v676, %v685
        %v814 = vmul.f32 %v681, %v684
        %v815 = vmul.f32 %v681, %v685
        %v817 = vperm.slane %v361, 0
        %v818 = vperm.slane %v361, 1
        %v821 = vadd.f32 %v817, %v688
        %v822 = vadd.f32 %v818, %v689
        %v823 = vadd.f32 %v817, %v690
        %v824 = vadd.f32 %v818, %v691
        %v825 = vadd.f32 %v817, %v692
        %v826 = vadd.f32 %v818, %v693
        %v827 = vadd.f32 %v817, %v694
        %v828 = vadd.f32 %v818, %v695
        %v829 = vadd.f32 %v817, %v696
        %v830 = vadd.f32 %v818, %v697
        %v831 = vadd.f32 %v817, %v698
        %v832 = vadd.f32 %v818, %v699
        %v833 = vadd.f32 %v817, %v700
        %v834 = vadd.f32 %v818, %v701
        %v835 = vadd.f32 %v817, %v702
        %v836 = vadd.f32 %v818, %v703
        %v837 = vadd.f32 %v817, %v704
        %v838 = vadd.f32 %v818, %v705
        %v839 = vadd.f32 %v817, %v706
        %v840 = vadd.f32 %v818, %v707
        %v841 = vadd.f32 %v817, %v708
        %v842 = vadd.f32 %v818, %v709
        %v843 = vadd.f32 %v817, %v710
        %v844 = vadd.f32 %v818, %v711
        %v845 = vadd.f32 %v817, %v712
        %v846 = vadd.f32 %v818, %v713
        %v847 = vadd.f32 %v817, %v714
        %v848 = vadd.f32 %v818, %v715
        %v849 = vadd.f32 %v817, %v716
        %v850 = vadd.f32 %v818, %v717
        %v851 = vadd.f32 %v817, %v718
        %v852 = vadd.f32 %v818, %v719
        %v853 = vadd.f32 %v817, %v720
        %v854 = vadd.f32 %v818, %v721
        %v855 = vadd.f32 %v817, %v722
        %v856 = vadd.f32 %v818, %v723
        %v857 = vadd.f32 %v817, %v724
        %v858 = vadd.f32 %v818, %v725
        %v859 = vadd.f32 %v817, %v726
        %v860 = vadd.f32 %v818, %v727
        %v861 = vadd.f32 %v817, %v728
        %v862 = vadd.f32 %v818, %v729
        %v863 = vadd.f32 %v817, %v730
        %v864 = vadd.f32 %v818, %v731
        %v865 = vadd.f32 %v817, %v732
        %v866 = vadd.f32 %v818, %v733
        %v867 = vadd.f32 %v817, %v734
        %v868 = vadd.f32 %v818, %v735
        %v869 = vadd.f32 %v817, %v736
        %v870 = vadd.f32 %v818, %v737
        %v871 = vadd.f32 %v817, %v738
        %v872 = vadd.f32 %v818, %v739
        %v873 = vadd.f32 %v817, %v740
        %v874 = vadd.f32 %v818, %v741
        %v875 = vadd.f32 %v817, %v742
        %v876 = vadd.f32 %v818, %v743
        %v877 = vadd.f32 %v817, %v744
        %v878 = vadd.f32 %v818, %v745
        %v879 = vadd.f32 %v817, %v746
        %v880 = vadd.f32 %v818, %v747
        %v881 = vadd.f32 %v817, %v748
        %v882 = vadd.f32 %v818, %v749
        %v883 = vadd.f32 %v817, %v750
        %v884 = vadd.f32 %v818, %v751
        %v885 = vadd.f32 %v817, %v752
        %v886 = vadd.f32 %v818, %v753
        %v887 = vadd.f32 %v817, %v754
        %v888 = vadd.f32 %v818, %v755
        %v889 = vadd.f32 %v817, %v756
        %v890 = vadd.f32 %v818, %v757
        %v891 = vadd.f32 %v817, %v758
        %v892 = vadd.f32 %v818, %v759
        %v893 = vadd.f32 %v817, %v760
        %v894 = vadd.f32 %v818, %v761
        %v895 = vadd.f32 %v817, %v762
        %v896 = vadd.f32 %v818, %v763
        %v897 = vadd.f32 %v817, %v764
        %v898 = vadd.f32 %v818, %v765
        %v899 = vadd.f32 %v817, %v766
        %v900 = vadd.f32 %v818, %v767
        %v901 = vadd.f32 %v817, %v768
        %v902 = vadd.f32 %v818, %v769
        %v903 = vadd.f32 %v817, %v770
        %v904 = vadd.f32 %v818, %v771
        %v905 = vadd.f32 %v817, %v772
        %v906 = vadd.f32 %v818, %v773
        %v907 = vadd.f32 %v817, %v774
        %v908 = vadd.f32 %v818, %v775
        %v909 = vadd.f32 %v817, %v776
        %v910 = vadd.f32 %v818, %v777
        %v911 = vadd.f32 %v817, %v778
        %v912 = vadd.f32 %v818, %v779
        %v913 = vadd.f32 %v817, %v780
        %v914 = vadd.f32 %v818, %v781
        %v915 = vadd.f32 %v817, %v782
        %v916 = vadd.f32 %v818, %v783
        %v917 = vadd.f32 %v817, %v784
        %v918 = vadd.f32 %v818, %v785
        %v919 = vadd.f32 %v817, %v786
        %v920 = vadd.f32 %v818, %v787
        %v921 = vadd.f32 %v817, %v788
        %v922 = vadd.f32 %v818, %v789
        %v923 = vadd.f32 %v817, %v790
        %v924 = vadd.f32 %v818, %v791
        %v925 = vadd.f32 %v817, %v792
        %v926 = vadd.f32 %v818, %v793
        %v927 = vadd.f32 %v817, %v794
        %v928 = vadd.f32 %v818, %v795
        %v929 = vadd.f32 %v817, %v796
        %v930 = vadd.f32 %v818, %v797
        %v931 = vadd.f32 %v817, %v798
        %v932 = vadd.f32 %v818, %v799
        %v933 = vadd.f32 %v817, %v800
        %v934 = vadd.f32 %v818, %v801
        %v935 = vadd.f32 %v817, %v802
        %v936 = vadd.f32 %v818, %v803
        %v937 = vadd.f32 %v817, %v804
        %v938 = vadd.f32 %v818, %v805
        %v939 = vadd.f32 %v817, %v806
        %v940 = vadd.f32 %v818, %v807
        %v941 = vadd.f32 %v817, %v808
        %v942 = vadd.f32 %v818, %v809
        %v943 = vadd.f32 %v817, %v810
        %v944 = vadd.f32 %v818, %v811
        %v945 = vadd.f32 %v817, %v812
        %v946 = vadd.f32 %v818, %v813
        %v947 = vadd.f32 %v817, %v814
        %v948 = vadd.f32 %v818, %v815
        %s949 = scalar_lea.vmem %s1, 1
        %v950 = vld [vmem:[%s949] ss:$8 sm:$0x3]
        %951 = vset.pattern.permute.xlu0 1
        %952 = vperm.xlu0 %951, %v297
        %v953 = vpop.permute.xlu0 %952
        %955 = vset.pattern.permute.xlu0 1
        %956 = vperm.xlu0 %955, %v298
        %v957 = vpop.permute.xlu0 %956
        %959 = vset.pattern.permute.xlu0 1
        %960 = vperm.xlu0 %959, %v299
        %v961 = vpop.permute.xlu0 %960
        %963 = vset.pattern.permute.xlu0 1
        %964 = vperm.xlu0 %963, %v300
        %v965 = vpop.permute.xlu0 %964
        %967 = vset.pattern.permute.xlu0 1
        %968 = vperm.xlu0 %967, %v301
        %v969 = vpop.permute.xlu0 %968
        %971 = vset.pattern.permute.xlu0 1
        %972 = vperm.xlu0 %971, %v302
        %v973 = vpop.permute.xlu0 %972
        %975 = vset.pattern.permute.xlu0 1
        %976 = vperm.xlu0 %975, %v303
        %v977 = vpop.permute.xlu0 %976
        %979 = vset.pattern.permute.xlu0 1
        %980 = vperm.xlu0 %979, %v304
        %v981 = vpop.permute.xlu0 %980
        %983 = vset.pattern.permute.xlu0 1
        %984 = vperm.xlu0 %983, %v305
        %v985 = vpop.permute.xlu0 %984
        %987 = vset.pattern.permute.xlu0 1
        %988 = vperm.xlu0 %987, %v306
        %v989 = vpop.permute.xlu0 %988
        %991 = vset.pattern.permute.xlu0 1
        %992 = vperm.xlu0 %991, %v307
        %v993 = vpop.permute.xlu0 %992
        %995 = vset.pattern.permute.xlu0 1
        %996 = vperm.xlu0 %995, %v308
        %v997 = vpop.permute.xlu0 %996
        %999 = vset.pattern.permute.xlu0 1
        %1000 = vperm.xlu0 %999, %v309
        %v1001 = vpop.permute.xlu0 %1000
        %1003 = vset.pattern.permute.xlu0 1
        %1004 = vperm.xlu0 %1003, %v310
        %v1005 = vpop.permute.xlu0 %1004
        %1007 = vset.pattern.permute.xlu0 1
        %1008 = vperm.xlu0 %1007, %v311
        %v1009 = vpop.permute.xlu0 %1008
        %1011 = vset.pattern.permute.xlu0 1
        %1012 = vperm.xlu0 %1011, %v312
        %v1013 = vpop.permute.xlu0 %1012
        %1015 = vset.pattern.permute.xlu0 1
        %1016 = vperm.xlu0 %1015, %v313
        %v1017 = vpop.permute.xlu0 %1016
        %1019 = vset.pattern.permute.xlu0 1
        %1020 = vperm.xlu0 %1019, %v314
        %v1021 = vpop.permute.xlu0 %1020
        %1023 = vset.pattern.permute.xlu0 1
        %1024 = vperm.xlu0 %1023, %v315
        %v1025 = vpop.permute.xlu0 %1024
        %1027 = vset.pattern.permute.xlu0 1
        %1028 = vperm.xlu0 %1027, %v316
        %v1029 = vpop.permute.xlu0 %1028
        %1031 = vset.pattern.permute.xlu0 1
        %1032 = vperm.xlu0 %1031, %v317
        %v1033 = vpop.permute.xlu0 %1032
        %1035 = vset.pattern.permute.xlu0 1
        %1036 = vperm.xlu0 %1035, %v318
        %v1037 = vpop.permute.xlu0 %1036
        %1039 = vset.pattern.permute.xlu0 1
        %1040 = vperm.xlu0 %1039, %v319
        %v1041 = vpop.permute.xlu0 %1040
        %1043 = vset.pattern.permute.xlu0 1
        %1044 = vperm.xlu0 %1043, %v320
        %v1045 = vpop.permute.xlu0 %1044
        %1047 = vset.pattern.permute.xlu0 1
        %1048 = vperm.xlu0 %1047, %v321
        %v1049 = vpop.permute.xlu0 %1048
        %1051 = vset.pattern.permute.xlu0 1
        %1052 = vperm.xlu0 %1051, %v322
        %v1053 = vpop.permute.xlu0 %1052
        %1055 = vset.pattern.permute.xlu0 1
        %1056 = vperm.xlu0 %1055, %v323
        %v1057 = vpop.permute.xlu0 %1056
        %1059 = vset.pattern.permute.xlu0 1
        %1060 = vperm.xlu0 %1059, %v324
        %v1061 = vpop.permute.xlu0 %1060
        %1063 = vset.pattern.permute.xlu0 1
        %1064 = vperm.xlu0 %1063, %v325
        %v1065 = vpop.permute.xlu0 %1064
        %1067 = vset.pattern.permute.xlu0 1
        %1068 = vperm.xlu0 %1067, %v326
        %v1069 = vpop.permute.xlu0 %1068
        %1071 = vset.pattern.permute.xlu0 1
        %1072 = vperm.xlu0 %1071, %v327
        %v1073 = vpop.permute.xlu0 %1072
        %1075 = vset.pattern.permute.xlu0 1
        %1076 = vperm.xlu0 %1075, %v328
        %v1077 = vpop.permute.xlu0 %1076
        %1079 = vset.pattern.permute.xlu0 1
        %1080 = vperm.xlu0 %1079, %v329
        %v1081 = vpop.permute.xlu0 %1080
        %1083 = vset.pattern.permute.xlu0 1
        %1084 = vperm.xlu0 %1083, %v330
        %v1085 = vpop.permute.xlu0 %1084
        %1087 = vset.pattern.permute.xlu0 1
        %1088 = vperm.xlu0 %1087, %v331
        %v1089 = vpop.permute.xlu0 %1088
        %1091 = vset.pattern.permute.xlu0 1
        %1092 = vperm.xlu0 %1091, %v332
        %v1093 = vpop.permute.xlu0 %1092
        %1095 = vset.pattern.permute.xlu0 1
        %1096 = vperm.xlu0 %1095, %v333
        %v1097 = vpop.permute.xlu0 %1096
        %1099 = vset.pattern.permute.xlu0 1
        %1100 = vperm.xlu0 %1099, %v334
        %v1101 = vpop.permute.xlu0 %1100
        %1103 = vset.pattern.permute.xlu0 1
        %1104 = vperm.xlu0 %1103, %v335
        %v1105 = vpop.permute.xlu0 %1104
        %1107 = vset.pattern.permute.xlu0 1
        %1108 = vperm.xlu0 %1107, %v336
        %v1109 = vpop.permute.xlu0 %1108
        %1111 = vset.pattern.permute.xlu0 1
        %1112 = vperm.xlu0 %1111, %v337
        %v1113 = vpop.permute.xlu0 %1112
        %1115 = vset.pattern.permute.xlu0 1
        %1116 = vperm.xlu0 %1115, %v338
        %v1117 = vpop.permute.xlu0 %1116
        %1119 = vset.pattern.permute.xlu0 1
        %1120 = vperm.xlu0 %1119, %v339
        %v1121 = vpop.permute.xlu0 %1120
        %1123 = vset.pattern.permute.xlu0 1
        %1124 = vperm.xlu0 %1123, %v340
        %v1125 = vpop.permute.xlu0 %1124
        %1127 = vset.pattern.permute.xlu0 1
        %1128 = vperm.xlu0 %1127, %v341
        %v1129 = vpop.permute.xlu0 %1128
        %1131 = vset.pattern.permute.xlu0 1
        %1132 = vperm.xlu0 %1131, %v342
        %v1133 = vpop.permute.xlu0 %1132
        %1135 = vset.pattern.permute.xlu0 1
        %1136 = vperm.xlu0 %1135, %v343
        %v1137 = vpop.permute.xlu0 %1136
        %1139 = vset.pattern.permute.xlu0 1
        %1140 = vperm.xlu0 %1139, %v344
        %v1141 = vpop.permute.xlu0 %1140
        %1143 = vset.pattern.permute.xlu0 1
        %1144 = vperm.xlu0 %1143, %v345
        %v1145 = vpop.permute.xlu0 %1144
        %1147 = vset.pattern.permute.xlu0 1
        %1148 = vperm.xlu0 %1147, %v346
        %v1149 = vpop.permute.xlu0 %1148
        %1151 = vset.pattern.permute.xlu0 1
        %1152 = vperm.xlu0 %1151, %v347
        %v1153 = vpop.permute.xlu0 %1152
        %1155 = vset.pattern.permute.xlu0 1
        %1156 = vperm.xlu0 %1155, %v348
        %v1157 = vpop.permute.xlu0 %1156
        %1159 = vset.pattern.permute.xlu0 1
        %1160 = vperm.xlu0 %1159, %v349
        %v1161 = vpop.permute.xlu0 %1160
        %1163 = vset.pattern.permute.xlu0 1
        %1164 = vperm.xlu0 %1163, %v350
        %v1165 = vpop.permute.xlu0 %1164
        %1167 = vset.pattern.permute.xlu0 1
        %1168 = vperm.xlu0 %1167, %v351
        %v1169 = vpop.permute.xlu0 %1168
        %1171 = vset.pattern.permute.xlu0 1
        %1172 = vperm.xlu0 %1171, %v352
        %v1173 = vpop.permute.xlu0 %1172
        %1175 = vset.pattern.permute.xlu0 1
        %1176 = vperm.xlu0 %1175, %v353
        %v1177 = vpop.permute.xlu0 %1176
        %1179 = vset.pattern.permute.xlu0 1
        %1180 = vperm.xlu0 %1179, %v354
        %v1181 = vpop.permute.xlu0 %1180
        %1183 = vset.pattern.permute.xlu0 1
        %1184 = vperm.xlu0 %1183, %v355
        %v1185 = vpop.permute.xlu0 %1184
        %1187 = vset.pattern.permute.xlu0 1
        %1188 = vperm.xlu0 %1187, %v356
        %v1189 = vpop.permute.xlu0 %1188
        %1191 = vset.pattern.permute.xlu0 1
        %1192 = vperm.xlu0 %1191, %v357
        %v1193 = vpop.permute.xlu0 %1192
        %1195 = vset.pattern.permute.xlu0 1
        %1196 = vperm.xlu0 %1195, %v358
        %v1197 = vpop.permute.xlu0 %1196
        %1199 = vset.pattern.permute.xlu0 1
        %1200 = vperm.xlu0 %1199, %v359
        %v1201 = vpop.permute.xlu0 %1200
        %1203 = vset.pattern.permute.xlu0 1
        %1204 = vperm.xlu0 %1203, %v360
        %v1205 = vpop.permute.xlu0 %1204
        %v1208 = vperm.slane %v950, 0
        %v1209 = vperm.slane %v950, 1
        %v1212 = vmul.f32 %v953, %v1208
        %v1213 = vmul.f32 %v953, %v1209
        %v1214 = vmul.f32 %v957, %v1208
        %v1215 = vmul.f32 %v957, %v1209
        %v1216 = vmul.f32 %v961, %v1208
        %v1217 = vmul.f32 %v961, %v1209
        %v1218 = vmul.f32 %v965, %v1208
        %v1219 = vmul.f32 %v965, %v1209
        %v1220 = vmul.f32 %v969, %v1208
        %v1221 = vmul.f32 %v969, %v1209
        %v1222 = vmul.f32 %v973, %v1208
        %v1223 = vmul.f32 %v973, %v1209
        %v1224 = vmul.f32 %v977, %v1208
        %v1225 = vmul.f32 %v977, %v1209
        %v1226 = vmul.f32 %v981, %v1208
        %v1227 = vmul.f32 %v981, %v1209
        %v1228 = vmul.f32 %v985, %v1208
        %v1229 = vmul.f32 %v985, %v1209
        %v1230 = vmul.f32 %v989, %v1208
        %v1231 = vmul.f32 %v989, %v1209
        %v1232 = vmul.f32 %v993, %v1208
        %v1233 = vmul.f32 %v993, %v1209
        %v1234 = vmul.f32 %v997, %v1208
        %v1235 = vmul.f32 %v997, %v1209
        %v1236 = vmul.f32 %v1001, %v1208
        %v1237 = vmul.f32 %v1001, %v1209
        %v1238 = vmul.f32 %v1005, %v1208
        %v1239 = vmul.f32 %v1005, %v1209
        %v1240 = vmul.f32 %v1009, %v1208
        %v1241 = vmul.f32 %v1009, %v1209
        %v1242 = vmul.f32 %v1013, %v1208
        %v1243 = vmul.f32 %v1013, %v1209
        %v1244 = vmul.f32 %v1017, %v1208
        %v1245 = vmul.f32 %v1017, %v1209
        %v1246 = vmul.f32 %v1021, %v1208
        %v1247 = vmul.f32 %v1021, %v1209
        %v1248 = vmul.f32 %v1025, %v1208
        %v1249 = vmul.f32 %v1025, %v1209
        %v1250 = vmul.f32 %v1029, %v1208
        %v1251 = vmul.f32 %v1029, %v1209
        %v1252 = vmul.f32 %v1033, %v1208
        %v1253 = vmul.f32 %v1033, %v1209
        %v1254 = vmul.f32 %v1037, %v1208
        %v1255 = vmul.f32 %v1037, %v1209
        %v1256 = vmul.f32 %v1041, %v1208
        %v1257 = vmul.f32 %v1041, %v1209
        %v1258 = vmul.f32 %v1045, %v1208
        %v1259 = vmul.f32 %v1045, %v1209
        %v1260 = vmul.f32 %v1049, %v1208
        %v1261 = vmul.f32 %v1049, %v1209
        %v1262 = vmul.f32 %v1053, %v1208
        %v1263 = vmul.f32 %v1053, %v1209
        %v1264 = vmul.f32 %v1057, %v1208
        %v1265 = vmul.f32 %v1057, %v1209
        %v1266 = vmul.f32 %v1061, %v1208
        %v1267 = vmul.f32 %v1061, %v1209
        %v1268 = vmul.f32 %v1065, %v1208
        %v1269 = vmul.f32 %v1065, %v1209
        %v1270 = vmul.f32 %v1069, %v1208
        %v1271 = vmul.f32 %v1069, %v1209
        %v1272 = vmul.f32 %v1073, %v1208
        %v1273 = vmul.f32 %v1073, %v1209
        %v1274 = vmul.f32 %v1077, %v1208
        %v1275 = vmul.f32 %v1077, %v1209
        %v1276 = vmul.f32 %v1081, %v1208
        %v1277 = vmul.f32 %v1081, %v1209
        %v1278 = vmul.f32 %v1085, %v1208
        %v1279 = vmul.f32 %v1085, %v1209
        %v1280 = vmul.f32 %v1089, %v1208
        %v1281 = vmul.f32 %v1089, %v1209
        %v1282 = vmul.f32 %v1093, %v1208
        %v1283 = vmul.f32 %v1093, %v1209
        %v1284 = vmul.f32 %v1097, %v1208
        %v1285 = vmul.f32 %v1097, %v1209
        %v1286 = vmul.f32 %v1101, %v1208
        %v1287 = vmul.f32 %v1101, %v1209
        %v1288 = vmul.f32 %v1105, %v1208
        %v1289 = vmul.f32 %v1105, %v1209
        %v1290 = vmul.f32 %v1109, %v1208
        %v1291 = vmul.f32 %v1109, %v1209
        %v1292 = vmul.f32 %v1113, %v1208
        %v1293 = vmul.f32 %v1113, %v1209
        %v1294 = vmul.f32 %v1117, %v1208
        %v1295 = vmul.f32 %v1117, %v1209
        %v1296 = vmul.f32 %v1121, %v1208
        %v1297 = vmul.f32 %v1121, %v1209
        %v1298 = vmul.f32 %v1125, %v1208
        %v1299 = vmul.f32 %v1125, %v1209
        %v1300 = vmul.f32 %v1129, %v1208
        %v1301 = vmul.f32 %v1129, %v1209
        %v1302 = vmul.f32 %v1133, %v1208
        %v1303 = vmul.f32 %v1133, %v1209
        %v1304 = vmul.f32 %v1137, %v1208
        %v1305 = vmul.f32 %v1137, %v1209
        %v1306 = vmul.f32 %v1141, %v1208
        %v1307 = vmul.f32 %v1141, %v1209
        %v1308 = vmul.f32 %v1145, %v1208
        %v1309 = vmul.f32 %v1145, %v1209
        %v1310 = vmul.f32 %v1149, %v1208
        %v1311 = vmul.f32 %v1149, %v1209
        %v1312 = vmul.f32 %v1153, %v1208
        %v1313 = vmul.f32 %v1153, %v1209
        %v1314 = vmul.f32 %v1157, %v1208
        %v1315 = vmul.f32 %v1157, %v1209
        %v1316 = vmul.f32 %v1161, %v1208
        %v1317 = vmul.f32 %v1161, %v1209
        %v1318 = vmul.f32 %v1165, %v1208
        %v1319 = vmul.f32 %v1165, %v1209
        %v1320 = vmul.f32 %v1169, %v1208
        %v1321 = vmul.f32 %v1169, %v1209
        %v1322 = vmul.f32 %v1173, %v1208
        %v1323 = vmul.f32 %v1173, %v1209
        %v1324 = vmul.f32 %v1177, %v1208
        %v1325 = vmul.f32 %v1177, %v1209
        %v1326 = vmul.f32 %v1181, %v1208
        %v1327 = vmul.f32 %v1181, %v1209
        %v1328 = vmul.f32 %v1185, %v1208
        %v1329 = vmul.f32 %v1185, %v1209
        %v1330 = vmul.f32 %v1189, %v1208
        %v1331 = vmul.f32 %v1189, %v1209
        %v1332 = vmul.f32 %v1193, %v1208
        %v1333 = vmul.f32 %v1193, %v1209
        %v1334 = vmul.f32 %v1197, %v1208
        %v1335 = vmul.f32 %v1197, %v1209
        %v1336 = vmul.f32 %v1201, %v1208
        %v1337 = vmul.f32 %v1201, %v1209
        %v1338 = vmul.f32 %v1205, %v1208
        %v1339 = vmul.f32 %v1205, %v1209
        %v1340 = vadd.f32 %v821, %v1212
        %v1341 = vadd.f32 %v822, %v1213
        %v1342 = vadd.f32 %v823, %v1214
        %v1343 = vadd.f32 %v824, %v1215
        %v1344 = vadd.f32 %v825, %v1216
        %v1345 = vadd.f32 %v826, %v1217
        %v1346 = vadd.f32 %v827, %v1218
        %v1347 = vadd.f32 %v828, %v1219
        %v1348 = vadd.f32 %v829, %v1220
        %v1349 = vadd.f32 %v830, %v1221
        %v1350 = vadd.f32 %v831, %v1222
        %v1351 = vadd.f32 %v832, %v1223
        %v1352 = vadd.f32 %v833, %v1224
        %v1353 = vadd.f32 %v834, %v1225
        %v1354 = vadd.f32 %v835, %v1226
        %v1355 = vadd.f32 %v836, %v1227
        %v1356 = vadd.f32 %v837, %v1228
        %v1357 = vadd.f32 %v838, %v1229
        %v1358 = vadd.f32 %v839, %v1230
        %v1359 = vadd.f32 %v840, %v1231
        %v1360 = vadd.f32 %v841, %v1232
        %v1361 = vadd.f32 %v842, %v1233
        %v1362 = vadd.f32 %v843, %v1234
        %v1363 = vadd.f32 %v844, %v1235
        %v1364 = vadd.f32 %v845, %v1236
        %v1365 = vadd.f32 %v846, %v1237
        %v1366 = vadd.f32 %v847, %v1238
        %v1367 = vadd.f32 %v848, %v1239
        %v1368 = vadd.f32 %v849, %v1240
        %v1369 = vadd.f32 %v850, %v1241
        %v1370 = vadd.f32 %v851, %v1242
        %v1371 = vadd.f32 %v852, %v1243
        %v1372 = vadd.f32 %v853, %v1244
        %v1373 = vadd.f32 %v854, %v1245
        %v1374 = vadd.f32 %v855, %v1246
        %v1375 = vadd.f32 %v856, %v1247
        %v1376 = vadd.f32 %v857, %v1248
        %v1377 = vadd.f32 %v858, %v1249
        %v1378 = vadd.f32 %v859, %v1250
        %v1379 = vadd.f32 %v860, %v1251
        %v1380 = vadd.f32 %v861, %v1252
        %v1381 = vadd.f32 %v862, %v1253
        %v1382 = vadd.f32 %v863, %v1254
        %v1383 = vadd.f32 %v864, %v1255
        %v1384 = vadd.f32 %v865, %v1256
        %v1385 = vadd.f32 %v866, %v1257
        %v1386 = vadd.f32 %v867, %v1258
        %v1387 = vadd.f32 %v868, %v1259
        %v1388 = vadd.f32 %v869, %v1260
        %v1389 = vadd.f32 %v870, %v1261
        %v1390 = vadd.f32 %v871, %v1262
        %v1391 = vadd.f32 %v872, %v1263
        %v1392 = vadd.f32 %v873, %v1264
        %v1393 = vadd.f32 %v874, %v1265
        %v1394 = vadd.f32 %v875, %v1266
        %v1395 = vadd.f32 %v876, %v1267
        %v1396 = vadd.f32 %v877, %v1268
        %v1397 = vadd.f32 %v878, %v1269
        %v1398 = vadd.f32 %v879, %v1270
        %v1399 = vadd.f32 %v880, %v1271
        %v1400 = vadd.f32 %v881, %v1272
        %v1401 = vadd.f32 %v882, %v1273
        %v1402 = vadd.f32 %v883, %v1274
        %v1403 = vadd.f32 %v884, %v1275
        %v1404 = vadd.f32 %v885, %v1276
        %v1405 = vadd.f32 %v886, %v1277
        %v1406 = vadd.f32 %v887, %v1278
        %v1407 = vadd.f32 %v888, %v1279
        %v1408 = vadd.f32 %v889, %v1280
        %v1409 = vadd.f32 %v890, %v1281
        %v1410 = vadd.f32 %v891, %v1282
        %v1411 = vadd.f32 %v892, %v1283
        %v1412 = vadd.f32 %v893, %v1284
        %v1413 = vadd.f32 %v894, %v1285
        %v1414 = vadd.f32 %v895, %v1286
        %v1415 = vadd.f32 %v896, %v1287
        %v1416 = vadd.f32 %v897, %v1288
        %v1417 = vadd.f32 %v898, %v1289
        %v1418 = vadd.f32 %v899, %v1290
        %v1419 = vadd.f32 %v900, %v1291
        %v1420 = vadd.f32 %v901, %v1292
        %v1421 = vadd.f32 %v902, %v1293
        %v1422 = vadd.f32 %v903, %v1294
        %v1423 = vadd.f32 %v904, %v1295
        %v1424 = vadd.f32 %v905, %v1296
        %v1425 = vadd.f32 %v906, %v1297
        %v1426 = vadd.f32 %v907, %v1298
        %v1427 = vadd.f32 %v908, %v1299
        %v1428 = vadd.f32 %v909, %v1300
        %v1429 = vadd.f32 %v910, %v1301
        %v1430 = vadd.f32 %v911, %v1302
        %v1431 = vadd.f32 %v912, %v1303
        %v1432 = vadd.f32 %v913, %v1304
        %v1433 = vadd.f32 %v914, %v1305
        %v1434 = vadd.f32 %v915, %v1306
        %v1435 = vadd.f32 %v916, %v1307
        %v1436 = vadd.f32 %v917, %v1308
        %v1437 = vadd.f32 %v918, %v1309
        %v1438 = vadd.f32 %v919, %v1310
        %v1439 = vadd.f32 %v920, %v1311
        %v1440 = vadd.f32 %v921, %v1312
        %v1441 = vadd.f32 %v922, %v1313
        %v1442 = vadd.f32 %v923, %v1314
        %v1443 = vadd.f32 %v924, %v1315
        %v1444 = vadd.f32 %v925, %v1316
        %v1445 = vadd.f32 %v926, %v1317
        %v1446 = vadd.f32 %v927, %v1318
        %v1447 = vadd.f32 %v928, %v1319
        %v1448 = vadd.f32 %v929, %v1320
        %v1449 = vadd.f32 %v930, %v1321
        %v1450 = vadd.f32 %v931, %v1322
        %v1451 = vadd.f32 %v932, %v1323
        %v1452 = vadd.f32 %v933, %v1324
        %v1453 = vadd.f32 %v934, %v1325
        %v1454 = vadd.f32 %v935, %v1326
        %v1455 = vadd.f32 %v936, %v1327
        %v1456 = vadd.f32 %v937, %v1328
        %v1457 = vadd.f32 %v938, %v1329
        %v1458 = vadd.f32 %v939, %v1330
        %v1459 = vadd.f32 %v940, %v1331
        %v1460 = vadd.f32 %v941, %v1332
        %v1461 = vadd.f32 %v942, %v1333
        %v1462 = vadd.f32 %v943, %v1334
        %v1463 = vadd.f32 %v944, %v1335
        %v1464 = vadd.f32 %v945, %v1336
        %v1465 = vadd.f32 %v946, %v1337
        %v1466 = vadd.f32 %v947, %v1338
        %v1467 = vadd.f32 %v948, %v1339
        %s1468 = scalar_lea.vmem %s1, 2
        %v1469 = vld [vmem:[%s1468] ss:$8 sm:$0x3]
        %1470 = vset.pattern.permute.xlu0 2
        %1471 = vperm.xlu0 %1470, %v297
        %v1472 = vpop.permute.xlu0 %1471
        %1474 = vset.pattern.permute.xlu0 2
        %1475 = vperm.xlu0 %1474, %v298
        %v1476 = vpop.permute.xlu0 %1475
        %1478 = vset.pattern.permute.xlu0 2
        %1479 = vperm.xlu0 %1478, %v299
        %v1480 = vpop.permute.xlu0 %1479
        %1482 = vset.pattern.permute.xlu0 2
        %1483 = vperm.xlu0 %1482, %v300
        %v1484 = vpop.permute.xlu0 %1483
        %1486 = vset.pattern.permute.xlu0 2
        %1487 = vperm.xlu0 %1486, %v301
        %v1488 = vpop.permute.xlu0 %1487
        %1490 = vset.pattern.permute.xlu0 2
        %1491 = vperm.xlu0 %1490, %v302
        %v1492 = vpop.permute.xlu0 %1491
        %1494 = vset.pattern.permute.xlu0 2
        %1495 = vperm.xlu0 %1494, %v303
        %v1496 = vpop.permute.xlu0 %1495
        %1498 = vset.pattern.permute.xlu0 2
        %1499 = vperm.xlu0 %1498, %v304
        %v1500 = vpop.permute.xlu0 %1499
        %1502 = vset.pattern.permute.xlu0 2
        %1503 = vperm.xlu0 %1502, %v305
        %v1504 = vpop.permute.xlu0 %1503
        %1506 = vset.pattern.permute.xlu0 2
        %1507 = vperm.xlu0 %1506, %v306
        %v1508 = vpop.permute.xlu0 %1507
        %1510 = vset.pattern.permute.xlu0 2
        %1511 = vperm.xlu0 %1510, %v307
        %v1512 = vpop.permute.xlu0 %1511
        %1514 = vset.pattern.permute.xlu0 2
        %1515 = vperm.xlu0 %1514, %v308
        %v1516 = vpop.permute.xlu0 %1515
        %1518 = vset.pattern.permute.xlu0 2
        %1519 = vperm.xlu0 %1518, %v309
        %v1520 = vpop.permute.xlu0 %1519
        %1522 = vset.pattern.permute.xlu0 2
        %1523 = vperm.xlu0 %1522, %v310
        %v1524 = vpop.permute.xlu0 %1523
        %1526 = vset.pattern.permute.xlu0 2
        %1527 = vperm.xlu0 %1526, %v311
        %v1528 = vpop.permute.xlu0 %1527
        %1530 = vset.pattern.permute.xlu0 2
        %1531 = vperm.xlu0 %1530, %v312
        %v1532 = vpop.permute.xlu0 %1531
        %1534 = vset.pattern.permute.xlu0 2
        %1535 = vperm.xlu0 %1534, %v313
        %v1536 = vpop.permute.xlu0 %1535
        %1538 = vset.pattern.permute.xlu0 2
        %1539 = vperm.xlu0 %1538, %v314
        %v1540 = vpop.permute.xlu0 %1539
        %1542 = vset.pattern.permute.xlu0 2
        %1543 = vperm.xlu0 %1542, %v315
        %v1544 = vpop.permute.xlu0 %1543
        %1546 = vset.pattern.permute.xlu0 2
        %1547 = vperm.xlu0 %1546, %v316
        %v1548 = vpop.permute.xlu0 %1547
        %1550 = vset.pattern.permute.xlu0 2
        %1551 = vperm.xlu0 %1550, %v317
        %v1552 = vpop.permute.xlu0 %1551
        %1554 = vset.pattern.permute.xlu0 2
        %1555 = vperm.xlu0 %1554, %v318
        %v1556 = vpop.permute.xlu0 %1555
        %1558 = vset.pattern.permute.xlu0 2
        %1559 = vperm.xlu0 %1558, %v319
        %v1560 = vpop.permute.xlu0 %1559
        %1562 = vset.pattern.permute.xlu0 2
        %1563 = vperm.xlu0 %1562, %v320
        %v1564 = vpop.permute.xlu0 %1563
        %1566 = vset.pattern.permute.xlu0 2
        %1567 = vperm.xlu0 %1566, %v321
        %v1568 = vpop.permute.xlu0 %1567
        %1570 = vset.pattern.permute.xlu0 2
        %1571 = vperm.xlu0 %1570, %v322
        %v1572 = vpop.permute.xlu0 %1571
        %1574 = vset.pattern.permute.xlu0 2
        %1575 = vperm.xlu0 %1574, %v323
        %v1576 = vpop.permute.xlu0 %1575
        %1578 = vset.pattern.permute.xlu0 2
        %1579 = vperm.xlu0 %1578, %v324
        %v1580 = vpop.permute.xlu0 %1579
        %1582 = vset.pattern.permute.xlu0 2
        %1583 = vperm.xlu0 %1582, %v325
        %v1584 = vpop.permute.xlu0 %1583
        %1586 = vset.pattern.permute.xlu0 2
        %1587 = vperm.xlu0 %1586, %v326
        %v1588 = vpop.permute.xlu0 %1587
        %1590 = vset.pattern.permute.xlu0 2
        %1591 = vperm.xlu0 %1590, %v327
        %v1592 = vpop.permute.xlu0 %1591
        %1594 = vset.pattern.permute.xlu0 2
        %1595 = vperm.xlu0 %1594, %v328
        %v1596 = vpop.permute.xlu0 %1595
        %1598 = vset.pattern.permute.xlu0 2
        %1599 = vperm.xlu0 %1598, %v329
        %v1600 = vpop.permute.xlu0 %1599
        %1602 = vset.pattern.permute.xlu0 2
        %1603 = vperm.xlu0 %1602, %v330
        %v1604 = vpop.permute.xlu0 %1603
        %1606 = vset.pattern.permute.xlu0 2
        %1607 = vperm.xlu0 %1606, %v331
        %v1608 = vpop.permute.xlu0 %1607
        %1610 = vset.pattern.permute.xlu0 2
        %1611 = vperm.xlu0 %1610, %v332
        %v1612 = vpop.permute.xlu0 %1611
        %1614 = vset.pattern.permute.xlu0 2
        %1615 = vperm.xlu0 %1614, %v333
        %v1616 = vpop.permute.xlu0 %1615
        %1618 = vset.pattern.permute.xlu0 2
        %1619 = vperm.xlu0 %1618, %v334
        %v1620 = vpop.permute.xlu0 %1619
        %1622 = vset.pattern.permute.xlu0 2
        %1623 = vperm.xlu0 %1622, %v335
        %v1624 = vpop.permute.xlu0 %1623
        %1626 = vset.pattern.permute.xlu0 2
        %1627 = vperm.xlu0 %1626, %v336
        %v1628 = vpop.permute.xlu0 %1627
        %1630 = vset.pattern.permute.xlu0 2
        %1631 = vperm.xlu0 %1630, %v337
        %v1632 = vpop.permute.xlu0 %1631
        %1634 = vset.pattern.permute.xlu0 2
        %1635 = vperm.xlu0 %1634, %v338
        %v1636 = vpop.permute.xlu0 %1635
        %1638 = vset.pattern.permute.xlu0 2
        %1639 = vperm.xlu0 %1638, %v339
        %v1640 = vpop.permute.xlu0 %1639
        %1642 = vset.pattern.permute.xlu0 2
        %1643 = vperm.xlu0 %1642, %v340
        %v1644 = vpop.permute.xlu0 %1643
        %1646 = vset.pattern.permute.xlu0 2
        %1647 = vperm.xlu0 %1646, %v341
        %v1648 = vpop.permute.xlu0 %1647
        %1650 = vset.pattern.permute.xlu0 2
        %1651 = vperm.xlu0 %1650, %v342
        %v1652 = vpop.permute.xlu0 %1651
        %1654 = vset.pattern.permute.xlu0 2
        %1655 = vperm.xlu0 %1654, %v343
        %v1656 = vpop.permute.xlu0 %1655
        %1658 = vset.pattern.permute.xlu0 2
        %1659 = vperm.xlu0 %1658, %v344
        %v1660 = vpop.permute.xlu0 %1659
        %1662 = vset.pattern.permute.xlu0 2
        %1663 = vperm.xlu0 %1662, %v345
        %v1664 = vpop.permute.xlu0 %1663
        %1666 = vset.pattern.permute.xlu0 2
        %1667 = vperm.xlu0 %1666, %v346
        %v1668 = vpop.permute.xlu0 %1667
        %1670 = vset.pattern.permute.xlu0 2
        %1671 = vperm.xlu0 %1670, %v347
        %v1672 = vpop.permute.xlu0 %1671
        %1674 = vset.pattern.permute.xlu0 2
        %1675 = vperm.xlu0 %1674, %v348
        %v1676 = vpop.permute.xlu0 %1675
        %1678 = vset.pattern.permute.xlu0 2
        %1679 = vperm.xlu0 %1678, %v349
        %v1680 = vpop.permute.xlu0 %1679
        %1682 = vset.pattern.permute.xlu0 2
        %1683 = vperm.xlu0 %1682, %v350
        %v1684 = vpop.permute.xlu0 %1683
        %1686 = vset.pattern.permute.xlu0 2
        %1687 = vperm.xlu0 %1686, %v351
        %v1688 = vpop.permute.xlu0 %1687
        %1690 = vset.pattern.permute.xlu0 2
        %1691 = vperm.xlu0 %1690, %v352
        %v1692 = vpop.permute.xlu0 %1691
        %1694 = vset.pattern.permute.xlu0 2
        %1695 = vperm.xlu0 %1694, %v353
        %v1696 = vpop.permute.xlu0 %1695
        %1698 = vset.pattern.permute.xlu0 2
        %1699 = vperm.xlu0 %1698, %v354
        %v1700 = vpop.permute.xlu0 %1699
        %1702 = vset.pattern.permute.xlu0 2
        %1703 = vperm.xlu0 %1702, %v355
        %v1704 = vpop.permute.xlu0 %1703
        %1706 = vset.pattern.permute.xlu0 2
        %1707 = vperm.xlu0 %1706, %v356
        %v1708 = vpop.permute.xlu0 %1707
        %1710 = vset.pattern.permute.xlu0 2
        %1711 = vperm.xlu0 %1710, %v357
        %v1712 = vpop.permute.xlu0 %1711
        %1714 = vset.pattern.permute.xlu0 2
        %1715 = vperm.xlu0 %1714, %v358
        %v1716 = vpop.permute.xlu0 %1715
        %1718 = vset.pattern.permute.xlu0 2
        %1719 = vperm.xlu0 %1718, %v359
        %v1720 = vpop.permute.xlu0 %1719
        %1722 = vset.pattern.permute.xlu0 2
        %1723 = vperm.xlu0 %1722, %v360
        %v1724 = vpop.permute.xlu0 %1723
        %v1727 = vperm.slane %v1469, 0
        %v1728 = vperm.slane %v1469, 1
        %v1731 = vmul.f32 %v1472, %v1727
        %v1732 = vmul.f32 %v1472, %v1728
        %v1733 = vmul.f32 %v1476, %v1727
        %v1734 = vmul.f32 %v1476, %v1728
        %v1735 = vmul.f32 %v1480, %v1727
        %v1736 = vmul.f32 %v1480, %v1728
        %v1737 = vmul.f32 %v1484, %v1727
        %v1738 = vmul.f32 %v1484, %v1728
        %v1739 = vmul.f32 %v1488, %v1727
        %v1740 = vmul.f32 %v1488, %v1728
        %v1741 = vmul.f32 %v1492, %v1727
        %v1742 = vmul.f32 %v1492, %v1728
        %v1743 = vmul.f32 %v1496, %v1727
        %v1744 = vmul.f32 %v1496, %v1728
        %v1745 = vmul.f32 %v1500, %v1727
        %v1746 = vmul.f32 %v1500, %v1728
        %v1747 = vmul.f32 %v1504, %v1727
        %v1748 = vmul.f32 %v1504, %v1728
        %v1749 = vmul.f32 %v1508, %v1727
        %v1750 = vmul.f32 %v1508, %v1728
        %v1751 = vmul.f32 %v1512, %v1727
        %v1752 = vmul.f32 %v1512, %v1728
        %v1753 = vmul.f32 %v1516, %v1727
        %v1754 = vmul.f32 %v1516, %v1728
        %v1755 = vmul.f32 %v1520, %v1727
        %v1756 = vmul.f32 %v1520, %v1728
        %v1757 = vmul.f32 %v1524, %v1727
        %v1758 = vmul.f32 %v1524, %v1728
        %v1759 = vmul.f32 %v1528, %v1727
        %v1760 = vmul.f32 %v1528, %v1728
        %v1761 = vmul.f32 %v1532, %v1727
        %v1762 = vmul.f32 %v1532, %v1728
        %v1763 = vmul.f32 %v1536, %v1727
        %v1764 = vmul.f32 %v1536, %v1728
        %v1765 = vmul.f32 %v1540, %v1727
        %v1766 = vmul.f32 %v1540, %v1728
        %v1767 = vmul.f32 %v1544, %v1727
        %v1768 = vmul.f32 %v1544, %v1728
        %v1769 = vmul.f32 %v1548, %v1727
        %v1770 = vmul.f32 %v1548, %v1728
        %v1771 = vmul.f32 %v1552, %v1727
        %v1772 = vmul.f32 %v1552, %v1728
        %v1773 = vmul.f32 %v1556, %v1727
        %v1774 = vmul.f32 %v1556, %v1728
        %v1775 = vmul.f32 %v1560, %v1727
        %v1776 = vmul.f32 %v1560, %v1728
        %v1777 = vmul.f32 %v1564, %v1727
        %v1778 = vmul.f32 %v1564, %v1728
        %v1779 = vmul.f32 %v1568, %v1727
        %v1780 = vmul.f32 %v1568, %v1728
        %v1781 = vmul.f32 %v1572, %v1727
        %v1782 = vmul.f32 %v1572, %v1728
        %v1783 = vmul.f32 %v1576, %v1727
        %v1784 = vmul.f32 %v1576, %v1728
        %v1785 = vmul.f32 %v1580, %v1727
        %v1786 = vmul.f32 %v1580, %v1728
        %v1787 = vmul.f32 %v1584, %v1727
        %v1788 = vmul.f32 %v1584, %v1728
        %v1789 = vmul.f32 %v1588, %v1727
        %v1790 = vmul.f32 %v1588, %v1728
        %v1791 = vmul.f32 %v1592, %v1727
        %v1792 = vmul.f32 %v1592, %v1728
        %v1793 = vmul.f32 %v1596, %v1727
        %v1794 = vmul.f32 %v1596, %v1728
        %v1795 = vmul.f32 %v1600, %v1727
        %v1796 = vmul.f32 %v1600, %v1728
        %v1797 = vmul.f32 %v1604, %v1727
        %v1798 = vmul.f32 %v1604, %v1728
        %v1799 = vmul.f32 %v1608, %v1727
        %v1800 = vmul.f32 %v1608, %v1728
        %v1801 = vmul.f32 %v1612, %v1727
        %v1802 = vmul.f32 %v1612, %v1728
        %v1803 = vmul.f32 %v1616, %v1727
        %v1804 = vmul.f32 %v1616, %v1728
        %v1805 = vmul.f32 %v1620, %v1727
        %v1806 = vmul.f32 %v1620, %v1728
        %v1807 = vmul.f32 %v1624, %v1727
        %v1808 = vmul.f32 %v1624, %v1728
        %v1809 = vmul.f32 %v1628, %v1727
        %v1810 = vmul.f32 %v1628, %v1728
        %v1811 = vmul.f32 %v1632, %v1727
        %v1812 = vmul.f32 %v1632, %v1728
        %v1813 = vmul.f32 %v1636, %v1727
        %v1814 = vmul.f32 %v1636, %v1728
        %v1815 = vmul.f32 %v1640, %v1727
        %v1816 = vmul.f32 %v1640, %v1728
        %v1817 = vmul.f32 %v1644, %v1727
        %v1818 = vmul.f32 %v1644, %v1728
        %v1819 = vmul.f32 %v1648, %v1727
        %v1820 = vmul.f32 %v1648, %v1728
        %v1821 = vmul.f32 %v1652, %v1727
        %v1822 = vmul.f32 %v1652, %v1728
        %v1823 = vmul.f32 %v1656, %v1727
        %v1824 = vmul.f32 %v1656, %v1728
        %v1825 = vmul.f32 %v1660, %v1727
        %v1826 = vmul.f32 %v1660, %v1728
        %v1827 = vmul.f32 %v1664, %v1727
        %v1828 = vmul.f32 %v1664, %v1728
        %v1829 = vmul.f32 %v1668, %v1727
        %v1830 = vmul.f32 %v1668, %v1728
        %v1831 = vmul.f32 %v1672, %v1727
        %v1832 = vmul.f32 %v1672, %v1728
        %v1833 = vmul.f32 %v1676, %v1727
        %v1834 = vmul.f32 %v1676, %v1728
        %v1835 = vmul.f32 %v1680, %v1727
        %v1836 = vmul.f32 %v1680, %v1728
        %v1837 = vmul.f32 %v1684, %v1727
        %v1838 = vmul.f32 %v1684, %v1728
        %v1839 = vmul.f32 %v1688, %v1727
        %v1840 = vmul.f32 %v1688, %v1728
        %v1841 = vmul.f32 %v1692, %v1727
        %v1842 = vmul.f32 %v1692, %v1728
        %v1843 = vmul.f32 %v1696, %v1727
        %v1844 = vmul.f32 %v1696, %v1728
        %v1845 = vmul.f32 %v1700, %v1727
        %v1846 = vmul.f32 %v1700, %v1728
        %v1847 = vmul.f32 %v1704, %v1727
        %v1848 = vmul.f32 %v1704, %v1728
        %v1849 = vmul.f32 %v1708, %v1727
        %v1850 = vmul.f32 %v1708, %v1728
        %v1851 = vmul.f32 %v1712, %v1727
        %v1852 = vmul.f32 %v1712, %v1728
        %v1853 = vmul.f32 %v1716, %v1727
        %v1854 = vmul.f32 %v1716, %v1728
        %v1855 = vmul.f32 %v1720, %v1727
        %v1856 = vmul.f32 %v1720, %v1728
        %v1857 = vmul.f32 %v1724, %v1727
        %v1858 = vmul.f32 %v1724, %v1728
        %v1859 = vadd.f32 %v1340, %v1731
        %v1860 = vadd.f32 %v1341, %v1732
        %v1861 = vadd.f32 %v1342, %v1733
        %v1862 = vadd.f32 %v1343, %v1734
        %v1863 = vadd.f32 %v1344, %v1735
        %v1864 = vadd.f32 %v1345, %v1736
        %v1865 = vadd.f32 %v1346, %v1737
        %v1866 = vadd.f32 %v1347, %v1738
        %v1867 = vadd.f32 %v1348, %v1739
        %v1868 = vadd.f32 %v1349, %v1740
        %v1869 = vadd.f32 %v1350, %v1741
        %v1870 = vadd.f32 %v1351, %v1742
        %v1871 = vadd.f32 %v1352, %v1743
        %v1872 = vadd.f32 %v1353, %v1744
        %v1873 = vadd.f32 %v1354, %v1745
        %v1874 = vadd.f32 %v1355, %v1746
        %v1875 = vadd.f32 %v1356, %v1747
        %v1876 = vadd.f32 %v1357, %v1748
        %v1877 = vadd.f32 %v1358, %v1749
        %v1878 = vadd.f32 %v1359, %v1750
        %v1879 = vadd.f32 %v1360, %v1751
        %v1880 = vadd.f32 %v1361, %v1752
        %v1881 = vadd.f32 %v1362, %v1753
        %v1882 = vadd.f32 %v1363, %v1754
        %v1883 = vadd.f32 %v1364, %v1755
        %v1884 = vadd.f32 %v1365, %v1756
        %v1885 = vadd.f32 %v1366, %v1757
        %v1886 = vadd.f32 %v1367, %v1758
        %v1887 = vadd.f32 %v1368, %v1759
        %v1888 = vadd.f32 %v1369, %v1760
        %v1889 = vadd.f32 %v1370, %v1761
        %v1890 = vadd.f32 %v1371, %v1762
        %v1891 = vadd.f32 %v1372, %v1763
        %v1892 = vadd.f32 %v1373, %v1764
        %v1893 = vadd.f32 %v1374, %v1765
        %v1894 = vadd.f32 %v1375, %v1766
        %v1895 = vadd.f32 %v1376, %v1767
        %v1896 = vadd.f32 %v1377, %v1768
        %v1897 = vadd.f32 %v1378, %v1769
        %v1898 = vadd.f32 %v1379, %v1770
        %v1899 = vadd.f32 %v1380, %v1771
        %v1900 = vadd.f32 %v1381, %v1772
        %v1901 = vadd.f32 %v1382, %v1773
        %v1902 = vadd.f32 %v1383, %v1774
        %v1903 = vadd.f32 %v1384, %v1775
        %v1904 = vadd.f32 %v1385, %v1776
        %v1905 = vadd.f32 %v1386, %v1777
        %v1906 = vadd.f32 %v1387, %v1778
        %v1907 = vadd.f32 %v1388, %v1779
        %v1908 = vadd.f32 %v1389, %v1780
        %v1909 = vadd.f32 %v1390, %v1781
        %v1910 = vadd.f32 %v1391, %v1782
        %v1911 = vadd.f32 %v1392, %v1783
        %v1912 = vadd.f32 %v1393, %v1784
        %v1913 = vadd.f32 %v1394, %v1785
        %v1914 = vadd.f32 %v1395, %v1786
        %v1915 = vadd.f32 %v1396, %v1787
        %v1916 = vadd.f32 %v1397, %v1788
        %v1917 = vadd.f32 %v1398, %v1789
        %v1918 = vadd.f32 %v1399, %v1790
        %v1919 = vadd.f32 %v1400, %v1791
        %v1920 = vadd.f32 %v1401, %v1792
        %v1921 = vadd.f32 %v1402, %v1793
        %v1922 = vadd.f32 %v1403, %v1794
        %v1923 = vadd.f32 %v1404, %v1795
        %v1924 = vadd.f32 %v1405, %v1796
        %v1925 = vadd.f32 %v1406, %v1797
        %v1926 = vadd.f32 %v1407, %v1798
        %v1927 = vadd.f32 %v1408, %v1799
        %v1928 = vadd.f32 %v1409, %v1800
        %v1929 = vadd.f32 %v1410, %v1801
        %v1930 = vadd.f32 %v1411, %v1802
        %v1931 = vadd.f32 %v1412, %v1803
        %v1932 = vadd.f32 %v1413, %v1804
        %v1933 = vadd.f32 %v1414, %v1805
        %v1934 = vadd.f32 %v1415, %v1806
        %v1935 = vadd.f32 %v1416, %v1807
        %v1936 = vadd.f32 %v1417, %v1808
        %v1937 = vadd.f32 %v1418, %v1809
        %v1938 = vadd.f32 %v1419, %v1810
        %v1939 = vadd.f32 %v1420, %v1811
        %v1940 = vadd.f32 %v1421, %v1812
        %v1941 = vadd.f32 %v1422, %v1813
        %v1942 = vadd.f32 %v1423, %v1814
        %v1943 = vadd.f32 %v1424, %v1815
        %v1944 = vadd.f32 %v1425, %v1816
        %v1945 = vadd.f32 %v1426, %v1817
        %v1946 = vadd.f32 %v1427, %v1818
        %v1947 = vadd.f32 %v1428, %v1819
        %v1948 = vadd.f32 %v1429, %v1820
        %v1949 = vadd.f32 %v1430, %v1821
        %v1950 = vadd.f32 %v1431, %v1822
        %v1951 = vadd.f32 %v1432, %v1823
        %v1952 = vadd.f32 %v1433, %v1824
        %v1953 = vadd.f32 %v1434, %v1825
        %v1954 = vadd.f32 %v1435, %v1826
        %v1955 = vadd.f32 %v1436, %v1827
        %v1956 = vadd.f32 %v1437, %v1828
        %v1957 = vadd.f32 %v1438, %v1829
        %v1958 = vadd.f32 %v1439, %v1830
        %v1959 = vadd.f32 %v1440, %v1831
        %v1960 = vadd.f32 %v1441, %v1832
        %v1961 = vadd.f32 %v1442, %v1833
        %v1962 = vadd.f32 %v1443, %v1834
        %v1963 = vadd.f32 %v1444, %v1835
        %v1964 = vadd.f32 %v1445, %v1836
        %v1965 = vadd.f32 %v1446, %v1837
        %v1966 = vadd.f32 %v1447, %v1838
        %v1967 = vadd.f32 %v1448, %v1839
        %v1968 = vadd.f32 %v1449, %v1840
        %v1969 = vadd.f32 %v1450, %v1841
        %v1970 = vadd.f32 %v1451, %v1842
        %v1971 = vadd.f32 %v1452, %v1843
        %v1972 = vadd.f32 %v1453, %v1844
        %v1973 = vadd.f32 %v1454, %v1845
        %v1974 = vadd.f32 %v1455, %v1846
        %v1975 = vadd.f32 %v1456, %v1847
        %v1976 = vadd.f32 %v1457, %v1848
        %v1977 = vadd.f32 %v1458, %v1849
        %v1978 = vadd.f32 %v1459, %v1850
        %v1979 = vadd.f32 %v1460, %v1851
        %v1980 = vadd.f32 %v1461, %v1852
        %v1981 = vadd.f32 %v1462, %v1853
        %v1982 = vadd.f32 %v1463, %v1854
        %v1983 = vadd.f32 %v1464, %v1855
        %v1984 = vadd.f32 %v1465, %v1856
        %v1985 = vadd.f32 %v1466, %v1857
        %v1986 = vadd.f32 %v1467, %v1858
        %v1987 = vmax.f32 %v1859, 0.0
        %v1988 = vmax.f32 %v1860, 0.0
        %v1989 = vmax.f32 %v1861, 0.0
        %v1990 = vmax.f32 %v1862, 0.0
        %v1991 = vmax.f32 %v1863, 0.0
        %v1992 = vmax.f32 %v1864, 0.0
        %v1993 = vmax.f32 %v1865, 0.0
        %v1994 = vmax.f32 %v1866, 0.0
        %v1995 = vmax.f32 %v1867, 0.0
        %v1996 = vmax.f32 %v1868, 0.0
        %v1997 = vmax.f32 %v1869, 0.0
        %v1998 = vmax.f32 %v1870, 0.0
        %v1999 = vmax.f32 %v1871, 0.0
        %v2000 = vmax.f32 %v1872, 0.0
        %v2001 = vmax.f32 %v1873, 0.0
        %v2002 = vmax.f32 %v1874, 0.0
        %v2003 = vmax.f32 %v1875, 0.0
        %v2004 = vmax.f32 %v1876, 0.0
        %v2005 = vmax.f32 %v1877, 0.0
        %v2006 = vmax.f32 %v1878, 0.0
        %v2007 = vmax.f32 %v1879, 0.0
        %v2008 = vmax.f32 %v1880, 0.0
        %v2009 = vmax.f32 %v1881, 0.0
        %v2010 = vmax.f32 %v1882, 0.0
        %v2011 = vmax.f32 %v1883, 0.0
        %v2012 = vmax.f32 %v1884, 0.0
        %v2013 = vmax.f32 %v1885, 0.0
        %v2014 = vmax.f32 %v1886, 0.0
        %v2015 = vmax.f32 %v1887, 0.0
        %v2016 = vmax.f32 %v1888, 0.0
        %v2017 = vmax.f32 %v1889, 0.0
        %v2018 = vmax.f32 %v1890, 0.0
        %v2019 = vmax.f32 %v1891, 0.0
        %v2020 = vmax.f32 %v1892, 0.0
        %v2021 = vmax.f32 %v1893, 0.0
        %v2022 = vmax.f32 %v1894, 0.0
        %v2023 = vmax.f32 %v1895, 0.0
        %v2024 = vmax.f32 %v1896, 0.0
        %v2025 = vmax.f32 %v1897, 0.0
        %v2026 = vmax.f32 %v1898, 0.0
        %v2027 = vmax.f32 %v1899, 0.0
        %v2028 = vmax.f32 %v1900, 0.0
        %v2029 = vmax.f32 %v1901, 0.0
        %v2030 = vmax.f32 %v1902, 0.0
        %v2031 = vmax.f32 %v1903, 0.0
        %v2032 = vmax.f32 %v1904, 0.0
        %v2033 = vmax.f32 %v1905, 0.0
        %v2034 = vmax.f32 %v1906, 0.0
        %v2035 = vmax.f32 %v1907, 0.0
        %v2036 = vmax.f32 %v1908, 0.0
        %v2037 = vmax.f32 %v1909, 0.0
        %v2038 = vmax.f32 %v1910, 0.0
        %v2039 = vmax.f32 %v1911, 0.0
        %v2040 = vmax.f32 %v1912, 0.0
        %v2041 = vmax.f32 %v1913, 0.0
        %v2042 = vmax.f32 %v1914, 0.0
        %v2043 = vmax.f32 %v1915, 0.0
        %v2044 = vmax.f32 %v1916, 0.0
        %v2045 = vmax.f32 %v1917, 0.0
        %v2046 = vmax.f32 %v1918, 0.0
        %v2047 = vmax.f32 %v1919, 0.0
        %v2048 = vmax.f32 %v1920, 0.0
        %v2049 = vmax.f32 %v1921, 0.0
        %v2050 = vmax.f32 %v1922, 0.0
        %v2051 = vmax.f32 %v1923, 0.0
        %v2052 = vmax.f32 %v1924, 0.0
        %v2053 = vmax.f32 %v1925, 0.0
        %v2054 = vmax.f32 %v1926, 0.0
        %v2055 = vmax.f32 %v1927, 0.0
        %v2056 = vmax.f32 %v1928, 0.0
        %v2057 = vmax.f32 %v1929, 0.0
        %v2058 = vmax.f32 %v1930, 0.0
        %v2059 = vmax.f32 %v1931, 0.0
        %v2060 = vmax.f32 %v1932, 0.0
        %v2061 = vmax.f32 %v1933, 0.0
        %v2062 = vmax.f32 %v1934, 0.0
        %v2063 = vmax.f32 %v1935, 0.0
        %v2064 = vmax.f32 %v1936, 0.0
        %v2065 = vmax.f32 %v1937, 0.0
        %v2066 = vmax.f32 %v1938, 0.0
        %v2067 = vmax.f32 %v1939, 0.0
        %v2068 = vmax.f32 %v1940, 0.0
        %v2069 = vmax.f32 %v1941, 0.0
        %v2070 = vmax.f32 %v1942, 0.0
        %v2071 = vmax.f32 %v1943, 0.0
        %v2072 = vmax.f32 %v1944, 0.0
        %v2073 = vmax.f32 %v1945, 0.0
        %v2074 = vmax.f32 %v1946, 0.0
        %v2075 = vmax.f32 %v1947, 0.0
        %v2076 = vmax.f32 %v1948, 0.0
        %v2077 = vmax.f32 %v1949, 0.0
        %v2078 = vmax.f32 %v1950, 0.0
        %v2079 = vmax.f32 %v1951, 0.0
        %v2080 = vmax.f32 %v1952, 0.0
        %v2081 = vmax.f32 %v1953, 0.0
        %v2082 = vmax.f32 %v1954, 0.0
        %v2083 = vmax.f32 %v1955, 0.0
        %v2084 = vmax.f32 %v1956, 0.0
        %v2085 = vmax.f32 %v1957, 0.0
        %v2086 = vmax.f32 %v1958, 0.0
        %v2087 = vmax.f32 %v1959, 0.0
        %v2088 = vmax.f32 %v1960, 0.0
        %v2089 = vmax.f32 %v1961, 0.0
        %v2090 = vmax.f32 %v1962, 0.0
        %v2091 = vmax.f32 %v1963, 0.0
        %v2092 = vmax.f32 %v1964, 0.0
        %v2093 = vmax.f32 %v1965, 0.0
        %v2094 = vmax.f32 %v1966, 0.0
        %v2095 = vmax.f32 %v1967, 0.0
        %v2096 = vmax.f32 %v1968, 0.0
        %v2097 = vmax.f32 %v1969, 0.0
        %v2098 = vmax.f32 %v1970, 0.0
        %v2099 = vmax.f32 %v1971, 0.0
        %v2100 = vmax.f32 %v1972, 0.0
        %v2101 = vmax.f32 %v1973, 0.0
        %v2102 = vmax.f32 %v1974, 0.0
        %v2103 = vmax.f32 %v1975, 0.0
        %v2104 = vmax.f32 %v1976, 0.0
        %v2105 = vmax.f32 %v1977, 0.0
        %v2106 = vmax.f32 %v1978, 0.0
        %v2107 = vmax.f32 %v1979, 0.0
        %v2108 = vmax.f32 %v1980, 0.0
        %v2109 = vmax.f32 %v1981, 0.0
        %v2110 = vmax.f32 %v1982, 0.0
        %v2111 = vmax.f32 %v1983, 0.0
        %v2112 = vmax.f32 %v1984, 0.0
        %v2113 = vmax.f32 %v1985, 0.0
        %v2114 = vmax.f32 %v1986, 0.0
        %v2115 = vpack.c.bf16 %v1989, %v1987
        %v2116 = vpack.c.bf16 %v1990, %v1988
        %v2117 = vpack.c.bf16 %v1993, %v1991
        %v2118 = vpack.c.bf16 %v1994, %v1992
        %v2119 = vpack.c.bf16 %v1997, %v1995
        %v2120 = vpack.c.bf16 %v1998, %v1996
        %v2121 = vpack.c.bf16 %v2001, %v1999
        %v2122 = vpack.c.bf16 %v2002, %v2000
        %v2123 = vpack.c.bf16 %v2005, %v2003
        %v2124 = vpack.c.bf16 %v2006, %v2004
        %v2125 = vpack.c.bf16 %v2009, %v2007
        %v2126 = vpack.c.bf16 %v2010, %v2008
        %v2127 = vpack.c.bf16 %v2013, %v2011
        %v2128 = vpack.c.bf16 %v2014, %v2012
        %v2129 = vpack.c.bf16 %v2017, %v2015
        %v2130 = vpack.c.bf16 %v2018, %v2016
        %v2131 = vpack.c.bf16 %v2021, %v2019
        %v2132 = vpack.c.bf16 %v2022, %v2020
        %v2133 = vpack.c.bf16 %v2025, %v2023
        %v2134 = vpack.c.bf16 %v2026, %v2024
        %v2135 = vpack.c.bf16 %v2029, %v2027
        %v2136 = vpack.c.bf16 %v2030, %v2028
        %v2137 = vpack.c.bf16 %v2033, %v2031
        %v2138 = vpack.c.bf16 %v2034, %v2032
        %v2139 = vpack.c.bf16 %v2037, %v2035
        %v2140 = vpack.c.bf16 %v2038, %v2036
        %v2141 = vpack.c.bf16 %v2041, %v2039
        %v2142 = vpack.c.bf16 %v2042, %v2040
        %v2143 = vpack.c.bf16 %v2045, %v2043
        %v2144 = vpack.c.bf16 %v2046, %v2044
        %v2145 = vpack.c.bf16 %v2049, %v2047
        %v2146 = vpack.c.bf16 %v2050, %v2048
        %v2147 = vpack.c.bf16 %v2053, %v2051
        %v2148 = vpack.c.bf16 %v2054, %v2052
        %v2149 = vpack.c.bf16 %v2057, %v2055
        %v2150 = vpack.c.bf16 %v2058, %v2056
        %v2151 = vpack.c.bf16 %v2061, %v2059
        %v2152 = vpack.c.bf16 %v2062, %v2060
        %v2153 = vpack.c.bf16 %v2065, %v2063
        %v2154 = vpack.c.bf16 %v2066, %v2064
        %v2155 = vpack.c.bf16 %v2069, %v2067
        %v2156 = vpack.c.bf16 %v2070, %v2068
        %v2157 = vpack.c.bf16 %v2073, %v2071
        %v2158 = vpack.c.bf16 %v2074, %v2072
        %v2159 = vpack.c.bf16 %v2077, %v2075
        %v2160 = vpack.c.bf16 %v2078, %v2076
        %v2161 = vpack.c.bf16 %v2081, %v2079
        %v2162 = vpack.c.bf16 %v2082, %v2080
        %v2163 = vpack.c.bf16 %v2085, %v2083
        %v2164 = vpack.c.bf16 %v2086, %v2084
        %v2165 = vpack.c.bf16 %v2089, %v2087
        %v2166 = vpack.c.bf16 %v2090, %v2088
        %v2167 = vpack.c.bf16 %v2093, %v2091
        %v2168 = vpack.c.bf16 %v2094, %v2092
        %v2169 = vpack.c.bf16 %v2097, %v2095
        %v2170 = vpack.c.bf16 %v2098, %v2096
        %v2171 = vpack.c.bf16 %v2101, %v2099
        %v2172 = vpack.c.bf16 %v2102, %v2100
        %v2173 = vpack.c.bf16 %v2105, %v2103
        %v2174 = vpack.c.bf16 %v2106, %v2104
        %v2175 = vpack.c.bf16 %v2109, %v2107
        %v2176 = vpack.c.bf16 %v2110, %v2108
        %v2177 = vpack.c.bf16 %v2113, %v2111
        %v2178 = vpack.c.bf16 %v2114, %v2112
        %v2179 = vld [vmem:[#allocation2] sm:$0xff]
        %v2180 = vld [vmem:[#allocation2 + $0x8] sm:$0xff]
        %v2181 = vld [vmem:[#allocation2 + $0x10] sm:$0xff]
        %v2182 = vld [vmem:[#allocation2 + $0x18] sm:$0xff]
        %v2183 = vld [vmem:[#allocation2 + $0x20] sm:$0xff]
        %v2184 = vld [vmem:[#allocation2 + $0x28] sm:$0xff]
        %v2185 = vld [vmem:[#allocation2 + $0x30] sm:$0xff]
        %v2186 = vld [vmem:[#allocation2 + $0x38] sm:$0xff]
        %v2187 = vld [vmem:[#allocation2 + $0x40] sm:$0xff]
        %v2188 = vld [vmem:[#allocation2 + $0x48] sm:$0xff]
        %v2189 = vld [vmem:[#allocation2 + $0x50] sm:$0xff]
        %v2190 = vld [vmem:[#allocation2 + $0x58] sm:$0xff]
        %v2191 = vld [vmem:[#allocation2 + $0x60] sm:$0xff]
        %v2192 = vld [vmem:[#allocation2 + $0x68] sm:$0xff]
        %v2193 = vld [vmem:[#allocation2 + $0x70] sm:$0xff]
        %v2194 = vld [vmem:[#allocation2 + $0x78] sm:$0xff]
        %v2195 = vld [vmem:[#allocation2 + $0x80] sm:$0xff]
        %v2196 = vld [vmem:[#allocation2 + $0x88] sm:$0xff]
        %v2197 = vld [vmem:[#allocation2 + $0x90] sm:$0xff]
        %v2198 = vld [vmem:[#allocation2 + $0x98] sm:$0xff]
        %v2199 = vld [vmem:[#allocation2 + $0xa0] sm:$0xff]
        %v2200 = vld [vmem:[#allocation2 + $0xa8] sm:$0xff]
        %v2201 = vld [vmem:[#allocation2 + $0xb0] sm:$0xff]
        %v2202 = vld [vmem:[#allocation2 + $0xb8] sm:$0xff]
        %v2203 = vld [vmem:[#allocation2 + $0xc0] sm:$0xff]
        %v2204 = vld [vmem:[#allocation2 + $0xc8] sm:$0xff]
        %v2205 = vld [vmem:[#allocation2 + $0xd0] sm:$0xff]
        %v2206 = vld [vmem:[#allocation2 + $0xd8] sm:$0xff]
        %v2207 = vld [vmem:[#allocation2 + $0xe0] sm:$0xff]
        %v2208 = vld [vmem:[#allocation2 + $0xe8] sm:$0xff]
        %v2209 = vld [vmem:[#allocation2 + $0xf0] sm:$0xff]
        %v2210 = vld [vmem:[#allocation2 + $0xf8] sm:$0xff]
        %s2211 = scalar_lea.vmem %s4, 1
        %v2212 = vld [vmem:[%s2211] ss:$8 sm:$0x3]
        %v2214 = vperm.slane %v2212, 0
        %v2215 = vperm.slane %v2212, 1
        %v2250 = vunpack.c.l.b16 %v2179
        %v2251 = vunpack.c.h.b16 %v2179
        %v2252 = vunpack.c.l.b16 %v2180
        %v2253 = vunpack.c.h.b16 %v2180
        %v2254 = vunpack.c.l.b16 %v2181
        %v2255 = vunpack.c.h.b16 %v2181
        %v2256 = vunpack.c.l.b16 %v2182
        %v2257 = vunpack.c.h.b16 %v2182
        %v2258 = vunpack.c.l.b16 %v2183
        %v2259 = vunpack.c.h.b16 %v2183
        %v2260 = vunpack.c.l.b16 %v2184
        %v2261 = vunpack.c.h.b16 %v2184
        %v2262 = vunpack.c.l.b16 %v2185
        %v2263 = vunpack.c.h.b16 %v2185
        %v2264 = vunpack.c.l.b16 %v2186
        %v2265 = vunpack.c.h.b16 %v2186
        %v2266 = vunpack.c.l.b16 %v2187
        %v2267 = vunpack.c.h.b16 %v2187
        %v2268 = vunpack.c.l.b16 %v2188
        %v2269 = vunpack.c.h.b16 %v2188
        %v2270 = vunpack.c.l.b16 %v2189
        %v2271 = vunpack.c.h.b16 %v2189
        %v2272 = vunpack.c.l.b16 %v2190
        %v2273 = vunpack.c.h.b16 %v2190
        %v2274 = vunpack.c.l.b16 %v2191
        %v2275 = vunpack.c.h.b16 %v2191
        %v2276 = vunpack.c.l.b16 %v2192
        %v2277 = vunpack.c.h.b16 %v2192
        %v2278 = vunpack.c.l.b16 %v2193
        %v2279 = vunpack.c.h.b16 %v2193
        %v2280 = vunpack.c.l.b16 %v2194
        %v2281 = vunpack.c.h.b16 %v2194
        %v2282 = vunpack.c.l.b16 %v2195
        %v2283 = vunpack.c.h.b16 %v2195
        %v2284 = vunpack.c.l.b16 %v2196
        %v2285 = vunpack.c.h.b16 %v2196
        %v2286 = vunpack.c.l.b16 %v2197
        %v2287 = vunpack.c.h.b16 %v2197
        %v2288 = vunpack.c.l.b16 %v2198
        %v2289 = vunpack.c.h.b16 %v2198
        %v2290 = vunpack.c.l.b16 %v2199
        %v2291 = vunpack.c.h.b16 %v2199
        %v2292 = vunpack.c.l.b16 %v2200
        %v2293 = vunpack.c.h.b16 %v2200
        %v2294 = vunpack.c.l.b16 %v2201
        %v2295 = vunpack.c.h.b16 %v2201
        %v2296 = vunpack.c.l.b16 %v2202
        %v2297 = vunpack.c.h.b16 %v2202
        %v2298 = vunpack.c.l.b16 %v2203
        %v2299 = vunpack.c.h.b16 %v2203
        %v2300 = vunpack.c.l.b16 %v2204
        %v2301 = vunpack.c.h.b16 %v2204
        %v2302 = vunpack.c.l.b16 %v2205
        %v2303 = vunpack.c.h.b16 %v2205
        %v2304 = vunpack.c.l.b16 %v2206
        %v2305 = vunpack.c.h.b16 %v2206
        %v2306 = vunpack.c.l.b16 %v2207
        %v2307 = vunpack.c.h.b16 %v2207
        %v2308 = vunpack.c.l.b16 %v2208
        %v2309 = vunpack.c.h.b16 %v2208
        %v2310 = vunpack.c.l.b16 %v2209
        %v2311 = vunpack.c.h.b16 %v2209
        %v2312 = vunpack.c.l.b16 %v2210
        %v2313 = vunpack.c.h.b16 %v2210
        %v2314 = vpack.c.b16 %v2252, %v2250
        %v2315 = vpack.c.b16 %v2253, %v2251
        %v2316 = vpack.c.b16 %v2256, %v2254
        %v2317 = vpack.c.b16 %v2257, %v2255
        %v2318 = vpack.c.b16 %v2260, %v2258
        %v2319 = vpack.c.b16 %v2261, %v2259
        %v2320 = vpack.c.b16 %v2264, %v2262
        %v2321 = vpack.c.b16 %v2265, %v2263
        %v2322 = vpack.c.b16 %v2268, %v2266
        %v2323 = vpack.c.b16 %v2269, %v2267
        %v2324 = vpack.c.b16 %v2272, %v2270
        %v2325 = vpack.c.b16 %v2273, %v2271
        %v2326 = vpack.c.b16 %v2276, %v2274
        %v2327 = vpack.c.b16 %v2277, %v2275
        %v2328 = vpack.c.b16 %v2280, %v2278
        %v2329 = vpack.c.b16 %v2281, %v2279
        %v2330 = vpack.c.b16 %v2284, %v2282
        %v2331 = vpack.c.b16 %v2285, %v2283
        %v2332 = vpack.c.b16 %v2288, %v2286
        %v2333 = vpack.c.b16 %v2289, %v2287
        %v2334 = vpack.c.b16 %v2292, %v2290
        %v2335 = vpack.c.b16 %v2293, %v2291
        %v2336 = vpack.c.b16 %v2296, %v2294
        %v2337 = vpack.c.b16 %v2297, %v2295
        %v2338 = vpack.c.b16 %v2300, %v2298
        %v2339 = vpack.c.b16 %v2301, %v2299
        %v2340 = vpack.c.b16 %v2304, %v2302
        %v2341 = vpack.c.b16 %v2305, %v2303
        %v2342 = vpack.c.b16 %v2308, %v2306
        %v2343 = vpack.c.b16 %v2309, %v2307
        %v2344 = vpack.c.b16 %v2312, %v2310
        %v2345 = vpack.c.b16 %v2313, %v2311
        %2378 = vmatpush.bf16.msra.mxu0 %v2328
        %2379 = vmatpush.bf16.msra.mxu0 %v2326
        %2380 = vmatpush.bf16.msra.mxu0 %v2324
        %2381 = vmatpush.bf16.msra.mxu0 %v2322
        %2382 = vmatpush.bf16.msra.mxu0 %v2320
        %2383 = vmatpush.bf16.msra.mxu0 %v2318
        %2384 = vmatpush.bf16.msra.mxu0 %v2316
        %2385 = vmatpush.bf16.msra.mxu0 %v2314
        %2386 = vmatmul.bf16.gmra.mxu0 %v2115
        %v2387 = vpop.f32.mrf.mxu0
        %v2388 = vadd.f32 %v2214, %v2387
        %v2389 = vpop.f32.mrf.mxu0
        %v2390 = vadd.f32 %v2214, %v2389
        %2391 = vmatmul.bf16.gmra.mxu0 %v2117
        %v2392 = vpop.f32.mrf.mxu0
        %v2393 = vadd.f32 %v2214, %v2392
        %v2394 = vpop.f32.mrf.mxu0
        %v2395 = vadd.f32 %v2214, %v2394
        %2396 = vmatmul.bf16.gmra.mxu0 %v2119
        %v2397 = vpop.f32.mrf.mxu0
        %v2398 = vadd.f32 %v2214, %v2397
        %v2399 = vpop.f32.mrf.mxu0
        %v2400 = vadd.f32 %v2214, %v2399
        %2401 = vmatmul.bf16.gmra.mxu0 %v2121
        %v2402 = vpop.f32.mrf.mxu0
        %v2403 = vadd.f32 %v2214, %v2402
        %v2404 = vpop.f32.mrf.mxu0
        %v2405 = vadd.f32 %v2214, %v2404
        %2406 = vmatmul.bf16.gmra.mxu0 %v2123
        %v2407 = vpop.f32.mrf.mxu0
        %v2408 = vadd.f32 %v2214, %v2407
        %v2409 = vpop.f32.mrf.mxu0
        %v2410 = vadd.f32 %v2214, %v2409
        %2411 = vmatmul.bf16.gmra.mxu0 %v2125
        %v2412 = vpop.f32.mrf.mxu0
        %v2413 = vadd.f32 %v2214, %v2412
        %v2414 = vpop.f32.mrf.mxu0
        %v2415 = vadd.f32 %v2214, %v2414
        %2416 = vmatmul.bf16.gmra.mxu0 %v2127
        %v2417 = vpop.f32.mrf.mxu0
        %v2418 = vadd.f32 %v2214, %v2417
        %v2419 = vpop.f32.mrf.mxu0
        %v2420 = vadd.f32 %v2214, %v2419
        %2421 = vmatmul.bf16.gmra.mxu0 %v2129
        %v2422 = vpop.f32.mrf.mxu0
        %v2423 = vadd.f32 %v2214, %v2422
        %v2424 = vpop.f32.mrf.mxu0
        %v2425 = vadd.f32 %v2214, %v2424
        %2426 = vmatmul.bf16.gmra.mxu0 %v2131
        %v2427 = vpop.f32.mrf.mxu0
        %v2428 = vadd.f32 %v2214, %v2427
        %v2429 = vpop.f32.mrf.mxu0
        %v2430 = vadd.f32 %v2214, %v2429
        %2431 = vmatmul.bf16.gmra.mxu0 %v2133
        %v2432 = vpop.f32.mrf.mxu0
        %v2433 = vadd.f32 %v2214, %v2432
        %v2434 = vpop.f32.mrf.mxu0
        %v2435 = vadd.f32 %v2214, %v2434
        %2436 = vmatmul.bf16.gmra.mxu0 %v2135
        %v2437 = vpop.f32.mrf.mxu0
        %v2438 = vadd.f32 %v2214, %v2437
        %v2439 = vpop.f32.mrf.mxu0
        %v2440 = vadd.f32 %v2214, %v2439
        %2441 = vmatmul.bf16.gmra.mxu0 %v2137
        %v2442 = vpop.f32.mrf.mxu0
        %v2443 = vadd.f32 %v2214, %v2442
        %v2444 = vpop.f32.mrf.mxu0
        %v2445 = vadd.f32 %v2214, %v2444
        %2446 = vmatmul.bf16.gmra.mxu0 %v2139
        %v2447 = vpop.f32.mrf.mxu0
        %v2448 = vadd.f32 %v2214, %v2447
        %v2449 = vpop.f32.mrf.mxu0
        %v2450 = vadd.f32 %v2214, %v2449
        %2451 = vmatmul.bf16.gmra.mxu0 %v2141
        %v2452 = vpop.f32.mrf.mxu0
        %v2453 = vadd.f32 %v2214, %v2452
        %v2454 = vpop.f32.mrf.mxu0
        %v2455 = vadd.f32 %v2214, %v2454
        %2456 = vmatmul.bf16.gmra.mxu0 %v2143
        %v2457 = vpop.f32.mrf.mxu0
        %v2458 = vadd.f32 %v2214, %v2457
        %v2459 = vpop.f32.mrf.mxu0
        %v2460 = vadd.f32 %v2214, %v2459
        %2461 = vmatmul.bf16.gmra.mxu0 %v2145
        %v2462 = vpop.f32.mrf.mxu0
        %v2463 = vadd.f32 %v2214, %v2462
        %v2464 = vpop.f32.mrf.mxu0
        %v2465 = vadd.f32 %v2214, %v2464
        %2466 = vmatmul.bf16.gmra.mxu0 %v2147
        %v2467 = vpop.f32.mrf.mxu0
        %v2468 = vadd.f32 %v2214, %v2467
        %v2469 = vpop.f32.mrf.mxu0
        %v2470 = vadd.f32 %v2214, %v2469
        %2471 = vmatmul.bf16.gmra.mxu0 %v2149
        %v2472 = vpop.f32.mrf.mxu0
        %v2473 = vadd.f32 %v2214, %v2472
        %v2474 = vpop.f32.mrf.mxu0
        %v2475 = vadd.f32 %v2214, %v2474
        %2476 = vmatmul.bf16.gmra.mxu0 %v2151
        %v2477 = vpop.f32.mrf.mxu0
        %v2478 = vadd.f32 %v2214, %v2477
        %v2479 = vpop.f32.mrf.mxu0
        %v2480 = vadd.f32 %v2214, %v2479
        %2481 = vmatmul.bf16.gmra.mxu0 %v2153
        %v2482 = vpop.f32.mrf.mxu0
        %v2483 = vadd.f32 %v2214, %v2482
        %v2484 = vpop.f32.mrf.mxu0
        %v2485 = vadd.f32 %v2214, %v2484
        %2486 = vmatmul.bf16.gmra.mxu0 %v2155
        %v2487 = vpop.f32.mrf.mxu0
        %v2488 = vadd.f32 %v2214, %v2487
        %v2489 = vpop.f32.mrf.mxu0
        %v2490 = vadd.f32 %v2214, %v2489
        %2491 = vmatmul.bf16.gmra.mxu0 %v2157
        %v2492 = vpop.f32.mrf.mxu0
        %v2493 = vadd.f32 %v2214, %v2492
        %v2494 = vpop.f32.mrf.mxu0
        %v2495 = vadd.f32 %v2214, %v2494
        %2496 = vmatmul.bf16.gmra.mxu0 %v2159
        %v2497 = vpop.f32.mrf.mxu0
        %v2498 = vadd.f32 %v2214, %v2497
        %v2499 = vpop.f32.mrf.mxu0
        %v2500 = vadd.f32 %v2214, %v2499
        %2501 = vmatmul.bf16.gmra.mxu0 %v2161
        %v2502 = vpop.f32.mrf.mxu0
        %v2503 = vadd.f32 %v2214, %v2502
        %v2504 = vpop.f32.mrf.mxu0
        %v2505 = vadd.f32 %v2214, %v2504
        %2506 = vmatmul.bf16.gmra.mxu0 %v2163
        %v2507 = vpop.f32.mrf.mxu0
        %v2508 = vadd.f32 %v2214, %v2507
        %v2509 = vpop.f32.mrf.mxu0
        %v2510 = vadd.f32 %v2214, %v2509
        %2511 = vmatmul.bf16.gmra.mxu0 %v2165
        %v2512 = vpop.f32.mrf.mxu0
        %v2513 = vadd.f32 %v2214, %v2512
        %v2514 = vpop.f32.mrf.mxu0
        %v2515 = vadd.f32 %v2214, %v2514
        %2516 = vmatmul.bf16.gmra.mxu0 %v2167
        %v2517 = vpop.f32.mrf.mxu0
        %v2518 = vadd.f32 %v2214, %v2517
        %v2519 = vpop.f32.mrf.mxu0
        %v2520 = vadd.f32 %v2214, %v2519
        %2521 = vmatmul.bf16.gmra.mxu0 %v2169
        %v2522 = vpop.f32.mrf.mxu0
        %v2523 = vadd.f32 %v2214, %v2522
        %v2524 = vpop.f32.mrf.mxu0
        %v2525 = vadd.f32 %v2214, %v2524
        %2526 = vmatmul.bf16.gmra.mxu0 %v2171
        %v2527 = vpop.f32.mrf.mxu0
        %v2528 = vadd.f32 %v2214, %v2527
        %v2529 = vpop.f32.mrf.mxu0
        %v2530 = vadd.f32 %v2214, %v2529
        %2531 = vmatmul.bf16.gmra.mxu0 %v2173
        %v2532 = vpop.f32.mrf.mxu0
        %v2533 = vadd.f32 %v2214, %v2532
        %v2534 = vpop.f32.mrf.mxu0
        %v2535 = vadd.f32 %v2214, %v2534
        %2536 = vmatmul.bf16.gmra.mxu0 %v2175
        %v2537 = vpop.f32.mrf.mxu0
        %v2538 = vadd.f32 %v2214, %v2537
        %v2539 = vpop.f32.mrf.mxu0
        %v2540 = vadd.f32 %v2214, %v2539
        %2541 = vmatmul.bf16.gmra.mxu0 %v2177
        %v2542 = vpop.f32.mrf.mxu0
        %v2543 = vadd.f32 %v2214, %v2542
        %v2544 = vpop.f32.mrf.mxu0
        %v2545 = vadd.f32 %v2214, %v2544
        %2546 = vdwg.mxu0
        %2547 = vmatpush.bf16.msra.mxu0 %v2344
        %2548 = vmatpush.bf16.msra.mxu0 %v2342
        %2549 = vmatpush.bf16.msra.mxu0 %v2340
        %2550 = vmatpush.bf16.msra.mxu0 %v2338
        %2551 = vmatpush.bf16.msra.mxu0 %v2336
        %2552 = vmatpush.bf16.msra.mxu0 %v2334
        %2553 = vmatpush.bf16.msra.mxu0 %v2332
        %2554 = vmatpush.bf16.msra.mxu0 %v2330
        %2555 = vmatmul.bf16.gmra.mxu0 %v2116
        %v2556 = vpop.f32.mrf.mxu0
        %v2557 = vadd.f32 %v2388, %v2556
        %v2558 = vpop.f32.mrf.mxu0
        %v2559 = vadd.f32 %v2390, %v2558
        %2560 = vmatmul.bf16.gmra.mxu0 %v2118
        %v2561 = vpop.f32.mrf.mxu0
        %v2562 = vadd.f32 %v2393, %v2561
        %v2563 = vpop.f32.mrf.mxu0
        %v2564 = vadd.f32 %v2395, %v2563
        %2565 = vmatmul.bf16.gmra.mxu0 %v2120
        %v2566 = vpop.f32.mrf.mxu0
        %v2567 = vadd.f32 %v2398, %v2566
        %v2568 = vpop.f32.mrf.mxu0
        %v2569 = vadd.f32 %v2400, %v2568
        %2570 = vmatmul.bf16.gmra.mxu0 %v2122
        %v2571 = vpop.f32.mrf.mxu0
        %v2572 = vadd.f32 %v2403, %v2571
        %v2573 = vpop.f32.mrf.mxu0
        %v2574 = vadd.f32 %v2405, %v2573
        %2575 = vmatmul.bf16.gmra.mxu0 %v2124
        %v2576 = vpop.f32.mrf.mxu0
        %v2577 = vadd.f32 %v2408, %v2576
        %v2578 = vpop.f32.mrf.mxu0
        %v2579 = vadd.f32 %v2410, %v2578
        %2580 = vmatmul.bf16.gmra.mxu0 %v2126
        %v2581 = vpop.f32.mrf.mxu0
        %v2582 = vadd.f32 %v2413, %v2581
        %v2583 = vpop.f32.mrf.mxu0
        %v2584 = vadd.f32 %v2415, %v2583
        %2585 = vmatmul.bf16.gmra.mxu0 %v2128
        %v2586 = vpop.f32.mrf.mxu0
        %v2587 = vadd.f32 %v2418, %v2586
        %v2588 = vpop.f32.mrf.mxu0
        %v2589 = vadd.f32 %v2420, %v2588
        %2590 = vmatmul.bf16.gmra.mxu0 %v2130
        %v2591 = vpop.f32.mrf.mxu0
        %v2592 = vadd.f32 %v2423, %v2591
        %v2593 = vpop.f32.mrf.mxu0
        %v2594 = vadd.f32 %v2425, %v2593
        %2595 = vmatmul.bf16.gmra.mxu0 %v2132
        %v2596 = vpop.f32.mrf.mxu0
        %v2597 = vadd.f32 %v2428, %v2596
        %v2598 = vpop.f32.mrf.mxu0
        %v2599 = vadd.f32 %v2430, %v2598
        %2600 = vmatmul.bf16.gmra.mxu0 %v2134
        %v2601 = vpop.f32.mrf.mxu0
        %v2602 = vadd.f32 %v2433, %v2601
        %v2603 = vpop.f32.mrf.mxu0
        %v2604 = vadd.f32 %v2435, %v2603
        %2605 = vmatmul.bf16.gmra.mxu0 %v2136
        %v2606 = vpop.f32.mrf.mxu0
        %v2607 = vadd.f32 %v2438, %v2606
        %v2608 = vpop.f32.mrf.mxu0
        %v2609 = vadd.f32 %v2440, %v2608
        %2610 = vmatmul.bf16.gmra.mxu0 %v2138
        %v2611 = vpop.f32.mrf.mxu0
        %v2612 = vadd.f32 %v2443, %v2611
        %v2613 = vpop.f32.mrf.mxu0
        %v2614 = vadd.f32 %v2445, %v2613
        %2615 = vmatmul.bf16.gmra.mxu0 %v2140
        %v2616 = vpop.f32.mrf.mxu0
        %v2617 = vadd.f32 %v2448, %v2616
        %v2618 = vpop.f32.mrf.mxu0
        %v2619 = vadd.f32 %v2450, %v2618
        %2620 = vmatmul.bf16.gmra.mxu0 %v2142
        %v2621 = vpop.f32.mrf.mxu0
        %v2622 = vadd.f32 %v2453, %v2621
        %v2623 = vpop.f32.mrf.mxu0
        %v2624 = vadd.f32 %v2455, %v2623
        %2625 = vmatmul.bf16.gmra.mxu0 %v2144
        %v2626 = vpop.f32.mrf.mxu0
        %v2627 = vadd.f32 %v2458, %v2626
        %v2628 = vpop.f32.mrf.mxu0
        %v2629 = vadd.f32 %v2460, %v2628
        %2630 = vmatmul.bf16.gmra.mxu0 %v2146
        %v2631 = vpop.f32.mrf.mxu0
        %v2632 = vadd.f32 %v2463, %v2631
        %v2633 = vpop.f32.mrf.mxu0
        %v2634 = vadd.f32 %v2465, %v2633
        %2635 = vmatmul.bf16.gmra.mxu0 %v2148
        %v2636 = vpop.f32.mrf.mxu0
        %v2637 = vadd.f32 %v2468, %v2636
        %v2638 = vpop.f32.mrf.mxu0
        %v2639 = vadd.f32 %v2470, %v2638
        %2640 = vmatmul.bf16.gmra.mxu0 %v2150
        %v2641 = vpop.f32.mrf.mxu0
        %v2642 = vadd.f32 %v2473, %v2641
        %v2643 = vpop.f32.mrf.mxu0
        %v2644 = vadd.f32 %v2475, %v2643
        %2645 = vmatmul.bf16.gmra.mxu0 %v2152
        %v2646 = vpop.f32.mrf.mxu0
        %v2647 = vadd.f32 %v2478, %v2646
        %v2648 = vpop.f32.mrf.mxu0
        %v2649 = vadd.f32 %v2480, %v2648
        %2650 = vmatmul.bf16.gmra.mxu0 %v2154
        %v2651 = vpop.f32.mrf.mxu0
        %v2652 = vadd.f32 %v2483, %v2651
        %v2653 = vpop.f32.mrf.mxu0
        %v2654 = vadd.f32 %v2485, %v2653
        %2655 = vmatmul.bf16.gmra.mxu0 %v2156
        %v2656 = vpop.f32.mrf.mxu0
        %v2657 = vadd.f32 %v2488, %v2656
        %v2658 = vpop.f32.mrf.mxu0
        %v2659 = vadd.f32 %v2490, %v2658
        %2660 = vmatmul.bf16.gmra.mxu0 %v2158
        %v2661 = vpop.f32.mrf.mxu0
        %v2662 = vadd.f32 %v2493, %v2661
        %v2663 = vpop.f32.mrf.mxu0
        %v2664 = vadd.f32 %v2495, %v2663
        %2665 = vmatmul.bf16.gmra.mxu0 %v2160
        %v2666 = vpop.f32.mrf.mxu0
        %v2667 = vadd.f32 %v2498, %v2666
        %v2668 = vpop.f32.mrf.mxu0
        %v2669 = vadd.f32 %v2500, %v2668
        %2670 = vmatmul.bf16.gmra.mxu0 %v2162
        %v2671 = vpop.f32.mrf.mxu0
        %v2672 = vadd.f32 %v2503, %v2671
        %v2673 = vpop.f32.mrf.mxu0
        %v2674 = vadd.f32 %v2505, %v2673
        %2675 = vmatmul.bf16.gmra.mxu0 %v2164
        %v2676 = vpop.f32.mrf.mxu0
        %v2677 = vadd.f32 %v2508, %v2676
        %v2678 = vpop.f32.mrf.mxu0
        %v2679 = vadd.f32 %v2510, %v2678
        %2680 = vmatmul.bf16.gmra.mxu0 %v2166
        %v2681 = vpop.f32.mrf.mxu0
        %v2682 = vadd.f32 %v2513, %v2681
        %v2683 = vpop.f32.mrf.mxu0
        %v2684 = vadd.f32 %v2515, %v2683
        %2685 = vmatmul.bf16.gmra.mxu0 %v2168
        %v2686 = vpop.f32.mrf.mxu0
        %v2687 = vadd.f32 %v2518, %v2686
        %v2688 = vpop.f32.mrf.mxu0
        %v2689 = vadd.f32 %v2520, %v2688
        %2690 = vmatmul.bf16.gmra.mxu0 %v2170
        %v2691 = vpop.f32.mrf.mxu0
        %v2692 = vadd.f32 %v2523, %v2691
        %v2693 = vpop.f32.mrf.mxu0
        %v2694 = vadd.f32 %v2525, %v2693
        %2695 = vmatmul.bf16.gmra.mxu0 %v2172
        %v2696 = vpop.f32.mrf.mxu0
        %v2697 = vadd.f32 %v2528, %v2696
        %v2698 = vpop.f32.mrf.mxu0
        %v2699 = vadd.f32 %v2530, %v2698
        %2700 = vmatmul.bf16.gmra.mxu0 %v2174
        %v2701 = vpop.f32.mrf.mxu0
        %v2702 = vadd.f32 %v2533, %v2701
        %v2703 = vpop.f32.mrf.mxu0
        %v2704 = vadd.f32 %v2535, %v2703
        %2705 = vmatmul.bf16.gmra.mxu0 %v2176
        %v2706 = vpop.f32.mrf.mxu0
        %v2707 = vadd.f32 %v2538, %v2706
        %v2708 = vpop.f32.mrf.mxu0
        %v2709 = vadd.f32 %v2540, %v2708
        %2710 = vmatmul.bf16.gmra.mxu0 %v2178
        %v2711 = vpop.f32.mrf.mxu0
        %v2712 = vadd.f32 %v2543, %v2711
        %v2713 = vpop.f32.mrf.mxu0
        %v2714 = vadd.f32 %v2545, %v2713
        %2715 = vdwg.mxu0
        %2716 = vmatpush.bf16.msra.mxu0 %v2329
        %2717 = vmatpush.bf16.msra.mxu0 %v2327
        %2718 = vmatpush.bf16.msra.mxu0 %v2325
        %2719 = vmatpush.bf16.msra.mxu0 %v2323
        %2720 = vmatpush.bf16.msra.mxu0 %v2321
        %2721 = vmatpush.bf16.msra.mxu0 %v2319
        %2722 = vmatpush.bf16.msra.mxu0 %v2317
        %2723 = vmatpush.bf16.msra.mxu0 %v2315
        %2724 = vmatmul.bf16.gmra.mxu0 %v2115
        %v2725 = vpop.f32.mrf.mxu0
        %v2726 = vadd.f32 %v2215, %v2725
        %v2727 = vpop.f32.mrf.mxu0
        %v2728 = vadd.f32 %v2215, %v2727
        %2729 = vmatmul.bf16.gmra.mxu0 %v2117
        %v2730 = vpop.f32.mrf.mxu0
        %v2731 = vadd.f32 %v2215, %v2730
        %v2732 = vpop.f32.mrf.mxu0
        %v2733 = vadd.f32 %v2215, %v2732
        %2734 = vmatmul.bf16.gmra.mxu0 %v2119
        %v2735 = vpop.f32.mrf.mxu0
        %v2736 = vadd.f32 %v2215, %v2735
        %v2737 = vpop.f32.mrf.mxu0
        %v2738 = vadd.f32 %v2215, %v2737
        %2739 = vmatmul.bf16.gmra.mxu0 %v2121
        %v2740 = vpop.f32.mrf.mxu0
        %v2741 = vadd.f32 %v2215, %v2740
        %v2742 = vpop.f32.mrf.mxu0
        %v2743 = vadd.f32 %v2215, %v2742
        %2744 = vmatmul.bf16.gmra.mxu0 %v2123
        %v2745 = vpop.f32.mrf.mxu0
        %v2746 = vadd.f32 %v2215, %v2745
        %v2747 = vpop.f32.mrf.mxu0
        %v2748 = vadd.f32 %v2215, %v2747
        %2749 = vmatmul.bf16.gmra.mxu0 %v2125
        %v2750 = vpop.f32.mrf.mxu0
        %v2751 = vadd.f32 %v2215, %v2750
        %v2752 = vpop.f32.mrf.mxu0
        %v2753 = vadd.f32 %v2215, %v2752
        %2754 = vmatmul.bf16.gmra.mxu0 %v2127
        %v2755 = vpop.f32.mrf.mxu0
        %v2756 = vadd.f32 %v2215, %v2755
        %v2757 = vpop.f32.mrf.mxu0
        %v2758 = vadd.f32 %v2215, %v2757
        %2759 = vmatmul.bf16.gmra.mxu0 %v2129
        %v2760 = vpop.f32.mrf.mxu0
        %v2761 = vadd.f32 %v2215, %v2760
        %v2762 = vpop.f32.mrf.mxu0
        %v2763 = vadd.f32 %v2215, %v2762
        %2764 = vmatmul.bf16.gmra.mxu0 %v2131
        %v2765 = vpop.f32.mrf.mxu0
        %v2766 = vadd.f32 %v2215, %v2765
        %v2767 = vpop.f32.mrf.mxu0
        %v2768 = vadd.f32 %v2215, %v2767
        %2769 = vmatmul.bf16.gmra.mxu0 %v2133
        %v2770 = vpop.f32.mrf.mxu0
        %v2771 = vadd.f32 %v2215, %v2770
        %v2772 = vpop.f32.mrf.mxu0
        %v2773 = vadd.f32 %v2215, %v2772
        %2774 = vmatmul.bf16.gmra.mxu0 %v2135
        %v2775 = vpop.f32.mrf.mxu0
        %v2776 = vadd.f32 %v2215, %v2775
        %v2777 = vpop.f32.mrf.mxu0
        %v2778 = vadd.f32 %v2215, %v2777
        %2779 = vmatmul.bf16.gmra.mxu0 %v2137
        %v2780 = vpop.f32.mrf.mxu0
        %v2781 = vadd.f32 %v2215, %v2780
        %v2782 = vpop.f32.mrf.mxu0
        %v2783 = vadd.f32 %v2215, %v2782
        %2784 = vmatmul.bf16.gmra.mxu0 %v2139
        %v2785 = vpop.f32.mrf.mxu0
        %v2786 = vadd.f32 %v2215, %v2785
        %v2787 = vpop.f32.mrf.mxu0
        %v2788 = vadd.f32 %v2215, %v2787
        %2789 = vmatmul.bf16.gmra.mxu0 %v2141
        %v2790 = vpop.f32.mrf.mxu0
        %v2791 = vadd.f32 %v2215, %v2790
        %v2792 = vpop.f32.mrf.mxu0
        %v2793 = vadd.f32 %v2215, %v2792
        %2794 = vmatmul.bf16.gmra.mxu0 %v2143
        %v2795 = vpop.f32.mrf.mxu0
        %v2796 = vadd.f32 %v2215, %v2795
        %v2797 = vpop.f32.mrf.mxu0
        %v2798 = vadd.f32 %v2215, %v2797
        %2799 = vmatmul.bf16.gmra.mxu0 %v2145
        %v2800 = vpop.f32.mrf.mxu0
        %v2801 = vadd.f32 %v2215, %v2800
        %v2802 = vpop.f32.mrf.mxu0
        %v2803 = vadd.f32 %v2215, %v2802
        %2804 = vmatmul.bf16.gmra.mxu0 %v2147
        %v2805 = vpop.f32.mrf.mxu0
        %v2806 = vadd.f32 %v2215, %v2805
        %v2807 = vpop.f32.mrf.mxu0
        %v2808 = vadd.f32 %v2215, %v2807
        %2809 = vmatmul.bf16.gmra.mxu0 %v2149
        %v2810 = vpop.f32.mrf.mxu0
        %v2811 = vadd.f32 %v2215, %v2810
        %v2812 = vpop.f32.mrf.mxu0
        %v2813 = vadd.f32 %v2215, %v2812
        %2814 = vmatmul.bf16.gmra.mxu0 %v2151
        %v2815 = vpop.f32.mrf.mxu0
        %v2816 = vadd.f32 %v2215, %v2815
        %v2817 = vpop.f32.mrf.mxu0
        %v2818 = vadd.f32 %v2215, %v2817
        %2819 = vmatmul.bf16.gmra.mxu0 %v2153
        %v2820 = vpop.f32.mrf.mxu0
        %v2821 = vadd.f32 %v2215, %v2820
        %v2822 = vpop.f32.mrf.mxu0
        %v2823 = vadd.f32 %v2215, %v2822
        %2824 = vmatmul.bf16.gmra.mxu0 %v2155
        %v2825 = vpop.f32.mrf.mxu0
        %v2826 = vadd.f32 %v2215, %v2825
        %v2827 = vpop.f32.mrf.mxu0
        %v2828 = vadd.f32 %v2215, %v2827
        %2829 = vmatmul.bf16.gmra.mxu0 %v2157
        %v2830 = vpop.f32.mrf.mxu0
        %v2831 = vadd.f32 %v2215, %v2830
        %v2832 = vpop.f32.mrf.mxu0
        %v2833 = vadd.f32 %v2215, %v2832
        %2834 = vmatmul.bf16.gmra.mxu0 %v2159
        %v2835 = vpop.f32.mrf.mxu0
        %v2836 = vadd.f32 %v2215, %v2835
        %v2837 = vpop.f32.mrf.mxu0
        %v2838 = vadd.f32 %v2215, %v2837
        %2839 = vmatmul.bf16.gmra.mxu0 %v2161
        %v2840 = vpop.f32.mrf.mxu0
        %v2841 = vadd.f32 %v2215, %v2840
        %v2842 = vpop.f32.mrf.mxu0
        %v2843 = vadd.f32 %v2215, %v2842
        %2844 = vmatmul.bf16.gmra.mxu0 %v2163
        %v2845 = vpop.f32.mrf.mxu0
        %v2846 = vadd.f32 %v2215, %v2845
        %v2847 = vpop.f32.mrf.mxu0
        %v2848 = vadd.f32 %v2215, %v2847
        %2849 = vmatmul.bf16.gmra.mxu0 %v2165
        %v2850 = vpop.f32.mrf.mxu0
        %v2851 = vadd.f32 %v2215, %v2850
        %v2852 = vpop.f32.mrf.mxu0
        %v2853 = vadd.f32 %v2215, %v2852
        %2854 = vmatmul.bf16.gmra.mxu0 %v2167
        %v2855 = vpop.f32.mrf.mxu0
        %v2856 = vadd.f32 %v2215, %v2855
        %v2857 = vpop.f32.mrf.mxu0
        %v2858 = vadd.f32 %v2215, %v2857
        %2859 = vmatmul.bf16.gmra.mxu0 %v2169
        %v2860 = vpop.f32.mrf.mxu0
        %v2861 = vadd.f32 %v2215, %v2860
        %v2862 = vpop.f32.mrf.mxu0
        %v2863 = vadd.f32 %v2215, %v2862
        %2864 = vmatmul.bf16.gmra.mxu0 %v2171
        %v2865 = vpop.f32.mrf.mxu0
        %v2866 = vadd.f32 %v2215, %v2865
        %v2867 = vpop.f32.mrf.mxu0
        %v2868 = vadd.f32 %v2215, %v2867
        %2869 = vmatmul.bf16.gmra.mxu0 %v2173
        %v2870 = vpop.f32.mrf.mxu0
        %v2871 = vadd.f32 %v2215, %v2870
        %v2872 = vpop.f32.mrf.mxu0
        %v2873 = vadd.f32 %v2215, %v2872
        %2874 = vmatmul.bf16.gmra.mxu0 %v2175
        %v2875 = vpop.f32.mrf.mxu0
        %v2876 = vadd.f32 %v2215, %v2875
        %v2877 = vpop.f32.mrf.mxu0
        %v2878 = vadd.f32 %v2215, %v2877
        %2879 = vmatmul.bf16.gmra.mxu0 %v2177
        %v2880 = vpop.f32.mrf.mxu0
        %v2881 = vadd.f32 %v2215, %v2880
        %v2882 = vpop.f32.mrf.mxu0
        %v2883 = vadd.f32 %v2215, %v2882
        %2884 = vdwg.mxu0
        %2885 = vmatpush.bf16.msra.mxu0 %v2345
        %2886 = vmatpush.bf16.msra.mxu0 %v2343
        %2887 = vmatpush.bf16.msra.mxu0 %v2341
        %2888 = vmatpush.bf16.msra.mxu0 %v2339
        %2889 = vmatpush.bf16.msra.mxu0 %v2337
        %2890 = vmatpush.bf16.msra.mxu0 %v2335
        %2891 = vmatpush.bf16.msra.mxu0 %v2333
        %2892 = vmatpush.bf16.msra.mxu0 %v2331
        %2893 = vmatmul.bf16.gmra.mxu0 %v2116
        %v2894 = vpop.f32.mrf.mxu0
        %v2895 = vadd.f32 %v2726, %v2894
        %v2896 = vpop.f32.mrf.mxu0
        %v2897 = vadd.f32 %v2728, %v2896
        %2898 = vmatmul.bf16.gmra.mxu0 %v2118
        %v2899 = vpop.f32.mrf.mxu0
        %v2900 = vadd.f32 %v2731, %v2899
        %v2901 = vpop.f32.mrf.mxu0
        %v2902 = vadd.f32 %v2733, %v2901
        %2903 = vmatmul.bf16.gmra.mxu0 %v2120
        %v2904 = vpop.f32.mrf.mxu0
        %v2905 = vadd.f32 %v2736, %v2904
        %v2906 = vpop.f32.mrf.mxu0
        %v2907 = vadd.f32 %v2738, %v2906
        %2908 = vmatmul.bf16.gmra.mxu0 %v2122
        %v2909 = vpop.f32.mrf.mxu0
        %v2910 = vadd.f32 %v2741, %v2909
        %v2911 = vpop.f32.mrf.mxu0
        %v2912 = vadd.f32 %v2743, %v2911
        %2913 = vmatmul.bf16.gmra.mxu0 %v2124
        %v2914 = vpop.f32.mrf.mxu0
        %v2915 = vadd.f32 %v2746, %v2914
        %v2916 = vpop.f32.mrf.mxu0
        %v2917 = vadd.f32 %v2748, %v2916
        %2918 = vmatmul.bf16.gmra.mxu0 %v2126
        %v2919 = vpop.f32.mrf.mxu0
        %v2920 = vadd.f32 %v2751, %v2919
        %v2921 = vpop.f32.mrf.mxu0
        %v2922 = vadd.f32 %v2753, %v2921
        %2923 = vmatmul.bf16.gmra.mxu0 %v2128
        %v2924 = vpop.f32.mrf.mxu0
        %v2925 = vadd.f32 %v2756, %v2924
        %v2926 = vpop.f32.mrf.mxu0
        %v2927 = vadd.f32 %v2758, %v2926
        %2928 = vmatmul.bf16.gmra.mxu0 %v2130
        %v2929 = vpop.f32.mrf.mxu0
        %v2930 = vadd.f32 %v2761, %v2929
        %v2931 = vpop.f32.mrf.mxu0
        %v2932 = vadd.f32 %v2763, %v2931
        %2933 = vmatmul.bf16.gmra.mxu0 %v2132
        %v2934 = vpop.f32.mrf.mxu0
        %v2935 = vadd.f32 %v2766, %v2934
        %v2936 = vpop.f32.mrf.mxu0
        %v2937 = vadd.f32 %v2768, %v2936
        %2938 = vmatmul.bf16.gmra.mxu0 %v2134
        %v2939 = vpop.f32.mrf.mxu0
        %v2940 = vadd.f32 %v2771, %v2939
        %v2941 = vpop.f32.mrf.mxu0
        %v2942 = vadd.f32 %v2773, %v2941
        %2943 = vmatmul.bf16.gmra.mxu0 %v2136
        %v2944 = vpop.f32.mrf.mxu0
        %v2945 = vadd.f32 %v2776, %v2944
        %v2946 = vpop.f32.mrf.mxu0
        %v2947 = vadd.f32 %v2778, %v2946
        %2948 = vmatmul.bf16.gmra.mxu0 %v2138
        %v2949 = vpop.f32.mrf.mxu0
        %v2950 = vadd.f32 %v2781, %v2949
        %v2951 = vpop.f32.mrf.mxu0
        %v2952 = vadd.f32 %v2783, %v2951
        %2953 = vmatmul.bf16.gmra.mxu0 %v2140
        %v2954 = vpop.f32.mrf.mxu0
        %v2955 = vadd.f32 %v2786, %v2954
        %v2956 = vpop.f32.mrf.mxu0
        %v2957 = vadd.f32 %v2788, %v2956
        %2958 = vmatmul.bf16.gmra.mxu0 %v2142
        %v2959 = vpop.f32.mrf.mxu0
        %v2960 = vadd.f32 %v2791, %v2959
        %v2961 = vpop.f32.mrf.mxu0
        %v2962 = vadd.f32 %v2793, %v2961
        %2963 = vmatmul.bf16.gmra.mxu0 %v2144
        %v2964 = vpop.f32.mrf.mxu0
        %v2965 = vadd.f32 %v2796, %v2964
        %v2966 = vpop.f32.mrf.mxu0
        %v2967 = vadd.f32 %v2798, %v2966
        %2968 = vmatmul.bf16.gmra.mxu0 %v2146
        %v2969 = vpop.f32.mrf.mxu0
        %v2970 = vadd.f32 %v2801, %v2969
        %v2971 = vpop.f32.mrf.mxu0
        %v2972 = vadd.f32 %v2803, %v2971
        %2973 = vmatmul.bf16.gmra.mxu0 %v2148
        %v2974 = vpop.f32.mrf.mxu0
        %v2975 = vadd.f32 %v2806, %v2974
        %v2976 = vpop.f32.mrf.mxu0
        %v2977 = vadd.f32 %v2808, %v2976
        %2978 = vmatmul.bf16.gmra.mxu0 %v2150
        %v2979 = vpop.f32.mrf.mxu0
        %v2980 = vadd.f32 %v2811, %v2979
        %v2981 = vpop.f32.mrf.mxu0
        %v2982 = vadd.f32 %v2813, %v2981
        %2983 = vmatmul.bf16.gmra.mxu0 %v2152
        %v2984 = vpop.f32.mrf.mxu0
        %v2985 = vadd.f32 %v2816, %v2984
        %v2986 = vpop.f32.mrf.mxu0
        %v2987 = vadd.f32 %v2818, %v2986
        %2988 = vmatmul.bf16.gmra.mxu0 %v2154
        %v2989 = vpop.f32.mrf.mxu0
        %v2990 = vadd.f32 %v2821, %v2989
        %v2991 = vpop.f32.mrf.mxu0
        %v2992 = vadd.f32 %v2823, %v2991
        %2993 = vmatmul.bf16.gmra.mxu0 %v2156
        %v2994 = vpop.f32.mrf.mxu0
        %v2995 = vadd.f32 %v2826, %v2994
        %v2996 = vpop.f32.mrf.mxu0
        %v2997 = vadd.f32 %v2828, %v2996
        %2998 = vmatmul.bf16.gmra.mxu0 %v2158
        %v2999 = vpop.f32.mrf.mxu0
        %v3000 = vadd.f32 %v2831, %v2999
        %v3001 = vpop.f32.mrf.mxu0
        %v3002 = vadd.f32 %v2833, %v3001
        %3003 = vmatmul.bf16.gmra.mxu0 %v2160
        %v3004 = vpop.f32.mrf.mxu0
        %v3005 = vadd.f32 %v2836, %v3004
        %v3006 = vpop.f32.mrf.mxu0
        %v3007 = vadd.f32 %v2838, %v3006
        %3008 = vmatmul.bf16.gmra.mxu0 %v2162
        %v3009 = vpop.f32.mrf.mxu0
        %v3010 = vadd.f32 %v2841, %v3009
        %v3011 = vpop.f32.mrf.mxu0
        %v3012 = vadd.f32 %v2843, %v3011
        %3013 = vmatmul.bf16.gmra.mxu0 %v2164
        %v3014 = vpop.f32.mrf.mxu0
        %v3015 = vadd.f32 %v2846, %v3014
        %v3016 = vpop.f32.mrf.mxu0
        %v3017 = vadd.f32 %v2848, %v3016
        %3018 = vmatmul.bf16.gmra.mxu0 %v2166
        %v3019 = vpop.f32.mrf.mxu0
        %v3020 = vadd.f32 %v2851, %v3019
        %v3021 = vpop.f32.mrf.mxu0
        %v3022 = vadd.f32 %v2853, %v3021
        %3023 = vmatmul.bf16.gmra.mxu0 %v2168
        %v3024 = vpop.f32.mrf.mxu0
        %v3025 = vadd.f32 %v2856, %v3024
        %v3026 = vpop.f32.mrf.mxu0
        %v3027 = vadd.f32 %v2858, %v3026
        %3028 = vmatmul.bf16.gmra.mxu0 %v2170
        %v3029 = vpop.f32.mrf.mxu0
        %v3030 = vadd.f32 %v2861, %v3029
        %v3031 = vpop.f32.mrf.mxu0
        %v3032 = vadd.f32 %v2863, %v3031
        %3033 = vmatmul.bf16.gmra.mxu0 %v2172
        %v3034 = vpop.f32.mrf.mxu0
        %v3035 = vadd.f32 %v2866, %v3034
        %v3036 = vpop.f32.mrf.mxu0
        %v3037 = vadd.f32 %v2868, %v3036
        %3038 = vmatmul.bf16.gmra.mxu0 %v2174
        %v3039 = vpop.f32.mrf.mxu0
        %v3040 = vadd.f32 %v2871, %v3039
        %v3041 = vpop.f32.mrf.mxu0
        %v3042 = vadd.f32 %v2873, %v3041
        %3043 = vmatmul.bf16.gmra.mxu0 %v2176
        %v3044 = vpop.f32.mrf.mxu0
        %v3045 = vadd.f32 %v2876, %v3044
        %v3046 = vpop.f32.mrf.mxu0
        %v3047 = vadd.f32 %v2878, %v3046
        %3048 = vmatmul.bf16.gmra.mxu0 %v2178
        %v3049 = vpop.f32.mrf.mxu0
        %v3050 = vadd.f32 %v2881, %v3049
        %v3051 = vpop.f32.mrf.mxu0
        %v3052 = vadd.f32 %v2883, %v3051
        %3053 = vdwg.mxu0
        %v3054 = vmax.f32 %v2557, 0.0
        %v3055 = vmax.f32 %v2895, 0.0
        %v3056 = vmax.f32 %v2559, 0.0
        %v3057 = vmax.f32 %v2897, 0.0
        %v3058 = vmax.f32 %v2562, 0.0
        %v3059 = vmax.f32 %v2900, 0.0
        %v3060 = vmax.f32 %v2564, 0.0
        %v3061 = vmax.f32 %v2902, 0.0
        %v3062 = vmax.f32 %v2567, 0.0
        %v3063 = vmax.f32 %v2905, 0.0
        %v3064 = vmax.f32 %v2569, 0.0
        %v3065 = vmax.f32 %v2907, 0.0
        %v3066 = vmax.f32 %v2572, 0.0
        %v3067 = vmax.f32 %v2910, 0.0
        %v3068 = vmax.f32 %v2574, 0.0
        %v3069 = vmax.f32 %v2912, 0.0
        %v3070 = vmax.f32 %v2577, 0.0
        %v3071 = vmax.f32 %v2915, 0.0
        %v3072 = vmax.f32 %v2579, 0.0
        %v3073 = vmax.f32 %v2917, 0.0
        %v3074 = vmax.f32 %v2582, 0.0
        %v3075 = vmax.f32 %v2920, 0.0
        %v3076 = vmax.f32 %v2584, 0.0
        %v3077 = vmax.f32 %v2922, 0.0
        %v3078 = vmax.f32 %v2587, 0.0
        %v3079 = vmax.f32 %v2925, 0.0
        %v3080 = vmax.f32 %v2589, 0.0
        %v3081 = vmax.f32 %v2927, 0.0
        %v3082 = vmax.f32 %v2592, 0.0
        %v3083 = vmax.f32 %v2930, 0.0
        %v3084 = vmax.f32 %v2594, 0.0
        %v3085 = vmax.f32 %v2932, 0.0
        %v3086 = vmax.f32 %v2597, 0.0
        %v3087 = vmax.f32 %v2935, 0.0
        %v3088 = vmax.f32 %v2599, 0.0
        %v3089 = vmax.f32 %v2937, 0.0
        %v3090 = vmax.f32 %v2602, 0.0
        %v3091 = vmax.f32 %v2940, 0.0
        %v3092 = vmax.f32 %v2604, 0.0
        %v3093 = vmax.f32 %v2942, 0.0
        %v3094 = vmax.f32 %v2607, 0.0
        %v3095 = vmax.f32 %v2945, 0.0
        %v3096 = vmax.f32 %v2609, 0.0
        %v3097 = vmax.f32 %v2947, 0.0
        %v3098 = vmax.f32 %v2612, 0.0
        %v3099 = vmax.f32 %v2950, 0.0
        %v3100 = vmax.f32 %v2614, 0.0
        %v3101 = vmax.f32 %v2952, 0.0
        %v3102 = vmax.f32 %v2617, 0.0
        %v3103 = vmax.f32 %v2955, 0.0
        %v3104 = vmax.f32 %v2619, 0.0
        %v3105 = vmax.f32 %v2957, 0.0
        %v3106 = vmax.f32 %v2622, 0.0
        %v3107 = vmax.f32 %v2960, 0.0
        %v3108 = vmax.f32 %v2624, 0.0
        %v3109 = vmax.f32 %v2962, 0.0
        %v3110 = vmax.f32 %v2627, 0.0
        %v3111 = vmax.f32 %v2965, 0.0
        %v3112 = vmax.f32 %v2629, 0.0
        %v3113 = vmax.f32 %v2967, 0.0
        %v3114 = vmax.f32 %v2632, 0.0
        %v3115 = vmax.f32 %v2970, 0.0
        %v3116 = vmax.f32 %v2634, 0.0
        %v3117 = vmax.f32 %v2972, 0.0
        %v3118 = vmax.f32 %v2637, 0.0
        %v3119 = vmax.f32 %v2975, 0.0
        %v3120 = vmax.f32 %v2639, 0.0
        %v3121 = vmax.f32 %v2977, 0.0
        %v3122 = vmax.f32 %v2642, 0.0
        %v3123 = vmax.f32 %v2980, 0.0
        %v3124 = vmax.f32 %v2644, 0.0
        %v3125 = vmax.f32 %v2982, 0.0
        %v3126 = vmax.f32 %v2647, 0.0
        %v3127 = vmax.f32 %v2985, 0.0
        %v3128 = vmax.f32 %v2649, 0.0
        %v3129 = vmax.f32 %v2987, 0.0
        %v3130 = vmax.f32 %v2652, 0.0
        %v3131 = vmax.f32 %v2990, 0.0
        %v3132 = vmax.f32 %v2654, 0.0
        %v3133 = vmax.f32 %v2992, 0.0
        %v3134 = vmax.f32 %v2657, 0.0
        %v3135 = vmax.f32 %v2995, 0.0
        %v3136 = vmax.f32 %v2659, 0.0
        %v3137 = vmax.f32 %v2997, 0.0
        %v3138 = vmax.f32 %v2662, 0.0
        %v3139 = vmax.f32 %v3000, 0.0
        %v3140 = vmax.f32 %v2664, 0.0
        %v3141 = vmax.f32 %v3002, 0.0
        %v3142 = vmax.f32 %v2667, 0.0
        %v3143 = vmax.f32 %v3005, 0.0
        %v3144 = vmax.f32 %v2669, 0.0
        %v3145 = vmax.f32 %v3007, 0.0
        %v3146 = vmax.f32 %v2672, 0.0
        %v3147 = vmax.f32 %v3010, 0.0
        %v3148 = vmax.f32 %v2674, 0.0
        %v3149 = vmax.f32 %v3012, 0.0
        %v3150 = vmax.f32 %v2677, 0.0
        %v3151 = vmax.f32 %v3015, 0.0
        %v3152 = vmax.f32 %v2679, 0.0
        %v3153 = vmax.f32 %v3017, 0.0
        %v3154 = vmax.f32 %v2682, 0.0
        %v3155 = vmax.f32 %v3020, 0.0
        %v3156 = vmax.f32 %v2684, 0.0
        %v3157 = vmax.f32 %v3022, 0.0
        %v3158 = vmax.f32 %v2687, 0.0
        %v3159 = vmax.f32 %v3025, 0.0
        %v3160 = vmax.f32 %v2689, 0.0
        %v3161 = vmax.f32 %v3027, 0.0
        %v3162 = vmax.f32 %v2692, 0.0
        %v3163 = vmax.f32 %v3030, 0.0
        %v3164 = vmax.f32 %v2694, 0.0
        %v3165 = vmax.f32 %v3032, 0.0
        %v3166 = vmax.f32 %v2697, 0.0
        %v3167 = vmax.f32 %v3035, 0.0
        %v3168 = vmax.f32 %v2699, 0.0
        %v3169 = vmax.f32 %v3037, 0.0
        %v3170 = vmax.f32 %v2702, 0.0
        %v3171 = vmax.f32 %v3040, 0.0
        %v3172 = vmax.f32 %v2704, 0.0
        %v3173 = vmax.f32 %v3042, 0.0
        %v3174 = vmax.f32 %v2707, 0.0
        %v3175 = vmax.f32 %v3045, 0.0
        %v3176 = vmax.f32 %v2709, 0.0
        %v3177 = vmax.f32 %v3047, 0.0
        %v3178 = vmax.f32 %v2712, 0.0
        %v3179 = vmax.f32 %v3050, 0.0
        %v3180 = vmax.f32 %v2714, 0.0
        %v3181 = vmax.f32 %v3052, 0.0
        %v3182 = vpack.c.bf16 %v3056, %v3054
        %v3183 = vpack.c.bf16 %v3057, %v3055
        %v3184 = vpack.c.bf16 %v3060, %v3058
        %v3185 = vpack.c.bf16 %v3061, %v3059
        %v3186 = vpack.c.bf16 %v3064, %v3062
        %v3187 = vpack.c.bf16 %v3065, %v3063
        %v3188 = vpack.c.bf16 %v3068, %v3066
        %v3189 = vpack.c.bf16 %v3069, %v3067
        %v3190 = vpack.c.bf16 %v3072, %v3070
        %v3191 = vpack.c.bf16 %v3073, %v3071
        %v3192 = vpack.c.bf16 %v3076, %v3074
        %v3193 = vpack.c.bf16 %v3077, %v3075
        %v3194 = vpack.c.bf16 %v3080, %v3078
        %v3195 = vpack.c.bf16 %v3081, %v3079
        %v3196 = vpack.c.bf16 %v3084, %v3082
        %v3197 = vpack.c.bf16 %v3085, %v3083
        %v3198 = vpack.c.bf16 %v3088, %v3086
        %v3199 = vpack.c.bf16 %v3089, %v3087
        %v3200 = vpack.c.bf16 %v3092, %v3090
        %v3201 = vpack.c.bf16 %v3093, %v3091
        %v3202 = vpack.c.bf16 %v3096, %v3094
        %v3203 = vpack.c.bf16 %v3097, %v3095
        %v3204 = vpack.c.bf16 %v3100, %v3098
        %v3205 = vpack.c.bf16 %v3101, %v3099
        %v3206 = vpack.c.bf16 %v3104, %v3102
        %v3207 = vpack.c.bf16 %v3105, %v3103
        %v3208 = vpack.c.bf16 %v3108, %v3106
        %v3209 = vpack.c.bf16 %v3109, %v3107
        %v3210 = vpack.c.bf16 %v3112, %v3110
        %v3211 = vpack.c.bf16 %v3113, %v3111
        %v3212 = vpack.c.bf16 %v3116, %v3114
        %v3213 = vpack.c.bf16 %v3117, %v3115
        %v3214 = vpack.c.bf16 %v3120, %v3118
        %v3215 = vpack.c.bf16 %v3121, %v3119
        %v3216 = vpack.c.bf16 %v3124, %v3122
        %v3217 = vpack.c.bf16 %v3125, %v3123
        %v3218 = vpack.c.bf16 %v3128, %v3126
        %v3219 = vpack.c.bf16 %v3129, %v3127
        %v3220 = vpack.c.bf16 %v3132, %v3130
        %v3221 = vpack.c.bf16 %v3133, %v3131
        %v3222 = vpack.c.bf16 %v3136, %v3134
        %v3223 = vpack.c.bf16 %v3137, %v3135
        %v3224 = vpack.c.bf16 %v3140, %v3138
        %v3225 = vpack.c.bf16 %v3141, %v3139
        %v3226 = vpack.c.bf16 %v3144, %v3142
        %v3227 = vpack.c.bf16 %v3145, %v3143
        %v3228 = vpack.c.bf16 %v3148, %v3146
        %v3229 = vpack.c.bf16 %v3149, %v3147
        %v3230 = vpack.c.bf16 %v3152, %v3150
        %v3231 = vpack.c.bf16 %v3153, %v3151
        %v3232 = vpack.c.bf16 %v3156, %v3154
        %v3233 = vpack.c.bf16 %v3157, %v3155
        %v3234 = vpack.c.bf16 %v3160, %v3158
        %v3235 = vpack.c.bf16 %v3161, %v3159
        %v3236 = vpack.c.bf16 %v3164, %v3162
        %v3237 = vpack.c.bf16 %v3165, %v3163
        %v3238 = vpack.c.bf16 %v3168, %v3166
        %v3239 = vpack.c.bf16 %v3169, %v3167
        %v3240 = vpack.c.bf16 %v3172, %v3170
        %v3241 = vpack.c.bf16 %v3173, %v3171
        %v3242 = vpack.c.bf16 %v3176, %v3174
        %v3243 = vpack.c.bf16 %v3177, %v3175
        %v3244 = vpack.c.bf16 %v3180, %v3178
        %v3245 = vpack.c.bf16 %v3181, %v3179
        %s3246 = scalar_lea.vmem [#allocation2], 256
        %v3247 = vld [vmem:[%s3246] sm:$0xff]
        %v3248 = vld [vmem:[%s3246 + $0x8] sm:$0xff]
        %v3249 = vld [vmem:[%s3246 + $0x10] sm:$0xff]
        %v3250 = vld [vmem:[%s3246 + $0x18] sm:$0xff]
        %v3251 = vld [vmem:[%s3246 + $0x20] sm:$0xff]
        %v3252 = vld [vmem:[%s3246 + $0x28] sm:$0xff]
        %v3253 = vld [vmem:[%s3246 + $0x30] sm:$0xff]
        %v3254 = vld [vmem:[%s3246 + $0x38] sm:$0xff]
        %v3255 = vld [vmem:[%s3246 + $0x40] sm:$0xff]
        %v3256 = vld [vmem:[%s3246 + $0x48] sm:$0xff]
        %v3257 = vld [vmem:[%s3246 + $0x50] sm:$0xff]
        %v3258 = vld [vmem:[%s3246 + $0x58] sm:$0xff]
        %v3259 = vld [vmem:[%s3246 + $0x60] sm:$0xff]
        %v3260 = vld [vmem:[%s3246 + $0x68] sm:$0xff]
        %v3261 = vld [vmem:[%s3246 + $0x70] sm:$0xff]
        %v3262 = vld [vmem:[%s3246 + $0x78] sm:$0xff]
        %v3263 = vld [vmem:[%s3246 + $0x80] sm:$0xff]
        %v3264 = vld [vmem:[%s3246 + $0x88] sm:$0xff]
        %v3265 = vld [vmem:[%s3246 + $0x90] sm:$0xff]
        %v3266 = vld [vmem:[%s3246 + $0x98] sm:$0xff]
        %v3267 = vld [vmem:[%s3246 + $0xa0] sm:$0xff]
        %v3268 = vld [vmem:[%s3246 + $0xa8] sm:$0xff]
        %v3269 = vld [vmem:[%s3246 + $0xb0] sm:$0xff]
        %v3270 = vld [vmem:[%s3246 + $0xb8] sm:$0xff]
        %v3271 = vld [vmem:[%s3246 + $0xc0] sm:$0xff]
        %v3272 = vld [vmem:[%s3246 + $0xc8] sm:$0xff]
        %v3273 = vld [vmem:[%s3246 + $0xd0] sm:$0xff]
        %v3274 = vld [vmem:[%s3246 + $0xd8] sm:$0xff]
        %v3275 = vld [vmem:[%s3246 + $0xe0] sm:$0xff]
        %v3276 = vld [vmem:[%s3246 + $0xe8] sm:$0xff]
        %v3277 = vld [vmem:[%s3246 + $0xf0] sm:$0xff]
        %v3278 = vld [vmem:[%s3246 + $0xf8] sm:$0xff]
        %s3279 = scalar_lea.vmem %s4, 2
        %v3280 = vld [vmem:[%s3279] ss:$8 sm:$0x3]
        %v3282 = vperm.slane %v3280, 0
        %v3283 = vperm.slane %v3280, 1
        %v3318 = vunpack.c.l.b16 %v3247
        %v3319 = vunpack.c.h.b16 %v3247
        %v3320 = vunpack.c.l.b16 %v3248
        %v3321 = vunpack.c.h.b16 %v3248
        %v3322 = vunpack.c.l.b16 %v3249
        %v3323 = vunpack.c.h.b16 %v3249
        %v3324 = vunpack.c.l.b16 %v3250
        %v3325 = vunpack.c.h.b16 %v3250
        %v3326 = vunpack.c.l.b16 %v3251
        %v3327 = vunpack.c.h.b16 %v3251
        %v3328 = vunpack.c.l.b16 %v3252
        %v3329 = vunpack.c.h.b16 %v3252
        %v3330 = vunpack.c.l.b16 %v3253
        %v3331 = vunpack.c.h.b16 %v3253
        %v3332 = vunpack.c.l.b16 %v3254
        %v3333 = vunpack.c.h.b16 %v3254
        %v3334 = vunpack.c.l.b16 %v3255
        %v3335 = vunpack.c.h.b16 %v3255
        %v3336 = vunpack.c.l.b16 %v3256
        %v3337 = vunpack.c.h.b16 %v3256
        %v3338 = vunpack.c.l.b16 %v3257
        %v3339 = vunpack.c.h.b16 %v3257
        %v3340 = vunpack.c.l.b16 %v3258
        %v3341 = vunpack.c.h.b16 %v3258
        %v3342 = vunpack.c.l.b16 %v3259
        %v3343 = vunpack.c.h.b16 %v3259
        %v3344 = vunpack.c.l.b16 %v3260
        %v3345 = vunpack.c.h.b16 %v3260
        %v3346 = vunpack.c.l.b16 %v3261
        %v3347 = vunpack.c.h.b16 %v3261
        %v3348 = vunpack.c.l.b16 %v3262
        %v3349 = vunpack.c.h.b16 %v3262
        %v3350 = vunpack.c.l.b16 %v3263
        %v3351 = vunpack.c.h.b16 %v3263
        %v3352 = vunpack.c.l.b16 %v3264
        %v3353 = vunpack.c.h.b16 %v3264
        %v3354 = vunpack.c.l.b16 %v3265
        %v3355 = vunpack.c.h.b16 %v3265
        %v3356 = vunpack.c.l.b16 %v3266
        %v3357 = vunpack.c.h.b16 %v3266
        %v3358 = vunpack.c.l.b16 %v3267
        %v3359 = vunpack.c.h.b16 %v3267
        %v3360 = vunpack.c.l.b16 %v3268
        %v3361 = vunpack.c.h.b16 %v3268
        %v3362 = vunpack.c.l.b16 %v3269
        %v3363 = vunpack.c.h.b16 %v3269
        %v3364 = vunpack.c.l.b16 %v3270
        %v3365 = vunpack.c.h.b16 %v3270
        %v3366 = vunpack.c.l.b16 %v3271
        %v3367 = vunpack.c.h.b16 %v3271
        %v3368 = vunpack.c.l.b16 %v3272
        %v3369 = vunpack.c.h.b16 %v3272
        %v3370 = vunpack.c.l.b16 %v3273
        %v3371 = vunpack.c.h.b16 %v3273
        %v3372 = vunpack.c.l.b16 %v3274
        %v3373 = vunpack.c.h.b16 %v3274
        %v3374 = vunpack.c.l.b16 %v3275
        %v3375 = vunpack.c.h.b16 %v3275
        %v3376 = vunpack.c.l.b16 %v3276
        %v3377 = vunpack.c.h.b16 %v3276
        %v3378 = vunpack.c.l.b16 %v3277
        %v3379 = vunpack.c.h.b16 %v3277
        %v3380 = vunpack.c.l.b16 %v3278
        %v3381 = vunpack.c.h.b16 %v3278
        %v3382 = vpack.c.b16 %v3320, %v3318
        %v3383 = vpack.c.b16 %v3321, %v3319
        %v3384 = vpack.c.b16 %v3324, %v3322
        %v3385 = vpack.c.b16 %v3325, %v3323
        %v3386 = vpack.c.b16 %v3328, %v3326
        %v3387 = vpack.c.b16 %v3329, %v3327
        %v3388 = vpack.c.b16 %v3332, %v3330
        %v3389 = vpack.c.b16 %v3333, %v3331
        %v3390 = vpack.c.b16 %v3336, %v3334
        %v3391 = vpack.c.b16 %v3337, %v3335
        %v3392 = vpack.c.b16 %v3340, %v3338
        %v3393 = vpack.c.b16 %v3341, %v3339
        %v3394 = vpack.c.b16 %v3344, %v3342
        %v3395 = vpack.c.b16 %v3345, %v3343
        %v3396 = vpack.c.b16 %v3348, %v3346
        %v3397 = vpack.c.b16 %v3349, %v3347
        %v3398 = vpack.c.b16 %v3352, %v3350
        %v3399 = vpack.c.b16 %v3353, %v3351
        %v3400 = vpack.c.b16 %v3356, %v3354
        %v3401 = vpack.c.b16 %v3357, %v3355
        %v3402 = vpack.c.b16 %v3360, %v3358
        %v3403 = vpack.c.b16 %v3361, %v3359
        %v3404 = vpack.c.b16 %v3364, %v3362
        %v3405 = vpack.c.b16 %v3365, %v3363
        %v3406 = vpack.c.b16 %v3368, %v3366
        %v3407 = vpack.c.b16 %v3369, %v3367
        %v3408 = vpack.c.b16 %v3372, %v3370
        %v3409 = vpack.c.b16 %v3373, %v3371
        %v3410 = vpack.c.b16 %v3376, %v3374
        %v3411 = vpack.c.b16 %v3377, %v3375
        %v3412 = vpack.c.b16 %v3380, %v3378
        %v3413 = vpack.c.b16 %v3381, %v3379
        %3446 = vmatpush.bf16.msra.mxu0 %v3396
        %3447 = vmatpush.bf16.msra.mxu0 %v3394
        %3448 = vmatpush.bf16.msra.mxu0 %v3392
        %3449 = vmatpush.bf16.msra.mxu0 %v3390
        %3450 = vmatpush.bf16.msra.mxu0 %v3388
        %3451 = vmatpush.bf16.msra.mxu0 %v3386
        %3452 = vmatpush.bf16.msra.mxu0 %v3384
        %3453 = vmatpush.bf16.msra.mxu0 %v3382
        %3454 = vmatmul.bf16.gmra.mxu0 %v3182
        %v3455 = vpop.f32.mrf.mxu0
        %v3456 = vadd.f32 %v3282, %v3455
        %v3457 = vpop.f32.mrf.mxu0
        %v3458 = vadd.f32 %v3282, %v3457
        %3459 = vmatmul.bf16.gmra.mxu0 %v3184
        %v3460 = vpop.f32.mrf.mxu0
        %v3461 = vadd.f32 %v3282, %v3460
        %v3462 = vpop.f32.mrf.mxu0
        %v3463 = vadd.f32 %v3282, %v3462
        %3464 = vmatmul.bf16.gmra.mxu0 %v3186
        %v3465 = vpop.f32.mrf.mxu0
        %v3466 = vadd.f32 %v3282, %v3465
        %v3467 = vpop.f32.mrf.mxu0
        %v3468 = vadd.f32 %v3282, %v3467
        %3469 = vmatmul.bf16.gmra.mxu0 %v3188
        %v3470 = vpop.f32.mrf.mxu0
        %v3471 = vadd.f32 %v3282, %v3470
        %v3472 = vpop.f32.mrf.mxu0
        %v3473 = vadd.f32 %v3282, %v3472
        %3474 = vmatmul.bf16.gmra.mxu0 %v3190
        %v3475 = vpop.f32.mrf.mxu0
        %v3476 = vadd.f32 %v3282, %v3475
        %v3477 = vpop.f32.mrf.mxu0
        %v3478 = vadd.f32 %v3282, %v3477
        %3479 = vmatmul.bf16.gmra.mxu0 %v3192
        %v3480 = vpop.f32.mrf.mxu0
        %v3481 = vadd.f32 %v3282, %v3480
        %v3482 = vpop.f32.mrf.mxu0
        %v3483 = vadd.f32 %v3282, %v3482
        %3484 = vmatmul.bf16.gmra.mxu0 %v3194
        %v3485 = vpop.f32.mrf.mxu0
        %v3486 = vadd.f32 %v3282, %v3485
        %v3487 = vpop.f32.mrf.mxu0
        %v3488 = vadd.f32 %v3282, %v3487
        %3489 = vmatmul.bf16.gmra.mxu0 %v3196
        %v3490 = vpop.f32.mrf.mxu0
        %v3491 = vadd.f32 %v3282, %v3490
        %v3492 = vpop.f32.mrf.mxu0
        %v3493 = vadd.f32 %v3282, %v3492
        %3494 = vmatmul.bf16.gmra.mxu0 %v3198
        %v3495 = vpop.f32.mrf.mxu0
        %v3496 = vadd.f32 %v3282, %v3495
        %v3497 = vpop.f32.mrf.mxu0
        %v3498 = vadd.f32 %v3282, %v3497
        %3499 = vmatmul.bf16.gmra.mxu0 %v3200
        %v3500 = vpop.f32.mrf.mxu0
        %v3501 = vadd.f32 %v3282, %v3500
        %v3502 = vpop.f32.mrf.mxu0
        %v3503 = vadd.f32 %v3282, %v3502
        %3504 = vmatmul.bf16.gmra.mxu0 %v3202
        %v3505 = vpop.f32.mrf.mxu0
        %v3506 = vadd.f32 %v3282, %v3505
        %v3507 = vpop.f32.mrf.mxu0
        %v3508 = vadd.f32 %v3282, %v3507
        %3509 = vmatmul.bf16.gmra.mxu0 %v3204
        %v3510 = vpop.f32.mrf.mxu0
        %v3511 = vadd.f32 %v3282, %v3510
        %v3512 = vpop.f32.mrf.mxu0
        %v3513 = vadd.f32 %v3282, %v3512
        %3514 = vmatmul.bf16.gmra.mxu0 %v3206
        %v3515 = vpop.f32.mrf.mxu0
        %v3516 = vadd.f32 %v3282, %v3515
        %v3517 = vpop.f32.mrf.mxu0
        %v3518 = vadd.f32 %v3282, %v3517
        %3519 = vmatmul.bf16.gmra.mxu0 %v3208
        %v3520 = vpop.f32.mrf.mxu0
        %v3521 = vadd.f32 %v3282, %v3520
        %v3522 = vpop.f32.mrf.mxu0
        %v3523 = vadd.f32 %v3282, %v3522
        %3524 = vmatmul.bf16.gmra.mxu0 %v3210
        %v3525 = vpop.f32.mrf.mxu0
        %v3526 = vadd.f32 %v3282, %v3525
        %v3527 = vpop.f32.mrf.mxu0
        %v3528 = vadd.f32 %v3282, %v3527
        %3529 = vmatmul.bf16.gmra.mxu0 %v3212
        %v3530 = vpop.f32.mrf.mxu0
        %v3531 = vadd.f32 %v3282, %v3530
        %v3532 = vpop.f32.mrf.mxu0
        %v3533 = vadd.f32 %v3282, %v3532
        %3534 = vmatmul.bf16.gmra.mxu0 %v3214
        %v3535 = vpop.f32.mrf.mxu0
        %v3536 = vadd.f32 %v3282, %v3535
        %v3537 = vpop.f32.mrf.mxu0
        %v3538 = vadd.f32 %v3282, %v3537
        %3539 = vmatmul.bf16.gmra.mxu0 %v3216
        %v3540 = vpop.f32.mrf.mxu0
        %v3541 = vadd.f32 %v3282, %v3540
        %v3542 = vpop.f32.mrf.mxu0
        %v3543 = vadd.f32 %v3282, %v3542
        %3544 = vmatmul.bf16.gmra.mxu0 %v3218
        %v3545 = vpop.f32.mrf.mxu0
        %v3546 = vadd.f32 %v3282, %v3545
        %v3547 = vpop.f32.mrf.mxu0
        %v3548 = vadd.f32 %v3282, %v3547
        %3549 = vmatmul.bf16.gmra.mxu0 %v3220
        %v3550 = vpop.f32.mrf.mxu0
        %v3551 = vadd.f32 %v3282, %v3550
        %v3552 = vpop.f32.mrf.mxu0
        %v3553 = vadd.f32 %v3282, %v3552
        %3554 = vmatmul.bf16.gmra.mxu0 %v3222
        %v3555 = vpop.f32.mrf.mxu0
        %v3556 = vadd.f32 %v3282, %v3555
        %v3557 = vpop.f32.mrf.mxu0
        %v3558 = vadd.f32 %v3282, %v3557
        %3559 = vmatmul.bf16.gmra.mxu0 %v3224
        %v3560 = vpop.f32.mrf.mxu0
        %v3561 = vadd.f32 %v3282, %v3560
        %v3562 = vpop.f32.mrf.mxu0
        %v3563 = vadd.f32 %v3282, %v3562
        %3564 = vmatmul.bf16.gmra.mxu0 %v3226
        %v3565 = vpop.f32.mrf.mxu0
        %v3566 = vadd.f32 %v3282, %v3565
        %v3567 = vpop.f32.mrf.mxu0
        %v3568 = vadd.f32 %v3282, %v3567
        %3569 = vmatmul.bf16.gmra.mxu0 %v3228
        %v3570 = vpop.f32.mrf.mxu0
        %v3571 = vadd.f32 %v3282, %v3570
        %v3572 = vpop.f32.mrf.mxu0
        %v3573 = vadd.f32 %v3282, %v3572
        %3574 = vmatmul.bf16.gmra.mxu0 %v3230
        %v3575 = vpop.f32.mrf.mxu0
        %v3576 = vadd.f32 %v3282, %v3575
        %v3577 = vpop.f32.mrf.mxu0
        %v3578 = vadd.f32 %v3282, %v3577
        %3579 = vmatmul.bf16.gmra.mxu0 %v3232
        %v3580 = vpop.f32.mrf.mxu0
        %v3581 = vadd.f32 %v3282, %v3580
        %v3582 = vpop.f32.mrf.mxu0
        %v3583 = vadd.f32 %v3282, %v3582
        %3584 = vmatmul.bf16.gmra.mxu0 %v3234
        %v3585 = vpop.f32.mrf.mxu0
        %v3586 = vadd.f32 %v3282, %v3585
        %v3587 = vpop.f32.mrf.mxu0
        %v3588 = vadd.f32 %v3282, %v3587
        %3589 = vmatmul.bf16.gmra.mxu0 %v3236
        %v3590 = vpop.f32.mrf.mxu0
        %v3591 = vadd.f32 %v3282, %v3590
        %v3592 = vpop.f32.mrf.mxu0
        %v3593 = vadd.f32 %v3282, %v3592
        %3594 = vmatmul.bf16.gmra.mxu0 %v3238
        %v3595 = vpop.f32.mrf.mxu0
        %v3596 = vadd.f32 %v3282, %v3595
        %v3597 = vpop.f32.mrf.mxu0
        %v3598 = vadd.f32 %v3282, %v3597
        %3599 = vmatmul.bf16.gmra.mxu0 %v3240
        %v3600 = vpop.f32.mrf.mxu0
        %v3601 = vadd.f32 %v3282, %v3600
        %v3602 = vpop.f32.mrf.mxu0
        %v3603 = vadd.f32 %v3282, %v3602
        %3604 = vmatmul.bf16.gmra.mxu0 %v3242
        %v3605 = vpop.f32.mrf.mxu0
        %v3606 = vadd.f32 %v3282, %v3605
        %v3607 = vpop.f32.mrf.mxu0
        %v3608 = vadd.f32 %v3282, %v3607
        %3609 = vmatmul.bf16.gmra.mxu0 %v3244
        %v3610 = vpop.f32.mrf.mxu0
        %v3611 = vadd.f32 %v3282, %v3610
        %v3612 = vpop.f32.mrf.mxu0
        %v3613 = vadd.f32 %v3282, %v3612
        %3614 = vdwg.mxu0
        %3615 = vmatpush.bf16.msra.mxu0 %v3412
        %3616 = vmatpush.bf16.msra.mxu0 %v3410
        %3617 = vmatpush.bf16.msra.mxu0 %v3408
        %3618 = vmatpush.bf16.msra.mxu0 %v3406
        %3619 = vmatpush.bf16.msra.mxu0 %v3404
        %3620 = vmatpush.bf16.msra.mxu0 %v3402
        %3621 = vmatpush.bf16.msra.mxu0 %v3400
        %3622 = vmatpush.bf16.msra.mxu0 %v3398
        %3623 = vmatmul.bf16.gmra.mxu0 %v3183
        %v3624 = vpop.f32.mrf.mxu0
        %v3625 = vadd.f32 %v3456, %v3624
        %v3626 = vpop.f32.mrf.mxu0
        %v3627 = vadd.f32 %v3458, %v3626
        %3628 = vmatmul.bf16.gmra.mxu0 %v3185
        %v3629 = vpop.f32.mrf.mxu0
        %v3630 = vadd.f32 %v3461, %v3629
        %v3631 = vpop.f32.mrf.mxu0
        %v3632 = vadd.f32 %v3463, %v3631
        %3633 = vmatmul.bf16.gmra.mxu0 %v3187
        %v3634 = vpop.f32.mrf.mxu0
        %v3635 = vadd.f32 %v3466, %v3634
        %v3636 = vpop.f32.mrf.mxu0
        %v3637 = vadd.f32 %v3468, %v3636
        %3638 = vmatmul.bf16.gmra.mxu0 %v3189
        %v3639 = vpop.f32.mrf.mxu0
        %v3640 = vadd.f32 %v3471, %v3639
        %v3641 = vpop.f32.mrf.mxu0
        %v3642 = vadd.f32 %v3473, %v3641
        %3643 = vmatmul.bf16.gmra.mxu0 %v3191
        %v3644 = vpop.f32.mrf.mxu0
        %v3645 = vadd.f32 %v3476, %v3644
        %v3646 = vpop.f32.mrf.mxu0
        %v3647 = vadd.f32 %v3478, %v3646
        %3648 = vmatmul.bf16.gmra.mxu0 %v3193
        %v3649 = vpop.f32.mrf.mxu0
        %v3650 = vadd.f32 %v3481, %v3649
        %v3651 = vpop.f32.mrf.mxu0
        %v3652 = vadd.f32 %v3483, %v3651
        %3653 = vmatmul.bf16.gmra.mxu0 %v3195
        %v3654 = vpop.f32.mrf.mxu0
        %v3655 = vadd.f32 %v3486, %v3654
        %v3656 = vpop.f32.mrf.mxu0
        %v3657 = vadd.f32 %v3488, %v3656
        %3658 = vmatmul.bf16.gmra.mxu0 %v3197
        %v3659 = vpop.f32.mrf.mxu0
        %v3660 = vadd.f32 %v3491, %v3659
        %v3661 = vpop.f32.mrf.mxu0
        %v3662 = vadd.f32 %v3493, %v3661
        %3663 = vmatmul.bf16.gmra.mxu0 %v3199
        %v3664 = vpop.f32.mrf.mxu0
        %v3665 = vadd.f32 %v3496, %v3664
        %v3666 = vpop.f32.mrf.mxu0
        %v3667 = vadd.f32 %v3498, %v3666
        %3668 = vmatmul.bf16.gmra.mxu0 %v3201
        %v3669 = vpop.f32.mrf.mxu0
        %v3670 = vadd.f32 %v3501, %v3669
        %v3671 = vpop.f32.mrf.mxu0
        %v3672 = vadd.f32 %v3503, %v3671
        %3673 = vmatmul.bf16.gmra.mxu0 %v3203
        %v3674 = vpop.f32.mrf.mxu0
        %v3675 = vadd.f32 %v3506, %v3674
        %v3676 = vpop.f32.mrf.mxu0
        %v3677 = vadd.f32 %v3508, %v3676
        %3678 = vmatmul.bf16.gmra.mxu0 %v3205
        %v3679 = vpop.f32.mrf.mxu0
        %v3680 = vadd.f32 %v3511, %v3679
        %v3681 = vpop.f32.mrf.mxu0
        %v3682 = vadd.f32 %v3513, %v3681
        %3683 = vmatmul.bf16.gmra.mxu0 %v3207
        %v3684 = vpop.f32.mrf.mxu0
        %v3685 = vadd.f32 %v3516, %v3684
        %v3686 = vpop.f32.mrf.mxu0
        %v3687 = vadd.f32 %v3518, %v3686
        %3688 = vmatmul.bf16.gmra.mxu0 %v3209
        %v3689 = vpop.f32.mrf.mxu0
        %v3690 = vadd.f32 %v3521, %v3689
        %v3691 = vpop.f32.mrf.mxu0
        %v3692 = vadd.f32 %v3523, %v3691
        %3693 = vmatmul.bf16.gmra.mxu0 %v3211
        %v3694 = vpop.f32.mrf.mxu0
        %v3695 = vadd.f32 %v3526, %v3694
        %v3696 = vpop.f32.mrf.mxu0
        %v3697 = vadd.f32 %v3528, %v3696
        %3698 = vmatmul.bf16.gmra.mxu0 %v3213
        %v3699 = vpop.f32.mrf.mxu0
        %v3700 = vadd.f32 %v3531, %v3699
        %v3701 = vpop.f32.mrf.mxu0
        %v3702 = vadd.f32 %v3533, %v3701
        %3703 = vmatmul.bf16.gmra.mxu0 %v3215
        %v3704 = vpop.f32.mrf.mxu0
        %v3705 = vadd.f32 %v3536, %v3704
        %v3706 = vpop.f32.mrf.mxu0
        %v3707 = vadd.f32 %v3538, %v3706
        %3708 = vmatmul.bf16.gmra.mxu0 %v3217
        %v3709 = vpop.f32.mrf.mxu0
        %v3710 = vadd.f32 %v3541, %v3709
        %v3711 = vpop.f32.mrf.mxu0
        %v3712 = vadd.f32 %v3543, %v3711
        %3713 = vmatmul.bf16.gmra.mxu0 %v3219
        %v3714 = vpop.f32.mrf.mxu0
        %v3715 = vadd.f32 %v3546, %v3714
        %v3716 = vpop.f32.mrf.mxu0
        %v3717 = vadd.f32 %v3548, %v3716
        %3718 = vmatmul.bf16.gmra.mxu0 %v3221
        %v3719 = vpop.f32.mrf.mxu0
        %v3720 = vadd.f32 %v3551, %v3719
        %v3721 = vpop.f32.mrf.mxu0
        %v3722 = vadd.f32 %v3553, %v3721
        %3723 = vmatmul.bf16.gmra.mxu0 %v3223
        %v3724 = vpop.f32.mrf.mxu0
        %v3725 = vadd.f32 %v3556, %v3724
        %v3726 = vpop.f32.mrf.mxu0
        %v3727 = vadd.f32 %v3558, %v3726
        %3728 = vmatmul.bf16.gmra.mxu0 %v3225
        %v3729 = vpop.f32.mrf.mxu0
        %v3730 = vadd.f32 %v3561, %v3729
        %v3731 = vpop.f32.mrf.mxu0
        %v3732 = vadd.f32 %v3563, %v3731
        %3733 = vmatmul.bf16.gmra.mxu0 %v3227
        %v3734 = vpop.f32.mrf.mxu0
        %v3735 = vadd.f32 %v3566, %v3734
        %v3736 = vpop.f32.mrf.mxu0
        %v3737 = vadd.f32 %v3568, %v3736
        %3738 = vmatmul.bf16.gmra.mxu0 %v3229
        %v3739 = vpop.f32.mrf.mxu0
        %v3740 = vadd.f32 %v3571, %v3739
        %v3741 = vpop.f32.mrf.mxu0
        %v3742 = vadd.f32 %v3573, %v3741
        %3743 = vmatmul.bf16.gmra.mxu0 %v3231
        %v3744 = vpop.f32.mrf.mxu0
        %v3745 = vadd.f32 %v3576, %v3744
        %v3746 = vpop.f32.mrf.mxu0
        %v3747 = vadd.f32 %v3578, %v3746
        %3748 = vmatmul.bf16.gmra.mxu0 %v3233
        %v3749 = vpop.f32.mrf.mxu0
        %v3750 = vadd.f32 %v3581, %v3749
        %v3751 = vpop.f32.mrf.mxu0
        %v3752 = vadd.f32 %v3583, %v3751
        %3753 = vmatmul.bf16.gmra.mxu0 %v3235
        %v3754 = vpop.f32.mrf.mxu0
        %v3755 = vadd.f32 %v3586, %v3754
        %v3756 = vpop.f32.mrf.mxu0
        %v3757 = vadd.f32 %v3588, %v3756
        %3758 = vmatmul.bf16.gmra.mxu0 %v3237
        %v3759 = vpop.f32.mrf.mxu0
        %v3760 = vadd.f32 %v3591, %v3759
        %v3761 = vpop.f32.mrf.mxu0
        %v3762 = vadd.f32 %v3593, %v3761
        %3763 = vmatmul.bf16.gmra.mxu0 %v3239
        %v3764 = vpop.f32.mrf.mxu0
        %v3765 = vadd.f32 %v3596, %v3764
        %v3766 = vpop.f32.mrf.mxu0
        %v3767 = vadd.f32 %v3598, %v3766
        %3768 = vmatmul.bf16.gmra.mxu0 %v3241
        %v3769 = vpop.f32.mrf.mxu0
        %v3770 = vadd.f32 %v3601, %v3769
        %v3771 = vpop.f32.mrf.mxu0
        %v3772 = vadd.f32 %v3603, %v3771
        %3773 = vmatmul.bf16.gmra.mxu0 %v3243
        %v3774 = vpop.f32.mrf.mxu0
        %v3775 = vadd.f32 %v3606, %v3774
        %v3776 = vpop.f32.mrf.mxu0
        %v3777 = vadd.f32 %v3608, %v3776
        %3778 = vmatmul.bf16.gmra.mxu0 %v3245
        %v3779 = vpop.f32.mrf.mxu0
        %v3780 = vadd.f32 %v3611, %v3779
        %v3781 = vpop.f32.mrf.mxu0
        %v3782 = vadd.f32 %v3613, %v3781
        %3783 = vdwg.mxu0
        %3784 = vmatpush.bf16.msra.mxu0 %v3397
        %3785 = vmatpush.bf16.msra.mxu0 %v3395
        %3786 = vmatpush.bf16.msra.mxu0 %v3393
        %3787 = vmatpush.bf16.msra.mxu0 %v3391
        %3788 = vmatpush.bf16.msra.mxu0 %v3389
        %3789 = vmatpush.bf16.msra.mxu0 %v3387
        %3790 = vmatpush.bf16.msra.mxu0 %v3385
        %3791 = vmatpush.bf16.msra.mxu0 %v3383
        %3792 = vmatmul.bf16.gmra.mxu0 %v3182
        %v3793 = vpop.f32.mrf.mxu0
        %v3794 = vadd.f32 %v3283, %v3793
        %v3795 = vpop.f32.mrf.mxu0
        %v3796 = vadd.f32 %v3283, %v3795
        %3797 = vmatmul.bf16.gmra.mxu0 %v3184
        %v3798 = vpop.f32.mrf.mxu0
        %v3799 = vadd.f32 %v3283, %v3798
        %v3800 = vpop.f32.mrf.mxu0
        %v3801 = vadd.f32 %v3283, %v3800
        %3802 = vmatmul.bf16.gmra.mxu0 %v3186
        %v3803 = vpop.f32.mrf.mxu0
        %v3804 = vadd.f32 %v3283, %v3803
        %v3805 = vpop.f32.mrf.mxu0
        %v3806 = vadd.f32 %v3283, %v3805
        %3807 = vmatmul.bf16.gmra.mxu0 %v3188
        %v3808 = vpop.f32.mrf.mxu0
        %v3809 = vadd.f32 %v3283, %v3808
        %v3810 = vpop.f32.mrf.mxu0
        %v3811 = vadd.f32 %v3283, %v3810
        %3812 = vmatmul.bf16.gmra.mxu0 %v3190
        %v3813 = vpop.f32.mrf.mxu0
        %v3814 = vadd.f32 %v3283, %v3813
        %v3815 = vpop.f32.mrf.mxu0
        %v3816 = vadd.f32 %v3283, %v3815
        %3817 = vmatmul.bf16.gmra.mxu0 %v3192
        %v3818 = vpop.f32.mrf.mxu0
        %v3819 = vadd.f32 %v3283, %v3818
        %v3820 = vpop.f32.mrf.mxu0
        %v3821 = vadd.f32 %v3283, %v3820
        %3822 = vmatmul.bf16.gmra.mxu0 %v3194
        %v3823 = vpop.f32.mrf.mxu0
        %v3824 = vadd.f32 %v3283, %v3823
        %v3825 = vpop.f32.mrf.mxu0
        %v3826 = vadd.f32 %v3283, %v3825
        %3827 = vmatmul.bf16.gmra.mxu0 %v3196
        %v3828 = vpop.f32.mrf.mxu0
        %v3829 = vadd.f32 %v3283, %v3828
        %v3830 = vpop.f32.mrf.mxu0
        %v3831 = vadd.f32 %v3283, %v3830
        %3832 = vmatmul.bf16.gmra.mxu0 %v3198
        %v3833 = vpop.f32.mrf.mxu0
        %v3834 = vadd.f32 %v3283, %v3833
        %v3835 = vpop.f32.mrf.mxu0
        %v3836 = vadd.f32 %v3283, %v3835
        %3837 = vmatmul.bf16.gmra.mxu0 %v3200
        %v3838 = vpop.f32.mrf.mxu0
        %v3839 = vadd.f32 %v3283, %v3838
        %v3840 = vpop.f32.mrf.mxu0
        %v3841 = vadd.f32 %v3283, %v3840
        %3842 = vmatmul.bf16.gmra.mxu0 %v3202
        %v3843 = vpop.f32.mrf.mxu0
        %v3844 = vadd.f32 %v3283, %v3843
        %v3845 = vpop.f32.mrf.mxu0
        %v3846 = vadd.f32 %v3283, %v3845
        %3847 = vmatmul.bf16.gmra.mxu0 %v3204
        %v3848 = vpop.f32.mrf.mxu0
        %v3849 = vadd.f32 %v3283, %v3848
        %v3850 = vpop.f32.mrf.mxu0
        %v3851 = vadd.f32 %v3283, %v3850
        %3852 = vmatmul.bf16.gmra.mxu0 %v3206
        %v3853 = vpop.f32.mrf.mxu0
        %v3854 = vadd.f32 %v3283, %v3853
        %v3855 = vpop.f32.mrf.mxu0
        %v3856 = vadd.f32 %v3283, %v3855
        %3857 = vmatmul.bf16.gmra.mxu0 %v3208
        %v3858 = vpop.f32.mrf.mxu0
        %v3859 = vadd.f32 %v3283, %v3858
        %v3860 = vpop.f32.mrf.mxu0
        %v3861 = vadd.f32 %v3283, %v3860
        %3862 = vmatmul.bf16.gmra.mxu0 %v3210
        %v3863 = vpop.f32.mrf.mxu0
        %v3864 = vadd.f32 %v3283, %v3863
        %v3865 = vpop.f32.mrf.mxu0
        %v3866 = vadd.f32 %v3283, %v3865
        %3867 = vmatmul.bf16.gmra.mxu0 %v3212
        %v3868 = vpop.f32.mrf.mxu0
        %v3869 = vadd.f32 %v3283, %v3868
        %v3870 = vpop.f32.mrf.mxu0
        %v3871 = vadd.f32 %v3283, %v3870
        %3872 = vmatmul.bf16.gmra.mxu0 %v3214
        %v3873 = vpop.f32.mrf.mxu0
        %v3874 = vadd.f32 %v3283, %v3873
        %v3875 = vpop.f32.mrf.mxu0
        %v3876 = vadd.f32 %v3283, %v3875
        %3877 = vmatmul.bf16.gmra.mxu0 %v3216
        %v3878 = vpop.f32.mrf.mxu0
        %v3879 = vadd.f32 %v3283, %v3878
        %v3880 = vpop.f32.mrf.mxu0
        %v3881 = vadd.f32 %v3283, %v3880
        %3882 = vmatmul.bf16.gmra.mxu0 %v3218
        %v3883 = vpop.f32.mrf.mxu0
        %v3884 = vadd.f32 %v3283, %v3883
        %v3885 = vpop.f32.mrf.mxu0
        %v3886 = vadd.f32 %v3283, %v3885
        %3887 = vmatmul.bf16.gmra.mxu0 %v3220
        %v3888 = vpop.f32.mrf.mxu0
        %v3889 = vadd.f32 %v3283, %v3888
        %v3890 = vpop.f32.mrf.mxu0
        %v3891 = vadd.f32 %v3283, %v3890
        %3892 = vmatmul.bf16.gmra.mxu0 %v3222
        %v3893 = vpop.f32.mrf.mxu0
        %v3894 = vadd.f32 %v3283, %v3893
        %v3895 = vpop.f32.mrf.mxu0
        %v3896 = vadd.f32 %v3283, %v3895
        %3897 = vmatmul.bf16.gmra.mxu0 %v3224
        %v3898 = vpop.f32.mrf.mxu0
        %v3899 = vadd.f32 %v3283, %v3898
        %v3900 = vpop.f32.mrf.mxu0
        %v3901 = vadd.f32 %v3283, %v3900
        %3902 = vmatmul.bf16.gmra.mxu0 %v3226
        %v3903 = vpop.f32.mrf.mxu0
        %v3904 = vadd.f32 %v3283, %v3903
        %v3905 = vpop.f32.mrf.mxu0
        %v3906 = vadd.f32 %v3283, %v3905
        %3907 = vmatmul.bf16.gmra.mxu0 %v3228
        %v3908 = vpop.f32.mrf.mxu0
        %v3909 = vadd.f32 %v3283, %v3908
        %v3910 = vpop.f32.mrf.mxu0
        %v3911 = vadd.f32 %v3283, %v3910
        %3912 = vmatmul.bf16.gmra.mxu0 %v3230
        %v3913 = vpop.f32.mrf.mxu0
        %v3914 = vadd.f32 %v3283, %v3913
        %v3915 = vpop.f32.mrf.mxu0
        %v3916 = vadd.f32 %v3283, %v3915
        %3917 = vmatmul.bf16.gmra.mxu0 %v3232
        %v3918 = vpop.f32.mrf.mxu0
        %v3919 = vadd.f32 %v3283, %v3918
        %v3920 = vpop.f32.mrf.mxu0
        %v3921 = vadd.f32 %v3283, %v3920
        %3922 = vmatmul.bf16.gmra.mxu0 %v3234
        %v3923 = vpop.f32.mrf.mxu0
        %v3924 = vadd.f32 %v3283, %v3923
        %v3925 = vpop.f32.mrf.mxu0
        %v3926 = vadd.f32 %v3283, %v3925
        %3927 = vmatmul.bf16.gmra.mxu0 %v3236
        %v3928 = vpop.f32.mrf.mxu0
        %v3929 = vadd.f32 %v3283, %v3928
        %v3930 = vpop.f32.mrf.mxu0
        %v3931 = vadd.f32 %v3283, %v3930
        %3932 = vmatmul.bf16.gmra.mxu0 %v3238
        %v3933 = vpop.f32.mrf.mxu0
        %v3934 = vadd.f32 %v3283, %v3933
        %v3935 = vpop.f32.mrf.mxu0
        %v3936 = vadd.f32 %v3283, %v3935
        %3937 = vmatmul.bf16.gmra.mxu0 %v3240
        %v3938 = vpop.f32.mrf.mxu0
        %v3939 = vadd.f32 %v3283, %v3938
        %v3940 = vpop.f32.mrf.mxu0
        %v3941 = vadd.f32 %v3283, %v3940
        %3942 = vmatmul.bf16.gmra.mxu0 %v3242
        %v3943 = vpop.f32.mrf.mxu0
        %v3944 = vadd.f32 %v3283, %v3943
        %v3945 = vpop.f32.mrf.mxu0
        %v3946 = vadd.f32 %v3283, %v3945
        %3947 = vmatmul.bf16.gmra.mxu0 %v3244
        %v3948 = vpop.f32.mrf.mxu0
        %v3949 = vadd.f32 %v3283, %v3948
        %v3950 = vpop.f32.mrf.mxu0
        %v3951 = vadd.f32 %v3283, %v3950
        %3952 = vdwg.mxu0
        %3953 = vmatpush.bf16.msra.mxu0 %v3413
        %3954 = vmatpush.bf16.msra.mxu0 %v3411
        %3955 = vmatpush.bf16.msra.mxu0 %v3409
        %3956 = vmatpush.bf16.msra.mxu0 %v3407
        %3957 = vmatpush.bf16.msra.mxu0 %v3405
        %3958 = vmatpush.bf16.msra.mxu0 %v3403
        %3959 = vmatpush.bf16.msra.mxu0 %v3401
        %3960 = vmatpush.bf16.msra.mxu0 %v3399
        %3961 = vmatmul.bf16.gmra.mxu0 %v3183
        %v3962 = vpop.f32.mrf.mxu0
        %v3963 = vadd.f32 %v3794, %v3962
        %v3964 = vpop.f32.mrf.mxu0
        %v3965 = vadd.f32 %v3796, %v3964
        %3966 = vmatmul.bf16.gmra.mxu0 %v3185
        %v3967 = vpop.f32.mrf.mxu0
        %v3968 = vadd.f32 %v3799, %v3967
        %v3969 = vpop.f32.mrf.mxu0
        %v3970 = vadd.f32 %v3801, %v3969
        %3971 = vmatmul.bf16.gmra.mxu0 %v3187
        %v3972 = vpop.f32.mrf.mxu0
        %v3973 = vadd.f32 %v3804, %v3972
        %v3974 = vpop.f32.mrf.mxu0
        %v3975 = vadd.f32 %v3806, %v3974
        %3976 = vmatmul.bf16.gmra.mxu0 %v3189
        %v3977 = vpop.f32.mrf.mxu0
        %v3978 = vadd.f32 %v3809, %v3977
        %v3979 = vpop.f32.mrf.mxu0
        %v3980 = vadd.f32 %v3811, %v3979
        %3981 = vmatmul.bf16.gmra.mxu0 %v3191
        %v3982 = vpop.f32.mrf.mxu0
        %v3983 = vadd.f32 %v3814, %v3982
        %v3984 = vpop.f32.mrf.mxu0
        %v3985 = vadd.f32 %v3816, %v3984
        %3986 = vmatmul.bf16.gmra.mxu0 %v3193
        %v3987 = vpop.f32.mrf.mxu0
        %v3988 = vadd.f32 %v3819, %v3987
        %v3989 = vpop.f32.mrf.mxu0
        %v3990 = vadd.f32 %v3821, %v3989
        %3991 = vmatmul.bf16.gmra.mxu0 %v3195
        %v3992 = vpop.f32.mrf.mxu0
        %v3993 = vadd.f32 %v3824, %v3992
        %v3994 = vpop.f32.mrf.mxu0
        %v3995 = vadd.f32 %v3826, %v3994
        %3996 = vmatmul.bf16.gmra.mxu0 %v3197
        %v3997 = vpop.f32.mrf.mxu0
        %v3998 = vadd.f32 %v3829, %v3997
        %v3999 = vpop.f32.mrf.mxu0
        %v4000 = vadd.f32 %v3831, %v3999
        %4001 = vmatmul.bf16.gmra.mxu0 %v3199
        %v4002 = vpop.f32.mrf.mxu0
        %v4003 = vadd.f32 %v3834, %v4002
        %v4004 = vpop.f32.mrf.mxu0
        %v4005 = vadd.f32 %v3836, %v4004
        %4006 = vmatmul.bf16.gmra.mxu0 %v3201
        %v4007 = vpop.f32.mrf.mxu0
        %v4008 = vadd.f32 %v3839, %v4007
        %v4009 = vpop.f32.mrf.mxu0
        %v4010 = vadd.f32 %v3841, %v4009
        %4011 = vmatmul.bf16.gmra.mxu0 %v3203
        %v4012 = vpop.f32.mrf.mxu0
        %v4013 = vadd.f32 %v3844, %v4012
        %v4014 = vpop.f32.mrf.mxu0
        %v4015 = vadd.f32 %v3846, %v4014
        %4016 = vmatmul.bf16.gmra.mxu0 %v3205
        %v4017 = vpop.f32.mrf.mxu0
        %v4018 = vadd.f32 %v3849, %v4017
        %v4019 = vpop.f32.mrf.mxu0
        %v4020 = vadd.f32 %v3851, %v4019
        %4021 = vmatmul.bf16.gmra.mxu0 %v3207
        %v4022 = vpop.f32.mrf.mxu0
        %v4023 = vadd.f32 %v3854, %v4022
        %v4024 = vpop.f32.mrf.mxu0
        %v4025 = vadd.f32 %v3856, %v4024
        %4026 = vmatmul.bf16.gmra.mxu0 %v3209
        %v4027 = vpop.f32.mrf.mxu0
        %v4028 = vadd.f32 %v3859, %v4027
        %v4029 = vpop.f32.mrf.mxu0
        %v4030 = vadd.f32 %v3861, %v4029
        %4031 = vmatmul.bf16.gmra.mxu0 %v3211
        %v4032 = vpop.f32.mrf.mxu0
        %v4033 = vadd.f32 %v3864, %v4032
        %v4034 = vpop.f32.mrf.mxu0
        %v4035 = vadd.f32 %v3866, %v4034
        %4036 = vmatmul.bf16.gmra.mxu0 %v3213
        %v4037 = vpop.f32.mrf.mxu0
        %v4038 = vadd.f32 %v3869, %v4037
        %v4039 = vpop.f32.mrf.mxu0
        %v4040 = vadd.f32 %v3871, %v4039
        %4041 = vmatmul.bf16.gmra.mxu0 %v3215
        %v4042 = vpop.f32.mrf.mxu0
        %v4043 = vadd.f32 %v3874, %v4042
        %v4044 = vpop.f32.mrf.mxu0
        %v4045 = vadd.f32 %v3876, %v4044
        %4046 = vmatmul.bf16.gmra.mxu0 %v3217
        %v4047 = vpop.f32.mrf.mxu0
        %v4048 = vadd.f32 %v3879, %v4047
        %v4049 = vpop.f32.mrf.mxu0
        %v4050 = vadd.f32 %v3881, %v4049
        %4051 = vmatmul.bf16.gmra.mxu0 %v3219
        %v4052 = vpop.f32.mrf.mxu0
        %v4053 = vadd.f32 %v3884, %v4052
        %v4054 = vpop.f32.mrf.mxu0
        %v4055 = vadd.f32 %v3886, %v4054
        %4056 = vmatmul.bf16.gmra.mxu0 %v3221
        %v4057 = vpop.f32.mrf.mxu0
        %v4058 = vadd.f32 %v3889, %v4057
        %v4059 = vpop.f32.mrf.mxu0
        %v4060 = vadd.f32 %v3891, %v4059
        %4061 = vmatmul.bf16.gmra.mxu0 %v3223
        %v4062 = vpop.f32.mrf.mxu0
        %v4063 = vadd.f32 %v3894, %v4062
        %v4064 = vpop.f32.mrf.mxu0
        %v4065 = vadd.f32 %v3896, %v4064
        %4066 = vmatmul.bf16.gmra.mxu0 %v3225
        %v4067 = vpop.f32.mrf.mxu0
        %v4068 = vadd.f32 %v3899, %v4067
        %v4069 = vpop.f32.mrf.mxu0
        %v4070 = vadd.f32 %v3901, %v4069
        %4071 = vmatmul.bf16.gmra.mxu0 %v3227
        %v4072 = vpop.f32.mrf.mxu0
        %v4073 = vadd.f32 %v3904, %v4072
        %v4074 = vpop.f32.mrf.mxu0
        %v4075 = vadd.f32 %v3906, %v4074
        %4076 = vmatmul.bf16.gmra.mxu0 %v3229
        %v4077 = vpop.f32.mrf.mxu0
        %v4078 = vadd.f32 %v3909, %v4077
        %v4079 = vpop.f32.mrf.mxu0
        %v4080 = vadd.f32 %v3911, %v4079
        %4081 = vmatmul.bf16.gmra.mxu0 %v3231
        %v4082 = vpop.f32.mrf.mxu0
        %v4083 = vadd.f32 %v3914, %v4082
        %v4084 = vpop.f32.mrf.mxu0
        %v4085 = vadd.f32 %v3916, %v4084
        %4086 = vmatmul.bf16.gmra.mxu0 %v3233
        %v4087 = vpop.f32.mrf.mxu0
        %v4088 = vadd.f32 %v3919, %v4087
        %v4089 = vpop.f32.mrf.mxu0
        %v4090 = vadd.f32 %v3921, %v4089
        %4091 = vmatmul.bf16.gmra.mxu0 %v3235
        %v4092 = vpop.f32.mrf.mxu0
        %v4093 = vadd.f32 %v3924, %v4092
        %v4094 = vpop.f32.mrf.mxu0
        %v4095 = vadd.f32 %v3926, %v4094
        %4096 = vmatmul.bf16.gmra.mxu0 %v3237
        %v4097 = vpop.f32.mrf.mxu0
        %v4098 = vadd.f32 %v3929, %v4097
        %v4099 = vpop.f32.mrf.mxu0
        %v4100 = vadd.f32 %v3931, %v4099
        %4101 = vmatmul.bf16.gmra.mxu0 %v3239
        %v4102 = vpop.f32.mrf.mxu0
        %v4103 = vadd.f32 %v3934, %v4102
        %v4104 = vpop.f32.mrf.mxu0
        %v4105 = vadd.f32 %v3936, %v4104
        %4106 = vmatmul.bf16.gmra.mxu0 %v3241
        %v4107 = vpop.f32.mrf.mxu0
        %v4108 = vadd.f32 %v3939, %v4107
        %v4109 = vpop.f32.mrf.mxu0
        %v4110 = vadd.f32 %v3941, %v4109
        %4111 = vmatmul.bf16.gmra.mxu0 %v3243
        %v4112 = vpop.f32.mrf.mxu0
        %v4113 = vadd.f32 %v3944, %v4112
        %v4114 = vpop.f32.mrf.mxu0
        %v4115 = vadd.f32 %v3946, %v4114
        %4116 = vmatmul.bf16.gmra.mxu0 %v3245
        %v4117 = vpop.f32.mrf.mxu0
        %v4118 = vadd.f32 %v3949, %v4117
        %v4119 = vpop.f32.mrf.mxu0
        %v4120 = vadd.f32 %v3951, %v4119
        %4121 = vdwg.mxu0
        %v4122 = vmax.f32 %v3625, 0.0
        %v4123 = vmax.f32 %v3963, 0.0
        %v4124 = vmax.f32 %v3627, 0.0
        %v4125 = vmax.f32 %v3965, 0.0
        %v4126 = vmax.f32 %v3630, 0.0
        %v4127 = vmax.f32 %v3968, 0.0
        %v4128 = vmax.f32 %v3632, 0.0
        %v4129 = vmax.f32 %v3970, 0.0
        %v4130 = vmax.f32 %v3635, 0.0
        %v4131 = vmax.f32 %v3973, 0.0
        %v4132 = vmax.f32 %v3637, 0.0
        %v4133 = vmax.f32 %v3975, 0.0
        %v4134 = vmax.f32 %v3640, 0.0
        %v4135 = vmax.f32 %v3978, 0.0
        %v4136 = vmax.f32 %v3642, 0.0
        %v4137 = vmax.f32 %v3980, 0.0
        %v4138 = vmax.f32 %v3645, 0.0
        %v4139 = vmax.f32 %v3983, 0.0
        %v4140 = vmax.f32 %v3647, 0.0
        %v4141 = vmax.f32 %v3985, 0.0
        %v4142 = vmax.f32 %v3650, 0.0
        %v4143 = vmax.f32 %v3988, 0.0
        %v4144 = vmax.f32 %v3652, 0.0
        %v4145 = vmax.f32 %v3990, 0.0
        %v4146 = vmax.f32 %v3655, 0.0
        %v4147 = vmax.f32 %v3993, 0.0
        %v4148 = vmax.f32 %v3657, 0.0
        %v4149 = vmax.f32 %v3995, 0.0
        %v4150 = vmax.f32 %v3660, 0.0
        %v4151 = vmax.f32 %v3998, 0.0
        %v4152 = vmax.f32 %v3662, 0.0
        %v4153 = vmax.f32 %v4000, 0.0
        %v4154 = vmax.f32 %v3665, 0.0
        %v4155 = vmax.f32 %v4003, 0.0
        %v4156 = vmax.f32 %v3667, 0.0
        %v4157 = vmax.f32 %v4005, 0.0
        %v4158 = vmax.f32 %v3670, 0.0
        %v4159 = vmax.f32 %v4008, 0.0
        %v4160 = vmax.f32 %v3672, 0.0
        %v4161 = vmax.f32 %v4010, 0.0
        %v4162 = vmax.f32 %v3675, 0.0
        %v4163 = vmax.f32 %v4013, 0.0
        %v4164 = vmax.f32 %v3677, 0.0
        %v4165 = vmax.f32 %v4015, 0.0
        %v4166 = vmax.f32 %v3680, 0.0
        %v4167 = vmax.f32 %v4018, 0.0
        %v4168 = vmax.f32 %v3682, 0.0
        %v4169 = vmax.f32 %v4020, 0.0
        %v4170 = vmax.f32 %v3685, 0.0
        %v4171 = vmax.f32 %v4023, 0.0
        %v4172 = vmax.f32 %v3687, 0.0
        %v4173 = vmax.f32 %v4025, 0.0
        %v4174 = vmax.f32 %v3690, 0.0
        %v4175 = vmax.f32 %v4028, 0.0
        %v4176 = vmax.f32 %v3692, 0.0
        %v4177 = vmax.f32 %v4030, 0.0
        %v4178 = vmax.f32 %v3695, 0.0
        %v4179 = vmax.f32 %v4033, 0.0
        %v4180 = vmax.f32 %v3697, 0.0
        %v4181 = vmax.f32 %v4035, 0.0
        %v4182 = vmax.f32 %v3700, 0.0
        %v4183 = vmax.f32 %v4038, 0.0
        %v4184 = vmax.f32 %v3702, 0.0
        %v4185 = vmax.f32 %v4040, 0.0
        %v4186 = vmax.f32 %v3705, 0.0
        %v4187 = vmax.f32 %v4043, 0.0
        %v4188 = vmax.f32 %v3707, 0.0
        %v4189 = vmax.f32 %v4045, 0.0
        %v4190 = vmax.f32 %v3710, 0.0
        %v4191 = vmax.f32 %v4048, 0.0
        %v4192 = vmax.f32 %v3712, 0.0
        %v4193 = vmax.f32 %v4050, 0.0
        %v4194 = vmax.f32 %v3715, 0.0
        %v4195 = vmax.f32 %v4053, 0.0
        %v4196 = vmax.f32 %v3717, 0.0
        %v4197 = vmax.f32 %v4055, 0.0
        %v4198 = vmax.f32 %v3720, 0.0
        %v4199 = vmax.f32 %v4058, 0.0
        %v4200 = vmax.f32 %v3722, 0.0
        %v4201 = vmax.f32 %v4060, 0.0
        %v4202 = vmax.f32 %v3725, 0.0
        %v4203 = vmax.f32 %v4063, 0.0
        %v4204 = vmax.f32 %v3727, 0.0
        %v4205 = vmax.f32 %v4065, 0.0
        %v4206 = vmax.f32 %v3730, 0.0
        %v4207 = vmax.f32 %v4068, 0.0
        %v4208 = vmax.f32 %v3732, 0.0
        %v4209 = vmax.f32 %v4070, 0.0
        %v4210 = vmax.f32 %v3735, 0.0
        %v4211 = vmax.f32 %v4073, 0.0
        %v4212 = vmax.f32 %v3737, 0.0
        %v4213 = vmax.f32 %v4075, 0.0
        %v4214 = vmax.f32 %v3740, 0.0
        %v4215 = vmax.f32 %v4078, 0.0
        %v4216 = vmax.f32 %v3742, 0.0
        %v4217 = vmax.f32 %v4080, 0.0
        %v4218 = vmax.f32 %v3745, 0.0
        %v4219 = vmax.f32 %v4083, 0.0
        %v4220 = vmax.f32 %v3747, 0.0
        %v4221 = vmax.f32 %v4085, 0.0
        %v4222 = vmax.f32 %v3750, 0.0
        %v4223 = vmax.f32 %v4088, 0.0
        %v4224 = vmax.f32 %v3752, 0.0
        %v4225 = vmax.f32 %v4090, 0.0
        %v4226 = vmax.f32 %v3755, 0.0
        %v4227 = vmax.f32 %v4093, 0.0
        %v4228 = vmax.f32 %v3757, 0.0
        %v4229 = vmax.f32 %v4095, 0.0
        %v4230 = vmax.f32 %v3760, 0.0
        %v4231 = vmax.f32 %v4098, 0.0
        %v4232 = vmax.f32 %v3762, 0.0
        %v4233 = vmax.f32 %v4100, 0.0
        %v4234 = vmax.f32 %v3765, 0.0
        %v4235 = vmax.f32 %v4103, 0.0
        %v4236 = vmax.f32 %v3767, 0.0
        %v4237 = vmax.f32 %v4105, 0.0
        %v4238 = vmax.f32 %v3770, 0.0
        %v4239 = vmax.f32 %v4108, 0.0
        %v4240 = vmax.f32 %v3772, 0.0
        %v4241 = vmax.f32 %v4110, 0.0
        %v4242 = vmax.f32 %v3775, 0.0
        %v4243 = vmax.f32 %v4113, 0.0
        %v4244 = vmax.f32 %v3777, 0.0
        %v4245 = vmax.f32 %v4115, 0.0
        %v4246 = vmax.f32 %v3780, 0.0
        %v4247 = vmax.f32 %v4118, 0.0
        %v4248 = vmax.f32 %v3782, 0.0
        %v4249 = vmax.f32 %v4120, 0.0
        %v4250 = vpack.c.bf16 %v4124, %v4122
        %v4251 = vpack.c.bf16 %v4125, %v4123
        %v4252 = vpack.c.bf16 %v4128, %v4126
        %v4253 = vpack.c.bf16 %v4129, %v4127
        %v4254 = vpack.c.bf16 %v4132, %v4130
        %v4255 = vpack.c.bf16 %v4133, %v4131
        %v4256 = vpack.c.bf16 %v4136, %v4134
        %v4257 = vpack.c.bf16 %v4137, %v4135
        %v4258 = vpack.c.bf16 %v4140, %v4138
        %v4259 = vpack.c.bf16 %v4141, %v4139
        %v4260 = vpack.c.bf16 %v4144, %v4142
        %v4261 = vpack.c.bf16 %v4145, %v4143
        %v4262 = vpack.c.bf16 %v4148, %v4146
        %v4263 = vpack.c.bf16 %v4149, %v4147
        %v4264 = vpack.c.bf16 %v4152, %v4150
        %v4265 = vpack.c.bf16 %v4153, %v4151
        %v4266 = vpack.c.bf16 %v4156, %v4154
        %v4267 = vpack.c.bf16 %v4157, %v4155
        %v4268 = vpack.c.bf16 %v4160, %v4158
        %v4269 = vpack.c.bf16 %v4161, %v4159
        %v4270 = vpack.c.bf16 %v4164, %v4162
        %v4271 = vpack.c.bf16 %v4165, %v4163
        %v4272 = vpack.c.bf16 %v4168, %v4166
        %v4273 = vpack.c.bf16 %v4169, %v4167
        %v4274 = vpack.c.bf16 %v4172, %v4170
        %v4275 = vpack.c.bf16 %v4173, %v4171
        %v4276 = vpack.c.bf16 %v4176, %v4174
        %v4277 = vpack.c.bf16 %v4177, %v4175
        %v4278 = vpack.c.bf16 %v4180, %v4178
        %v4279 = vpack.c.bf16 %v4181, %v4179
        %v4280 = vpack.c.bf16 %v4184, %v4182
        %v4281 = vpack.c.bf16 %v4185, %v4183
        %v4282 = vpack.c.bf16 %v4188, %v4186
        %v4283 = vpack.c.bf16 %v4189, %v4187
        %v4284 = vpack.c.bf16 %v4192, %v4190
        %v4285 = vpack.c.bf16 %v4193, %v4191
        %v4286 = vpack.c.bf16 %v4196, %v4194
        %v4287 = vpack.c.bf16 %v4197, %v4195
        %v4288 = vpack.c.bf16 %v4200, %v4198
        %v4289 = vpack.c.bf16 %v4201, %v4199
        %v4290 = vpack.c.bf16 %v4204, %v4202
        %v4291 = vpack.c.bf16 %v4205, %v4203
        %v4292 = vpack.c.bf16 %v4208, %v4206
        %v4293 = vpack.c.bf16 %v4209, %v4207
        %v4294 = vpack.c.bf16 %v4212, %v4210
        %v4295 = vpack.c.bf16 %v4213, %v4211
        %v4296 = vpack.c.bf16 %v4216, %v4214
        %v4297 = vpack.c.bf16 %v4217, %v4215
        %v4298 = vpack.c.bf16 %v4220, %v4218
        %v4299 = vpack.c.bf16 %v4221, %v4219
        %v4300 = vpack.c.bf16 %v4224, %v4222
        %v4301 = vpack.c.bf16 %v4225, %v4223
        %v4302 = vpack.c.bf16 %v4228, %v4226
        %v4303 = vpack.c.bf16 %v4229, %v4227
        %v4304 = vpack.c.bf16 %v4232, %v4230
        %v4305 = vpack.c.bf16 %v4233, %v4231
        %v4306 = vpack.c.bf16 %v4236, %v4234
        %v4307 = vpack.c.bf16 %v4237, %v4235
        %v4308 = vpack.c.bf16 %v4240, %v4238
        %v4309 = vpack.c.bf16 %v4241, %v4239
        %v4310 = vpack.c.bf16 %v4244, %v4242
        %v4311 = vpack.c.bf16 %v4245, %v4243
        %v4312 = vpack.c.bf16 %v4248, %v4246
        %v4313 = vpack.c.bf16 %v4249, %v4247
        %s4314 = scalar_lea.vmem [#allocation2], 512
        %v4315 = vld [vmem:[%s4314] sm:$0xff]
        %v4316 = vld [vmem:[%s4314 + $0x8] sm:$0xff]
        %v4317 = vld [vmem:[%s4314 + $0x10] sm:$0xff]
        %v4318 = vld [vmem:[%s4314 + $0x18] sm:$0xff]
        %v4319 = vld [vmem:[%s4314 + $0x20] sm:$0xff]
        %v4320 = vld [vmem:[%s4314 + $0x28] sm:$0xff]
        %v4321 = vld [vmem:[%s4314 + $0x30] sm:$0xff]
        %v4322 = vld [vmem:[%s4314 + $0x38] sm:$0xff]
        %v4323 = vld [vmem:[%s4314 + $0x40] sm:$0xff]
        %v4324 = vld [vmem:[%s4314 + $0x48] sm:$0xff]
        %v4325 = vld [vmem:[%s4314 + $0x50] sm:$0xff]
        %v4326 = vld [vmem:[%s4314 + $0x58] sm:$0xff]
        %v4327 = vld [vmem:[%s4314 + $0x60] sm:$0xff]
        %v4328 = vld [vmem:[%s4314 + $0x68] sm:$0xff]
        %v4329 = vld [vmem:[%s4314 + $0x70] sm:$0xff]
        %v4330 = vld [vmem:[%s4314 + $0x78] sm:$0xff]
        %v4331 = vld [vmem:[%s4314 + $0x80] sm:$0xff]
        %v4332 = vld [vmem:[%s4314 + $0x88] sm:$0xff]
        %v4333 = vld [vmem:[%s4314 + $0x90] sm:$0xff]
        %v4334 = vld [vmem:[%s4314 + $0x98] sm:$0xff]
        %v4335 = vld [vmem:[%s4314 + $0xa0] sm:$0xff]
        %v4336 = vld [vmem:[%s4314 + $0xa8] sm:$0xff]
        %v4337 = vld [vmem:[%s4314 + $0xb0] sm:$0xff]
        %v4338 = vld [vmem:[%s4314 + $0xb8] sm:$0xff]
        %v4339 = vld [vmem:[%s4314 + $0xc0] sm:$0xff]
        %v4340 = vld [vmem:[%s4314 + $0xc8] sm:$0xff]
        %v4341 = vld [vmem:[%s4314 + $0xd0] sm:$0xff]
        %v4342 = vld [vmem:[%s4314 + $0xd8] sm:$0xff]
        %v4343 = vld [vmem:[%s4314 + $0xe0] sm:$0xff]
        %v4344 = vld [vmem:[%s4314 + $0xe8] sm:$0xff]
        %v4345 = vld [vmem:[%s4314 + $0xf0] sm:$0xff]
        %v4346 = vld [vmem:[%s4314 + $0xf8] sm:$0xff]
        %s4347 = scalar_lea.vmem %s4, 3
        %v4348 = vld [vmem:[%s4347] ss:$8 sm:$0x3]
        %v4350 = vperm.slane %v4348, 0
        %v4351 = vperm.slane %v4348, 1
        %v4386 = vunpack.c.l.b16 %v4315
        %v4387 = vunpack.c.h.b16 %v4315
        %v4388 = vunpack.c.l.b16 %v4316
        %v4389 = vunpack.c.h.b16 %v4316
        %v4390 = vunpack.c.l.b16 %v4317
        %v4391 = vunpack.c.h.b16 %v4317
        %v4392 = vunpack.c.l.b16 %v4318
        %v4393 = vunpack.c.h.b16 %v4318
        %v4394 = vunpack.c.l.b16 %v4319
        %v4395 = vunpack.c.h.b16 %v4319
        %v4396 = vunpack.c.l.b16 %v4320
        %v4397 = vunpack.c.h.b16 %v4320
        %v4398 = vunpack.c.l.b16 %v4321
        %v4399 = vunpack.c.h.b16 %v4321
        %v4400 = vunpack.c.l.b16 %v4322
        %v4401 = vunpack.c.h.b16 %v4322
        %v4402 = vunpack.c.l.b16 %v4323
        %v4403 = vunpack.c.h.b16 %v4323
        %v4404 = vunpack.c.l.b16 %v4324
        %v4405 = vunpack.c.h.b16 %v4324
        %v4406 = vunpack.c.l.b16 %v4325
        %v4407 = vunpack.c.h.b16 %v4325
        %v4408 = vunpack.c.l.b16 %v4326
        %v4409 = vunpack.c.h.b16 %v4326
        %v4410 = vunpack.c.l.b16 %v4327
        %v4411 = vunpack.c.h.b16 %v4327
        %v4412 = vunpack.c.l.b16 %v4328
        %v4413 = vunpack.c.h.b16 %v4328
        %v4414 = vunpack.c.l.b16 %v4329
        %v4415 = vunpack.c.h.b16 %v4329
        %v4416 = vunpack.c.l.b16 %v4330
        %v4417 = vunpack.c.h.b16 %v4330
        %v4418 = vunpack.c.l.b16 %v4331
        %v4419 = vunpack.c.h.b16 %v4331
        %v4420 = vunpack.c.l.b16 %v4332
        %v4421 = vunpack.c.h.b16 %v4332
        %v4422 = vunpack.c.l.b16 %v4333
        %v4423 = vunpack.c.h.b16 %v4333
        %v4424 = vunpack.c.l.b16 %v4334
        %v4425 = vunpack.c.h.b16 %v4334
        %v4426 = vunpack.c.l.b16 %v4335
        %v4427 = vunpack.c.h.b16 %v4335
        %v4428 = vunpack.c.l.b16 %v4336
        %v4429 = vunpack.c.h.b16 %v4336
        %v4430 = vunpack.c.l.b16 %v4337
        %v4431 = vunpack.c.h.b16 %v4337
        %v4432 = vunpack.c.l.b16 %v4338
        %v4433 = vunpack.c.h.b16 %v4338
        %v4434 = vunpack.c.l.b16 %v4339
        %v4435 = vunpack.c.h.b16 %v4339
        %v4436 = vunpack.c.l.b16 %v4340
        %v4437 = vunpack.c.h.b16 %v4340
        %v4438 = vunpack.c.l.b16 %v4341
        %v4439 = vunpack.c.h.b16 %v4341
        %v4440 = vunpack.c.l.b16 %v4342
        %v4441 = vunpack.c.h.b16 %v4342
        %v4442 = vunpack.c.l.b16 %v4343
        %v4443 = vunpack.c.h.b16 %v4343
        %v4444 = vunpack.c.l.b16 %v4344
        %v4445 = vunpack.c.h.b16 %v4344
        %v4446 = vunpack.c.l.b16 %v4345
        %v4447 = vunpack.c.h.b16 %v4345
        %v4448 = vunpack.c.l.b16 %v4346
        %v4449 = vunpack.c.h.b16 %v4346
        %v4450 = vpack.c.b16 %v4388, %v4386
        %v4451 = vpack.c.b16 %v4389, %v4387
        %v4452 = vpack.c.b16 %v4392, %v4390
        %v4453 = vpack.c.b16 %v4393, %v4391
        %v4454 = vpack.c.b16 %v4396, %v4394
        %v4455 = vpack.c.b16 %v4397, %v4395
        %v4456 = vpack.c.b16 %v4400, %v4398
        %v4457 = vpack.c.b16 %v4401, %v4399
        %v4458 = vpack.c.b16 %v4404, %v4402
        %v4459 = vpack.c.b16 %v4405, %v4403
        %v4460 = vpack.c.b16 %v4408, %v4406
        %v4461 = vpack.c.b16 %v4409, %v4407
        %v4462 = vpack.c.b16 %v4412, %v4410
        %v4463 = vpack.c.b16 %v4413, %v4411
        %v4464 = vpack.c.b16 %v4416, %v4414
        %v4465 = vpack.c.b16 %v4417, %v4415
        %v4466 = vpack.c.b16 %v4420, %v4418
        %v4467 = vpack.c.b16 %v4421, %v4419
        %v4468 = vpack.c.b16 %v4424, %v4422
        %v4469 = vpack.c.b16 %v4425, %v4423
        %v4470 = vpack.c.b16 %v4428, %v4426
        %v4471 = vpack.c.b16 %v4429, %v4427
        %v4472 = vpack.c.b16 %v4432, %v4430
        %v4473 = vpack.c.b16 %v4433, %v4431
        %v4474 = vpack.c.b16 %v4436, %v4434
        %v4475 = vpack.c.b16 %v4437, %v4435
        %v4476 = vpack.c.b16 %v4440, %v4438
        %v4477 = vpack.c.b16 %v4441, %v4439
        %v4478 = vpack.c.b16 %v4444, %v4442
        %v4479 = vpack.c.b16 %v4445, %v4443
        %v4480 = vpack.c.b16 %v4448, %v4446
        %v4481 = vpack.c.b16 %v4449, %v4447
        %4514 = vmatpush.bf16.msra.mxu0 %v4464
        %4515 = vmatpush.bf16.msra.mxu0 %v4462
        %4516 = vmatpush.bf16.msra.mxu0 %v4460
        %4517 = vmatpush.bf16.msra.mxu0 %v4458
        %4518 = vmatpush.bf16.msra.mxu0 %v4456
        %4519 = vmatpush.bf16.msra.mxu0 %v4454
        %4520 = vmatpush.bf16.msra.mxu0 %v4452
        %4521 = vmatpush.bf16.msra.mxu0 %v4450
        %4522 = vmatmul.bf16.gmra.mxu0 %v4250
        %v4523 = vpop.f32.mrf.mxu0
        %v4524 = vadd.f32 %v4350, %v4523
        %v4525 = vpop.f32.mrf.mxu0
        %v4526 = vadd.f32 %v4350, %v4525
        %4527 = vmatmul.bf16.gmra.mxu0 %v4252
        %v4528 = vpop.f32.mrf.mxu0
        %v4529 = vadd.f32 %v4350, %v4528
        %v4530 = vpop.f32.mrf.mxu0
        %v4531 = vadd.f32 %v4350, %v4530
        %4532 = vmatmul.bf16.gmra.mxu0 %v4254
        %v4533 = vpop.f32.mrf.mxu0
        %v4534 = vadd.f32 %v4350, %v4533
        %v4535 = vpop.f32.mrf.mxu0
        %v4536 = vadd.f32 %v4350, %v4535
        %4537 = vmatmul.bf16.gmra.mxu0 %v4256
        %v4538 = vpop.f32.mrf.mxu0
        %v4539 = vadd.f32 %v4350, %v4538
        %v4540 = vpop.f32.mrf.mxu0
        %v4541 = vadd.f32 %v4350, %v4540
        %4542 = vmatmul.bf16.gmra.mxu0 %v4258
        %v4543 = vpop.f32.mrf.mxu0
        %v4544 = vadd.f32 %v4350, %v4543
        %v4545 = vpop.f32.mrf.mxu0
        %v4546 = vadd.f32 %v4350, %v4545
        %4547 = vmatmul.bf16.gmra.mxu0 %v4260
        %v4548 = vpop.f32.mrf.mxu0
        %v4549 = vadd.f32 %v4350, %v4548
        %v4550 = vpop.f32.mrf.mxu0
        %v4551 = vadd.f32 %v4350, %v4550
        %4552 = vmatmul.bf16.gmra.mxu0 %v4262
        %v4553 = vpop.f32.mrf.mxu0
        %v4554 = vadd.f32 %v4350, %v4553
        %v4555 = vpop.f32.mrf.mxu0
        %v4556 = vadd.f32 %v4350, %v4555
        %4557 = vmatmul.bf16.gmra.mxu0 %v4264
        %v4558 = vpop.f32.mrf.mxu0
        %v4559 = vadd.f32 %v4350, %v4558
        %v4560 = vpop.f32.mrf.mxu0
        %v4561 = vadd.f32 %v4350, %v4560
        %4562 = vmatmul.bf16.gmra.mxu0 %v4266
        %v4563 = vpop.f32.mrf.mxu0
        %v4564 = vadd.f32 %v4350, %v4563
        %v4565 = vpop.f32.mrf.mxu0
        %v4566 = vadd.f32 %v4350, %v4565
        %4567 = vmatmul.bf16.gmra.mxu0 %v4268
        %v4568 = vpop.f32.mrf.mxu0
        %v4569 = vadd.f32 %v4350, %v4568
        %v4570 = vpop.f32.mrf.mxu0
        %v4571 = vadd.f32 %v4350, %v4570
        %4572 = vmatmul.bf16.gmra.mxu0 %v4270
        %v4573 = vpop.f32.mrf.mxu0
        %v4574 = vadd.f32 %v4350, %v4573
        %v4575 = vpop.f32.mrf.mxu0
        %v4576 = vadd.f32 %v4350, %v4575
        %4577 = vmatmul.bf16.gmra.mxu0 %v4272
        %v4578 = vpop.f32.mrf.mxu0
        %v4579 = vadd.f32 %v4350, %v4578
        %v4580 = vpop.f32.mrf.mxu0
        %v4581 = vadd.f32 %v4350, %v4580
        %4582 = vmatmul.bf16.gmra.mxu0 %v4274
        %v4583 = vpop.f32.mrf.mxu0
        %v4584 = vadd.f32 %v4350, %v4583
        %v4585 = vpop.f32.mrf.mxu0
        %v4586 = vadd.f32 %v4350, %v4585
        %4587 = vmatmul.bf16.gmra.mxu0 %v4276
        %v4588 = vpop.f32.mrf.mxu0
        %v4589 = vadd.f32 %v4350, %v4588
        %v4590 = vpop.f32.mrf.mxu0
        %v4591 = vadd.f32 %v4350, %v4590
        %4592 = vmatmul.bf16.gmra.mxu0 %v4278
        %v4593 = vpop.f32.mrf.mxu0
        %v4594 = vadd.f32 %v4350, %v4593
        %v4595 = vpop.f32.mrf.mxu0
        %v4596 = vadd.f32 %v4350, %v4595
        %4597 = vmatmul.bf16.gmra.mxu0 %v4280
        %v4598 = vpop.f32.mrf.mxu0
        %v4599 = vadd.f32 %v4350, %v4598
        %v4600 = vpop.f32.mrf.mxu0
        %v4601 = vadd.f32 %v4350, %v4600
        %4602 = vmatmul.bf16.gmra.mxu0 %v4282
        %v4603 = vpop.f32.mrf.mxu0
        %v4604 = vadd.f32 %v4350, %v4603
        %v4605 = vpop.f32.mrf.mxu0
        %v4606 = vadd.f32 %v4350, %v4605
        %4607 = vmatmul.bf16.gmra.mxu0 %v4284
        %v4608 = vpop.f32.mrf.mxu0
        %v4609 = vadd.f32 %v4350, %v4608
        %v4610 = vpop.f32.mrf.mxu0
        %v4611 = vadd.f32 %v4350, %v4610
        %4612 = vmatmul.bf16.gmra.mxu0 %v4286
        %v4613 = vpop.f32.mrf.mxu0
        %v4614 = vadd.f32 %v4350, %v4613
        %v4615 = vpop.f32.mrf.mxu0
        %v4616 = vadd.f32 %v4350, %v4615
        %4617 = vmatmul.bf16.gmra.mxu0 %v4288
        %v4618 = vpop.f32.mrf.mxu0
        %v4619 = vadd.f32 %v4350, %v4618
        %v4620 = vpop.f32.mrf.mxu0
        %v4621 = vadd.f32 %v4350, %v4620
        %4622 = vmatmul.bf16.gmra.mxu0 %v4290
        %v4623 = vpop.f32.mrf.mxu0
        %v4624 = vadd.f32 %v4350, %v4623
        %v4625 = vpop.f32.mrf.mxu0
        %v4626 = vadd.f32 %v4350, %v4625
        %4627 = vmatmul.bf16.gmra.mxu0 %v4292
        %v4628 = vpop.f32.mrf.mxu0
        %v4629 = vadd.f32 %v4350, %v4628
        %v4630 = vpop.f32.mrf.mxu0
        %v4631 = vadd.f32 %v4350, %v4630
        %4632 = vmatmul.bf16.gmra.mxu0 %v4294
        %v4633 = vpop.f32.mrf.mxu0
        %v4634 = vadd.f32 %v4350, %v4633
        %v4635 = vpop.f32.mrf.mxu0
        %v4636 = vadd.f32 %v4350, %v4635
        %4637 = vmatmul.bf16.gmra.mxu0 %v4296
        %v4638 = vpop.f32.mrf.mxu0
        %v4639 = vadd.f32 %v4350, %v4638
        %v4640 = vpop.f32.mrf.mxu0
        %v4641 = vadd.f32 %v4350, %v4640
        %4642 = vmatmul.bf16.gmra.mxu0 %v4298
        %v4643 = vpop.f32.mrf.mxu0
        %v4644 = vadd.f32 %v4350, %v4643
        %v4645 = vpop.f32.mrf.mxu0
        %v4646 = vadd.f32 %v4350, %v4645
        %4647 = vmatmul.bf16.gmra.mxu0 %v4300
        %v4648 = vpop.f32.mrf.mxu0
        %v4649 = vadd.f32 %v4350, %v4648
        %v4650 = vpop.f32.mrf.mxu0
        %v4651 = vadd.f32 %v4350, %v4650
        %4652 = vmatmul.bf16.gmra.mxu0 %v4302
        %v4653 = vpop.f32.mrf.mxu0
        %v4654 = vadd.f32 %v4350, %v4653
        %v4655 = vpop.f32.mrf.mxu0
        %v4656 = vadd.f32 %v4350, %v4655
        %4657 = vmatmul.bf16.gmra.mxu0 %v4304
        %v4658 = vpop.f32.mrf.mxu0
        %v4659 = vadd.f32 %v4350, %v4658
        %v4660 = vpop.f32.mrf.mxu0
        %v4661 = vadd.f32 %v4350, %v4660
        %4662 = vmatmul.bf16.gmra.mxu0 %v4306
        %v4663 = vpop.f32.mrf.mxu0
        %v4664 = vadd.f32 %v4350, %v4663
        %v4665 = vpop.f32.mrf.mxu0
        %v4666 = vadd.f32 %v4350, %v4665
        %4667 = vmatmul.bf16.gmra.mxu0 %v4308
        %v4668 = vpop.f32.mrf.mxu0
        %v4669 = vadd.f32 %v4350, %v4668
        %v4670 = vpop.f32.mrf.mxu0
        %v4671 = vadd.f32 %v4350, %v4670
        %4672 = vmatmul.bf16.gmra.mxu0 %v4310
        %v4673 = vpop.f32.mrf.mxu0
        %v4674 = vadd.f32 %v4350, %v4673
        %v4675 = vpop.f32.mrf.mxu0
        %v4676 = vadd.f32 %v4350, %v4675
        %4677 = vmatmul.bf16.gmra.mxu0 %v4312
        %v4678 = vpop.f32.mrf.mxu0
        %v4679 = vadd.f32 %v4350, %v4678
        %v4680 = vpop.f32.mrf.mxu0
        %v4681 = vadd.f32 %v4350, %v4680
        %4682 = vdwg.mxu0
        %4683 = vmatpush.bf16.msra.mxu0 %v4480
        %4684 = vmatpush.bf16.msra.mxu0 %v4478
        %4685 = vmatpush.bf16.msra.mxu0 %v4476
        %4686 = vmatpush.bf16.msra.mxu0 %v4474
        %4687 = vmatpush.bf16.msra.mxu0 %v4472
        %4688 = vmatpush.bf16.msra.mxu0 %v4470
        %4689 = vmatpush.bf16.msra.mxu0 %v4468
        %4690 = vmatpush.bf16.msra.mxu0 %v4466
        %4691 = vmatmul.bf16.gmra.mxu0 %v4251
        %v4692 = vpop.f32.mrf.mxu0
        %v4693 = vadd.f32 %v4524, %v4692
        %v4694 = vpop.f32.mrf.mxu0
        %v4695 = vadd.f32 %v4526, %v4694
        %4696 = vmatmul.bf16.gmra.mxu0 %v4253
        %v4697 = vpop.f32.mrf.mxu0
        %v4698 = vadd.f32 %v4529, %v4697
        %v4699 = vpop.f32.mrf.mxu0
        %v4700 = vadd.f32 %v4531, %v4699
        %4701 = vmatmul.bf16.gmra.mxu0 %v4255
        %v4702 = vpop.f32.mrf.mxu0
        %v4703 = vadd.f32 %v4534, %v4702
        %v4704 = vpop.f32.mrf.mxu0
        %v4705 = vadd.f32 %v4536, %v4704
        %4706 = vmatmul.bf16.gmra.mxu0 %v4257
        %v4707 = vpop.f32.mrf.mxu0
        %v4708 = vadd.f32 %v4539, %v4707
        %v4709 = vpop.f32.mrf.mxu0
        %v4710 = vadd.f32 %v4541, %v4709
        %4711 = vmatmul.bf16.gmra.mxu0 %v4259
        %v4712 = vpop.f32.mrf.mxu0
        %v4713 = vadd.f32 %v4544, %v4712
        %v4714 = vpop.f32.mrf.mxu0
        %v4715 = vadd.f32 %v4546, %v4714
        %4716 = vmatmul.bf16.gmra.mxu0 %v4261
        %v4717 = vpop.f32.mrf.mxu0
        %v4718 = vadd.f32 %v4549, %v4717
        %v4719 = vpop.f32.mrf.mxu0
        %v4720 = vadd.f32 %v4551, %v4719
        %4721 = vmatmul.bf16.gmra.mxu0 %v4263
        %v4722 = vpop.f32.mrf.mxu0
        %v4723 = vadd.f32 %v4554, %v4722
        %v4724 = vpop.f32.mrf.mxu0
        %v4725 = vadd.f32 %v4556, %v4724
        %4726 = vmatmul.bf16.gmra.mxu0 %v4265
        %v4727 = vpop.f32.mrf.mxu0
        %v4728 = vadd.f32 %v4559, %v4727
        %v4729 = vpop.f32.mrf.mxu0
        %v4730 = vadd.f32 %v4561, %v4729
        %4731 = vmatmul.bf16.gmra.mxu0 %v4267
        %v4732 = vpop.f32.mrf.mxu0
        %v4733 = vadd.f32 %v4564, %v4732
        %v4734 = vpop.f32.mrf.mxu0
        %v4735 = vadd.f32 %v4566, %v4734
        %4736 = vmatmul.bf16.gmra.mxu0 %v4269
        %v4737 = vpop.f32.mrf.mxu0
        %v4738 = vadd.f32 %v4569, %v4737
        %v4739 = vpop.f32.mrf.mxu0
        %v4740 = vadd.f32 %v4571, %v4739
        %4741 = vmatmul.bf16.gmra.mxu0 %v4271
        %v4742 = vpop.f32.mrf.mxu0
        %v4743 = vadd.f32 %v4574, %v4742
        %v4744 = vpop.f32.mrf.mxu0
        %v4745 = vadd.f32 %v4576, %v4744
        %4746 = vmatmul.bf16.gmra.mxu0 %v4273
        %v4747 = vpop.f32.mrf.mxu0
        %v4748 = vadd.f32 %v4579, %v4747
        %v4749 = vpop.f32.mrf.mxu0
        %v4750 = vadd.f32 %v4581, %v4749
        %4751 = vmatmul.bf16.gmra.mxu0 %v4275
        %v4752 = vpop.f32.mrf.mxu0
        %v4753 = vadd.f32 %v4584, %v4752
        %v4754 = vpop.f32.mrf.mxu0
        %v4755 = vadd.f32 %v4586, %v4754
        %4756 = vmatmul.bf16.gmra.mxu0 %v4277
        %v4757 = vpop.f32.mrf.mxu0
        %v4758 = vadd.f32 %v4589, %v4757
        %v4759 = vpop.f32.mrf.mxu0
        %v4760 = vadd.f32 %v4591, %v4759
        %4761 = vmatmul.bf16.gmra.mxu0 %v4279
        %v4762 = vpop.f32.mrf.mxu0
        %v4763 = vadd.f32 %v4594, %v4762
        %v4764 = vpop.f32.mrf.mxu0
        %v4765 = vadd.f32 %v4596, %v4764
        %4766 = vmatmul.bf16.gmra.mxu0 %v4281
        %v4767 = vpop.f32.mrf.mxu0
        %v4768 = vadd.f32 %v4599, %v4767
        %v4769 = vpop.f32.mrf.mxu0
        %v4770 = vadd.f32 %v4601, %v4769
        %4771 = vmatmul.bf16.gmra.mxu0 %v4283
        %v4772 = vpop.f32.mrf.mxu0
        %v4773 = vadd.f32 %v4604, %v4772
        %v4774 = vpop.f32.mrf.mxu0
        %v4775 = vadd.f32 %v4606, %v4774
        %4776 = vmatmul.bf16.gmra.mxu0 %v4285
        %v4777 = vpop.f32.mrf.mxu0
        %v4778 = vadd.f32 %v4609, %v4777
        %v4779 = vpop.f32.mrf.mxu0
        %v4780 = vadd.f32 %v4611, %v4779
        %4781 = vmatmul.bf16.gmra.mxu0 %v4287
        %v4782 = vpop.f32.mrf.mxu0
        %v4783 = vadd.f32 %v4614, %v4782
        %v4784 = vpop.f32.mrf.mxu0
        %v4785 = vadd.f32 %v4616, %v4784
        %4786 = vmatmul.bf16.gmra.mxu0 %v4289
        %v4787 = vpop.f32.mrf.mxu0
        %v4788 = vadd.f32 %v4619, %v4787
        %v4789 = vpop.f32.mrf.mxu0
        %v4790 = vadd.f32 %v4621, %v4789
        %4791 = vmatmul.bf16.gmra.mxu0 %v4291
        %v4792 = vpop.f32.mrf.mxu0
        %v4793 = vadd.f32 %v4624, %v4792
        %v4794 = vpop.f32.mrf.mxu0
        %v4795 = vadd.f32 %v4626, %v4794
        %4796 = vmatmul.bf16.gmra.mxu0 %v4293
        %v4797 = vpop.f32.mrf.mxu0
        %v4798 = vadd.f32 %v4629, %v4797
        %v4799 = vpop.f32.mrf.mxu0
        %v4800 = vadd.f32 %v4631, %v4799
        %4801 = vmatmul.bf16.gmra.mxu0 %v4295
        %v4802 = vpop.f32.mrf.mxu0
        %v4803 = vadd.f32 %v4634, %v4802
        %v4804 = vpop.f32.mrf.mxu0
        %v4805 = vadd.f32 %v4636, %v4804
        %4806 = vmatmul.bf16.gmra.mxu0 %v4297
        %v4807 = vpop.f32.mrf.mxu0
        %v4808 = vadd.f32 %v4639, %v4807
        %v4809 = vpop.f32.mrf.mxu0
        %v4810 = vadd.f32 %v4641, %v4809
        %4811 = vmatmul.bf16.gmra.mxu0 %v4299
        %v4812 = vpop.f32.mrf.mxu0
        %v4813 = vadd.f32 %v4644, %v4812
        %v4814 = vpop.f32.mrf.mxu0
        %v4815 = vadd.f32 %v4646, %v4814
        %4816 = vmatmul.bf16.gmra.mxu0 %v4301
        %v4817 = vpop.f32.mrf.mxu0
        %v4818 = vadd.f32 %v4649, %v4817
        %v4819 = vpop.f32.mrf.mxu0
        %v4820 = vadd.f32 %v4651, %v4819
        %4821 = vmatmul.bf16.gmra.mxu0 %v4303
        %v4822 = vpop.f32.mrf.mxu0
        %v4823 = vadd.f32 %v4654, %v4822
        %v4824 = vpop.f32.mrf.mxu0
        %v4825 = vadd.f32 %v4656, %v4824
        %4826 = vmatmul.bf16.gmra.mxu0 %v4305
        %v4827 = vpop.f32.mrf.mxu0
        %v4828 = vadd.f32 %v4659, %v4827
        %v4829 = vpop.f32.mrf.mxu0
        %v4830 = vadd.f32 %v4661, %v4829
        %4831 = vmatmul.bf16.gmra.mxu0 %v4307
        %v4832 = vpop.f32.mrf.mxu0
        %v4833 = vadd.f32 %v4664, %v4832
        %v4834 = vpop.f32.mrf.mxu0
        %v4835 = vadd.f32 %v4666, %v4834
        %4836 = vmatmul.bf16.gmra.mxu0 %v4309
        %v4837 = vpop.f32.mrf.mxu0
        %v4838 = vadd.f32 %v4669, %v4837
        %v4839 = vpop.f32.mrf.mxu0
        %v4840 = vadd.f32 %v4671, %v4839
        %4841 = vmatmul.bf16.gmra.mxu0 %v4311
        %v4842 = vpop.f32.mrf.mxu0
        %v4843 = vadd.f32 %v4674, %v4842
        %v4844 = vpop.f32.mrf.mxu0
        %v4845 = vadd.f32 %v4676, %v4844
        %4846 = vmatmul.bf16.gmra.mxu0 %v4313
        %v4847 = vpop.f32.mrf.mxu0
        %v4848 = vadd.f32 %v4679, %v4847
        %v4849 = vpop.f32.mrf.mxu0
        %v4850 = vadd.f32 %v4681, %v4849
        %4851 = vdwg.mxu0
        %4852 = vmatpush.bf16.msra.mxu0 %v4465
        %4853 = vmatpush.bf16.msra.mxu0 %v4463
        %4854 = vmatpush.bf16.msra.mxu0 %v4461
        %4855 = vmatpush.bf16.msra.mxu0 %v4459
        %4856 = vmatpush.bf16.msra.mxu0 %v4457
        %4857 = vmatpush.bf16.msra.mxu0 %v4455
        %4858 = vmatpush.bf16.msra.mxu0 %v4453
        %4859 = vmatpush.bf16.msra.mxu0 %v4451
        %4860 = vmatmul.bf16.gmra.mxu0 %v4250
        %v4861 = vpop.f32.mrf.mxu0
        %v4862 = vadd.f32 %v4351, %v4861
        %v4863 = vpop.f32.mrf.mxu0
        %v4864 = vadd.f32 %v4351, %v4863
        %4865 = vmatmul.bf16.gmra.mxu0 %v4252
        %v4866 = vpop.f32.mrf.mxu0
        %v4867 = vadd.f32 %v4351, %v4866
        %v4868 = vpop.f32.mrf.mxu0
        %v4869 = vadd.f32 %v4351, %v4868
        %4870 = vmatmul.bf16.gmra.mxu0 %v4254
        %v4871 = vpop.f32.mrf.mxu0
        %v4872 = vadd.f32 %v4351, %v4871
        %v4873 = vpop.f32.mrf.mxu0
        %v4874 = vadd.f32 %v4351, %v4873
        %4875 = vmatmul.bf16.gmra.mxu0 %v4256
        %v4876 = vpop.f32.mrf.mxu0
        %v4877 = vadd.f32 %v4351, %v4876
        %v4878 = vpop.f32.mrf.mxu0
        %v4879 = vadd.f32 %v4351, %v4878
        %4880 = vmatmul.bf16.gmra.mxu0 %v4258
        %v4881 = vpop.f32.mrf.mxu0
        %v4882 = vadd.f32 %v4351, %v4881
        %v4883 = vpop.f32.mrf.mxu0
        %v4884 = vadd.f32 %v4351, %v4883
        %4885 = vmatmul.bf16.gmra.mxu0 %v4260
        %v4886 = vpop.f32.mrf.mxu0
        %v4887 = vadd.f32 %v4351, %v4886
        %v4888 = vpop.f32.mrf.mxu0
        %v4889 = vadd.f32 %v4351, %v4888
        %4890 = vmatmul.bf16.gmra.mxu0 %v4262
        %v4891 = vpop.f32.mrf.mxu0
        %v4892 = vadd.f32 %v4351, %v4891
        %v4893 = vpop.f32.mrf.mxu0
        %v4894 = vadd.f32 %v4351, %v4893
        %4895 = vmatmul.bf16.gmra.mxu0 %v4264
        %v4896 = vpop.f32.mrf.mxu0
        %v4897 = vadd.f32 %v4351, %v4896
        %v4898 = vpop.f32.mrf.mxu0
        %v4899 = vadd.f32 %v4351, %v4898
        %4900 = vmatmul.bf16.gmra.mxu0 %v4266
        %v4901 = vpop.f32.mrf.mxu0
        %v4902 = vadd.f32 %v4351, %v4901
        %v4903 = vpop.f32.mrf.mxu0
        %v4904 = vadd.f32 %v4351, %v4903
        %4905 = vmatmul.bf16.gmra.mxu0 %v4268
        %v4906 = vpop.f32.mrf.mxu0
        %v4907 = vadd.f32 %v4351, %v4906
        %v4908 = vpop.f32.mrf.mxu0
        %v4909 = vadd.f32 %v4351, %v4908
        %4910 = vmatmul.bf16.gmra.mxu0 %v4270
        %v4911 = vpop.f32.mrf.mxu0
        %v4912 = vadd.f32 %v4351, %v4911
        %v4913 = vpop.f32.mrf.mxu0
        %v4914 = vadd.f32 %v4351, %v4913
        %4915 = vmatmul.bf16.gmra.mxu0 %v4272
        %v4916 = vpop.f32.mrf.mxu0
        %v4917 = vadd.f32 %v4351, %v4916
        %v4918 = vpop.f32.mrf.mxu0
        %v4919 = vadd.f32 %v4351, %v4918
        %4920 = vmatmul.bf16.gmra.mxu0 %v4274
        %v4921 = vpop.f32.mrf.mxu0
        %v4922 = vadd.f32 %v4351, %v4921
        %v4923 = vpop.f32.mrf.mxu0
        %v4924 = vadd.f32 %v4351, %v4923
        %4925 = vmatmul.bf16.gmra.mxu0 %v4276
        %v4926 = vpop.f32.mrf.mxu0
        %v4927 = vadd.f32 %v4351, %v4926
        %v4928 = vpop.f32.mrf.mxu0
        %v4929 = vadd.f32 %v4351, %v4928
        %4930 = vmatmul.bf16.gmra.mxu0 %v4278
        %v4931 = vpop.f32.mrf.mxu0
        %v4932 = vadd.f32 %v4351, %v4931
        %v4933 = vpop.f32.mrf.mxu0
        %v4934 = vadd.f32 %v4351, %v4933
        %4935 = vmatmul.bf16.gmra.mxu0 %v4280
        %v4936 = vpop.f32.mrf.mxu0
        %v4937 = vadd.f32 %v4351, %v4936
        %v4938 = vpop.f32.mrf.mxu0
        %v4939 = vadd.f32 %v4351, %v4938
        %4940 = vmatmul.bf16.gmra.mxu0 %v4282
        %v4941 = vpop.f32.mrf.mxu0
        %v4942 = vadd.f32 %v4351, %v4941
        %v4943 = vpop.f32.mrf.mxu0
        %v4944 = vadd.f32 %v4351, %v4943
        %4945 = vmatmul.bf16.gmra.mxu0 %v4284
        %v4946 = vpop.f32.mrf.mxu0
        %v4947 = vadd.f32 %v4351, %v4946
        %v4948 = vpop.f32.mrf.mxu0
        %v4949 = vadd.f32 %v4351, %v4948
        %4950 = vmatmul.bf16.gmra.mxu0 %v4286
        %v4951 = vpop.f32.mrf.mxu0
        %v4952 = vadd.f32 %v4351, %v4951
        %v4953 = vpop.f32.mrf.mxu0
        %v4954 = vadd.f32 %v4351, %v4953
        %4955 = vmatmul.bf16.gmra.mxu0 %v4288
        %v4956 = vpop.f32.mrf.mxu0
        %v4957 = vadd.f32 %v4351, %v4956
        %v4958 = vpop.f32.mrf.mxu0
        %v4959 = vadd.f32 %v4351, %v4958
        %4960 = vmatmul.bf16.gmra.mxu0 %v4290
        %v4961 = vpop.f32.mrf.mxu0
        %v4962 = vadd.f32 %v4351, %v4961
        %v4963 = vpop.f32.mrf.mxu0
        %v4964 = vadd.f32 %v4351, %v4963
        %4965 = vmatmul.bf16.gmra.mxu0 %v4292
        %v4966 = vpop.f32.mrf.mxu0
        %v4967 = vadd.f32 %v4351, %v4966
        %v4968 = vpop.f32.mrf.mxu0
        %v4969 = vadd.f32 %v4351, %v4968
        %4970 = vmatmul.bf16.gmra.mxu0 %v4294
        %v4971 = vpop.f32.mrf.mxu0
        %v4972 = vadd.f32 %v4351, %v4971
        %v4973 = vpop.f32.mrf.mxu0
        %v4974 = vadd.f32 %v4351, %v4973
        %4975 = vmatmul.bf16.gmra.mxu0 %v4296
        %v4976 = vpop.f32.mrf.mxu0
        %v4977 = vadd.f32 %v4351, %v4976
        %v4978 = vpop.f32.mrf.mxu0
        %v4979 = vadd.f32 %v4351, %v4978
        %4980 = vmatmul.bf16.gmra.mxu0 %v4298
        %v4981 = vpop.f32.mrf.mxu0
        %v4982 = vadd.f32 %v4351, %v4981
        %v4983 = vpop.f32.mrf.mxu0
        %v4984 = vadd.f32 %v4351, %v4983
        %4985 = vmatmul.bf16.gmra.mxu0 %v4300
        %v4986 = vpop.f32.mrf.mxu0
        %v4987 = vadd.f32 %v4351, %v4986
        %v4988 = vpop.f32.mrf.mxu0
        %v4989 = vadd.f32 %v4351, %v4988
        %4990 = vmatmul.bf16.gmra.mxu0 %v4302
        %v4991 = vpop.f32.mrf.mxu0
        %v4992 = vadd.f32 %v4351, %v4991
        %v4993 = vpop.f32.mrf.mxu0
        %v4994 = vadd.f32 %v4351, %v4993
        %4995 = vmatmul.bf16.gmra.mxu0 %v4304
        %v4996 = vpop.f32.mrf.mxu0
        %v4997 = vadd.f32 %v4351, %v4996
        %v4998 = vpop.f32.mrf.mxu0
        %v4999 = vadd.f32 %v4351, %v4998
        %5000 = vmatmul.bf16.gmra.mxu0 %v4306
        %v5001 = vpop.f32.mrf.mxu0
        %v5002 = vadd.f32 %v4351, %v5001
        %v5003 = vpop.f32.mrf.mxu0
        %v5004 = vadd.f32 %v4351, %v5003
        %5005 = vmatmul.bf16.gmra.mxu0 %v4308
        %v5006 = vpop.f32.mrf.mxu0
        %v5007 = vadd.f32 %v4351, %v5006
        %v5008 = vpop.f32.mrf.mxu0
        %v5009 = vadd.f32 %v4351, %v5008
        %5010 = vmatmul.bf16.gmra.mxu0 %v4310
        %v5011 = vpop.f32.mrf.mxu0
        %v5012 = vadd.f32 %v4351, %v5011
        %v5013 = vpop.f32.mrf.mxu0
        %v5014 = vadd.f32 %v4351, %v5013
        %5015 = vmatmul.bf16.gmra.mxu0 %v4312
        %v5016 = vpop.f32.mrf.mxu0
        %v5017 = vadd.f32 %v4351, %v5016
        %v5018 = vpop.f32.mrf.mxu0
        %v5019 = vadd.f32 %v4351, %v5018
        %5020 = vdwg.mxu0
        %5021 = vmatpush.bf16.msra.mxu0 %v4481
        %5022 = vmatpush.bf16.msra.mxu0 %v4479
        %5023 = vmatpush.bf16.msra.mxu0 %v4477
        %5024 = vmatpush.bf16.msra.mxu0 %v4475
        %5025 = vmatpush.bf16.msra.mxu0 %v4473
        %5026 = vmatpush.bf16.msra.mxu0 %v4471
        %5027 = vmatpush.bf16.msra.mxu0 %v4469
        %5028 = vmatpush.bf16.msra.mxu0 %v4467
        %5029 = vmatmul.bf16.gmra.mxu0 %v4251
        %v5030 = vpop.f32.mrf.mxu0
        %v5031 = vadd.f32 %v4862, %v5030
        %v5032 = vpop.f32.mrf.mxu0
        %v5033 = vadd.f32 %v4864, %v5032
        %5034 = vmatmul.bf16.gmra.mxu0 %v4253
        %v5035 = vpop.f32.mrf.mxu0
        %v5036 = vadd.f32 %v4867, %v5035
        %v5037 = vpop.f32.mrf.mxu0
        %v5038 = vadd.f32 %v4869, %v5037
        %5039 = vmatmul.bf16.gmra.mxu0 %v4255
        %v5040 = vpop.f32.mrf.mxu0
        %v5041 = vadd.f32 %v4872, %v5040
        %v5042 = vpop.f32.mrf.mxu0
        %v5043 = vadd.f32 %v4874, %v5042
        %5044 = vmatmul.bf16.gmra.mxu0 %v4257
        %v5045 = vpop.f32.mrf.mxu0
        %v5046 = vadd.f32 %v4877, %v5045
        %v5047 = vpop.f32.mrf.mxu0
        %v5048 = vadd.f32 %v4879, %v5047
        %5049 = vmatmul.bf16.gmra.mxu0 %v4259
        %v5050 = vpop.f32.mrf.mxu0
        %v5051 = vadd.f32 %v4882, %v5050
        %v5052 = vpop.f32.mrf.mxu0
        %v5053 = vadd.f32 %v4884, %v5052
        %5054 = vmatmul.bf16.gmra.mxu0 %v4261
        %v5055 = vpop.f32.mrf.mxu0
        %v5056 = vadd.f32 %v4887, %v5055
        %v5057 = vpop.f32.mrf.mxu0
        %v5058 = vadd.f32 %v4889, %v5057
        %5059 = vmatmul.bf16.gmra.mxu0 %v4263
        %v5060 = vpop.f32.mrf.mxu0
        %v5061 = vadd.f32 %v4892, %v5060
        %v5062 = vpop.f32.mrf.mxu0
        %v5063 = vadd.f32 %v4894, %v5062
        %5064 = vmatmul.bf16.gmra.mxu0 %v4265
        %v5065 = vpop.f32.mrf.mxu0
        %v5066 = vadd.f32 %v4897, %v5065
        %v5067 = vpop.f32.mrf.mxu0
        %v5068 = vadd.f32 %v4899, %v5067
        %5069 = vmatmul.bf16.gmra.mxu0 %v4267
        %v5070 = vpop.f32.mrf.mxu0
        %v5071 = vadd.f32 %v4902, %v5070
        %v5072 = vpop.f32.mrf.mxu0
        %v5073 = vadd.f32 %v4904, %v5072
        %5074 = vmatmul.bf16.gmra.mxu0 %v4269
        %v5075 = vpop.f32.mrf.mxu0
        %v5076 = vadd.f32 %v4907, %v5075
        %v5077 = vpop.f32.mrf.mxu0
        %v5078 = vadd.f32 %v4909, %v5077
        %5079 = vmatmul.bf16.gmra.mxu0 %v4271
        %v5080 = vpop.f32.mrf.mxu0
        %v5081 = vadd.f32 %v4912, %v5080
        %v5082 = vpop.f32.mrf.mxu0
        %v5083 = vadd.f32 %v4914, %v5082
        %5084 = vmatmul.bf16.gmra.mxu0 %v4273
        %v5085 = vpop.f32.mrf.mxu0
        %v5086 = vadd.f32 %v4917, %v5085
        %v5087 = vpop.f32.mrf.mxu0
        %v5088 = vadd.f32 %v4919, %v5087
        %5089 = vmatmul.bf16.gmra.mxu0 %v4275
        %v5090 = vpop.f32.mrf.mxu0
        %v5091 = vadd.f32 %v4922, %v5090
        %v5092 = vpop.f32.mrf.mxu0
        %v5093 = vadd.f32 %v4924, %v5092
        %5094 = vmatmul.bf16.gmra.mxu0 %v4277
        %v5095 = vpop.f32.mrf.mxu0
        %v5096 = vadd.f32 %v4927, %v5095
        %v5097 = vpop.f32.mrf.mxu0
        %v5098 = vadd.f32 %v4929, %v5097
        %5099 = vmatmul.bf16.gmra.mxu0 %v4279
        %v5100 = vpop.f32.mrf.mxu0
        %v5101 = vadd.f32 %v4932, %v5100
        %v5102 = vpop.f32.mrf.mxu0
        %v5103 = vadd.f32 %v4934, %v5102
        %5104 = vmatmul.bf16.gmra.mxu0 %v4281
        %v5105 = vpop.f32.mrf.mxu0
        %v5106 = vadd.f32 %v4937, %v5105
        %v5107 = vpop.f32.mrf.mxu0
        %v5108 = vadd.f32 %v4939, %v5107
        %5109 = vmatmul.bf16.gmra.mxu0 %v4283
        %v5110 = vpop.f32.mrf.mxu0
        %v5111 = vadd.f32 %v4942, %v5110
        %v5112 = vpop.f32.mrf.mxu0
        %v5113 = vadd.f32 %v4944, %v5112
        %5114 = vmatmul.bf16.gmra.mxu0 %v4285
        %v5115 = vpop.f32.mrf.mxu0
        %v5116 = vadd.f32 %v4947, %v5115
        %v5117 = vpop.f32.mrf.mxu0
        %v5118 = vadd.f32 %v4949, %v5117
        %5119 = vmatmul.bf16.gmra.mxu0 %v4287
        %v5120 = vpop.f32.mrf.mxu0
        %v5121 = vadd.f32 %v4952, %v5120
        %v5122 = vpop.f32.mrf.mxu0
        %v5123 = vadd.f32 %v4954, %v5122
        %5124 = vmatmul.bf16.gmra.mxu0 %v4289
        %v5125 = vpop.f32.mrf.mxu0
        %v5126 = vadd.f32 %v4957, %v5125
        %v5127 = vpop.f32.mrf.mxu0
        %v5128 = vadd.f32 %v4959, %v5127
        %5129 = vmatmul.bf16.gmra.mxu0 %v4291
        %v5130 = vpop.f32.mrf.mxu0
        %v5131 = vadd.f32 %v4962, %v5130
        %v5132 = vpop.f32.mrf.mxu0
        %v5133 = vadd.f32 %v4964, %v5132
        %5134 = vmatmul.bf16.gmra.mxu0 %v4293
        %v5135 = vpop.f32.mrf.mxu0
        %v5136 = vadd.f32 %v4967, %v5135
        %v5137 = vpop.f32.mrf.mxu0
        %v5138 = vadd.f32 %v4969, %v5137
        %5139 = vmatmul.bf16.gmra.mxu0 %v4295
        %v5140 = vpop.f32.mrf.mxu0
        %v5141 = vadd.f32 %v4972, %v5140
        %v5142 = vpop.f32.mrf.mxu0
        %v5143 = vadd.f32 %v4974, %v5142
        %5144 = vmatmul.bf16.gmra.mxu0 %v4297
        %v5145 = vpop.f32.mrf.mxu0
        %v5146 = vadd.f32 %v4977, %v5145
        %v5147 = vpop.f32.mrf.mxu0
        %v5148 = vadd.f32 %v4979, %v5147
        %5149 = vmatmul.bf16.gmra.mxu0 %v4299
        %v5150 = vpop.f32.mrf.mxu0
        %v5151 = vadd.f32 %v4982, %v5150
        %v5152 = vpop.f32.mrf.mxu0
        %v5153 = vadd.f32 %v4984, %v5152
        %5154 = vmatmul.bf16.gmra.mxu0 %v4301
        %v5155 = vpop.f32.mrf.mxu0
        %v5156 = vadd.f32 %v4987, %v5155
        %v5157 = vpop.f32.mrf.mxu0
        %v5158 = vadd.f32 %v4989, %v5157
        %5159 = vmatmul.bf16.gmra.mxu0 %v4303
        %v5160 = vpop.f32.mrf.mxu0
        %v5161 = vadd.f32 %v4992, %v5160
        %v5162 = vpop.f32.mrf.mxu0
        %v5163 = vadd.f32 %v4994, %v5162
        %5164 = vmatmul.bf16.gmra.mxu0 %v4305
        %v5165 = vpop.f32.mrf.mxu0
        %v5166 = vadd.f32 %v4997, %v5165
        %v5167 = vpop.f32.mrf.mxu0
        %v5168 = vadd.f32 %v4999, %v5167
        %5169 = vmatmul.bf16.gmra.mxu0 %v4307
        %v5170 = vpop.f32.mrf.mxu0
        %v5171 = vadd.f32 %v5002, %v5170
        %v5172 = vpop.f32.mrf.mxu0
        %v5173 = vadd.f32 %v5004, %v5172
        %5174 = vmatmul.bf16.gmra.mxu0 %v4309
        %v5175 = vpop.f32.mrf.mxu0
        %v5176 = vadd.f32 %v5007, %v5175
        %v5177 = vpop.f32.mrf.mxu0
        %v5178 = vadd.f32 %v5009, %v5177
        %5179 = vmatmul.bf16.gmra.mxu0 %v4311
        %v5180 = vpop.f32.mrf.mxu0
        %v5181 = vadd.f32 %v5012, %v5180
        %v5182 = vpop.f32.mrf.mxu0
        %v5183 = vadd.f32 %v5014, %v5182
        %5184 = vmatmul.bf16.gmra.mxu0 %v4313
        %v5185 = vpop.f32.mrf.mxu0
        %v5186 = vadd.f32 %v5017, %v5185
        %v5187 = vpop.f32.mrf.mxu0
        %v5188 = vadd.f32 %v5019, %v5187
        %5189 = vdwg.mxu0
        %v5190 = vmax.f32 %v4693, 0.0
        %v5191 = vmax.f32 %v5031, 0.0
        %v5192 = vmax.f32 %v4695, 0.0
        %v5193 = vmax.f32 %v5033, 0.0
        %v5194 = vmax.f32 %v4698, 0.0
        %v5195 = vmax.f32 %v5036, 0.0
        %v5196 = vmax.f32 %v4700, 0.0
        %v5197 = vmax.f32 %v5038, 0.0
        %v5198 = vmax.f32 %v4703, 0.0
        %v5199 = vmax.f32 %v5041, 0.0
        %v5200 = vmax.f32 %v4705, 0.0
        %v5201 = vmax.f32 %v5043, 0.0
        %v5202 = vmax.f32 %v4708, 0.0
        %v5203 = vmax.f32 %v5046, 0.0
        %v5204 = vmax.f32 %v4710, 0.0
        %v5205 = vmax.f32 %v5048, 0.0
        %v5206 = vmax.f32 %v4713, 0.0
        %v5207 = vmax.f32 %v5051, 0.0
        %v5208 = vmax.f32 %v4715, 0.0
        %v5209 = vmax.f32 %v5053, 0.0
        %v5210 = vmax.f32 %v4718, 0.0
        %v5211 = vmax.f32 %v5056, 0.0
        %v5212 = vmax.f32 %v4720, 0.0
        %v5213 = vmax.f32 %v5058, 0.0
        %v5214 = vmax.f32 %v4723, 0.0
        %v5215 = vmax.f32 %v5061, 0.0
        %v5216 = vmax.f32 %v4725, 0.0
        %v5217 = vmax.f32 %v5063, 0.0
        %v5218 = vmax.f32 %v4728, 0.0
        %v5219 = vmax.f32 %v5066, 0.0
        %v5220 = vmax.f32 %v4730, 0.0
        %v5221 = vmax.f32 %v5068, 0.0
        %v5222 = vmax.f32 %v4733, 0.0
        %v5223 = vmax.f32 %v5071, 0.0
        %v5224 = vmax.f32 %v4735, 0.0
        %v5225 = vmax.f32 %v5073, 0.0
        %v5226 = vmax.f32 %v4738, 0.0
        %v5227 = vmax.f32 %v5076, 0.0
        %v5228 = vmax.f32 %v4740, 0.0
        %v5229 = vmax.f32 %v5078, 0.0
        %v5230 = vmax.f32 %v4743, 0.0
        %v5231 = vmax.f32 %v5081, 0.0
        %v5232 = vmax.f32 %v4745, 0.0
        %v5233 = vmax.f32 %v5083, 0.0
        %v5234 = vmax.f32 %v4748, 0.0
        %v5235 = vmax.f32 %v5086, 0.0
        %v5236 = vmax.f32 %v4750, 0.0
        %v5237 = vmax.f32 %v5088, 0.0
        %v5238 = vmax.f32 %v4753, 0.0
        %v5239 = vmax.f32 %v5091, 0.0
        %v5240 = vmax.f32 %v4755, 0.0
        %v5241 = vmax.f32 %v5093, 0.0
        %v5242 = vmax.f32 %v4758, 0.0
        %v5243 = vmax.f32 %v5096, 0.0
        %v5244 = vmax.f32 %v4760, 0.0
        %v5245 = vmax.f32 %v5098, 0.0
        %v5246 = vmax.f32 %v4763, 0.0
        %v5247 = vmax.f32 %v5101, 0.0
        %v5248 = vmax.f32 %v4765, 0.0
        %v5249 = vmax.f32 %v5103, 0.0
        %v5250 = vmax.f32 %v4768, 0.0
        %v5251 = vmax.f32 %v5106, 0.0
        %v5252 = vmax.f32 %v4770, 0.0
        %v5253 = vmax.f32 %v5108, 0.0
        %v5254 = vmax.f32 %v4773, 0.0
        %v5255 = vmax.f32 %v5111, 0.0
        %v5256 = vmax.f32 %v4775, 0.0
        %v5257 = vmax.f32 %v5113, 0.0
        %v5258 = vmax.f32 %v4778, 0.0
        %v5259 = vmax.f32 %v5116, 0.0
        %v5260 = vmax.f32 %v4780, 0.0
        %v5261 = vmax.f32 %v5118, 0.0
        %v5262 = vmax.f32 %v4783, 0.0
        %v5263 = vmax.f32 %v5121, 0.0
        %v5264 = vmax.f32 %v4785, 0.0
        %v5265 = vmax.f32 %v5123, 0.0
        %v5266 = vmax.f32 %v4788, 0.0
        %v5267 = vmax.f32 %v5126, 0.0
        %v5268 = vmax.f32 %v4790, 0.0
        %v5269 = vmax.f32 %v5128, 0.0
        %v5270 = vmax.f32 %v4793, 0.0
        %v5271 = vmax.f32 %v5131, 0.0
        %v5272 = vmax.f32 %v4795, 0.0
        %v5273 = vmax.f32 %v5133, 0.0
        %v5274 = vmax.f32 %v4798, 0.0
        %v5275 = vmax.f32 %v5136, 0.0
        %v5276 = vmax.f32 %v4800, 0.0
        %v5277 = vmax.f32 %v5138, 0.0
        %v5278 = vmax.f32 %v4803, 0.0
        %v5279 = vmax.f32 %v5141, 0.0
        %v5280 = vmax.f32 %v4805, 0.0
        %v5281 = vmax.f32 %v5143, 0.0
        %v5282 = vmax.f32 %v4808, 0.0
        %v5283 = vmax.f32 %v5146, 0.0
        %v5284 = vmax.f32 %v4810, 0.0
        %v5285 = vmax.f32 %v5148, 0.0
        %v5286 = vmax.f32 %v4813, 0.0
        %v5287 = vmax.f32 %v5151, 0.0
        %v5288 = vmax.f32 %v4815, 0.0
        %v5289 = vmax.f32 %v5153, 0.0
        %v5290 = vmax.f32 %v4818, 0.0
        %v5291 = vmax.f32 %v5156, 0.0
        %v5292 = vmax.f32 %v4820, 0.0
        %v5293 = vmax.f32 %v5158, 0.0
        %v5294 = vmax.f32 %v4823, 0.0
        %v5295 = vmax.f32 %v5161, 0.0
        %v5296 = vmax.f32 %v4825, 0.0
        %v5297 = vmax.f32 %v5163, 0.0
        %v5298 = vmax.f32 %v4828, 0.0
        %v5299 = vmax.f32 %v5166, 0.0
        %v5300 = vmax.f32 %v4830, 0.0
        %v5301 = vmax.f32 %v5168, 0.0
        %v5302 = vmax.f32 %v4833, 0.0
        %v5303 = vmax.f32 %v5171, 0.0
        %v5304 = vmax.f32 %v4835, 0.0
        %v5305 = vmax.f32 %v5173, 0.0
        %v5306 = vmax.f32 %v4838, 0.0
        %v5307 = vmax.f32 %v5176, 0.0
        %v5308 = vmax.f32 %v4840, 0.0
        %v5309 = vmax.f32 %v5178, 0.0
        %v5310 = vmax.f32 %v4843, 0.0
        %v5311 = vmax.f32 %v5181, 0.0
        %v5312 = vmax.f32 %v4845, 0.0
        %v5313 = vmax.f32 %v5183, 0.0
        %v5314 = vmax.f32 %v4848, 0.0
        %v5315 = vmax.f32 %v5186, 0.0
        %v5316 = vmax.f32 %v4850, 0.0
        %v5317 = vmax.f32 %v5188, 0.0
        %v5318 = vpack.c.bf16 %v5192, %v5190
        %v5319 = vpack.c.bf16 %v5193, %v5191
        %v5320 = vpack.c.bf16 %v5196, %v5194
        %v5321 = vpack.c.bf16 %v5197, %v5195
        %v5322 = vpack.c.bf16 %v5200, %v5198
        %v5323 = vpack.c.bf16 %v5201, %v5199
        %v5324 = vpack.c.bf16 %v5204, %v5202
        %v5325 = vpack.c.bf16 %v5205, %v5203
        %v5326 = vpack.c.bf16 %v5208, %v5206
        %v5327 = vpack.c.bf16 %v5209, %v5207
        %v5328 = vpack.c.bf16 %v5212, %v5210
        %v5329 = vpack.c.bf16 %v5213, %v5211
        %v5330 = vpack.c.bf16 %v5216, %v5214
        %v5331 = vpack.c.bf16 %v5217, %v5215
        %v5332 = vpack.c.bf16 %v5220, %v5218
        %v5333 = vpack.c.bf16 %v5221, %v5219
        %v5334 = vpack.c.bf16 %v5224, %v5222
        %v5335 = vpack.c.bf16 %v5225, %v5223
        %v5336 = vpack.c.bf16 %v5228, %v5226
        %v5337 = vpack.c.bf16 %v5229, %v5227
        %v5338 = vpack.c.bf16 %v5232, %v5230
        %v5339 = vpack.c.bf16 %v5233, %v5231
        %v5340 = vpack.c.bf16 %v5236, %v5234
        %v5341 = vpack.c.bf16 %v5237, %v5235
        %v5342 = vpack.c.bf16 %v5240, %v5238
        %v5343 = vpack.c.bf16 %v5241, %v5239
        %v5344 = vpack.c.bf16 %v5244, %v5242
        %v5345 = vpack.c.bf16 %v5245, %v5243
        %v5346 = vpack.c.bf16 %v5248, %v5246
        %v5347 = vpack.c.bf16 %v5249, %v5247
        %v5348 = vpack.c.bf16 %v5252, %v5250
        %v5349 = vpack.c.bf16 %v5253, %v5251
        %v5350 = vpack.c.bf16 %v5256, %v5254
        %v5351 = vpack.c.bf16 %v5257, %v5255
        %v5352 = vpack.c.bf16 %v5260, %v5258
        %v5353 = vpack.c.bf16 %v5261, %v5259
        %v5354 = vpack.c.bf16 %v5264, %v5262
        %v5355 = vpack.c.bf16 %v5265, %v5263
        %v5356 = vpack.c.bf16 %v5268, %v5266
        %v5357 = vpack.c.bf16 %v5269, %v5267
        %v5358 = vpack.c.bf16 %v5272, %v5270
        %v5359 = vpack.c.bf16 %v5273, %v5271
        %v5360 = vpack.c.bf16 %v5276, %v5274
        %v5361 = vpack.c.bf16 %v5277, %v5275
        %v5362 = vpack.c.bf16 %v5280, %v5278
        %v5363 = vpack.c.bf16 %v5281, %v5279
        %v5364 = vpack.c.bf16 %v5284, %v5282
        %v5365 = vpack.c.bf16 %v5285, %v5283
        %v5366 = vpack.c.bf16 %v5288, %v5286
        %v5367 = vpack.c.bf16 %v5289, %v5287
        %v5368 = vpack.c.bf16 %v5292, %v5290
        %v5369 = vpack.c.bf16 %v5293, %v5291
        %v5370 = vpack.c.bf16 %v5296, %v5294
        %v5371 = vpack.c.bf16 %v5297, %v5295
        %v5372 = vpack.c.bf16 %v5300, %v5298
        %v5373 = vpack.c.bf16 %v5301, %v5299
        %v5374 = vpack.c.bf16 %v5304, %v5302
        %v5375 = vpack.c.bf16 %v5305, %v5303
        %v5376 = vpack.c.bf16 %v5308, %v5306
        %v5377 = vpack.c.bf16 %v5309, %v5307
        %v5378 = vpack.c.bf16 %v5312, %v5310
        %v5379 = vpack.c.bf16 %v5313, %v5311
        %v5380 = vpack.c.bf16 %v5316, %v5314
        %v5381 = vpack.c.bf16 %v5317, %v5315
        %s5382 = scalar_lea.vmem [#allocation2], 768
        %v5383 = vld [vmem:[%s5382] sm:$0xff]
        %v5384 = vld [vmem:[%s5382 + $0x8] sm:$0xff]
        %v5385 = vld [vmem:[%s5382 + $0x10] sm:$0xff]
        %v5386 = vld [vmem:[%s5382 + $0x18] sm:$0xff]
        %v5387 = vld [vmem:[%s5382 + $0x20] sm:$0xff]
        %v5388 = vld [vmem:[%s5382 + $0x28] sm:$0xff]
        %v5389 = vld [vmem:[%s5382 + $0x30] sm:$0xff]
        %v5390 = vld [vmem:[%s5382 + $0x38] sm:$0xff]
        %v5391 = vld [vmem:[%s5382 + $0x40] sm:$0xff]
        %v5392 = vld [vmem:[%s5382 + $0x48] sm:$0xff]
        %v5393 = vld [vmem:[%s5382 + $0x50] sm:$0xff]
        %v5394 = vld [vmem:[%s5382 + $0x58] sm:$0xff]
        %v5395 = vld [vmem:[%s5382 + $0x60] sm:$0xff]
        %v5396 = vld [vmem:[%s5382 + $0x68] sm:$0xff]
        %v5397 = vld [vmem:[%s5382 + $0x70] sm:$0xff]
        %v5398 = vld [vmem:[%s5382 + $0x78] sm:$0xff]
        %v5399 = vld [vmem:[%s5382 + $0x80] sm:$0xff]
        %v5400 = vld [vmem:[%s5382 + $0x88] sm:$0xff]
        %v5401 = vld [vmem:[%s5382 + $0x90] sm:$0xff]
        %v5402 = vld [vmem:[%s5382 + $0x98] sm:$0xff]
        %v5403 = vld [vmem:[%s5382 + $0xa0] sm:$0xff]
        %v5404 = vld [vmem:[%s5382 + $0xa8] sm:$0xff]
        %v5405 = vld [vmem:[%s5382 + $0xb0] sm:$0xff]
        %v5406 = vld [vmem:[%s5382 + $0xb8] sm:$0xff]
        %v5407 = vld [vmem:[%s5382 + $0xc0] sm:$0xff]
        %v5408 = vld [vmem:[%s5382 + $0xc8] sm:$0xff]
        %v5409 = vld [vmem:[%s5382 + $0xd0] sm:$0xff]
        %v5410 = vld [vmem:[%s5382 + $0xd8] sm:$0xff]
        %v5411 = vld [vmem:[%s5382 + $0xe0] sm:$0xff]
        %v5412 = vld [vmem:[%s5382 + $0xe8] sm:$0xff]
        %v5413 = vld [vmem:[%s5382 + $0xf0] sm:$0xff]
        %v5414 = vld [vmem:[%s5382 + $0xf8] sm:$0xff]
        %s5415 = scalar_lea.vmem %s4, 4
        %v5416 = vld [vmem:[%s5415] ss:$8 sm:$0x3]
        %v5418 = vperm.slane %v5416, 0
        %v5419 = vperm.slane %v5416, 1
        %v5454 = vunpack.c.l.b16 %v5383
        %v5455 = vunpack.c.h.b16 %v5383
        %v5456 = vunpack.c.l.b16 %v5384
        %v5457 = vunpack.c.h.b16 %v5384
        %v5458 = vunpack.c.l.b16 %v5385
        %v5459 = vunpack.c.h.b16 %v5385
        %v5460 = vunpack.c.l.b16 %v5386
        %v5461 = vunpack.c.h.b16 %v5386
        %v5462 = vunpack.c.l.b16 %v5387
        %v5463 = vunpack.c.h.b16 %v5387
        %v5464 = vunpack.c.l.b16 %v5388
        %v5465 = vunpack.c.h.b16 %v5388
        %v5466 = vunpack.c.l.b16 %v5389
        %v5467 = vunpack.c.h.b16 %v5389
        %v5468 = vunpack.c.l.b16 %v5390
        %v5469 = vunpack.c.h.b16 %v5390
        %v5470 = vunpack.c.l.b16 %v5391
        %v5471 = vunpack.c.h.b16 %v5391
        %v5472 = vunpack.c.l.b16 %v5392
        %v5473 = vunpack.c.h.b16 %v5392
        %v5474 = vunpack.c.l.b16 %v5393
        %v5475 = vunpack.c.h.b16 %v5393
        %v5476 = vunpack.c.l.b16 %v5394
        %v5477 = vunpack.c.h.b16 %v5394
        %v5478 = vunpack.c.l.b16 %v5395
        %v5479 = vunpack.c.h.b16 %v5395
        %v5480 = vunpack.c.l.b16 %v5396
        %v5481 = vunpack.c.h.b16 %v5396
        %v5482 = vunpack.c.l.b16 %v5397
        %v5483 = vunpack.c.h.b16 %v5397
        %v5484 = vunpack.c.l.b16 %v5398
        %v5485 = vunpack.c.h.b16 %v5398
        %v5486 = vunpack.c.l.b16 %v5399
        %v5487 = vunpack.c.h.b16 %v5399
        %v5488 = vunpack.c.l.b16 %v5400
        %v5489 = vunpack.c.h.b16 %v5400
        %v5490 = vunpack.c.l.b16 %v5401
        %v5491 = vunpack.c.h.b16 %v5401
        %v5492 = vunpack.c.l.b16 %v5402
        %v5493 = vunpack.c.h.b16 %v5402
        %v5494 = vunpack.c.l.b16 %v5403
        %v5495 = vunpack.c.h.b16 %v5403
        %v5496 = vunpack.c.l.b16 %v5404
        %v5497 = vunpack.c.h.b16 %v5404
        %v5498 = vunpack.c.l.b16 %v5405
        %v5499 = vunpack.c.h.b16 %v5405
        %v5500 = vunpack.c.l.b16 %v5406
        %v5501 = vunpack.c.h.b16 %v5406
        %v5502 = vunpack.c.l.b16 %v5407
        %v5503 = vunpack.c.h.b16 %v5407
        %v5504 = vunpack.c.l.b16 %v5408
        %v5505 = vunpack.c.h.b16 %v5408
        %v5506 = vunpack.c.l.b16 %v5409
        %v5507 = vunpack.c.h.b16 %v5409
        %v5508 = vunpack.c.l.b16 %v5410
        %v5509 = vunpack.c.h.b16 %v5410
        %v5510 = vunpack.c.l.b16 %v5411
        %v5511 = vunpack.c.h.b16 %v5411
        %v5512 = vunpack.c.l.b16 %v5412
        %v5513 = vunpack.c.h.b16 %v5412
        %v5514 = vunpack.c.l.b16 %v5413
        %v5515 = vunpack.c.h.b16 %v5413
        %v5516 = vunpack.c.l.b16 %v5414
        %v5517 = vunpack.c.h.b16 %v5414
        %v5518 = vpack.c.b16 %v5456, %v5454
        %v5519 = vpack.c.b16 %v5457, %v5455
        %v5520 = vpack.c.b16 %v5460, %v5458
        %v5521 = vpack.c.b16 %v5461, %v5459
        %v5522 = vpack.c.b16 %v5464, %v5462
        %v5523 = vpack.c.b16 %v5465, %v5463
        %v5524 = vpack.c.b16 %v5468, %v5466
        %v5525 = vpack.c.b16 %v5469, %v5467
        %v5526 = vpack.c.b16 %v5472, %v5470
        %v5527 = vpack.c.b16 %v5473, %v5471
        %v5528 = vpack.c.b16 %v5476, %v5474
        %v5529 = vpack.c.b16 %v5477, %v5475
        %v5530 = vpack.c.b16 %v5480, %v5478
        %v5531 = vpack.c.b16 %v5481, %v5479
        %v5532 = vpack.c.b16 %v5484, %v5482
        %v5533 = vpack.c.b16 %v5485, %v5483
        %v5534 = vpack.c.b16 %v5488, %v5486
        %v5535 = vpack.c.b16 %v5489, %v5487
        %v5536 = vpack.c.b16 %v5492, %v5490
        %v5537 = vpack.c.b16 %v5493, %v5491
        %v5538 = vpack.c.b16 %v5496, %v5494
        %v5539 = vpack.c.b16 %v5497, %v5495
        %v5540 = vpack.c.b16 %v5500, %v5498
        %v5541 = vpack.c.b16 %v5501, %v5499
        %v5542 = vpack.c.b16 %v5504, %v5502
        %v5543 = vpack.c.b16 %v5505, %v5503
        %v5544 = vpack.c.b16 %v5508, %v5506
        %v5545 = vpack.c.b16 %v5509, %v5507
        %v5546 = vpack.c.b16 %v5512, %v5510
        %v5547 = vpack.c.b16 %v5513, %v5511
        %v5548 = vpack.c.b16 %v5516, %v5514
        %v5549 = vpack.c.b16 %v5517, %v5515
        %5582 = vmatpush.bf16.msra.mxu0 %v5532
        %5583 = vmatpush.bf16.msra.mxu0 %v5530
        %5584 = vmatpush.bf16.msra.mxu0 %v5528
        %5585 = vmatpush.bf16.msra.mxu0 %v5526
        %5586 = vmatpush.bf16.msra.mxu0 %v5524
        %5587 = vmatpush.bf16.msra.mxu0 %v5522
        %5588 = vmatpush.bf16.msra.mxu0 %v5520
        %5589 = vmatpush.bf16.msra.mxu0 %v5518
        %5590 = vmatmul.bf16.gmra.mxu0 %v5318
        %v5591 = vpop.f32.mrf.mxu0
        %v5592 = vadd.f32 %v5418, %v5591
        %v5593 = vpop.f32.mrf.mxu0
        %v5594 = vadd.f32 %v5418, %v5593
        %5595 = vmatmul.bf16.gmra.mxu0 %v5320
        %v5596 = vpop.f32.mrf.mxu0
        %v5597 = vadd.f32 %v5418, %v5596
        %v5598 = vpop.f32.mrf.mxu0
        %v5599 = vadd.f32 %v5418, %v5598
        %5600 = vmatmul.bf16.gmra.mxu0 %v5322
        %v5601 = vpop.f32.mrf.mxu0
        %v5602 = vadd.f32 %v5418, %v5601
        %v5603 = vpop.f32.mrf.mxu0
        %v5604 = vadd.f32 %v5418, %v5603
        %5605 = vmatmul.bf16.gmra.mxu0 %v5324
        %v5606 = vpop.f32.mrf.mxu0
        %v5607 = vadd.f32 %v5418, %v5606
        %v5608 = vpop.f32.mrf.mxu0
        %v5609 = vadd.f32 %v5418, %v5608
        %5610 = vmatmul.bf16.gmra.mxu0 %v5326
        %v5611 = vpop.f32.mrf.mxu0
        %v5612 = vadd.f32 %v5418, %v5611
        %v5613 = vpop.f32.mrf.mxu0
        %v5614 = vadd.f32 %v5418, %v5613
        %5615 = vmatmul.bf16.gmra.mxu0 %v5328
        %v5616 = vpop.f32.mrf.mxu0
        %v5617 = vadd.f32 %v5418, %v5616
        %v5618 = vpop.f32.mrf.mxu0
        %v5619 = vadd.f32 %v5418, %v5618
        %5620 = vmatmul.bf16.gmra.mxu0 %v5330
        %v5621 = vpop.f32.mrf.mxu0
        %v5622 = vadd.f32 %v5418, %v5621
        %v5623 = vpop.f32.mrf.mxu0
        %v5624 = vadd.f32 %v5418, %v5623
        %5625 = vmatmul.bf16.gmra.mxu0 %v5332
        %v5626 = vpop.f32.mrf.mxu0
        %v5627 = vadd.f32 %v5418, %v5626
        %v5628 = vpop.f32.mrf.mxu0
        %v5629 = vadd.f32 %v5418, %v5628
        %5630 = vmatmul.bf16.gmra.mxu0 %v5334
        %v5631 = vpop.f32.mrf.mxu0
        %v5632 = vadd.f32 %v5418, %v5631
        %v5633 = vpop.f32.mrf.mxu0
        %v5634 = vadd.f32 %v5418, %v5633
        %5635 = vmatmul.bf16.gmra.mxu0 %v5336
        %v5636 = vpop.f32.mrf.mxu0
        %v5637 = vadd.f32 %v5418, %v5636
        %v5638 = vpop.f32.mrf.mxu0
        %v5639 = vadd.f32 %v5418, %v5638
        %5640 = vmatmul.bf16.gmra.mxu0 %v5338
        %v5641 = vpop.f32.mrf.mxu0
        %v5642 = vadd.f32 %v5418, %v5641
        %v5643 = vpop.f32.mrf.mxu0
        %v5644 = vadd.f32 %v5418, %v5643
        %5645 = vmatmul.bf16.gmra.mxu0 %v5340
        %v5646 = vpop.f32.mrf.mxu0
        %v5647 = vadd.f32 %v5418, %v5646
        %v5648 = vpop.f32.mrf.mxu0
        %v5649 = vadd.f32 %v5418, %v5648
        %5650 = vmatmul.bf16.gmra.mxu0 %v5342
        %v5651 = vpop.f32.mrf.mxu0
        %v5652 = vadd.f32 %v5418, %v5651
        %v5653 = vpop.f32.mrf.mxu0
        %v5654 = vadd.f32 %v5418, %v5653
        %5655 = vmatmul.bf16.gmra.mxu0 %v5344
        %v5656 = vpop.f32.mrf.mxu0
        %v5657 = vadd.f32 %v5418, %v5656
        %v5658 = vpop.f32.mrf.mxu0
        %v5659 = vadd.f32 %v5418, %v5658
        %5660 = vmatmul.bf16.gmra.mxu0 %v5346
        %v5661 = vpop.f32.mrf.mxu0
        %v5662 = vadd.f32 %v5418, %v5661
        %v5663 = vpop.f32.mrf.mxu0
        %v5664 = vadd.f32 %v5418, %v5663
        %5665 = vmatmul.bf16.gmra.mxu0 %v5348
        %v5666 = vpop.f32.mrf.mxu0
        %v5667 = vadd.f32 %v5418, %v5666
        %v5668 = vpop.f32.mrf.mxu0
        %v5669 = vadd.f32 %v5418, %v5668
        %5670 = vmatmul.bf16.gmra.mxu0 %v5350
        %v5671 = vpop.f32.mrf.mxu0
        %v5672 = vadd.f32 %v5418, %v5671
        %v5673 = vpop.f32.mrf.mxu0
        %v5674 = vadd.f32 %v5418, %v5673
        %5675 = vmatmul.bf16.gmra.mxu0 %v5352
        %v5676 = vpop.f32.mrf.mxu0
        %v5677 = vadd.f32 %v5418, %v5676
        %v5678 = vpop.f32.mrf.mxu0
        %v5679 = vadd.f32 %v5418, %v5678
        %5680 = vmatmul.bf16.gmra.mxu0 %v5354
        %v5681 = vpop.f32.mrf.mxu0
        %v5682 = vadd.f32 %v5418, %v5681
        %v5683 = vpop.f32.mrf.mxu0
        %v5684 = vadd.f32 %v5418, %v5683
        %5685 = vmatmul.bf16.gmra.mxu0 %v5356
        %v5686 = vpop.f32.mrf.mxu0
        %v5687 = vadd.f32 %v5418, %v5686
        %v5688 = vpop.f32.mrf.mxu0
        %v5689 = vadd.f32 %v5418, %v5688
        %5690 = vmatmul.bf16.gmra.mxu0 %v5358
        %v5691 = vpop.f32.mrf.mxu0
        %v5692 = vadd.f32 %v5418, %v5691
        %v5693 = vpop.f32.mrf.mxu0
        %v5694 = vadd.f32 %v5418, %v5693
        %5695 = vmatmul.bf16.gmra.mxu0 %v5360
        %v5696 = vpop.f32.mrf.mxu0
        %v5697 = vadd.f32 %v5418, %v5696
        %v5698 = vpop.f32.mrf.mxu0
        %v5699 = vadd.f32 %v5418, %v5698
        %5700 = vmatmul.bf16.gmra.mxu0 %v5362
        %v5701 = vpop.f32.mrf.mxu0
        %v5702 = vadd.f32 %v5418, %v5701
        %v5703 = vpop.f32.mrf.mxu0
        %v5704 = vadd.f32 %v5418, %v5703
        %5705 = vmatmul.bf16.gmra.mxu0 %v5364
        %v5706 = vpop.f32.mrf.mxu0
        %v5707 = vadd.f32 %v5418, %v5706
        %v5708 = vpop.f32.mrf.mxu0
        %v5709 = vadd.f32 %v5418, %v5708
        %5710 = vmatmul.bf16.gmra.mxu0 %v5366
        %v5711 = vpop.f32.mrf.mxu0
        %v5712 = vadd.f32 %v5418, %v5711
        %v5713 = vpop.f32.mrf.mxu0
        %v5714 = vadd.f32 %v5418, %v5713
        %5715 = vmatmul.bf16.gmra.mxu0 %v5368
        %v5716 = vpop.f32.mrf.mxu0
        %v5717 = vadd.f32 %v5418, %v5716
        %v5718 = vpop.f32.mrf.mxu0
        %v5719 = vadd.f32 %v5418, %v5718
        %5720 = vmatmul.bf16.gmra.mxu0 %v5370
        %v5721 = vpop.f32.mrf.mxu0
        %v5722 = vadd.f32 %v5418, %v5721
        %v5723 = vpop.f32.mrf.mxu0
        %v5724 = vadd.f32 %v5418, %v5723
        %5725 = vmatmul.bf16.gmra.mxu0 %v5372
        %v5726 = vpop.f32.mrf.mxu0
        %v5727 = vadd.f32 %v5418, %v5726
        %v5728 = vpop.f32.mrf.mxu0
        %v5729 = vadd.f32 %v5418, %v5728
        %5730 = vmatmul.bf16.gmra.mxu0 %v5374
        %v5731 = vpop.f32.mrf.mxu0
        %v5732 = vadd.f32 %v5418, %v5731
        %v5733 = vpop.f32.mrf.mxu0
        %v5734 = vadd.f32 %v5418, %v5733
        %5735 = vmatmul.bf16.gmra.mxu0 %v5376
        %v5736 = vpop.f32.mrf.mxu0
        %v5737 = vadd.f32 %v5418, %v5736
        %v5738 = vpop.f32.mrf.mxu0
        %v5739 = vadd.f32 %v5418, %v5738
        %5740 = vmatmul.bf16.gmra.mxu0 %v5378
        %v5741 = vpop.f32.mrf.mxu0
        %v5742 = vadd.f32 %v5418, %v5741
        %v5743 = vpop.f32.mrf.mxu0
        %v5744 = vadd.f32 %v5418, %v5743
        %5745 = vmatmul.bf16.gmra.mxu0 %v5380
        %v5746 = vpop.f32.mrf.mxu0
        %v5747 = vadd.f32 %v5418, %v5746
        %v5748 = vpop.f32.mrf.mxu0
        %v5749 = vadd.f32 %v5418, %v5748
        %5750 = vdwg.mxu0
        %5751 = vmatpush.bf16.msra.mxu0 %v5548
        %5752 = vmatpush.bf16.msra.mxu0 %v5546
        %5753 = vmatpush.bf16.msra.mxu0 %v5544
        %5754 = vmatpush.bf16.msra.mxu0 %v5542
        %5755 = vmatpush.bf16.msra.mxu0 %v5540
        %5756 = vmatpush.bf16.msra.mxu0 %v5538
        %5757 = vmatpush.bf16.msra.mxu0 %v5536
        %5758 = vmatpush.bf16.msra.mxu0 %v5534
        %5759 = vmatmul.bf16.gmra.mxu0 %v5319
        %v5760 = vpop.f32.mrf.mxu0
        %v5761 = vadd.f32 %v5592, %v5760
        %v5762 = vpop.f32.mrf.mxu0
        %v5763 = vadd.f32 %v5594, %v5762
        %5764 = vmatmul.bf16.gmra.mxu0 %v5321
        %v5765 = vpop.f32.mrf.mxu0
        %v5766 = vadd.f32 %v5597, %v5765
        %v5767 = vpop.f32.mrf.mxu0
        %v5768 = vadd.f32 %v5599, %v5767
        %5769 = vmatmul.bf16.gmra.mxu0 %v5323
        %v5770 = vpop.f32.mrf.mxu0
        %v5771 = vadd.f32 %v5602, %v5770
        %v5772 = vpop.f32.mrf.mxu0
        %v5773 = vadd.f32 %v5604, %v5772
        %5774 = vmatmul.bf16.gmra.mxu0 %v5325
        %v5775 = vpop.f32.mrf.mxu0
        %v5776 = vadd.f32 %v5607, %v5775
        %v5777 = vpop.f32.mrf.mxu0
        %v5778 = vadd.f32 %v5609, %v5777
        %5779 = vmatmul.bf16.gmra.mxu0 %v5327
        %v5780 = vpop.f32.mrf.mxu0
        %v5781 = vadd.f32 %v5612, %v5780
        %v5782 = vpop.f32.mrf.mxu0
        %v5783 = vadd.f32 %v5614, %v5782
        %5784 = vmatmul.bf16.gmra.mxu0 %v5329
        %v5785 = vpop.f32.mrf.mxu0
        %v5786 = vadd.f32 %v5617, %v5785
        %v5787 = vpop.f32.mrf.mxu0
        %v5788 = vadd.f32 %v5619, %v5787
        %5789 = vmatmul.bf16.gmra.mxu0 %v5331
        %v5790 = vpop.f32.mrf.mxu0
        %v5791 = vadd.f32 %v5622, %v5790
        %v5792 = vpop.f32.mrf.mxu0
        %v5793 = vadd.f32 %v5624, %v5792
        %5794 = vmatmul.bf16.gmra.mxu0 %v5333
        %v5795 = vpop.f32.mrf.mxu0
        %v5796 = vadd.f32 %v5627, %v5795
        %v5797 = vpop.f32.mrf.mxu0
        %v5798 = vadd.f32 %v5629, %v5797
        %5799 = vmatmul.bf16.gmra.mxu0 %v5335
        %v5800 = vpop.f32.mrf.mxu0
        %v5801 = vadd.f32 %v5632, %v5800
        %v5802 = vpop.f32.mrf.mxu0
        %v5803 = vadd.f32 %v5634, %v5802
        %5804 = vmatmul.bf16.gmra.mxu0 %v5337
        %v5805 = vpop.f32.mrf.mxu0
        %v5806 = vadd.f32 %v5637, %v5805
        %v5807 = vpop.f32.mrf.mxu0
        %v5808 = vadd.f32 %v5639, %v5807
        %5809 = vmatmul.bf16.gmra.mxu0 %v5339
        %v5810 = vpop.f32.mrf.mxu0
        %v5811 = vadd.f32 %v5642, %v5810
        %v5812 = vpop.f32.mrf.mxu0
        %v5813 = vadd.f32 %v5644, %v5812
        %5814 = vmatmul.bf16.gmra.mxu0 %v5341
        %v5815 = vpop.f32.mrf.mxu0
        %v5816 = vadd.f32 %v5647, %v5815
        %v5817 = vpop.f32.mrf.mxu0
        %v5818 = vadd.f32 %v5649, %v5817
        %5819 = vmatmul.bf16.gmra.mxu0 %v5343
        %v5820 = vpop.f32.mrf.mxu0
        %v5821 = vadd.f32 %v5652, %v5820
        %v5822 = vpop.f32.mrf.mxu0
        %v5823 = vadd.f32 %v5654, %v5822
        %5824 = vmatmul.bf16.gmra.mxu0 %v5345
        %v5825 = vpop.f32.mrf.mxu0
        %v5826 = vadd.f32 %v5657, %v5825
        %v5827 = vpop.f32.mrf.mxu0
        %v5828 = vadd.f32 %v5659, %v5827
        %5829 = vmatmul.bf16.gmra.mxu0 %v5347
        %v5830 = vpop.f32.mrf.mxu0
        %v5831 = vadd.f32 %v5662, %v5830
        %v5832 = vpop.f32.mrf.mxu0
        %v5833 = vadd.f32 %v5664, %v5832
        %5834 = vmatmul.bf16.gmra.mxu0 %v5349
        %v5835 = vpop.f32.mrf.mxu0
        %v5836 = vadd.f32 %v5667, %v5835
        %v5837 = vpop.f32.mrf.mxu0
        %v5838 = vadd.f32 %v5669, %v5837
        %5839 = vmatmul.bf16.gmra.mxu0 %v5351
        %v5840 = vpop.f32.mrf.mxu0
        %v5841 = vadd.f32 %v5672, %v5840
        %v5842 = vpop.f32.mrf.mxu0
        %v5843 = vadd.f32 %v5674, %v5842
        %5844 = vmatmul.bf16.gmra.mxu0 %v5353
        %v5845 = vpop.f32.mrf.mxu0
        %v5846 = vadd.f32 %v5677, %v5845
        %v5847 = vpop.f32.mrf.mxu0
        %v5848 = vadd.f32 %v5679, %v5847
        %5849 = vmatmul.bf16.gmra.mxu0 %v5355
        %v5850 = vpop.f32.mrf.mxu0
        %v5851 = vadd.f32 %v5682, %v5850
        %v5852 = vpop.f32.mrf.mxu0
        %v5853 = vadd.f32 %v5684, %v5852
        %5854 = vmatmul.bf16.gmra.mxu0 %v5357
        %v5855 = vpop.f32.mrf.mxu0
        %v5856 = vadd.f32 %v5687, %v5855
        %v5857 = vpop.f32.mrf.mxu0
        %v5858 = vadd.f32 %v5689, %v5857
        %5859 = vmatmul.bf16.gmra.mxu0 %v5359
        %v5860 = vpop.f32.mrf.mxu0
        %v5861 = vadd.f32 %v5692, %v5860
        %v5862 = vpop.f32.mrf.mxu0
        %v5863 = vadd.f32 %v5694, %v5862
        %5864 = vmatmul.bf16.gmra.mxu0 %v5361
        %v5865 = vpop.f32.mrf.mxu0
        %v5866 = vadd.f32 %v5697, %v5865
        %v5867 = vpop.f32.mrf.mxu0
        %v5868 = vadd.f32 %v5699, %v5867
        %5869 = vmatmul.bf16.gmra.mxu0 %v5363
        %v5870 = vpop.f32.mrf.mxu0
        %v5871 = vadd.f32 %v5702, %v5870
        %v5872 = vpop.f32.mrf.mxu0
        %v5873 = vadd.f32 %v5704, %v5872
        %5874 = vmatmul.bf16.gmra.mxu0 %v5365
        %v5875 = vpop.f32.mrf.mxu0
        %v5876 = vadd.f32 %v5707, %v5875
        %v5877 = vpop.f32.mrf.mxu0
        %v5878 = vadd.f32 %v5709, %v5877
        %5879 = vmatmul.bf16.gmra.mxu0 %v5367
        %v5880 = vpop.f32.mrf.mxu0
        %v5881 = vadd.f32 %v5712, %v5880
        %v5882 = vpop.f32.mrf.mxu0
        %v5883 = vadd.f32 %v5714, %v5882
        %5884 = vmatmul.bf16.gmra.mxu0 %v5369
        %v5885 = vpop.f32.mrf.mxu0
        %v5886 = vadd.f32 %v5717, %v5885
        %v5887 = vpop.f32.mrf.mxu0
        %v5888 = vadd.f32 %v5719, %v5887
        %5889 = vmatmul.bf16.gmra.mxu0 %v5371
        %v5890 = vpop.f32.mrf.mxu0
        %v5891 = vadd.f32 %v5722, %v5890
        %v5892 = vpop.f32.mrf.mxu0
        %v5893 = vadd.f32 %v5724, %v5892
        %5894 = vmatmul.bf16.gmra.mxu0 %v5373
        %v5895 = vpop.f32.mrf.mxu0
        %v5896 = vadd.f32 %v5727, %v5895
        %v5897 = vpop.f32.mrf.mxu0
        %v5898 = vadd.f32 %v5729, %v5897
        %5899 = vmatmul.bf16.gmra.mxu0 %v5375
        %v5900 = vpop.f32.mrf.mxu0
        %v5901 = vadd.f32 %v5732, %v5900
        %v5902 = vpop.f32.mrf.mxu0
        %v5903 = vadd.f32 %v5734, %v5902
        %5904 = vmatmul.bf16.gmra.mxu0 %v5377
        %v5905 = vpop.f32.mrf.mxu0
        %v5906 = vadd.f32 %v5737, %v5905
        %v5907 = vpop.f32.mrf.mxu0
        %v5908 = vadd.f32 %v5739, %v5907
        %5909 = vmatmul.bf16.gmra.mxu0 %v5379
        %v5910 = vpop.f32.mrf.mxu0
        %v5911 = vadd.f32 %v5742, %v5910
        %v5912 = vpop.f32.mrf.mxu0
        %v5913 = vadd.f32 %v5744, %v5912
        %5914 = vmatmul.bf16.gmra.mxu0 %v5381
        %v5915 = vpop.f32.mrf.mxu0
        %v5916 = vadd.f32 %v5747, %v5915
        %v5917 = vpop.f32.mrf.mxu0
        %v5918 = vadd.f32 %v5749, %v5917
        %5919 = vdwg.mxu0
        %5920 = vmatpush.bf16.msra.mxu0 %v5533
        %5921 = vmatpush.bf16.msra.mxu0 %v5531
        %5922 = vmatpush.bf16.msra.mxu0 %v5529
        %5923 = vmatpush.bf16.msra.mxu0 %v5527
        %5924 = vmatpush.bf16.msra.mxu0 %v5525
        %5925 = vmatpush.bf16.msra.mxu0 %v5523
        %5926 = vmatpush.bf16.msra.mxu0 %v5521
        %5927 = vmatpush.bf16.msra.mxu0 %v5519
        %5928 = vmatmul.bf16.gmra.mxu0 %v5318
        %v5929 = vpop.f32.mrf.mxu0
        %v5930 = vadd.f32 %v5419, %v5929
        %v5931 = vpop.f32.mrf.mxu0
        %v5932 = vadd.f32 %v5419, %v5931
        %5933 = vmatmul.bf16.gmra.mxu0 %v5320
        %v5934 = vpop.f32.mrf.mxu0
        %v5935 = vadd.f32 %v5419, %v5934
        %v5936 = vpop.f32.mrf.mxu0
        %v5937 = vadd.f32 %v5419, %v5936
        %5938 = vmatmul.bf16.gmra.mxu0 %v5322
        %v5939 = vpop.f32.mrf.mxu0
        %v5940 = vadd.f32 %v5419, %v5939
        %v5941 = vpop.f32.mrf.mxu0
        %v5942 = vadd.f32 %v5419, %v5941
        %5943 = vmatmul.bf16.gmra.mxu0 %v5324
        %v5944 = vpop.f32.mrf.mxu0
        %v5945 = vadd.f32 %v5419, %v5944
        %v5946 = vpop.f32.mrf.mxu0
        %v5947 = vadd.f32 %v5419, %v5946
        %5948 = vmatmul.bf16.gmra.mxu0 %v5326
        %v5949 = vpop.f32.mrf.mxu0
        %v5950 = vadd.f32 %v5419, %v5949
        %v5951 = vpop.f32.mrf.mxu0
        %v5952 = vadd.f32 %v5419, %v5951
        %5953 = vmatmul.bf16.gmra.mxu0 %v5328
        %v5954 = vpop.f32.mrf.mxu0
        %v5955 = vadd.f32 %v5419, %v5954
        %v5956 = vpop.f32.mrf.mxu0
        %v5957 = vadd.f32 %v5419, %v5956
        %5958 = vmatmul.bf16.gmra.mxu0 %v5330
        %v5959 = vpop.f32.mrf.mxu0
        %v5960 = vadd.f32 %v5419, %v5959
        %v5961 = vpop.f32.mrf.mxu0
        %v5962 = vadd.f32 %v5419, %v5961
        %5963 = vmatmul.bf16.gmra.mxu0 %v5332
        %v5964 = vpop.f32.mrf.mxu0
        %v5965 = vadd.f32 %v5419, %v5964
        %v5966 = vpop.f32.mrf.mxu0
        %v5967 = vadd.f32 %v5419, %v5966
        %5968 = vmatmul.bf16.gmra.mxu0 %v5334
        %v5969 = vpop.f32.mrf.mxu0
        %v5970 = vadd.f32 %v5419, %v5969
        %v5971 = vpop.f32.mrf.mxu0
        %v5972 = vadd.f32 %v5419, %v5971
        %5973 = vmatmul.bf16.gmra.mxu0 %v5336
        %v5974 = vpop.f32.mrf.mxu0
        %v5975 = vadd.f32 %v5419, %v5974
        %v5976 = vpop.f32.mrf.mxu0
        %v5977 = vadd.f32 %v5419, %v5976
        %5978 = vmatmul.bf16.gmra.mxu0 %v5338
        %v5979 = vpop.f32.mrf.mxu0
        %v5980 = vadd.f32 %v5419, %v5979
        %v5981 = vpop.f32.mrf.mxu0
        %v5982 = vadd.f32 %v5419, %v5981
        %5983 = vmatmul.bf16.gmra.mxu0 %v5340
        %v5984 = vpop.f32.mrf.mxu0
        %v5985 = vadd.f32 %v5419, %v5984
        %v5986 = vpop.f32.mrf.mxu0
        %v5987 = vadd.f32 %v5419, %v5986
        %5988 = vmatmul.bf16.gmra.mxu0 %v5342
        %v5989 = vpop.f32.mrf.mxu0
        %v5990 = vadd.f32 %v5419, %v5989
        %v5991 = vpop.f32.mrf.mxu0
        %v5992 = vadd.f32 %v5419, %v5991
        %5993 = vmatmul.bf16.gmra.mxu0 %v5344
        %v5994 = vpop.f32.mrf.mxu0
        %v5995 = vadd.f32 %v5419, %v5994
        %v5996 = vpop.f32.mrf.mxu0
        %v5997 = vadd.f32 %v5419, %v5996
        %5998 = vmatmul.bf16.gmra.mxu0 %v5346
        %v5999 = vpop.f32.mrf.mxu0
        %v6000 = vadd.f32 %v5419, %v5999
        %v6001 = vpop.f32.mrf.mxu0
        %v6002 = vadd.f32 %v5419, %v6001
        %6003 = vmatmul.bf16.gmra.mxu0 %v5348
        %v6004 = vpop.f32.mrf.mxu0
        %v6005 = vadd.f32 %v5419, %v6004
        %v6006 = vpop.f32.mrf.mxu0
        %v6007 = vadd.f32 %v5419, %v6006
        %6008 = vmatmul.bf16.gmra.mxu0 %v5350
        %v6009 = vpop.f32.mrf.mxu0
        %v6010 = vadd.f32 %v5419, %v6009
        %v6011 = vpop.f32.mrf.mxu0
        %v6012 = vadd.f32 %v5419, %v6011
        %6013 = vmatmul.bf16.gmra.mxu0 %v5352
        %v6014 = vpop.f32.mrf.mxu0
        %v6015 = vadd.f32 %v5419, %v6014
        %v6016 = vpop.f32.mrf.mxu0
        %v6017 = vadd.f32 %v5419, %v6016
        %6018 = vmatmul.bf16.gmra.mxu0 %v5354
        %v6019 = vpop.f32.mrf.mxu0
        %v6020 = vadd.f32 %v5419, %v6019
        %v6021 = vpop.f32.mrf.mxu0
        %v6022 = vadd.f32 %v5419, %v6021
        %6023 = vmatmul.bf16.gmra.mxu0 %v5356
        %v6024 = vpop.f32.mrf.mxu0
        %v6025 = vadd.f32 %v5419, %v6024
        %v6026 = vpop.f32.mrf.mxu0
        %v6027 = vadd.f32 %v5419, %v6026
        %6028 = vmatmul.bf16.gmra.mxu0 %v5358
        %v6029 = vpop.f32.mrf.mxu0
        %v6030 = vadd.f32 %v5419, %v6029
        %v6031 = vpop.f32.mrf.mxu0
        %v6032 = vadd.f32 %v5419, %v6031
        %6033 = vmatmul.bf16.gmra.mxu0 %v5360
        %v6034 = vpop.f32.mrf.mxu0
        %v6035 = vadd.f32 %v5419, %v6034
        %v6036 = vpop.f32.mrf.mxu0
        %v6037 = vadd.f32 %v5419, %v6036
        %6038 = vmatmul.bf16.gmra.mxu0 %v5362
        %v6039 = vpop.f32.mrf.mxu0
        %v6040 = vadd.f32 %v5419, %v6039
        %v6041 = vpop.f32.mrf.mxu0
        %v6042 = vadd.f32 %v5419, %v6041
        %6043 = vmatmul.bf16.gmra.mxu0 %v5364
        %v6044 = vpop.f32.mrf.mxu0
        %v6045 = vadd.f32 %v5419, %v6044
        %v6046 = vpop.f32.mrf.mxu0
        %v6047 = vadd.f32 %v5419, %v6046
        %6048 = vmatmul.bf16.gmra.mxu0 %v5366
        %v6049 = vpop.f32.mrf.mxu0
        %v6050 = vadd.f32 %v5419, %v6049
        %v6051 = vpop.f32.mrf.mxu0
        %v6052 = vadd.f32 %v5419, %v6051
        %6053 = vmatmul.bf16.gmra.mxu0 %v5368
        %v6054 = vpop.f32.mrf.mxu0
        %v6055 = vadd.f32 %v5419, %v6054
        %v6056 = vpop.f32.mrf.mxu0
        %v6057 = vadd.f32 %v5419, %v6056
        %6058 = vmatmul.bf16.gmra.mxu0 %v5370
        %v6059 = vpop.f32.mrf.mxu0
        %v6060 = vadd.f32 %v5419, %v6059
        %v6061 = vpop.f32.mrf.mxu0
        %v6062 = vadd.f32 %v5419, %v6061
        %6063 = vmatmul.bf16.gmra.mxu0 %v5372
        %v6064 = vpop.f32.mrf.mxu0
        %v6065 = vadd.f32 %v5419, %v6064
        %v6066 = vpop.f32.mrf.mxu0
        %v6067 = vadd.f32 %v5419, %v6066
        %6068 = vmatmul.bf16.gmra.mxu0 %v5374
        %v6069 = vpop.f32.mrf.mxu0
        %v6070 = vadd.f32 %v5419, %v6069
        %v6071 = vpop.f32.mrf.mxu0
        %v6072 = vadd.f32 %v5419, %v6071
        %6073 = vmatmul.bf16.gmra.mxu0 %v5376
        %v6074 = vpop.f32.mrf.mxu0
        %v6075 = vadd.f32 %v5419, %v6074
        %v6076 = vpop.f32.mrf.mxu0
        %v6077 = vadd.f32 %v5419, %v6076
        %6078 = vmatmul.bf16.gmra.mxu0 %v5378
        %v6079 = vpop.f32.mrf.mxu0
        %v6080 = vadd.f32 %v5419, %v6079
        %v6081 = vpop.f32.mrf.mxu0
        %v6082 = vadd.f32 %v5419, %v6081
        %6083 = vmatmul.bf16.gmra.mxu0 %v5380
        %v6084 = vpop.f32.mrf.mxu0
        %v6085 = vadd.f32 %v5419, %v6084
        %v6086 = vpop.f32.mrf.mxu0
        %v6087 = vadd.f32 %v5419, %v6086
        %6088 = vdwg.mxu0
        %6089 = vmatpush.bf16.msra.mxu0 %v5549
        %6090 = vmatpush.bf16.msra.mxu0 %v5547
        %6091 = vmatpush.bf16.msra.mxu0 %v5545
        %6092 = vmatpush.bf16.msra.mxu0 %v5543
        %6093 = vmatpush.bf16.msra.mxu0 %v5541
        %6094 = vmatpush.bf16.msra.mxu0 %v5539
        %6095 = vmatpush.bf16.msra.mxu0 %v5537
        %6096 = vmatpush.bf16.msra.mxu0 %v5535
        %6097 = vmatmul.bf16.gmra.mxu0 %v5319
        %v6098 = vpop.f32.mrf.mxu0
        %v6099 = vadd.f32 %v5930, %v6098
        %v6100 = vpop.f32.mrf.mxu0
        %v6101 = vadd.f32 %v5932, %v6100
        %6102 = vmatmul.bf16.gmra.mxu0 %v5321
        %v6103 = vpop.f32.mrf.mxu0
        %v6104 = vadd.f32 %v5935, %v6103
        %v6105 = vpop.f32.mrf.mxu0
        %v6106 = vadd.f32 %v5937, %v6105
        %6107 = vmatmul.bf16.gmra.mxu0 %v5323
        %v6108 = vpop.f32.mrf.mxu0
        %v6109 = vadd.f32 %v5940, %v6108
        %v6110 = vpop.f32.mrf.mxu0
        %v6111 = vadd.f32 %v5942, %v6110
        %6112 = vmatmul.bf16.gmra.mxu0 %v5325
        %v6113 = vpop.f32.mrf.mxu0
        %v6114 = vadd.f32 %v5945, %v6113
        %v6115 = vpop.f32.mrf.mxu0
        %v6116 = vadd.f32 %v5947, %v6115
        %6117 = vmatmul.bf16.gmra.mxu0 %v5327
        %v6118 = vpop.f32.mrf.mxu0
        %v6119 = vadd.f32 %v5950, %v6118
        %v6120 = vpop.f32.mrf.mxu0
        %v6121 = vadd.f32 %v5952, %v6120
        %6122 = vmatmul.bf16.gmra.mxu0 %v5329
        %v6123 = vpop.f32.mrf.mxu0
        %v6124 = vadd.f32 %v5955, %v6123
        %v6125 = vpop.f32.mrf.mxu0
        %v6126 = vadd.f32 %v5957, %v6125
        %6127 = vmatmul.bf16.gmra.mxu0 %v5331
        %v6128 = vpop.f32.mrf.mxu0
        %v6129 = vadd.f32 %v5960, %v6128
        %v6130 = vpop.f32.mrf.mxu0
        %v6131 = vadd.f32 %v5962, %v6130
        %6132 = vmatmul.bf16.gmra.mxu0 %v5333
        %v6133 = vpop.f32.mrf.mxu0
        %v6134 = vadd.f32 %v5965, %v6133
        %v6135 = vpop.f32.mrf.mxu0
        %v6136 = vadd.f32 %v5967, %v6135
        %6137 = vmatmul.bf16.gmra.mxu0 %v5335
        %v6138 = vpop.f32.mrf.mxu0
        %v6139 = vadd.f32 %v5970, %v6138
        %v6140 = vpop.f32.mrf.mxu0
        %v6141 = vadd.f32 %v5972, %v6140
        %6142 = vmatmul.bf16.gmra.mxu0 %v5337
        %v6143 = vpop.f32.mrf.mxu0
        %v6144 = vadd.f32 %v5975, %v6143
        %v6145 = vpop.f32.mrf.mxu0
        %v6146 = vadd.f32 %v5977, %v6145
        %6147 = vmatmul.bf16.gmra.mxu0 %v5339
        %v6148 = vpop.f32.mrf.mxu0
        %v6149 = vadd.f32 %v5980, %v6148
        %v6150 = vpop.f32.mrf.mxu0
        %v6151 = vadd.f32 %v5982, %v6150
        %6152 = vmatmul.bf16.gmra.mxu0 %v5341
        %v6153 = vpop.f32.mrf.mxu0
        %v6154 = vadd.f32 %v5985, %v6153
        %v6155 = vpop.f32.mrf.mxu0
        %v6156 = vadd.f32 %v5987, %v6155
        %6157 = vmatmul.bf16.gmra.mxu0 %v5343
        %v6158 = vpop.f32.mrf.mxu0
        %v6159 = vadd.f32 %v5990, %v6158
        %v6160 = vpop.f32.mrf.mxu0
        %v6161 = vadd.f32 %v5992, %v6160
        %6162 = vmatmul.bf16.gmra.mxu0 %v5345
        %v6163 = vpop.f32.mrf.mxu0
        %v6164 = vadd.f32 %v5995, %v6163
        %v6165 = vpop.f32.mrf.mxu0
        %v6166 = vadd.f32 %v5997, %v6165
        %6167 = vmatmul.bf16.gmra.mxu0 %v5347
        %v6168 = vpop.f32.mrf.mxu0
        %v6169 = vadd.f32 %v6000, %v6168
        %v6170 = vpop.f32.mrf.mxu0
        %v6171 = vadd.f32 %v6002, %v6170
        %6172 = vmatmul.bf16.gmra.mxu0 %v5349
        %v6173 = vpop.f32.mrf.mxu0
        %v6174 = vadd.f32 %v6005, %v6173
        %v6175 = vpop.f32.mrf.mxu0
        %v6176 = vadd.f32 %v6007, %v6175
        %6177 = vmatmul.bf16.gmra.mxu0 %v5351
        %v6178 = vpop.f32.mrf.mxu0
        %v6179 = vadd.f32 %v6010, %v6178
        %v6180 = vpop.f32.mrf.mxu0
        %v6181 = vadd.f32 %v6012, %v6180
        %6182 = vmatmul.bf16.gmra.mxu0 %v5353
        %v6183 = vpop.f32.mrf.mxu0
        %v6184 = vadd.f32 %v6015, %v6183
        %v6185 = vpop.f32.mrf.mxu0
        %v6186 = vadd.f32 %v6017, %v6185
        %6187 = vmatmul.bf16.gmra.mxu0 %v5355
        %v6188 = vpop.f32.mrf.mxu0
        %v6189 = vadd.f32 %v6020, %v6188
        %v6190 = vpop.f32.mrf.mxu0
        %v6191 = vadd.f32 %v6022, %v6190
        %6192 = vmatmul.bf16.gmra.mxu0 %v5357
        %v6193 = vpop.f32.mrf.mxu0
        %v6194 = vadd.f32 %v6025, %v6193
        %v6195 = vpop.f32.mrf.mxu0
        %v6196 = vadd.f32 %v6027, %v6195
        %6197 = vmatmul.bf16.gmra.mxu0 %v5359
        %v6198 = vpop.f32.mrf.mxu0
        %v6199 = vadd.f32 %v6030, %v6198
        %v6200 = vpop.f32.mrf.mxu0
        %v6201 = vadd.f32 %v6032, %v6200
        %6202 = vmatmul.bf16.gmra.mxu0 %v5361
        %v6203 = vpop.f32.mrf.mxu0
        %v6204 = vadd.f32 %v6035, %v6203
        %v6205 = vpop.f32.mrf.mxu0
        %v6206 = vadd.f32 %v6037, %v6205
        %6207 = vmatmul.bf16.gmra.mxu0 %v5363
        %v6208 = vpop.f32.mrf.mxu0
        %v6209 = vadd.f32 %v6040, %v6208
        %v6210 = vpop.f32.mrf.mxu0
        %v6211 = vadd.f32 %v6042, %v6210
        %6212 = vmatmul.bf16.gmra.mxu0 %v5365
        %v6213 = vpop.f32.mrf.mxu0
        %v6214 = vadd.f32 %v6045, %v6213
        %v6215 = vpop.f32.mrf.mxu0
        %v6216 = vadd.f32 %v6047, %v6215
        %6217 = vmatmul.bf16.gmra.mxu0 %v5367
        %v6218 = vpop.f32.mrf.mxu0
        %v6219 = vadd.f32 %v6050, %v6218
        %v6220 = vpop.f32.mrf.mxu0
        %v6221 = vadd.f32 %v6052, %v6220
        %6222 = vmatmul.bf16.gmra.mxu0 %v5369
        %v6223 = vpop.f32.mrf.mxu0
        %v6224 = vadd.f32 %v6055, %v6223
        %v6225 = vpop.f32.mrf.mxu0
        %v6226 = vadd.f32 %v6057, %v6225
        %6227 = vmatmul.bf16.gmra.mxu0 %v5371
        %v6228 = vpop.f32.mrf.mxu0
        %v6229 = vadd.f32 %v6060, %v6228
        %v6230 = vpop.f32.mrf.mxu0
        %v6231 = vadd.f32 %v6062, %v6230
        %6232 = vmatmul.bf16.gmra.mxu0 %v5373
        %v6233 = vpop.f32.mrf.mxu0
        %v6234 = vadd.f32 %v6065, %v6233
        %v6235 = vpop.f32.mrf.mxu0
        %v6236 = vadd.f32 %v6067, %v6235
        %6237 = vmatmul.bf16.gmra.mxu0 %v5375
        %v6238 = vpop.f32.mrf.mxu0
        %v6239 = vadd.f32 %v6070, %v6238
        %v6240 = vpop.f32.mrf.mxu0
        %v6241 = vadd.f32 %v6072, %v6240
        %6242 = vmatmul.bf16.gmra.mxu0 %v5377
        %v6243 = vpop.f32.mrf.mxu0
        %v6244 = vadd.f32 %v6075, %v6243
        %v6245 = vpop.f32.mrf.mxu0
        %v6246 = vadd.f32 %v6077, %v6245
        %6247 = vmatmul.bf16.gmra.mxu0 %v5379
        %v6248 = vpop.f32.mrf.mxu0
        %v6249 = vadd.f32 %v6080, %v6248
        %v6250 = vpop.f32.mrf.mxu0
        %v6251 = vadd.f32 %v6082, %v6250
        %6252 = vmatmul.bf16.gmra.mxu0 %v5381
        %v6253 = vpop.f32.mrf.mxu0
        %v6254 = vadd.f32 %v6085, %v6253
        %v6255 = vpop.f32.mrf.mxu0
        %v6256 = vadd.f32 %v6087, %v6255
        %6257 = vdwg.mxu0
        %v6258 = vmax.f32 %v5761, 0.0
        %v6259 = vmax.f32 %v6099, 0.0
        %v6260 = vmax.f32 %v5763, 0.0
        %v6261 = vmax.f32 %v6101, 0.0
        %v6262 = vmax.f32 %v5766, 0.0
        %v6263 = vmax.f32 %v6104, 0.0
        %v6264 = vmax.f32 %v5768, 0.0
        %v6265 = vmax.f32 %v6106, 0.0
        %v6266 = vmax.f32 %v5771, 0.0
        %v6267 = vmax.f32 %v6109, 0.0
        %v6268 = vmax.f32 %v5773, 0.0
        %v6269 = vmax.f32 %v6111, 0.0
        %v6270 = vmax.f32 %v5776, 0.0
        %v6271 = vmax.f32 %v6114, 0.0
        %v6272 = vmax.f32 %v5778, 0.0
        %v6273 = vmax.f32 %v6116, 0.0
        %v6274 = vmax.f32 %v5781, 0.0
        %v6275 = vmax.f32 %v6119, 0.0
        %v6276 = vmax.f32 %v5783, 0.0
        %v6277 = vmax.f32 %v6121, 0.0
        %v6278 = vmax.f32 %v5786, 0.0
        %v6279 = vmax.f32 %v6124, 0.0
        %v6280 = vmax.f32 %v5788, 0.0
        %v6281 = vmax.f32 %v6126, 0.0
        %v6282 = vmax.f32 %v5791, 0.0
        %v6283 = vmax.f32 %v6129, 0.0
        %v6284 = vmax.f32 %v5793, 0.0
        %v6285 = vmax.f32 %v6131, 0.0
        %v6286 = vmax.f32 %v5796, 0.0
        %v6287 = vmax.f32 %v6134, 0.0
        %v6288 = vmax.f32 %v5798, 0.0
        %v6289 = vmax.f32 %v6136, 0.0
        %v6290 = vmax.f32 %v5801, 0.0
        %v6291 = vmax.f32 %v6139, 0.0
        %v6292 = vmax.f32 %v5803, 0.0
        %v6293 = vmax.f32 %v6141, 0.0
        %v6294 = vmax.f32 %v5806, 0.0
        %v6295 = vmax.f32 %v6144, 0.0
        %v6296 = vmax.f32 %v5808, 0.0
        %v6297 = vmax.f32 %v6146, 0.0
        %v6298 = vmax.f32 %v5811, 0.0
        %v6299 = vmax.f32 %v6149, 0.0
        %v6300 = vmax.f32 %v5813, 0.0
        %v6301 = vmax.f32 %v6151, 0.0
        %v6302 = vmax.f32 %v5816, 0.0
        %v6303 = vmax.f32 %v6154, 0.0
        %v6304 = vmax.f32 %v5818, 0.0
        %v6305 = vmax.f32 %v6156, 0.0
        %v6306 = vmax.f32 %v5821, 0.0
        %v6307 = vmax.f32 %v6159, 0.0
        %v6308 = vmax.f32 %v5823, 0.0
        %v6309 = vmax.f32 %v6161, 0.0
        %v6310 = vmax.f32 %v5826, 0.0
        %v6311 = vmax.f32 %v6164, 0.0
        %v6312 = vmax.f32 %v5828, 0.0
        %v6313 = vmax.f32 %v6166, 0.0
        %v6314 = vmax.f32 %v5831, 0.0
        %v6315 = vmax.f32 %v6169, 0.0
        %v6316 = vmax.f32 %v5833, 0.0
        %v6317 = vmax.f32 %v6171, 0.0
        %v6318 = vmax.f32 %v5836, 0.0
        %v6319 = vmax.f32 %v6174, 0.0
        %v6320 = vmax.f32 %v5838, 0.0
        %v6321 = vmax.f32 %v6176, 0.0
        %v6322 = vmax.f32 %v5841, 0.0
        %v6323 = vmax.f32 %v6179, 0.0
        %v6324 = vmax.f32 %v5843, 0.0
        %v6325 = vmax.f32 %v6181, 0.0
        %v6326 = vmax.f32 %v5846, 0.0
        %v6327 = vmax.f32 %v6184, 0.0
        %v6328 = vmax.f32 %v5848, 0.0
        %v6329 = vmax.f32 %v6186, 0.0
        %v6330 = vmax.f32 %v5851, 0.0
        %v6331 = vmax.f32 %v6189, 0.0
        %v6332 = vmax.f32 %v5853, 0.0
        %v6333 = vmax.f32 %v6191, 0.0
        %v6334 = vmax.f32 %v5856, 0.0
        %v6335 = vmax.f32 %v6194, 0.0
        %v6336 = vmax.f32 %v5858, 0.0
        %v6337 = vmax.f32 %v6196, 0.0
        %v6338 = vmax.f32 %v5861, 0.0
        %v6339 = vmax.f32 %v6199, 0.0
        %v6340 = vmax.f32 %v5863, 0.0
        %v6341 = vmax.f32 %v6201, 0.0
        %v6342 = vmax.f32 %v5866, 0.0
        %v6343 = vmax.f32 %v6204, 0.0
        %v6344 = vmax.f32 %v5868, 0.0
        %v6345 = vmax.f32 %v6206, 0.0
        %v6346 = vmax.f32 %v5871, 0.0
        %v6347 = vmax.f32 %v6209, 0.0
        %v6348 = vmax.f32 %v5873, 0.0
        %v6349 = vmax.f32 %v6211, 0.0
        %v6350 = vmax.f32 %v5876, 0.0
        %v6351 = vmax.f32 %v6214, 0.0
        %v6352 = vmax.f32 %v5878, 0.0
        %v6353 = vmax.f32 %v6216, 0.0
        %v6354 = vmax.f32 %v5881, 0.0
        %v6355 = vmax.f32 %v6219, 0.0
        %v6356 = vmax.f32 %v5883, 0.0
        %v6357 = vmax.f32 %v6221, 0.0
        %v6358 = vmax.f32 %v5886, 0.0
        %v6359 = vmax.f32 %v6224, 0.0
        %v6360 = vmax.f32 %v5888, 0.0
        %v6361 = vmax.f32 %v6226, 0.0
        %v6362 = vmax.f32 %v5891, 0.0
        %v6363 = vmax.f32 %v6229, 0.0
        %v6364 = vmax.f32 %v5893, 0.0
        %v6365 = vmax.f32 %v6231, 0.0
        %v6366 = vmax.f32 %v5896, 0.0
        %v6367 = vmax.f32 %v6234, 0.0
        %v6368 = vmax.f32 %v5898, 0.0
        %v6369 = vmax.f32 %v6236, 0.0
        %v6370 = vmax.f32 %v5901, 0.0
        %v6371 = vmax.f32 %v6239, 0.0
        %v6372 = vmax.f32 %v5903, 0.0
        %v6373 = vmax.f32 %v6241, 0.0
        %v6374 = vmax.f32 %v5906, 0.0
        %v6375 = vmax.f32 %v6244, 0.0
        %v6376 = vmax.f32 %v5908, 0.0
        %v6377 = vmax.f32 %v6246, 0.0
        %v6378 = vmax.f32 %v5911, 0.0
        %v6379 = vmax.f32 %v6249, 0.0
        %v6380 = vmax.f32 %v5913, 0.0
        %v6381 = vmax.f32 %v6251, 0.0
        %v6382 = vmax.f32 %v5916, 0.0
        %v6383 = vmax.f32 %v6254, 0.0
        %v6384 = vmax.f32 %v5918, 0.0
        %v6385 = vmax.f32 %v6256, 0.0
        %v6386 = vpack.c.bf16 %v6260, %v6258
        %v6387 = vpack.c.bf16 %v6261, %v6259
        %v6388 = vpack.c.bf16 %v6264, %v6262
        %v6389 = vpack.c.bf16 %v6265, %v6263
        %v6390 = vpack.c.bf16 %v6268, %v6266
        %v6391 = vpack.c.bf16 %v6269, %v6267
        %v6392 = vpack.c.bf16 %v6272, %v6270
        %v6393 = vpack.c.bf16 %v6273, %v6271
        %v6394 = vpack.c.bf16 %v6276, %v6274
        %v6395 = vpack.c.bf16 %v6277, %v6275
        %v6396 = vpack.c.bf16 %v6280, %v6278
        %v6397 = vpack.c.bf16 %v6281, %v6279
        %v6398 = vpack.c.bf16 %v6284, %v6282
        %v6399 = vpack.c.bf16 %v6285, %v6283
        %v6400 = vpack.c.bf16 %v6288, %v6286
        %v6401 = vpack.c.bf16 %v6289, %v6287
        %v6402 = vpack.c.bf16 %v6292, %v6290
        %v6403 = vpack.c.bf16 %v6293, %v6291
        %v6404 = vpack.c.bf16 %v6296, %v6294
        %v6405 = vpack.c.bf16 %v6297, %v6295
        %v6406 = vpack.c.bf16 %v6300, %v6298
        %v6407 = vpack.c.bf16 %v6301, %v6299
        %v6408 = vpack.c.bf16 %v6304, %v6302
        %v6409 = vpack.c.bf16 %v6305, %v6303
        %v6410 = vpack.c.bf16 %v6308, %v6306
        %v6411 = vpack.c.bf16 %v6309, %v6307
        %v6412 = vpack.c.bf16 %v6312, %v6310
        %v6413 = vpack.c.bf16 %v6313, %v6311
        %v6414 = vpack.c.bf16 %v6316, %v6314
        %v6415 = vpack.c.bf16 %v6317, %v6315
        %v6416 = vpack.c.bf16 %v6320, %v6318
        %v6417 = vpack.c.bf16 %v6321, %v6319
        %v6418 = vpack.c.bf16 %v6324, %v6322
        %v6419 = vpack.c.bf16 %v6325, %v6323
        %v6420 = vpack.c.bf16 %v6328, %v6326
        %v6421 = vpack.c.bf16 %v6329, %v6327
        %v6422 = vpack.c.bf16 %v6332, %v6330
        %v6423 = vpack.c.bf16 %v6333, %v6331
        %v6424 = vpack.c.bf16 %v6336, %v6334
        %v6425 = vpack.c.bf16 %v6337, %v6335
        %v6426 = vpack.c.bf16 %v6340, %v6338
        %v6427 = vpack.c.bf16 %v6341, %v6339
        %v6428 = vpack.c.bf16 %v6344, %v6342
        %v6429 = vpack.c.bf16 %v6345, %v6343
        %v6430 = vpack.c.bf16 %v6348, %v6346
        %v6431 = vpack.c.bf16 %v6349, %v6347
        %v6432 = vpack.c.bf16 %v6352, %v6350
        %v6433 = vpack.c.bf16 %v6353, %v6351
        %v6434 = vpack.c.bf16 %v6356, %v6354
        %v6435 = vpack.c.bf16 %v6357, %v6355
        %v6436 = vpack.c.bf16 %v6360, %v6358
        %v6437 = vpack.c.bf16 %v6361, %v6359
        %v6438 = vpack.c.bf16 %v6364, %v6362
        %v6439 = vpack.c.bf16 %v6365, %v6363
        %v6440 = vpack.c.bf16 %v6368, %v6366
        %v6441 = vpack.c.bf16 %v6369, %v6367
        %v6442 = vpack.c.bf16 %v6372, %v6370
        %v6443 = vpack.c.bf16 %v6373, %v6371
        %v6444 = vpack.c.bf16 %v6376, %v6374
        %v6445 = vpack.c.bf16 %v6377, %v6375
        %v6446 = vpack.c.bf16 %v6380, %v6378
        %v6447 = vpack.c.bf16 %v6381, %v6379
        %v6448 = vpack.c.bf16 %v6384, %v6382
        %v6449 = vpack.c.bf16 %v6385, %v6383
        %s6450 = scalar_lea.vmem [#allocation2], 1024
        %v6451 = vld [vmem:[%s6450] sm:$0xff]
        %v6452 = vld [vmem:[%s6450 + $0x8] sm:$0xff]
        %v6453 = vld [vmem:[%s6450 + $0x10] sm:$0xff]
        %v6454 = vld [vmem:[%s6450 + $0x18] sm:$0xff]
        %v6455 = vld [vmem:[%s6450 + $0x20] sm:$0xff]
        %v6456 = vld [vmem:[%s6450 + $0x28] sm:$0xff]
        %v6457 = vld [vmem:[%s6450 + $0x30] sm:$0xff]
        %v6458 = vld [vmem:[%s6450 + $0x38] sm:$0xff]
        %v6459 = vld [vmem:[%s6450 + $0x40] sm:$0xff]
        %v6460 = vld [vmem:[%s6450 + $0x48] sm:$0xff]
        %v6461 = vld [vmem:[%s6450 + $0x50] sm:$0xff]
        %v6462 = vld [vmem:[%s6450 + $0x58] sm:$0xff]
        %v6463 = vld [vmem:[%s6450 + $0x60] sm:$0xff]
        %v6464 = vld [vmem:[%s6450 + $0x68] sm:$0xff]
        %v6465 = vld [vmem:[%s6450 + $0x70] sm:$0xff]
        %v6466 = vld [vmem:[%s6450 + $0x78] sm:$0xff]
        %v6467 = vld [vmem:[%s6450 + $0x80] sm:$0xff]
        %v6468 = vld [vmem:[%s6450 + $0x88] sm:$0xff]
        %v6469 = vld [vmem:[%s6450 + $0x90] sm:$0xff]
        %v6470 = vld [vmem:[%s6450 + $0x98] sm:$0xff]
        %v6471 = vld [vmem:[%s6450 + $0xa0] sm:$0xff]
        %v6472 = vld [vmem:[%s6450 + $0xa8] sm:$0xff]
        %v6473 = vld [vmem:[%s6450 + $0xb0] sm:$0xff]
        %v6474 = vld [vmem:[%s6450 + $0xb8] sm:$0xff]
        %v6475 = vld [vmem:[%s6450 + $0xc0] sm:$0xff]
        %v6476 = vld [vmem:[%s6450 + $0xc8] sm:$0xff]
        %v6477 = vld [vmem:[%s6450 + $0xd0] sm:$0xff]
        %v6478 = vld [vmem:[%s6450 + $0xd8] sm:$0xff]
        %v6479 = vld [vmem:[%s6450 + $0xe0] sm:$0xff]
        %v6480 = vld [vmem:[%s6450 + $0xe8] sm:$0xff]
        %v6481 = vld [vmem:[%s6450 + $0xf0] sm:$0xff]
        %v6482 = vld [vmem:[%s6450 + $0xf8] sm:$0xff]
        %s6483 = scalar_lea.vmem %s4, 5
        %v6484 = vld [vmem:[%s6483] ss:$8 sm:$0x3]
        %v6486 = vperm.slane %v6484, 0
        %v6487 = vperm.slane %v6484, 1
        %v6522 = vunpack.c.l.b16 %v6451
        %v6523 = vunpack.c.h.b16 %v6451
        %v6524 = vunpack.c.l.b16 %v6452
        %v6525 = vunpack.c.h.b16 %v6452
        %v6526 = vunpack.c.l.b16 %v6453
        %v6527 = vunpack.c.h.b16 %v6453
        %v6528 = vunpack.c.l.b16 %v6454
        %v6529 = vunpack.c.h.b16 %v6454
        %v6530 = vunpack.c.l.b16 %v6455
        %v6531 = vunpack.c.h.b16 %v6455
        %v6532 = vunpack.c.l.b16 %v6456
        %v6533 = vunpack.c.h.b16 %v6456
        %v6534 = vunpack.c.l.b16 %v6457
        %v6535 = vunpack.c.h.b16 %v6457
        %v6536 = vunpack.c.l.b16 %v6458
        %v6537 = vunpack.c.h.b16 %v6458
        %v6538 = vunpack.c.l.b16 %v6459
        %v6539 = vunpack.c.h.b16 %v6459
        %v6540 = vunpack.c.l.b16 %v6460
        %v6541 = vunpack.c.h.b16 %v6460
        %v6542 = vunpack.c.l.b16 %v6461
        %v6543 = vunpack.c.h.b16 %v6461
        %v6544 = vunpack.c.l.b16 %v6462
        %v6545 = vunpack.c.h.b16 %v6462
        %v6546 = vunpack.c.l.b16 %v6463
        %v6547 = vunpack.c.h.b16 %v6463
        %v6548 = vunpack.c.l.b16 %v6464
        %v6549 = vunpack.c.h.b16 %v6464
        %v6550 = vunpack.c.l.b16 %v6465
        %v6551 = vunpack.c.h.b16 %v6465
        %v6552 = vunpack.c.l.b16 %v6466
        %v6553 = vunpack.c.h.b16 %v6466
        %v6554 = vunpack.c.l.b16 %v6467
        %v6555 = vunpack.c.h.b16 %v6467
        %v6556 = vunpack.c.l.b16 %v6468
        %v6557 = vunpack.c.h.b16 %v6468
        %v6558 = vunpack.c.l.b16 %v6469
        %v6559 = vunpack.c.h.b16 %v6469
        %v6560 = vunpack.c.l.b16 %v6470
        %v6561 = vunpack.c.h.b16 %v6470
        %v6562 = vunpack.c.l.b16 %v6471
        %v6563 = vunpack.c.h.b16 %v6471
        %v6564 = vunpack.c.l.b16 %v6472
        %v6565 = vunpack.c.h.b16 %v6472
        %v6566 = vunpack.c.l.b16 %v6473
        %v6567 = vunpack.c.h.b16 %v6473
        %v6568 = vunpack.c.l.b16 %v6474
        %v6569 = vunpack.c.h.b16 %v6474
        %v6570 = vunpack.c.l.b16 %v6475
        %v6571 = vunpack.c.h.b16 %v6475
        %v6572 = vunpack.c.l.b16 %v6476
        %v6573 = vunpack.c.h.b16 %v6476
        %v6574 = vunpack.c.l.b16 %v6477
        %v6575 = vunpack.c.h.b16 %v6477
        %v6576 = vunpack.c.l.b16 %v6478
        %v6577 = vunpack.c.h.b16 %v6478
        %v6578 = vunpack.c.l.b16 %v6479
        %v6579 = vunpack.c.h.b16 %v6479
        %v6580 = vunpack.c.l.b16 %v6480
        %v6581 = vunpack.c.h.b16 %v6480
        %v6582 = vunpack.c.l.b16 %v6481
        %v6583 = vunpack.c.h.b16 %v6481
        %v6584 = vunpack.c.l.b16 %v6482
        %v6585 = vunpack.c.h.b16 %v6482
        %v6586 = vpack.c.b16 %v6524, %v6522
        %v6587 = vpack.c.b16 %v6525, %v6523
        %v6588 = vpack.c.b16 %v6528, %v6526
        %v6589 = vpack.c.b16 %v6529, %v6527
        %v6590 = vpack.c.b16 %v6532, %v6530
        %v6591 = vpack.c.b16 %v6533, %v6531
        %v6592 = vpack.c.b16 %v6536, %v6534
        %v6593 = vpack.c.b16 %v6537, %v6535
        %v6594 = vpack.c.b16 %v6540, %v6538
        %v6595 = vpack.c.b16 %v6541, %v6539
        %v6596 = vpack.c.b16 %v6544, %v6542
        %v6597 = vpack.c.b16 %v6545, %v6543
        %v6598 = vpack.c.b16 %v6548, %v6546
        %v6599 = vpack.c.b16 %v6549, %v6547
        %v6600 = vpack.c.b16 %v6552, %v6550
        %v6601 = vpack.c.b16 %v6553, %v6551
        %v6602 = vpack.c.b16 %v6556, %v6554
        %v6603 = vpack.c.b16 %v6557, %v6555
        %v6604 = vpack.c.b16 %v6560, %v6558
        %v6605 = vpack.c.b16 %v6561, %v6559
        %v6606 = vpack.c.b16 %v6564, %v6562
        %v6607 = vpack.c.b16 %v6565, %v6563
        %v6608 = vpack.c.b16 %v6568, %v6566
        %v6609 = vpack.c.b16 %v6569, %v6567
        %v6610 = vpack.c.b16 %v6572, %v6570
        %v6611 = vpack.c.b16 %v6573, %v6571
        %v6612 = vpack.c.b16 %v6576, %v6574
        %v6613 = vpack.c.b16 %v6577, %v6575
        %v6614 = vpack.c.b16 %v6580, %v6578
        %v6615 = vpack.c.b16 %v6581, %v6579
        %v6616 = vpack.c.b16 %v6584, %v6582
        %v6617 = vpack.c.b16 %v6585, %v6583
        %6650 = vmatpush.bf16.msra.mxu0 %v6600
        %6651 = vmatpush.bf16.msra.mxu0 %v6598
        %6652 = vmatpush.bf16.msra.mxu0 %v6596
        %6653 = vmatpush.bf16.msra.mxu0 %v6594
        %6654 = vmatpush.bf16.msra.mxu0 %v6592
        %6655 = vmatpush.bf16.msra.mxu0 %v6590
        %6656 = vmatpush.bf16.msra.mxu0 %v6588
        %6657 = vmatpush.bf16.msra.mxu0 %v6586
        %6658 = vmatmul.bf16.gmra.mxu0 %v6386
        %v6659 = vpop.f32.mrf.mxu0
        %v6660 = vadd.f32 %v6486, %v6659
        %v6661 = vpop.f32.mrf.mxu0
        %v6662 = vadd.f32 %v6486, %v6661
        %6663 = vmatmul.bf16.gmra.mxu0 %v6388
        %v6664 = vpop.f32.mrf.mxu0
        %v6665 = vadd.f32 %v6486, %v6664
        %v6666 = vpop.f32.mrf.mxu0
        %v6667 = vadd.f32 %v6486, %v6666
        %6668 = vmatmul.bf16.gmra.mxu0 %v6390
        %v6669 = vpop.f32.mrf.mxu0
        %v6670 = vadd.f32 %v6486, %v6669
        %v6671 = vpop.f32.mrf.mxu0
        %v6672 = vadd.f32 %v6486, %v6671
        %6673 = vmatmul.bf16.gmra.mxu0 %v6392
        %v6674 = vpop.f32.mrf.mxu0
        %v6675 = vadd.f32 %v6486, %v6674
        %v6676 = vpop.f32.mrf.mxu0
        %v6677 = vadd.f32 %v6486, %v6676
        %6678 = vmatmul.bf16.gmra.mxu0 %v6394
        %v6679 = vpop.f32.mrf.mxu0
        %v6680 = vadd.f32 %v6486, %v6679
        %v6681 = vpop.f32.mrf.mxu0
        %v6682 = vadd.f32 %v6486, %v6681
        %6683 = vmatmul.bf16.gmra.mxu0 %v6396
        %v6684 = vpop.f32.mrf.mxu0
        %v6685 = vadd.f32 %v6486, %v6684
        %v6686 = vpop.f32.mrf.mxu0
        %v6687 = vadd.f32 %v6486, %v6686
        %6688 = vmatmul.bf16.gmra.mxu0 %v6398
        %v6689 = vpop.f32.mrf.mxu0
        %v6690 = vadd.f32 %v6486, %v6689
        %v6691 = vpop.f32.mrf.mxu0
        %v6692 = vadd.f32 %v6486, %v6691
        %6693 = vmatmul.bf16.gmra.mxu0 %v6400
        %v6694 = vpop.f32.mrf.mxu0
        %v6695 = vadd.f32 %v6486, %v6694
        %v6696 = vpop.f32.mrf.mxu0
        %v6697 = vadd.f32 %v6486, %v6696
        %6698 = vmatmul.bf16.gmra.mxu0 %v6402
        %v6699 = vpop.f32.mrf.mxu0
        %v6700 = vadd.f32 %v6486, %v6699
        %v6701 = vpop.f32.mrf.mxu0
        %v6702 = vadd.f32 %v6486, %v6701
        %6703 = vmatmul.bf16.gmra.mxu0 %v6404
        %v6704 = vpop.f32.mrf.mxu0
        %v6705 = vadd.f32 %v6486, %v6704
        %v6706 = vpop.f32.mrf.mxu0
        %v6707 = vadd.f32 %v6486, %v6706
        %6708 = vmatmul.bf16.gmra.mxu0 %v6406
        %v6709 = vpop.f32.mrf.mxu0
        %v6710 = vadd.f32 %v6486, %v6709
        %v6711 = vpop.f32.mrf.mxu0
        %v6712 = vadd.f32 %v6486, %v6711
        %6713 = vmatmul.bf16.gmra.mxu0 %v6408
        %v6714 = vpop.f32.mrf.mxu0
        %v6715 = vadd.f32 %v6486, %v6714
        %v6716 = vpop.f32.mrf.mxu0
        %v6717 = vadd.f32 %v6486, %v6716
        %6718 = vmatmul.bf16.gmra.mxu0 %v6410
        %v6719 = vpop.f32.mrf.mxu0
        %v6720 = vadd.f32 %v6486, %v6719
        %v6721 = vpop.f32.mrf.mxu0
        %v6722 = vadd.f32 %v6486, %v6721
        %6723 = vmatmul.bf16.gmra.mxu0 %v6412
        %v6724 = vpop.f32.mrf.mxu0
        %v6725 = vadd.f32 %v6486, %v6724
        %v6726 = vpop.f32.mrf.mxu0
        %v6727 = vadd.f32 %v6486, %v6726
        %6728 = vmatmul.bf16.gmra.mxu0 %v6414
        %v6729 = vpop.f32.mrf.mxu0
        %v6730 = vadd.f32 %v6486, %v6729
        %v6731 = vpop.f32.mrf.mxu0
        %v6732 = vadd.f32 %v6486, %v6731
        %6733 = vmatmul.bf16.gmra.mxu0 %v6416
        %v6734 = vpop.f32.mrf.mxu0
        %v6735 = vadd.f32 %v6486, %v6734
        %v6736 = vpop.f32.mrf.mxu0
        %v6737 = vadd.f32 %v6486, %v6736
        %6738 = vmatmul.bf16.gmra.mxu0 %v6418
        %v6739 = vpop.f32.mrf.mxu0
        %v6740 = vadd.f32 %v6486, %v6739
        %v6741 = vpop.f32.mrf.mxu0
        %v6742 = vadd.f32 %v6486, %v6741
        %6743 = vmatmul.bf16.gmra.mxu0 %v6420
        %v6744 = vpop.f32.mrf.mxu0
        %v6745 = vadd.f32 %v6486, %v6744
        %v6746 = vpop.f32.mrf.mxu0
        %v6747 = vadd.f32 %v6486, %v6746
        %6748 = vmatmul.bf16.gmra.mxu0 %v6422
        %v6749 = vpop.f32.mrf.mxu0
        %v6750 = vadd.f32 %v6486, %v6749
        %v6751 = vpop.f32.mrf.mxu0
        %v6752 = vadd.f32 %v6486, %v6751
        %6753 = vmatmul.bf16.gmra.mxu0 %v6424
        %v6754 = vpop.f32.mrf.mxu0
        %v6755 = vadd.f32 %v6486, %v6754
        %v6756 = vpop.f32.mrf.mxu0
        %v6757 = vadd.f32 %v6486, %v6756
        %6758 = vmatmul.bf16.gmra.mxu0 %v6426
        %v6759 = vpop.f32.mrf.mxu0
        %v6760 = vadd.f32 %v6486, %v6759
        %v6761 = vpop.f32.mrf.mxu0
        %v6762 = vadd.f32 %v6486, %v6761
        %6763 = vmatmul.bf16.gmra.mxu0 %v6428
        %v6764 = vpop.f32.mrf.mxu0
        %v6765 = vadd.f32 %v6486, %v6764
        %v6766 = vpop.f32.mrf.mxu0
        %v6767 = vadd.f32 %v6486, %v6766
        %6768 = vmatmul.bf16.gmra.mxu0 %v6430
        %v6769 = vpop.f32.mrf.mxu0
        %v6770 = vadd.f32 %v6486, %v6769
        %v6771 = vpop.f32.mrf.mxu0
        %v6772 = vadd.f32 %v6486, %v6771
        %6773 = vmatmul.bf16.gmra.mxu0 %v6432
        %v6774 = vpop.f32.mrf.mxu0
        %v6775 = vadd.f32 %v6486, %v6774
        %v6776 = vpop.f32.mrf.mxu0
        %v6777 = vadd.f32 %v6486, %v6776
        %6778 = vmatmul.bf16.gmra.mxu0 %v6434
        %v6779 = vpop.f32.mrf.mxu0
        %v6780 = vadd.f32 %v6486, %v6779
        %v6781 = vpop.f32.mrf.mxu0
        %v6782 = vadd.f32 %v6486, %v6781
        %6783 = vmatmul.bf16.gmra.mxu0 %v6436
        %v6784 = vpop.f32.mrf.mxu0
        %v6785 = vadd.f32 %v6486, %v6784
        %v6786 = vpop.f32.mrf.mxu0
        %v6787 = vadd.f32 %v6486, %v6786
        %6788 = vmatmul.bf16.gmra.mxu0 %v6438
        %v6789 = vpop.f32.mrf.mxu0
        %v6790 = vadd.f32 %v6486, %v6789
        %v6791 = vpop.f32.mrf.mxu0
        %v6792 = vadd.f32 %v6486, %v6791
        %6793 = vmatmul.bf16.gmra.mxu0 %v6440
        %v6794 = vpop.f32.mrf.mxu0
        %v6795 = vadd.f32 %v6486, %v6794
        %v6796 = vpop.f32.mrf.mxu0
        %v6797 = vadd.f32 %v6486, %v6796
        %6798 = vmatmul.bf16.gmra.mxu0 %v6442
        %v6799 = vpop.f32.mrf.mxu0
        %v6800 = vadd.f32 %v6486, %v6799
        %v6801 = vpop.f32.mrf.mxu0
        %v6802 = vadd.f32 %v6486, %v6801
        %6803 = vmatmul.bf16.gmra.mxu0 %v6444
        %v6804 = vpop.f32.mrf.mxu0
        %v6805 = vadd.f32 %v6486, %v6804
        %v6806 = vpop.f32.mrf.mxu0
        %v6807 = vadd.f32 %v6486, %v6806
        %6808 = vmatmul.bf16.gmra.mxu0 %v6446
        %v6809 = vpop.f32.mrf.mxu0
        %v6810 = vadd.f32 %v6486, %v6809
        %v6811 = vpop.f32.mrf.mxu0
        %v6812 = vadd.f32 %v6486, %v6811
        %6813 = vmatmul.bf16.gmra.mxu0 %v6448
        %v6814 = vpop.f32.mrf.mxu0
        %v6815 = vadd.f32 %v6486, %v6814
        %v6816 = vpop.f32.mrf.mxu0
        %v6817 = vadd.f32 %v6486, %v6816
        %6818 = vdwg.mxu0
        %6819 = vmatpush.bf16.msra.mxu0 %v6616
        %6820 = vmatpush.bf16.msra.mxu0 %v6614
        %6821 = vmatpush.bf16.msra.mxu0 %v6612
        %6822 = vmatpush.bf16.msra.mxu0 %v6610
        %6823 = vmatpush.bf16.msra.mxu0 %v6608
        %6824 = vmatpush.bf16.msra.mxu0 %v6606
        %6825 = vmatpush.bf16.msra.mxu0 %v6604
        %6826 = vmatpush.bf16.msra.mxu0 %v6602
        %6827 = vmatmul.bf16.gmra.mxu0 %v6387
        %v6828 = vpop.f32.mrf.mxu0
        %v6829 = vadd.f32 %v6660, %v6828
        %v6830 = vpop.f32.mrf.mxu0
        %v6831 = vadd.f32 %v6662, %v6830
        %6832 = vmatmul.bf16.gmra.mxu0 %v6389
        %v6833 = vpop.f32.mrf.mxu0
        %v6834 = vadd.f32 %v6665, %v6833
        %v6835 = vpop.f32.mrf.mxu0
        %v6836 = vadd.f32 %v6667, %v6835
        %6837 = vmatmul.bf16.gmra.mxu0 %v6391
        %v6838 = vpop.f32.mrf.mxu0
        %v6839 = vadd.f32 %v6670, %v6838
        %v6840 = vpop.f32.mrf.mxu0
        %v6841 = vadd.f32 %v6672, %v6840
        %6842 = vmatmul.bf16.gmra.mxu0 %v6393
        %v6843 = vpop.f32.mrf.mxu0
        %v6844 = vadd.f32 %v6675, %v6843
        %v6845 = vpop.f32.mrf.mxu0
        %v6846 = vadd.f32 %v6677, %v6845
        %6847 = vmatmul.bf16.gmra.mxu0 %v6395
        %v6848 = vpop.f32.mrf.mxu0
        %v6849 = vadd.f32 %v6680, %v6848
        %v6850 = vpop.f32.mrf.mxu0
        %v6851 = vadd.f32 %v6682, %v6850
        %6852 = vmatmul.bf16.gmra.mxu0 %v6397
        %v6853 = vpop.f32.mrf.mxu0
        %v6854 = vadd.f32 %v6685, %v6853
        %v6855 = vpop.f32.mrf.mxu0
        %v6856 = vadd.f32 %v6687, %v6855
        %6857 = vmatmul.bf16.gmra.mxu0 %v6399
        %v6858 = vpop.f32.mrf.mxu0
        %v6859 = vadd.f32 %v6690, %v6858
        %v6860 = vpop.f32.mrf.mxu0
        %v6861 = vadd.f32 %v6692, %v6860
        %6862 = vmatmul.bf16.gmra.mxu0 %v6401
        %v6863 = vpop.f32.mrf.mxu0
        %v6864 = vadd.f32 %v6695, %v6863
        %v6865 = vpop.f32.mrf.mxu0
        %v6866 = vadd.f32 %v6697, %v6865
        %6867 = vmatmul.bf16.gmra.mxu0 %v6403
        %v6868 = vpop.f32.mrf.mxu0
        %v6869 = vadd.f32 %v6700, %v6868
        %v6870 = vpop.f32.mrf.mxu0
        %v6871 = vadd.f32 %v6702, %v6870
        %6872 = vmatmul.bf16.gmra.mxu0 %v6405
        %v6873 = vpop.f32.mrf.mxu0
        %v6874 = vadd.f32 %v6705, %v6873
        %v6875 = vpop.f32.mrf.mxu0
        %v6876 = vadd.f32 %v6707, %v6875
        %6877 = vmatmul.bf16.gmra.mxu0 %v6407
        %v6878 = vpop.f32.mrf.mxu0
        %v6879 = vadd.f32 %v6710, %v6878
        %v6880 = vpop.f32.mrf.mxu0
        %v6881 = vadd.f32 %v6712, %v6880
        %6882 = vmatmul.bf16.gmra.mxu0 %v6409
        %v6883 = vpop.f32.mrf.mxu0
        %v6884 = vadd.f32 %v6715, %v6883
        %v6885 = vpop.f32.mrf.mxu0
        %v6886 = vadd.f32 %v6717, %v6885
        %6887 = vmatmul.bf16.gmra.mxu0 %v6411
        %v6888 = vpop.f32.mrf.mxu0
        %v6889 = vadd.f32 %v6720, %v6888
        %v6890 = vpop.f32.mrf.mxu0
        %v6891 = vadd.f32 %v6722, %v6890
        %6892 = vmatmul.bf16.gmra.mxu0 %v6413
        %v6893 = vpop.f32.mrf.mxu0
        %v6894 = vadd.f32 %v6725, %v6893
        %v6895 = vpop.f32.mrf.mxu0
        %v6896 = vadd.f32 %v6727, %v6895
        %6897 = vmatmul.bf16.gmra.mxu0 %v6415
        %v6898 = vpop.f32.mrf.mxu0
        %v6899 = vadd.f32 %v6730, %v6898
        %v6900 = vpop.f32.mrf.mxu0
        %v6901 = vadd.f32 %v6732, %v6900
        %6902 = vmatmul.bf16.gmra.mxu0 %v6417
        %v6903 = vpop.f32.mrf.mxu0
        %v6904 = vadd.f32 %v6735, %v6903
        %v6905 = vpop.f32.mrf.mxu0
        %v6906 = vadd.f32 %v6737, %v6905
        %6907 = vmatmul.bf16.gmra.mxu0 %v6419
        %v6908 = vpop.f32.mrf.mxu0
        %v6909 = vadd.f32 %v6740, %v6908
        %v6910 = vpop.f32.mrf.mxu0
        %v6911 = vadd.f32 %v6742, %v6910
        %6912 = vmatmul.bf16.gmra.mxu0 %v6421
        %v6913 = vpop.f32.mrf.mxu0
        %v6914 = vadd.f32 %v6745, %v6913
        %v6915 = vpop.f32.mrf.mxu0
        %v6916 = vadd.f32 %v6747, %v6915
        %6917 = vmatmul.bf16.gmra.mxu0 %v6423
        %v6918 = vpop.f32.mrf.mxu0
        %v6919 = vadd.f32 %v6750, %v6918
        %v6920 = vpop.f32.mrf.mxu0
        %v6921 = vadd.f32 %v6752, %v6920
        %6922 = vmatmul.bf16.gmra.mxu0 %v6425
        %v6923 = vpop.f32.mrf.mxu0
        %v6924 = vadd.f32 %v6755, %v6923
        %v6925 = vpop.f32.mrf.mxu0
        %v6926 = vadd.f32 %v6757, %v6925
        %6927 = vmatmul.bf16.gmra.mxu0 %v6427
        %v6928 = vpop.f32.mrf.mxu0
        %v6929 = vadd.f32 %v6760, %v6928
        %v6930 = vpop.f32.mrf.mxu0
        %v6931 = vadd.f32 %v6762, %v6930
        %6932 = vmatmul.bf16.gmra.mxu0 %v6429
        %v6933 = vpop.f32.mrf.mxu0
        %v6934 = vadd.f32 %v6765, %v6933
        %v6935 = vpop.f32.mrf.mxu0
        %v6936 = vadd.f32 %v6767, %v6935
        %6937 = vmatmul.bf16.gmra.mxu0 %v6431
        %v6938 = vpop.f32.mrf.mxu0
        %v6939 = vadd.f32 %v6770, %v6938
        %v6940 = vpop.f32.mrf.mxu0
        %v6941 = vadd.f32 %v6772, %v6940
        %6942 = vmatmul.bf16.gmra.mxu0 %v6433
        %v6943 = vpop.f32.mrf.mxu0
        %v6944 = vadd.f32 %v6775, %v6943
        %v6945 = vpop.f32.mrf.mxu0
        %v6946 = vadd.f32 %v6777, %v6945
        %6947 = vmatmul.bf16.gmra.mxu0 %v6435
        %v6948 = vpop.f32.mrf.mxu0
        %v6949 = vadd.f32 %v6780, %v6948
        %v6950 = vpop.f32.mrf.mxu0
        %v6951 = vadd.f32 %v6782, %v6950
        %6952 = vmatmul.bf16.gmra.mxu0 %v6437
        %v6953 = vpop.f32.mrf.mxu0
        %v6954 = vadd.f32 %v6785, %v6953
        %v6955 = vpop.f32.mrf.mxu0
        %v6956 = vadd.f32 %v6787, %v6955
        %6957 = vmatmul.bf16.gmra.mxu0 %v6439
        %v6958 = vpop.f32.mrf.mxu0
        %v6959 = vadd.f32 %v6790, %v6958
        %v6960 = vpop.f32.mrf.mxu0
        %v6961 = vadd.f32 %v6792, %v6960
        %6962 = vmatmul.bf16.gmra.mxu0 %v6441
        %v6963 = vpop.f32.mrf.mxu0
        %v6964 = vadd.f32 %v6795, %v6963
        %v6965 = vpop.f32.mrf.mxu0
        %v6966 = vadd.f32 %v6797, %v6965
        %6967 = vmatmul.bf16.gmra.mxu0 %v6443
        %v6968 = vpop.f32.mrf.mxu0
        %v6969 = vadd.f32 %v6800, %v6968
        %v6970 = vpop.f32.mrf.mxu0
        %v6971 = vadd.f32 %v6802, %v6970
        %6972 = vmatmul.bf16.gmra.mxu0 %v6445
        %v6973 = vpop.f32.mrf.mxu0
        %v6974 = vadd.f32 %v6805, %v6973
        %v6975 = vpop.f32.mrf.mxu0
        %v6976 = vadd.f32 %v6807, %v6975
        %6977 = vmatmul.bf16.gmra.mxu0 %v6447
        %v6978 = vpop.f32.mrf.mxu0
        %v6979 = vadd.f32 %v6810, %v6978
        %v6980 = vpop.f32.mrf.mxu0
        %v6981 = vadd.f32 %v6812, %v6980
        %6982 = vmatmul.bf16.gmra.mxu0 %v6449
        %v6983 = vpop.f32.mrf.mxu0
        %v6984 = vadd.f32 %v6815, %v6983
        %v6985 = vpop.f32.mrf.mxu0
        %v6986 = vadd.f32 %v6817, %v6985
        %6987 = vdwg.mxu0
        %6988 = vmatpush.bf16.msra.mxu0 %v6601
        %6989 = vmatpush.bf16.msra.mxu0 %v6599
        %6990 = vmatpush.bf16.msra.mxu0 %v6597
        %6991 = vmatpush.bf16.msra.mxu0 %v6595
        %6992 = vmatpush.bf16.msra.mxu0 %v6593
        %6993 = vmatpush.bf16.msra.mxu0 %v6591
        %6994 = vmatpush.bf16.msra.mxu0 %v6589
        %6995 = vmatpush.bf16.msra.mxu0 %v6587
        %6996 = vmatmul.bf16.gmra.mxu0 %v6386
        %v6997 = vpop.f32.mrf.mxu0
        %v6998 = vadd.f32 %v6487, %v6997
        %v6999 = vpop.f32.mrf.mxu0
        %v7000 = vadd.f32 %v6487, %v6999
        %7001 = vmatmul.bf16.gmra.mxu0 %v6388
        %v7002 = vpop.f32.mrf.mxu0
        %v7003 = vadd.f32 %v6487, %v7002
        %v7004 = vpop.f32.mrf.mxu0
        %v7005 = vadd.f32 %v6487, %v7004
        %7006 = vmatmul.bf16.gmra.mxu0 %v6390
        %v7007 = vpop.f32.mrf.mxu0
        %v7008 = vadd.f32 %v6487, %v7007
        %v7009 = vpop.f32.mrf.mxu0
        %v7010 = vadd.f32 %v6487, %v7009
        %7011 = vmatmul.bf16.gmra.mxu0 %v6392
        %v7012 = vpop.f32.mrf.mxu0
        %v7013 = vadd.f32 %v6487, %v7012
        %v7014 = vpop.f32.mrf.mxu0
        %v7015 = vadd.f32 %v6487, %v7014
        %7016 = vmatmul.bf16.gmra.mxu0 %v6394
        %v7017 = vpop.f32.mrf.mxu0
        %v7018 = vadd.f32 %v6487, %v7017
        %v7019 = vpop.f32.mrf.mxu0
        %v7020 = vadd.f32 %v6487, %v7019
        %7021 = vmatmul.bf16.gmra.mxu0 %v6396
        %v7022 = vpop.f32.mrf.mxu0
        %v7023 = vadd.f32 %v6487, %v7022
        %v7024 = vpop.f32.mrf.mxu0
        %v7025 = vadd.f32 %v6487, %v7024
        %7026 = vmatmul.bf16.gmra.mxu0 %v6398
        %v7027 = vpop.f32.mrf.mxu0
        %v7028 = vadd.f32 %v6487, %v7027
        %v7029 = vpop.f32.mrf.mxu0
        %v7030 = vadd.f32 %v6487, %v7029
        %7031 = vmatmul.bf16.gmra.mxu0 %v6400
        %v7032 = vpop.f32.mrf.mxu0
        %v7033 = vadd.f32 %v6487, %v7032
        %v7034 = vpop.f32.mrf.mxu0
        %v7035 = vadd.f32 %v6487, %v7034
        %7036 = vmatmul.bf16.gmra.mxu0 %v6402
        %v7037 = vpop.f32.mrf.mxu0
        %v7038 = vadd.f32 %v6487, %v7037
        %v7039 = vpop.f32.mrf.mxu0
        %v7040 = vadd.f32 %v6487, %v7039
        %7041 = vmatmul.bf16.gmra.mxu0 %v6404
        %v7042 = vpop.f32.mrf.mxu0
        %v7043 = vadd.f32 %v6487, %v7042
        %v7044 = vpop.f32.mrf.mxu0
        %v7045 = vadd.f32 %v6487, %v7044
        %7046 = vmatmul.bf16.gmra.mxu0 %v6406
        %v7047 = vpop.f32.mrf.mxu0
        %v7048 = vadd.f32 %v6487, %v7047
        %v7049 = vpop.f32.mrf.mxu0
        %v7050 = vadd.f32 %v6487, %v7049
        %7051 = vmatmul.bf16.gmra.mxu0 %v6408
        %v7052 = vpop.f32.mrf.mxu0
        %v7053 = vadd.f32 %v6487, %v7052
        %v7054 = vpop.f32.mrf.mxu0
        %v7055 = vadd.f32 %v6487, %v7054
        %7056 = vmatmul.bf16.gmra.mxu0 %v6410
        %v7057 = vpop.f32.mrf.mxu0
        %v7058 = vadd.f32 %v6487, %v7057
        %v7059 = vpop.f32.mrf.mxu0
        %v7060 = vadd.f32 %v6487, %v7059
        %7061 = vmatmul.bf16.gmra.mxu0 %v6412
        %v7062 = vpop.f32.mrf.mxu0
        %v7063 = vadd.f32 %v6487, %v7062
        %v7064 = vpop.f32.mrf.mxu0
        %v7065 = vadd.f32 %v6487, %v7064
        %7066 = vmatmul.bf16.gmra.mxu0 %v6414
        %v7067 = vpop.f32.mrf.mxu0
        %v7068 = vadd.f32 %v6487, %v7067
        %v7069 = vpop.f32.mrf.mxu0
        %v7070 = vadd.f32 %v6487, %v7069
        %7071 = vmatmul.bf16.gmra.mxu0 %v6416
        %v7072 = vpop.f32.mrf.mxu0
        %v7073 = vadd.f32 %v6487, %v7072
        %v7074 = vpop.f32.mrf.mxu0
        %v7075 = vadd.f32 %v6487, %v7074
        %7076 = vmatmul.bf16.gmra.mxu0 %v6418
        %v7077 = vpop.f32.mrf.mxu0
        %v7078 = vadd.f32 %v6487, %v7077
        %v7079 = vpop.f32.mrf.mxu0
        %v7080 = vadd.f32 %v6487, %v7079
        %7081 = vmatmul.bf16.gmra.mxu0 %v6420
        %v7082 = vpop.f32.mrf.mxu0
        %v7083 = vadd.f32 %v6487, %v7082
        %v7084 = vpop.f32.mrf.mxu0
        %v7085 = vadd.f32 %v6487, %v7084
        %7086 = vmatmul.bf16.gmra.mxu0 %v6422
        %v7087 = vpop.f32.mrf.mxu0
        %v7088 = vadd.f32 %v6487, %v7087
        %v7089 = vpop.f32.mrf.mxu0
        %v7090 = vadd.f32 %v6487, %v7089
        %7091 = vmatmul.bf16.gmra.mxu0 %v6424
        %v7092 = vpop.f32.mrf.mxu0
        %v7093 = vadd.f32 %v6487, %v7092
        %v7094 = vpop.f32.mrf.mxu0
        %v7095 = vadd.f32 %v6487, %v7094
        %7096 = vmatmul.bf16.gmra.mxu0 %v6426
        %v7097 = vpop.f32.mrf.mxu0
        %v7098 = vadd.f32 %v6487, %v7097
        %v7099 = vpop.f32.mrf.mxu0
        %v7100 = vadd.f32 %v6487, %v7099
        %7101 = vmatmul.bf16.gmra.mxu0 %v6428
        %v7102 = vpop.f32.mrf.mxu0
        %v7103 = vadd.f32 %v6487, %v7102
        %v7104 = vpop.f32.mrf.mxu0
        %v7105 = vadd.f32 %v6487, %v7104
        %7106 = vmatmul.bf16.gmra.mxu0 %v6430
        %v7107 = vpop.f32.mrf.mxu0
        %v7108 = vadd.f32 %v6487, %v7107
        %v7109 = vpop.f32.mrf.mxu0
        %v7110 = vadd.f32 %v6487, %v7109
        %7111 = vmatmul.bf16.gmra.mxu0 %v6432
        %v7112 = vpop.f32.mrf.mxu0
        %v7113 = vadd.f32 %v6487, %v7112
        %v7114 = vpop.f32.mrf.mxu0
        %v7115 = vadd.f32 %v6487, %v7114
        %7116 = vmatmul.bf16.gmra.mxu0 %v6434
        %v7117 = vpop.f32.mrf.mxu0
        %v7118 = vadd.f32 %v6487, %v7117
        %v7119 = vpop.f32.mrf.mxu0
        %v7120 = vadd.f32 %v6487, %v7119
        %7121 = vmatmul.bf16.gmra.mxu0 %v6436
        %v7122 = vpop.f32.mrf.mxu0
        %v7123 = vadd.f32 %v6487, %v7122
        %v7124 = vpop.f32.mrf.mxu0
        %v7125 = vadd.f32 %v6487, %v7124
        %7126 = vmatmul.bf16.gmra.mxu0 %v6438
        %v7127 = vpop.f32.mrf.mxu0
        %v7128 = vadd.f32 %v6487, %v7127
        %v7129 = vpop.f32.mrf.mxu0
        %v7130 = vadd.f32 %v6487, %v7129
        %7131 = vmatmul.bf16.gmra.mxu0 %v6440
        %v7132 = vpop.f32.mrf.mxu0
        %v7133 = vadd.f32 %v6487, %v7132
        %v7134 = vpop.f32.mrf.mxu0
        %v7135 = vadd.f32 %v6487, %v7134
        %7136 = vmatmul.bf16.gmra.mxu0 %v6442
        %v7137 = vpop.f32.mrf.mxu0
        %v7138 = vadd.f32 %v6487, %v7137
        %v7139 = vpop.f32.mrf.mxu0
        %v7140 = vadd.f32 %v6487, %v7139
        %7141 = vmatmul.bf16.gmra.mxu0 %v6444
        %v7142 = vpop.f32.mrf.mxu0
        %v7143 = vadd.f32 %v6487, %v7142
        %v7144 = vpop.f32.mrf.mxu0
        %v7145 = vadd.f32 %v6487, %v7144
        %7146 = vmatmul.bf16.gmra.mxu0 %v6446
        %v7147 = vpop.f32.mrf.mxu0
        %v7148 = vadd.f32 %v6487, %v7147
        %v7149 = vpop.f32.mrf.mxu0
        %v7150 = vadd.f32 %v6487, %v7149
        %7151 = vmatmul.bf16.gmra.mxu0 %v6448
        %v7152 = vpop.f32.mrf.mxu0
        %v7153 = vadd.f32 %v6487, %v7152
        %v7154 = vpop.f32.mrf.mxu0
        %v7155 = vadd.f32 %v6487, %v7154
        %7156 = vdwg.mxu0
        %7157 = vmatpush.bf16.msra.mxu0 %v6617
        %7158 = vmatpush.bf16.msra.mxu0 %v6615
        %7159 = vmatpush.bf16.msra.mxu0 %v6613
        %7160 = vmatpush.bf16.msra.mxu0 %v6611
        %7161 = vmatpush.bf16.msra.mxu0 %v6609
        %7162 = vmatpush.bf16.msra.mxu0 %v6607
        %7163 = vmatpush.bf16.msra.mxu0 %v6605
        %7164 = vmatpush.bf16.msra.mxu0 %v6603
        %7165 = vmatmul.bf16.gmra.mxu0 %v6387
        %v7166 = vpop.f32.mrf.mxu0
        %v7167 = vadd.f32 %v6998, %v7166
        %v7168 = vpop.f32.mrf.mxu0
        %v7169 = vadd.f32 %v7000, %v7168
        %7170 = vmatmul.bf16.gmra.mxu0 %v6389
        %v7171 = vpop.f32.mrf.mxu0
        %v7172 = vadd.f32 %v7003, %v7171
        %v7173 = vpop.f32.mrf.mxu0
        %v7174 = vadd.f32 %v7005, %v7173
        %7175 = vmatmul.bf16.gmra.mxu0 %v6391
        %v7176 = vpop.f32.mrf.mxu0
        %v7177 = vadd.f32 %v7008, %v7176
        %v7178 = vpop.f32.mrf.mxu0
        %v7179 = vadd.f32 %v7010, %v7178
        %7180 = vmatmul.bf16.gmra.mxu0 %v6393
        %v7181 = vpop.f32.mrf.mxu0
        %v7182 = vadd.f32 %v7013, %v7181
        %v7183 = vpop.f32.mrf.mxu0
        %v7184 = vadd.f32 %v7015, %v7183
        %7185 = vmatmul.bf16.gmra.mxu0 %v6395
        %v7186 = vpop.f32.mrf.mxu0
        %v7187 = vadd.f32 %v7018, %v7186
        %v7188 = vpop.f32.mrf.mxu0
        %v7189 = vadd.f32 %v7020, %v7188
        %7190 = vmatmul.bf16.gmra.mxu0 %v6397
        %v7191 = vpop.f32.mrf.mxu0
        %v7192 = vadd.f32 %v7023, %v7191
        %v7193 = vpop.f32.mrf.mxu0
        %v7194 = vadd.f32 %v7025, %v7193
        %7195 = vmatmul.bf16.gmra.mxu0 %v6399
        %v7196 = vpop.f32.mrf.mxu0
        %v7197 = vadd.f32 %v7028, %v7196
        %v7198 = vpop.f32.mrf.mxu0
        %v7199 = vadd.f32 %v7030, %v7198
        %7200 = vmatmul.bf16.gmra.mxu0 %v6401
        %v7201 = vpop.f32.mrf.mxu0
        %v7202 = vadd.f32 %v7033, %v7201
        %v7203 = vpop.f32.mrf.mxu0
        %v7204 = vadd.f32 %v7035, %v7203
        %7205 = vmatmul.bf16.gmra.mxu0 %v6403
        %v7206 = vpop.f32.mrf.mxu0
        %v7207 = vadd.f32 %v7038, %v7206
        %v7208 = vpop.f32.mrf.mxu0
        %v7209 = vadd.f32 %v7040, %v7208
        %7210 = vmatmul.bf16.gmra.mxu0 %v6405
        %v7211 = vpop.f32.mrf.mxu0
        %v7212 = vadd.f32 %v7043, %v7211
        %v7213 = vpop.f32.mrf.mxu0
        %v7214 = vadd.f32 %v7045, %v7213
        %7215 = vmatmul.bf16.gmra.mxu0 %v6407
        %v7216 = vpop.f32.mrf.mxu0
        %v7217 = vadd.f32 %v7048, %v7216
        %v7218 = vpop.f32.mrf.mxu0
        %v7219 = vadd.f32 %v7050, %v7218
        %7220 = vmatmul.bf16.gmra.mxu0 %v6409
        %v7221 = vpop.f32.mrf.mxu0
        %v7222 = vadd.f32 %v7053, %v7221
        %v7223 = vpop.f32.mrf.mxu0
        %v7224 = vadd.f32 %v7055, %v7223
        %7225 = vmatmul.bf16.gmra.mxu0 %v6411
        %v7226 = vpop.f32.mrf.mxu0
        %v7227 = vadd.f32 %v7058, %v7226
        %v7228 = vpop.f32.mrf.mxu0
        %v7229 = vadd.f32 %v7060, %v7228
        %7230 = vmatmul.bf16.gmra.mxu0 %v6413
        %v7231 = vpop.f32.mrf.mxu0
        %v7232 = vadd.f32 %v7063, %v7231
        %v7233 = vpop.f32.mrf.mxu0
        %v7234 = vadd.f32 %v7065, %v7233
        %7235 = vmatmul.bf16.gmra.mxu0 %v6415
        %v7236 = vpop.f32.mrf.mxu0
        %v7237 = vadd.f32 %v7068, %v7236
        %v7238 = vpop.f32.mrf.mxu0
        %v7239 = vadd.f32 %v7070, %v7238
        %7240 = vmatmul.bf16.gmra.mxu0 %v6417
        %v7241 = vpop.f32.mrf.mxu0
        %v7242 = vadd.f32 %v7073, %v7241
        %v7243 = vpop.f32.mrf.mxu0
        %v7244 = vadd.f32 %v7075, %v7243
        %7245 = vmatmul.bf16.gmra.mxu0 %v6419
        %v7246 = vpop.f32.mrf.mxu0
        %v7247 = vadd.f32 %v7078, %v7246
        %v7248 = vpop.f32.mrf.mxu0
        %v7249 = vadd.f32 %v7080, %v7248
        %7250 = vmatmul.bf16.gmra.mxu0 %v6421
        %v7251 = vpop.f32.mrf.mxu0
        %v7252 = vadd.f32 %v7083, %v7251
        %v7253 = vpop.f32.mrf.mxu0
        %v7254 = vadd.f32 %v7085, %v7253
        %7255 = vmatmul.bf16.gmra.mxu0 %v6423
        %v7256 = vpop.f32.mrf.mxu0
        %v7257 = vadd.f32 %v7088, %v7256
        %v7258 = vpop.f32.mrf.mxu0
        %v7259 = vadd.f32 %v7090, %v7258
        %7260 = vmatmul.bf16.gmra.mxu0 %v6425
        %v7261 = vpop.f32.mrf.mxu0
        %v7262 = vadd.f32 %v7093, %v7261
        %v7263 = vpop.f32.mrf.mxu0
        %v7264 = vadd.f32 %v7095, %v7263
        %7265 = vmatmul.bf16.gmra.mxu0 %v6427
        %v7266 = vpop.f32.mrf.mxu0
        %v7267 = vadd.f32 %v7098, %v7266
        %v7268 = vpop.f32.mrf.mxu0
        %v7269 = vadd.f32 %v7100, %v7268
        %7270 = vmatmul.bf16.gmra.mxu0 %v6429
        %v7271 = vpop.f32.mrf.mxu0
        %v7272 = vadd.f32 %v7103, %v7271
        %v7273 = vpop.f32.mrf.mxu0
        %v7274 = vadd.f32 %v7105, %v7273
        %7275 = vmatmul.bf16.gmra.mxu0 %v6431
        %v7276 = vpop.f32.mrf.mxu0
        %v7277 = vadd.f32 %v7108, %v7276
        %v7278 = vpop.f32.mrf.mxu0
        %v7279 = vadd.f32 %v7110, %v7278
        %7280 = vmatmul.bf16.gmra.mxu0 %v6433
        %v7281 = vpop.f32.mrf.mxu0
        %v7282 = vadd.f32 %v7113, %v7281
        %v7283 = vpop.f32.mrf.mxu0
        %v7284 = vadd.f32 %v7115, %v7283
        %7285 = vmatmul.bf16.gmra.mxu0 %v6435
        %v7286 = vpop.f32.mrf.mxu0
        %v7287 = vadd.f32 %v7118, %v7286
        %v7288 = vpop.f32.mrf.mxu0
        %v7289 = vadd.f32 %v7120, %v7288
        %7290 = vmatmul.bf16.gmra.mxu0 %v6437
        %v7291 = vpop.f32.mrf.mxu0
        %v7292 = vadd.f32 %v7123, %v7291
        %v7293 = vpop.f32.mrf.mxu0
        %v7294 = vadd.f32 %v7125, %v7293
        %7295 = vmatmul.bf16.gmra.mxu0 %v6439
        %v7296 = vpop.f32.mrf.mxu0
        %v7297 = vadd.f32 %v7128, %v7296
        %v7298 = vpop.f32.mrf.mxu0
        %v7299 = vadd.f32 %v7130, %v7298
        %7300 = vmatmul.bf16.gmra.mxu0 %v6441
        %v7301 = vpop.f32.mrf.mxu0
        %v7302 = vadd.f32 %v7133, %v7301
        %v7303 = vpop.f32.mrf.mxu0
        %v7304 = vadd.f32 %v7135, %v7303
        %7305 = vmatmul.bf16.gmra.mxu0 %v6443
        %v7306 = vpop.f32.mrf.mxu0
        %v7307 = vadd.f32 %v7138, %v7306
        %v7308 = vpop.f32.mrf.mxu0
        %v7309 = vadd.f32 %v7140, %v7308
        %7310 = vmatmul.bf16.gmra.mxu0 %v6445
        %v7311 = vpop.f32.mrf.mxu0
        %v7312 = vadd.f32 %v7143, %v7311
        %v7313 = vpop.f32.mrf.mxu0
        %v7314 = vadd.f32 %v7145, %v7313
        %7315 = vmatmul.bf16.gmra.mxu0 %v6447
        %v7316 = vpop.f32.mrf.mxu0
        %v7317 = vadd.f32 %v7148, %v7316
        %v7318 = vpop.f32.mrf.mxu0
        %v7319 = vadd.f32 %v7150, %v7318
        %7320 = vmatmul.bf16.gmra.mxu0 %v6449
        %v7321 = vpop.f32.mrf.mxu0
        %v7322 = vadd.f32 %v7153, %v7321
        %v7323 = vpop.f32.mrf.mxu0
        %v7324 = vadd.f32 %v7155, %v7323
        %7325 = vdwg.mxu0
        %v7326 = vld [vmem:[%s2] ss:$8 sm:$0x3]
        %v7328 = vperm.slane %v7326, 0
        %v7329 = vperm.slane %v7326, 1
        %v7332 = vmul.f32 %v366, %v7328
        %v7333 = vmul.f32 %v366, %v7329
        %v7334 = vmul.f32 %v371, %v7328
        %v7335 = vmul.f32 %v371, %v7329
        %v7336 = vmul.f32 %v376, %v7328
        %v7337 = vmul.f32 %v376, %v7329
        %v7338 = vmul.f32 %v381, %v7328
        %v7339 = vmul.f32 %v381, %v7329
        %v7340 = vmul.f32 %v386, %v7328
        %v7341 = vmul.f32 %v386, %v7329
        %v7342 = vmul.f32 %v391, %v7328
        %v7343 = vmul.f32 %v391, %v7329
        %v7344 = vmul.f32 %v396, %v7328
        %v7345 = vmul.f32 %v396, %v7329
        %v7346 = vmul.f32 %v401, %v7328
        %v7347 = vmul.f32 %v401, %v7329
        %v7348 = vmul.f32 %v406, %v7328
        %v7349 = vmul.f32 %v406, %v7329
        %v7350 = vmul.f32 %v411, %v7328
        %v7351 = vmul.f32 %v411, %v7329
        %v7352 = vmul.f32 %v416, %v7328
        %v7353 = vmul.f32 %v416, %v7329
        %v7354 = vmul.f32 %v421, %v7328
        %v7355 = vmul.f32 %v421, %v7329
        %v7356 = vmul.f32 %v426, %v7328
        %v7357 = vmul.f32 %v426, %v7329
        %v7358 = vmul.f32 %v431, %v7328
        %v7359 = vmul.f32 %v431, %v7329
        %v7360 = vmul.f32 %v436, %v7328
        %v7361 = vmul.f32 %v436, %v7329
        %v7362 = vmul.f32 %v441, %v7328
        %v7363 = vmul.f32 %v441, %v7329
        %v7364 = vmul.f32 %v446, %v7328
        %v7365 = vmul.f32 %v446, %v7329
        %v7366 = vmul.f32 %v451, %v7328
        %v7367 = vmul.f32 %v451, %v7329
        %v7368 = vmul.f32 %v456, %v7328
        %v7369 = vmul.f32 %v456, %v7329
        %v7370 = vmul.f32 %v461, %v7328
        %v7371 = vmul.f32 %v461, %v7329
        %v7372 = vmul.f32 %v466, %v7328
        %v7373 = vmul.f32 %v466, %v7329
        %v7374 = vmul.f32 %v471, %v7328
        %v7375 = vmul.f32 %v471, %v7329
        %v7376 = vmul.f32 %v476, %v7328
        %v7377 = vmul.f32 %v476, %v7329
        %v7378 = vmul.f32 %v481, %v7328
        %v7379 = vmul.f32 %v481, %v7329
        %v7380 = vmul.f32 %v486, %v7328
        %v7381 = vmul.f32 %v486, %v7329
        %v7382 = vmul.f32 %v491, %v7328
        %v7383 = vmul.f32 %v491, %v7329
        %v7384 = vmul.f32 %v496, %v7328
        %v7385 = vmul.f32 %v496, %v7329
        %v7386 = vmul.f32 %v501, %v7328
        %v7387 = vmul.f32 %v501, %v7329
        %v7388 = vmul.f32 %v506, %v7328
        %v7389 = vmul.f32 %v506, %v7329
        %v7390 = vmul.f32 %v511, %v7328
        %v7391 = vmul.f32 %v511, %v7329
        %v7392 = vmul.f32 %v516, %v7328
        %v7393 = vmul.f32 %v516, %v7329
        %v7394 = vmul.f32 %v521, %v7328
        %v7395 = vmul.f32 %v521, %v7329
        %v7396 = vmul.f32 %v526, %v7328
        %v7397 = vmul.f32 %v526, %v7329
        %v7398 = vmul.f32 %v531, %v7328
        %v7399 = vmul.f32 %v531, %v7329
        %v7400 = vmul.f32 %v536, %v7328
        %v7401 = vmul.f32 %v536, %v7329
        %v7402 = vmul.f32 %v541, %v7328
        %v7403 = vmul.f32 %v541, %v7329
        %v7404 = vmul.f32 %v546, %v7328
        %v7405 = vmul.f32 %v546, %v7329
        %v7406 = vmul.f32 %v551, %v7328
        %v7407 = vmul.f32 %v551, %v7329
        %v7408 = vmul.f32 %v556, %v7328
        %v7409 = vmul.f32 %v556, %v7329
        %v7410 = vmul.f32 %v561, %v7328
        %v7411 = vmul.f32 %v561, %v7329
        %v7412 = vmul.f32 %v566, %v7328
        %v7413 = vmul.f32 %v566, %v7329
        %v7414 = vmul.f32 %v571, %v7328
        %v7415 = vmul.f32 %v571, %v7329
        %v7416 = vmul.f32 %v576, %v7328
        %v7417 = vmul.f32 %v576, %v7329
        %v7418 = vmul.f32 %v581, %v7328
        %v7419 = vmul.f32 %v581, %v7329
        %v7420 = vmul.f32 %v586, %v7328
        %v7421 = vmul.f32 %v586, %v7329
        %v7422 = vmul.f32 %v591, %v7328
        %v7423 = vmul.f32 %v591, %v7329
        %v7424 = vmul.f32 %v596, %v7328
        %v7425 = vmul.f32 %v596, %v7329
        %v7426 = vmul.f32 %v601, %v7328
        %v7427 = vmul.f32 %v601, %v7329
        %v7428 = vmul.f32 %v606, %v7328
        %v7429 = vmul.f32 %v606, %v7329
        %v7430 = vmul.f32 %v611, %v7328
        %v7431 = vmul.f32 %v611, %v7329
        %v7432 = vmul.f32 %v616, %v7328
        %v7433 = vmul.f32 %v616, %v7329
        %v7434 = vmul.f32 %v621, %v7328
        %v7435 = vmul.f32 %v621, %v7329
        %v7436 = vmul.f32 %v626, %v7328
        %v7437 = vmul.f32 %v626, %v7329
        %v7438 = vmul.f32 %v631, %v7328
        %v7439 = vmul.f32 %v631, %v7329
        %v7440 = vmul.f32 %v636, %v7328
        %v7441 = vmul.f32 %v636, %v7329
        %v7442 = vmul.f32 %v641, %v7328
        %v7443 = vmul.f32 %v641, %v7329
        %v7444 = vmul.f32 %v646, %v7328
        %v7445 = vmul.f32 %v646, %v7329
        %v7446 = vmul.f32 %v651, %v7328
        %v7447 = vmul.f32 %v651, %v7329
        %v7448 = vmul.f32 %v656, %v7328
        %v7449 = vmul.f32 %v656, %v7329
        %v7450 = vmul.f32 %v661, %v7328
        %v7451 = vmul.f32 %v661, %v7329
        %v7452 = vmul.f32 %v666, %v7328
        %v7453 = vmul.f32 %v666, %v7329
        %v7454 = vmul.f32 %v671, %v7328
        %v7455 = vmul.f32 %v671, %v7329
        %v7456 = vmul.f32 %v676, %v7328
        %v7457 = vmul.f32 %v676, %v7329
        %v7458 = vmul.f32 %v681, %v7328
        %v7459 = vmul.f32 %v681, %v7329
        %v7460 = vadd.f32 %v6829, %v7332
        %v7461 = vadd.f32 %v7167, %v7333
        %v7462 = vadd.f32 %v6831, %v7334
        %v7463 = vadd.f32 %v7169, %v7335
        %v7464 = vadd.f32 %v6834, %v7336
        %v7465 = vadd.f32 %v7172, %v7337
        %v7466 = vadd.f32 %v6836, %v7338
        %v7467 = vadd.f32 %v7174, %v7339
        %v7468 = vadd.f32 %v6839, %v7340
        %v7469 = vadd.f32 %v7177, %v7341
        %v7470 = vadd.f32 %v6841, %v7342
        %v7471 = vadd.f32 %v7179, %v7343
        %v7472 = vadd.f32 %v6844, %v7344
        %v7473 = vadd.f32 %v7182, %v7345
        %v7474 = vadd.f32 %v6846, %v7346
        %v7475 = vadd.f32 %v7184, %v7347
        %v7476 = vadd.f32 %v6849, %v7348
        %v7477 = vadd.f32 %v7187, %v7349
        %v7478 = vadd.f32 %v6851, %v7350
        %v7479 = vadd.f32 %v7189, %v7351
        %v7480 = vadd.f32 %v6854, %v7352
        %v7481 = vadd.f32 %v7192, %v7353
        %v7482 = vadd.f32 %v6856, %v7354
        %v7483 = vadd.f32 %v7194, %v7355
        %v7484 = vadd.f32 %v6859, %v7356
        %v7485 = vadd.f32 %v7197, %v7357
        %v7486 = vadd.f32 %v6861, %v7358
        %v7487 = vadd.f32 %v7199, %v7359
        %v7488 = vadd.f32 %v6864, %v7360
        %v7489 = vadd.f32 %v7202, %v7361
        %v7490 = vadd.f32 %v6866, %v7362
        %v7491 = vadd.f32 %v7204, %v7363
        %v7492 = vadd.f32 %v6869, %v7364
        %v7493 = vadd.f32 %v7207, %v7365
        %v7494 = vadd.f32 %v6871, %v7366
        %v7495 = vadd.f32 %v7209, %v7367
        %v7496 = vadd.f32 %v6874, %v7368
        %v7497 = vadd.f32 %v7212, %v7369
        %v7498 = vadd.f32 %v6876, %v7370
        %v7499 = vadd.f32 %v7214, %v7371
        %v7500 = vadd.f32 %v6879, %v7372
        %v7501 = vadd.f32 %v7217, %v7373
        %v7502 = vadd.f32 %v6881, %v7374
        %v7503 = vadd.f32 %v7219, %v7375
        %v7504 = vadd.f32 %v6884, %v7376
        %v7505 = vadd.f32 %v7222, %v7377
        %v7506 = vadd.f32 %v6886, %v7378
        %v7507 = vadd.f32 %v7224, %v7379
        %v7508 = vadd.f32 %v6889, %v7380
        %v7509 = vadd.f32 %v7227, %v7381
        %v7510 = vadd.f32 %v6891, %v7382
        %v7511 = vadd.f32 %v7229, %v7383
        %v7512 = vadd.f32 %v6894, %v7384
        %v7513 = vadd.f32 %v7232, %v7385
        %v7514 = vadd.f32 %v6896, %v7386
        %v7515 = vadd.f32 %v7234, %v7387
        %v7516 = vadd.f32 %v6899, %v7388
        %v7517 = vadd.f32 %v7237, %v7389
        %v7518 = vadd.f32 %v6901, %v7390
        %v7519 = vadd.f32 %v7239, %v7391
        %v7520 = vadd.f32 %v6904, %v7392
        %v7521 = vadd.f32 %v7242, %v7393
        %v7522 = vadd.f32 %v6906, %v7394
        %v7523 = vadd.f32 %v7244, %v7395
        %v7524 = vadd.f32 %v6909, %v7396
        %v7525 = vadd.f32 %v7247, %v7397
        %v7526 = vadd.f32 %v6911, %v7398
        %v7527 = vadd.f32 %v7249, %v7399
        %v7528 = vadd.f32 %v6914, %v7400
        %v7529 = vadd.f32 %v7252, %v7401
        %v7530 = vadd.f32 %v6916, %v7402
        %v7531 = vadd.f32 %v7254, %v7403
        %v7532 = vadd.f32 %v6919, %v7404
        %v7533 = vadd.f32 %v7257, %v7405
        %v7534 = vadd.f32 %v6921, %v7406
        %v7535 = vadd.f32 %v7259, %v7407
        %v7536 = vadd.f32 %v6924, %v7408
        %v7537 = vadd.f32 %v7262, %v7409
        %v7538 = vadd.f32 %v6926, %v7410
        %v7539 = vadd.f32 %v7264, %v7411
        %v7540 = vadd.f32 %v6929, %v7412
        %v7541 = vadd.f32 %v7267, %v7413
        %v7542 = vadd.f32 %v6931, %v7414
        %v7543 = vadd.f32 %v7269, %v7415
        %v7544 = vadd.f32 %v6934, %v7416
        %v7545 = vadd.f32 %v7272, %v7417
        %v7546 = vadd.f32 %v6936, %v7418
        %v7547 = vadd.f32 %v7274, %v7419
        %v7548 = vadd.f32 %v6939, %v7420
        %v7549 = vadd.f32 %v7277, %v7421
        %v7550 = vadd.f32 %v6941, %v7422
        %v7551 = vadd.f32 %v7279, %v7423
        %v7552 = vadd.f32 %v6944, %v7424
        %v7553 = vadd.f32 %v7282, %v7425
        %v7554 = vadd.f32 %v6946, %v7426
        %v7555 = vadd.f32 %v7284, %v7427
        %v7556 = vadd.f32 %v6949, %v7428
        %v7557 = vadd.f32 %v7287, %v7429
        %v7558 = vadd.f32 %v6951, %v7430
        %v7559 = vadd.f32 %v7289, %v7431
        %v7560 = vadd.f32 %v6954, %v7432
        %v7561 = vadd.f32 %v7292, %v7433
        %v7562 = vadd.f32 %v6956, %v7434
        %v7563 = vadd.f32 %v7294, %v7435
        %v7564 = vadd.f32 %v6959, %v7436
        %v7565 = vadd.f32 %v7297, %v7437
        %v7566 = vadd.f32 %v6961, %v7438
        %v7567 = vadd.f32 %v7299, %v7439
        %v7568 = vadd.f32 %v6964, %v7440
        %v7569 = vadd.f32 %v7302, %v7441
        %v7570 = vadd.f32 %v6966, %v7442
        %v7571 = vadd.f32 %v7304, %v7443
        %v7572 = vadd.f32 %v6969, %v7444
        %v7573 = vadd.f32 %v7307, %v7445
        %v7574 = vadd.f32 %v6971, %v7446
        %v7575 = vadd.f32 %v7309, %v7447
        %v7576 = vadd.f32 %v6974, %v7448
        %v7577 = vadd.f32 %v7312, %v7449
        %v7578 = vadd.f32 %v6976, %v7450
        %v7579 = vadd.f32 %v7314, %v7451
        %v7580 = vadd.f32 %v6979, %v7452
        %v7581 = vadd.f32 %v7317, %v7453
        %v7582 = vadd.f32 %v6981, %v7454
        %v7583 = vadd.f32 %v7319, %v7455
        %v7584 = vadd.f32 %v6984, %v7456
        %v7585 = vadd.f32 %v7322, %v7457
        %v7586 = vadd.f32 %v6986, %v7458
        %v7587 = vadd.f32 %v7324, %v7459
        %s7588 = scalar_lea.vmem %s2, 1
        %v7589 = vld [vmem:[%s7588] ss:$8 sm:$0x3]
        %v7591 = vperm.slane %v7589, 0
        %v7592 = vperm.slane %v7589, 1
        %v7595 = vmul.f32 %v953, %v7591
        %v7596 = vmul.f32 %v953, %v7592
        %v7597 = vmul.f32 %v957, %v7591
        %v7598 = vmul.f32 %v957, %v7592
        %v7599 = vmul.f32 %v961, %v7591
        %v7600 = vmul.f32 %v961, %v7592
        %v7601 = vmul.f32 %v965, %v7591
        %v7602 = vmul.f32 %v965, %v7592
        %v7603 = vmul.f32 %v969, %v7591
        %v7604 = vmul.f32 %v969, %v7592
        %v7605 = vmul.f32 %v973, %v7591
        %v7606 = vmul.f32 %v973, %v7592
        %v7607 = vmul.f32 %v977, %v7591
        %v7608 = vmul.f32 %v977, %v7592
        %v7609 = vmul.f32 %v981, %v7591
        %v7610 = vmul.f32 %v981, %v7592
        %v7611 = vmul.f32 %v985, %v7591
        %v7612 = vmul.f32 %v985, %v7592
        %v7613 = vmul.f32 %v989, %v7591
        %v7614 = vmul.f32 %v989, %v7592
        %v7615 = vmul.f32 %v993, %v7591
        %v7616 = vmul.f32 %v993, %v7592
        %v7617 = vmul.f32 %v997, %v7591
        %v7618 = vmul.f32 %v997, %v7592
        %v7619 = vmul.f32 %v1001, %v7591
        %v7620 = vmul.f32 %v1001, %v7592
        %v7621 = vmul.f32 %v1005, %v7591
        %v7622 = vmul.f32 %v1005, %v7592
        %v7623 = vmul.f32 %v1009, %v7591
        %v7624 = vmul.f32 %v1009, %v7592
        %v7625 = vmul.f32 %v1013, %v7591
        %v7626 = vmul.f32 %v1013, %v7592
        %v7627 = vmul.f32 %v1017, %v7591
        %v7628 = vmul.f32 %v1017, %v7592
        %v7629 = vmul.f32 %v1021, %v7591
        %v7630 = vmul.f32 %v1021, %v7592
        %v7631 = vmul.f32 %v1025, %v7591
        %v7632 = vmul.f32 %v1025, %v7592
        %v7633 = vmul.f32 %v1029, %v7591
        %v7634 = vmul.f32 %v1029, %v7592
        %v7635 = vmul.f32 %v1033, %v7591
        %v7636 = vmul.f32 %v1033, %v7592
        %v7637 = vmul.f32 %v1037, %v7591
        %v7638 = vmul.f32 %v1037, %v7592
        %v7639 = vmul.f32 %v1041, %v7591
        %v7640 = vmul.f32 %v1041, %v7592
        %v7641 = vmul.f32 %v1045, %v7591
        %v7642 = vmul.f32 %v1045, %v7592
        %v7643 = vmul.f32 %v1049, %v7591
        %v7644 = vmul.f32 %v1049, %v7592
        %v7645 = vmul.f32 %v1053, %v7591
        %v7646 = vmul.f32 %v1053, %v7592
        %v7647 = vmul.f32 %v1057, %v7591
        %v7648 = vmul.f32 %v1057, %v7592
        %v7649 = vmul.f32 %v1061, %v7591
        %v7650 = vmul.f32 %v1061, %v7592
        %v7651 = vmul.f32 %v1065, %v7591
        %v7652 = vmul.f32 %v1065, %v7592
        %v7653 = vmul.f32 %v1069, %v7591
        %v7654 = vmul.f32 %v1069, %v7592
        %v7655 = vmul.f32 %v1073, %v7591
        %v7656 = vmul.f32 %v1073, %v7592
        %v7657 = vmul.f32 %v1077, %v7591
        %v7658 = vmul.f32 %v1077, %v7592
        %v7659 = vmul.f32 %v1081, %v7591
        %v7660 = vmul.f32 %v1081, %v7592
        %v7661 = vmul.f32 %v1085, %v7591
        %v7662 = vmul.f32 %v1085, %v7592
        %v7663 = vmul.f32 %v1089, %v7591
        %v7664 = vmul.f32 %v1089, %v7592
        %v7665 = vmul.f32 %v1093, %v7591
        %v7666 = vmul.f32 %v1093, %v7592
        %v7667 = vmul.f32 %v1097, %v7591
        %v7668 = vmul.f32 %v1097, %v7592
        %v7669 = vmul.f32 %v1101, %v7591
        %v7670 = vmul.f32 %v1101, %v7592
        %v7671 = vmul.f32 %v1105, %v7591
        %v7672 = vmul.f32 %v1105, %v7592
        %v7673 = vmul.f32 %v1109, %v7591
        %v7674 = vmul.f32 %v1109, %v7592
        %v7675 = vmul.f32 %v1113, %v7591
        %v7676 = vmul.f32 %v1113, %v7592
        %v7677 = vmul.f32 %v1117, %v7591
        %v7678 = vmul.f32 %v1117, %v7592
        %v7679 = vmul.f32 %v1121, %v7591
        %v7680 = vmul.f32 %v1121, %v7592
        %v7681 = vmul.f32 %v1125, %v7591
        %v7682 = vmul.f32 %v1125, %v7592
        %v7683 = vmul.f32 %v1129, %v7591
        %v7684 = vmul.f32 %v1129, %v7592
        %v7685 = vmul.f32 %v1133, %v7591
        %v7686 = vmul.f32 %v1133, %v7592
        %v7687 = vmul.f32 %v1137, %v7591
        %v7688 = vmul.f32 %v1137, %v7592
        %v7689 = vmul.f32 %v1141, %v7591
        %v7690 = vmul.f32 %v1141, %v7592
        %v7691 = vmul.f32 %v1145, %v7591
        %v7692 = vmul.f32 %v1145, %v7592
        %v7693 = vmul.f32 %v1149, %v7591
        %v7694 = vmul.f32 %v1149, %v7592
        %v7695 = vmul.f32 %v1153, %v7591
        %v7696 = vmul.f32 %v1153, %v7592
        %v7697 = vmul.f32 %v1157, %v7591
        %v7698 = vmul.f32 %v1157, %v7592
        %v7699 = vmul.f32 %v1161, %v7591
        %v7700 = vmul.f32 %v1161, %v7592
        %v7701 = vmul.f32 %v1165, %v7591
        %v7702 = vmul.f32 %v1165, %v7592
        %v7703 = vmul.f32 %v1169, %v7591
        %v7704 = vmul.f32 %v1169, %v7592
        %v7705 = vmul.f32 %v1173, %v7591
        %v7706 = vmul.f32 %v1173, %v7592
        %v7707 = vmul.f32 %v1177, %v7591
        %v7708 = vmul.f32 %v1177, %v7592
        %v7709 = vmul.f32 %v1181, %v7591
        %v7710 = vmul.f32 %v1181, %v7592
        %v7711 = vmul.f32 %v1185, %v7591
        %v7712 = vmul.f32 %v1185, %v7592
        %v7713 = vmul.f32 %v1189, %v7591
        %v7714 = vmul.f32 %v1189, %v7592
        %v7715 = vmul.f32 %v1193, %v7591
        %v7716 = vmul.f32 %v1193, %v7592
        %v7717 = vmul.f32 %v1197, %v7591
        %v7718 = vmul.f32 %v1197, %v7592
        %v7719 = vmul.f32 %v1201, %v7591
        %v7720 = vmul.f32 %v1201, %v7592
        %v7721 = vmul.f32 %v1205, %v7591
        %v7722 = vmul.f32 %v1205, %v7592
        %v7723 = vadd.f32 %v7460, %v7595
        %v7724 = vadd.f32 %v7461, %v7596
        %v7725 = vadd.f32 %v7462, %v7597
        %v7726 = vadd.f32 %v7463, %v7598
        %v7727 = vadd.f32 %v7464, %v7599
        %v7728 = vadd.f32 %v7465, %v7600
        %v7729 = vadd.f32 %v7466, %v7601
        %v7730 = vadd.f32 %v7467, %v7602
        %v7731 = vadd.f32 %v7468, %v7603
        %v7732 = vadd.f32 %v7469, %v7604
        %v7733 = vadd.f32 %v7470, %v7605
        %v7734 = vadd.f32 %v7471, %v7606
        %v7735 = vadd.f32 %v7472, %v7607
        %v7736 = vadd.f32 %v7473, %v7608
        %v7737 = vadd.f32 %v7474, %v7609
        %v7738 = vadd.f32 %v7475, %v7610
        %v7739 = vadd.f32 %v7476, %v7611
        %v7740 = vadd.f32 %v7477, %v7612
        %v7741 = vadd.f32 %v7478, %v7613
        %v7742 = vadd.f32 %v7479, %v7614
        %v7743 = vadd.f32 %v7480, %v7615
        %v7744 = vadd.f32 %v7481, %v7616
        %v7745 = vadd.f32 %v7482, %v7617
        %v7746 = vadd.f32 %v7483, %v7618
        %v7747 = vadd.f32 %v7484, %v7619
        %v7748 = vadd.f32 %v7485, %v7620
        %v7749 = vadd.f32 %v7486, %v7621
        %v7750 = vadd.f32 %v7487, %v7622
        %v7751 = vadd.f32 %v7488, %v7623
        %v7752 = vadd.f32 %v7489, %v7624
        %v7753 = vadd.f32 %v7490, %v7625
        %v7754 = vadd.f32 %v7491, %v7626
        %v7755 = vadd.f32 %v7492, %v7627
        %v7756 = vadd.f32 %v7493, %v7628
        %v7757 = vadd.f32 %v7494, %v7629
        %v7758 = vadd.f32 %v7495, %v7630
        %v7759 = vadd.f32 %v7496, %v7631
        %v7760 = vadd.f32 %v7497, %v7632
        %v7761 = vadd.f32 %v7498, %v7633
        %v7762 = vadd.f32 %v7499, %v7634
        %v7763 = vadd.f32 %v7500, %v7635
        %v7764 = vadd.f32 %v7501, %v7636
        %v7765 = vadd.f32 %v7502, %v7637
        %v7766 = vadd.f32 %v7503, %v7638
        %v7767 = vadd.f32 %v7504, %v7639
        %v7768 = vadd.f32 %v7505, %v7640
        %v7769 = vadd.f32 %v7506, %v7641
        %v7770 = vadd.f32 %v7507, %v7642
        %v7771 = vadd.f32 %v7508, %v7643
        %v7772 = vadd.f32 %v7509, %v7644
        %v7773 = vadd.f32 %v7510, %v7645
        %v7774 = vadd.f32 %v7511, %v7646
        %v7775 = vadd.f32 %v7512, %v7647
        %v7776 = vadd.f32 %v7513, %v7648
        %v7777 = vadd.f32 %v7514, %v7649
        %v7778 = vadd.f32 %v7515, %v7650
        %v7779 = vadd.f32 %v7516, %v7651
        %v7780 = vadd.f32 %v7517, %v7652
        %v7781 = vadd.f32 %v7518, %v7653
        %v7782 = vadd.f32 %v7519, %v7654
        %v7783 = vadd.f32 %v7520, %v7655
        %v7784 = vadd.f32 %v7521, %v7656
        %v7785 = vadd.f32 %v7522, %v7657
        %v7786 = vadd.f32 %v7523, %v7658
        %v7787 = vadd.f32 %v7524, %v7659
        %v7788 = vadd.f32 %v7525, %v7660
        %v7789 = vadd.f32 %v7526, %v7661
        %v7790 = vadd.f32 %v7527, %v7662
        %v7791 = vadd.f32 %v7528, %v7663
        %v7792 = vadd.f32 %v7529, %v7664
        %v7793 = vadd.f32 %v7530, %v7665
        %v7794 = vadd.f32 %v7531, %v7666
        %v7795 = vadd.f32 %v7532, %v7667
        %v7796 = vadd.f32 %v7533, %v7668
        %v7797 = vadd.f32 %v7534, %v7669
        %v7798 = vadd.f32 %v7535, %v7670
        %v7799 = vadd.f32 %v7536, %v7671
        %v7800 = vadd.f32 %v7537, %v7672
        %v7801 = vadd.f32 %v7538, %v7673
        %v7802 = vadd.f32 %v7539, %v7674
        %v7803 = vadd.f32 %v7540, %v7675
        %v7804 = vadd.f32 %v7541, %v7676
        %v7805 = vadd.f32 %v7542, %v7677
        %v7806 = vadd.f32 %v7543, %v7678
        %v7807 = vadd.f32 %v7544, %v7679
        %v7808 = vadd.f32 %v7545, %v7680
        %v7809 = vadd.f32 %v7546, %v7681
        %v7810 = vadd.f32 %v7547, %v7682
        %v7811 = vadd.f32 %v7548, %v7683
        %v7812 = vadd.f32 %v7549, %v7684
        %v7813 = vadd.f32 %v7550, %v7685
        %v7814 = vadd.f32 %v7551, %v7686
        %v7815 = vadd.f32 %v7552, %v7687
        %v7816 = vadd.f32 %v7553, %v7688
        %v7817 = vadd.f32 %v7554, %v7689
        %v7818 = vadd.f32 %v7555, %v7690
        %v7819 = vadd.f32 %v7556, %v7691
        %v7820 = vadd.f32 %v7557, %v7692
        %v7821 = vadd.f32 %v7558, %v7693
        %v7822 = vadd.f32 %v7559, %v7694
        %v7823 = vadd.f32 %v7560, %v7695
        %v7824 = vadd.f32 %v7561, %v7696
        %v7825 = vadd.f32 %v7562, %v7697
        %v7826 = vadd.f32 %v7563, %v7698
        %v7827 = vadd.f32 %v7564, %v7699
        %v7828 = vadd.f32 %v7565, %v7700
        %v7829 = vadd.f32 %v7566, %v7701
        %v7830 = vadd.f32 %v7567, %v7702
        %v7831 = vadd.f32 %v7568, %v7703
        %v7832 = vadd.f32 %v7569, %v7704
        %v7833 = vadd.f32 %v7570, %v7705
        %v7834 = vadd.f32 %v7571, %v7706
        %v7835 = vadd.f32 %v7572, %v7707
        %v7836 = vadd.f32 %v7573, %v7708
        %v7837 = vadd.f32 %v7574, %v7709
        %v7838 = vadd.f32 %v7575, %v7710
        %v7839 = vadd.f32 %v7576, %v7711
        %v7840 = vadd.f32 %v7577, %v7712
        %v7841 = vadd.f32 %v7578, %v7713
        %v7842 = vadd.f32 %v7579, %v7714
        %v7843 = vadd.f32 %v7580, %v7715
        %v7844 = vadd.f32 %v7581, %v7716
        %v7845 = vadd.f32 %v7582, %v7717
        %v7846 = vadd.f32 %v7583, %v7718
        %v7847 = vadd.f32 %v7584, %v7719
        %v7848 = vadd.f32 %v7585, %v7720
        %v7849 = vadd.f32 %v7586, %v7721
        %v7850 = vadd.f32 %v7587, %v7722
        %s7851 = scalar_lea.vmem %s2, 2
        %v7852 = vld [vmem:[%s7851] ss:$8 sm:$0x3]
        %v7854 = vperm.slane %v7852, 0
        %v7855 = vperm.slane %v7852, 1
        %v7858 = vmul.f32 %v1472, %v7854
        %v7859 = vmul.f32 %v1472, %v7855
        %v7860 = vmul.f32 %v1476, %v7854
        %v7861 = vmul.f32 %v1476, %v7855
        %v7862 = vmul.f32 %v1480, %v7854
        %v7863 = vmul.f32 %v1480, %v7855
        %v7864 = vmul.f32 %v1484, %v7854
        %v7865 = vmul.f32 %v1484, %v7855
        %v7866 = vmul.f32 %v1488, %v7854
        %v7867 = vmul.f32 %v1488, %v7855
        %v7868 = vmul.f32 %v1492, %v7854
        %v7869 = vmul.f32 %v1492, %v7855
        %v7870 = vmul.f32 %v1496, %v7854
        %v7871 = vmul.f32 %v1496, %v7855
        %v7872 = vmul.f32 %v1500, %v7854
        %v7873 = vmul.f32 %v1500, %v7855
        %v7874 = vmul.f32 %v1504, %v7854
        %v7875 = vmul.f32 %v1504, %v7855
        %v7876 = vmul.f32 %v1508, %v7854
        %v7877 = vmul.f32 %v1508, %v7855
        %v7878 = vmul.f32 %v1512, %v7854
        %v7879 = vmul.f32 %v1512, %v7855
        %v7880 = vmul.f32 %v1516, %v7854
        %v7881 = vmul.f32 %v1516, %v7855
        %v7882 = vmul.f32 %v1520, %v7854
        %v7883 = vmul.f32 %v1520, %v7855
        %v7884 = vmul.f32 %v1524, %v7854
        %v7885 = vmul.f32 %v1524, %v7855
        %v7886 = vmul.f32 %v1528, %v7854
        %v7887 = vmul.f32 %v1528, %v7855
        %v7888 = vmul.f32 %v1532, %v7854
        %v7889 = vmul.f32 %v1532, %v7855
        %v7890 = vmul.f32 %v1536, %v7854
        %v7891 = vmul.f32 %v1536, %v7855
        %v7892 = vmul.f32 %v1540, %v7854
        %v7893 = vmul.f32 %v1540, %v7855
        %v7894 = vmul.f32 %v1544, %v7854
        %v7895 = vmul.f32 %v1544, %v7855
        %v7896 = vmul.f32 %v1548, %v7854
        %v7897 = vmul.f32 %v1548, %v7855
        %v7898 = vmul.f32 %v1552, %v7854
        %v7899 = vmul.f32 %v1552, %v7855
        %v7900 = vmul.f32 %v1556, %v7854
        %v7901 = vmul.f32 %v1556, %v7855
        %v7902 = vmul.f32 %v1560, %v7854
        %v7903 = vmul.f32 %v1560, %v7855
        %v7904 = vmul.f32 %v1564, %v7854
        %v7905 = vmul.f32 %v1564, %v7855
        %v7906 = vmul.f32 %v1568, %v7854
        %v7907 = vmul.f32 %v1568, %v7855
        %v7908 = vmul.f32 %v1572, %v7854
        %v7909 = vmul.f32 %v1572, %v7855
        %v7910 = vmul.f32 %v1576, %v7854
        %v7911 = vmul.f32 %v1576, %v7855
        %v7912 = vmul.f32 %v1580, %v7854
        %v7913 = vmul.f32 %v1580, %v7855
        %v7914 = vmul.f32 %v1584, %v7854
        %v7915 = vmul.f32 %v1584, %v7855
        %v7916 = vmul.f32 %v1588, %v7854
        %v7917 = vmul.f32 %v1588, %v7855
        %v7918 = vmul.f32 %v1592, %v7854
        %v7919 = vmul.f32 %v1592, %v7855
        %v7920 = vmul.f32 %v1596, %v7854
        %v7921 = vmul.f32 %v1596, %v7855
        %v7922 = vmul.f32 %v1600, %v7854
        %v7923 = vmul.f32 %v1600, %v7855
        %v7924 = vmul.f32 %v1604, %v7854
        %v7925 = vmul.f32 %v1604, %v7855
        %v7926 = vmul.f32 %v1608, %v7854
        %v7927 = vmul.f32 %v1608, %v7855
        %v7928 = vmul.f32 %v1612, %v7854
        %v7929 = vmul.f32 %v1612, %v7855
        %v7930 = vmul.f32 %v1616, %v7854
        %v7931 = vmul.f32 %v1616, %v7855
        %v7932 = vmul.f32 %v1620, %v7854
        %v7933 = vmul.f32 %v1620, %v7855
        %v7934 = vmul.f32 %v1624, %v7854
        %v7935 = vmul.f32 %v1624, %v7855
        %v7936 = vmul.f32 %v1628, %v7854
        %v7937 = vmul.f32 %v1628, %v7855
        %v7938 = vmul.f32 %v1632, %v7854
        %v7939 = vmul.f32 %v1632, %v7855
        %v7940 = vmul.f32 %v1636, %v7854
        %v7941 = vmul.f32 %v1636, %v7855
        %v7942 = vmul.f32 %v1640, %v7854
        %v7943 = vmul.f32 %v1640, %v7855
        %v7944 = vmul.f32 %v1644, %v7854
        %v7945 = vmul.f32 %v1644, %v7855
        %v7946 = vmul.f32 %v1648, %v7854
        %v7947 = vmul.f32 %v1648, %v7855
        %v7948 = vmul.f32 %v1652, %v7854
        %v7949 = vmul.f32 %v1652, %v7855
        %v7950 = vmul.f32 %v1656, %v7854
        %v7951 = vmul.f32 %v1656, %v7855
        %v7952 = vmul.f32 %v1660, %v7854
        %v7953 = vmul.f32 %v1660, %v7855
        %v7954 = vmul.f32 %v1664, %v7854
        %v7955 = vmul.f32 %v1664, %v7855
        %v7956 = vmul.f32 %v1668, %v7854
        %v7957 = vmul.f32 %v1668, %v7855
        %v7958 = vmul.f32 %v1672, %v7854
        %v7959 = vmul.f32 %v1672, %v7855
        %v7960 = vmul.f32 %v1676, %v7854
        %v7961 = vmul.f32 %v1676, %v7855
        %v7962 = vmul.f32 %v1680, %v7854
        %v7963 = vmul.f32 %v1680, %v7855
        %v7964 = vmul.f32 %v1684, %v7854
        %v7965 = vmul.f32 %v1684, %v7855
        %v7966 = vmul.f32 %v1688, %v7854
        %v7967 = vmul.f32 %v1688, %v7855
        %v7968 = vmul.f32 %v1692, %v7854
        %v7969 = vmul.f32 %v1692, %v7855
        %v7970 = vmul.f32 %v1696, %v7854
        %v7971 = vmul.f32 %v1696, %v7855
        %v7972 = vmul.f32 %v1700, %v7854
        %v7973 = vmul.f32 %v1700, %v7855
        %v7974 = vmul.f32 %v1704, %v7854
        %v7975 = vmul.f32 %v1704, %v7855
        %v7976 = vmul.f32 %v1708, %v7854
        %v7977 = vmul.f32 %v1708, %v7855
        %v7978 = vmul.f32 %v1712, %v7854
        %v7979 = vmul.f32 %v1712, %v7855
        %v7980 = vmul.f32 %v1716, %v7854
        %v7981 = vmul.f32 %v1716, %v7855
        %v7982 = vmul.f32 %v1720, %v7854
        %v7983 = vmul.f32 %v1720, %v7855
        %v7984 = vmul.f32 %v1724, %v7854
        %v7985 = vmul.f32 %v1724, %v7855
        %v7986 = vadd.f32 %v7723, %v7858
        %v7987 = vadd.f32 %v7724, %v7859
        %v7988 = vadd.f32 %v7725, %v7860
        %v7989 = vadd.f32 %v7726, %v7861
        %v7990 = vadd.f32 %v7727, %v7862
        %v7991 = vadd.f32 %v7728, %v7863
        %v7992 = vadd.f32 %v7729, %v7864
        %v7993 = vadd.f32 %v7730, %v7865
        %v7994 = vadd.f32 %v7731, %v7866
        %v7995 = vadd.f32 %v7732, %v7867
        %v7996 = vadd.f32 %v7733, %v7868
        %v7997 = vadd.f32 %v7734, %v7869
        %v7998 = vadd.f32 %v7735, %v7870
        %v7999 = vadd.f32 %v7736, %v7871
        %v8000 = vadd.f32 %v7737, %v7872
        %v8001 = vadd.f32 %v7738, %v7873
        %v8002 = vadd.f32 %v7739, %v7874
        %v8003 = vadd.f32 %v7740, %v7875
        %v8004 = vadd.f32 %v7741, %v7876
        %v8005 = vadd.f32 %v7742, %v7877
        %v8006 = vadd.f32 %v7743, %v7878
        %v8007 = vadd.f32 %v7744, %v7879
        %v8008 = vadd.f32 %v7745, %v7880
        %v8009 = vadd.f32 %v7746, %v7881
        %v8010 = vadd.f32 %v7747, %v7882
        %v8011 = vadd.f32 %v7748, %v7883
        %v8012 = vadd.f32 %v7749, %v7884
        %v8013 = vadd.f32 %v7750, %v7885
        %v8014 = vadd.f32 %v7751, %v7886
        %v8015 = vadd.f32 %v7752, %v7887
        %v8016 = vadd.f32 %v7753, %v7888
        %v8017 = vadd.f32 %v7754, %v7889
        %v8018 = vadd.f32 %v7755, %v7890
        %v8019 = vadd.f32 %v7756, %v7891
        %v8020 = vadd.f32 %v7757, %v7892
        %v8021 = vadd.f32 %v7758, %v7893
        %v8022 = vadd.f32 %v7759, %v7894
        %v8023 = vadd.f32 %v7760, %v7895
        %v8024 = vadd.f32 %v7761, %v7896
        %v8025 = vadd.f32 %v7762, %v7897
        %v8026 = vadd.f32 %v7763, %v7898
        %v8027 = vadd.f32 %v7764, %v7899
        %v8028 = vadd.f32 %v7765, %v7900
        %v8029 = vadd.f32 %v7766, %v7901
        %v8030 = vadd.f32 %v7767, %v7902
        %v8031 = vadd.f32 %v7768, %v7903
        %v8032 = vadd.f32 %v7769, %v7904
        %v8033 = vadd.f32 %v7770, %v7905
        %v8034 = vadd.f32 %v7771, %v7906
        %v8035 = vadd.f32 %v7772, %v7907
        %v8036 = vadd.f32 %v7773, %v7908
        %v8037 = vadd.f32 %v7774, %v7909
        %v8038 = vadd.f32 %v7775, %v7910
        %v8039 = vadd.f32 %v7776, %v7911
        %v8040 = vadd.f32 %v7777, %v7912
        %v8041 = vadd.f32 %v7778, %v7913
        %v8042 = vadd.f32 %v7779, %v7914
        %v8043 = vadd.f32 %v7780, %v7915
        %v8044 = vadd.f32 %v7781, %v7916
        %v8045 = vadd.f32 %v7782, %v7917
        %v8046 = vadd.f32 %v7783, %v7918
        %v8047 = vadd.f32 %v7784, %v7919
        %v8048 = vadd.f32 %v7785, %v7920
        %v8049 = vadd.f32 %v7786, %v7921
        %v8050 = vadd.f32 %v7787, %v7922
        %v8051 = vadd.f32 %v7788, %v7923
        %v8052 = vadd.f32 %v7789, %v7924
        %v8053 = vadd.f32 %v7790, %v7925
        %v8054 = vadd.f32 %v7791, %v7926
        %v8055 = vadd.f32 %v7792, %v7927
        %v8056 = vadd.f32 %v7793, %v7928
        %v8057 = vadd.f32 %v7794, %v7929
        %v8058 = vadd.f32 %v7795, %v7930
        %v8059 = vadd.f32 %v7796, %v7931
        %v8060 = vadd.f32 %v7797, %v7932
        %v8061 = vadd.f32 %v7798, %v7933
        %v8062 = vadd.f32 %v7799, %v7934
        %v8063 = vadd.f32 %v7800, %v7935
        %v8064 = vadd.f32 %v7801, %v7936
        %v8065 = vadd.f32 %v7802, %v7937
        %v8066 = vadd.f32 %v7803, %v7938
        %v8067 = vadd.f32 %v7804, %v7939
        %v8068 = vadd.f32 %v7805, %v7940
        %v8069 = vadd.f32 %v7806, %v7941
        %v8070 = vadd.f32 %v7807, %v7942
        %v8071 = vadd.f32 %v7808, %v7943
        %v8072 = vadd.f32 %v7809, %v7944
        %v8073 = vadd.f32 %v7810, %v7945
        %v8074 = vadd.f32 %v7811, %v7946
        %v8075 = vadd.f32 %v7812, %v7947
        %v8076 = vadd.f32 %v7813, %v7948
        %v8077 = vadd.f32 %v7814, %v7949
        %v8078 = vadd.f32 %v7815, %v7950
        %v8079 = vadd.f32 %v7816, %v7951
        %v8080 = vadd.f32 %v7817, %v7952
        %v8081 = vadd.f32 %v7818, %v7953
        %v8082 = vadd.f32 %v7819, %v7954
        %v8083 = vadd.f32 %v7820, %v7955
        %v8084 = vadd.f32 %v7821, %v7956
        %v8085 = vadd.f32 %v7822, %v7957
        %v8086 = vadd.f32 %v7823, %v7958
        %v8087 = vadd.f32 %v7824, %v7959
        %v8088 = vadd.f32 %v7825, %v7960
        %v8089 = vadd.f32 %v7826, %v7961
        %v8090 = vadd.f32 %v7827, %v7962
        %v8091 = vadd.f32 %v7828, %v7963
        %v8092 = vadd.f32 %v7829, %v7964
        %v8093 = vadd.f32 %v7830, %v7965
        %v8094 = vadd.f32 %v7831, %v7966
        %v8095 = vadd.f32 %v7832, %v7967
        %v8096 = vadd.f32 %v7833, %v7968
        %v8097 = vadd.f32 %v7834, %v7969
        %v8098 = vadd.f32 %v7835, %v7970
        %v8099 = vadd.f32 %v7836, %v7971
        %v8100 = vadd.f32 %v7837, %v7972
        %v8101 = vadd.f32 %v7838, %v7973
        %v8102 = vadd.f32 %v7839, %v7974
        %v8103 = vadd.f32 %v7840, %v7975
        %v8104 = vadd.f32 %v7841, %v7976
        %v8105 = vadd.f32 %v7842, %v7977
        %v8106 = vadd.f32 %v7843, %v7978
        %v8107 = vadd.f32 %v7844, %v7979
        %v8108 = vadd.f32 %v7845, %v7980
        %v8109 = vadd.f32 %v7846, %v7981
        %v8110 = vadd.f32 %v7847, %v7982
        %v8111 = vadd.f32 %v7848, %v7983
        %v8112 = vadd.f32 %v7849, %v7984
        %v8113 = vadd.f32 %v7850, %v7985
        %v8114 = vmax.f32 %v7986, 0.0
        %v8115 = vmax.f32 %v7987, 0.0
        %v8116 = vmax.f32 %v7988, 0.0
        %v8117 = vmax.f32 %v7989, 0.0
        %v8118 = vmax.f32 %v7990, 0.0
        %v8119 = vmax.f32 %v7991, 0.0
        %v8120 = vmax.f32 %v7992, 0.0
        %v8121 = vmax.f32 %v7993, 0.0
        %v8122 = vmax.f32 %v7994, 0.0
        %v8123 = vmax.f32 %v7995, 0.0
        %v8124 = vmax.f32 %v7996, 0.0
        %v8125 = vmax.f32 %v7997, 0.0
        %v8126 = vmax.f32 %v7998, 0.0
        %v8127 = vmax.f32 %v7999, 0.0
        %v8128 = vmax.f32 %v8000, 0.0
        %v8129 = vmax.f32 %v8001, 0.0
        %v8130 = vmax.f32 %v8002, 0.0
        %v8131 = vmax.f32 %v8003, 0.0
        %v8132 = vmax.f32 %v8004, 0.0
        %v8133 = vmax.f32 %v8005, 0.0
        %v8134 = vmax.f32 %v8006, 0.0
        %v8135 = vmax.f32 %v8007, 0.0
        %v8136 = vmax.f32 %v8008, 0.0
        %v8137 = vmax.f32 %v8009, 0.0
        %v8138 = vmax.f32 %v8010, 0.0
        %v8139 = vmax.f32 %v8011, 0.0
        %v8140 = vmax.f32 %v8012, 0.0
        %v8141 = vmax.f32 %v8013, 0.0
        %v8142 = vmax.f32 %v8014, 0.0
        %v8143 = vmax.f32 %v8015, 0.0
        %v8144 = vmax.f32 %v8016, 0.0
        %v8145 = vmax.f32 %v8017, 0.0
        %v8146 = vmax.f32 %v8018, 0.0
        %v8147 = vmax.f32 %v8019, 0.0
        %v8148 = vmax.f32 %v8020, 0.0
        %v8149 = vmax.f32 %v8021, 0.0
        %v8150 = vmax.f32 %v8022, 0.0
        %v8151 = vmax.f32 %v8023, 0.0
        %v8152 = vmax.f32 %v8024, 0.0
        %v8153 = vmax.f32 %v8025, 0.0
        %v8154 = vmax.f32 %v8026, 0.0
        %v8155 = vmax.f32 %v8027, 0.0
        %v8156 = vmax.f32 %v8028, 0.0
        %v8157 = vmax.f32 %v8029, 0.0
        %v8158 = vmax.f32 %v8030, 0.0
        %v8159 = vmax.f32 %v8031, 0.0
        %v8160 = vmax.f32 %v8032, 0.0
        %v8161 = vmax.f32 %v8033, 0.0
        %v8162 = vmax.f32 %v8034, 0.0
        %v8163 = vmax.f32 %v8035, 0.0
        %v8164 = vmax.f32 %v8036, 0.0
        %v8165 = vmax.f32 %v8037, 0.0
        %v8166 = vmax.f32 %v8038, 0.0
        %v8167 = vmax.f32 %v8039, 0.0
        %v8168 = vmax.f32 %v8040, 0.0
        %v8169 = vmax.f32 %v8041, 0.0
        %v8170 = vmax.f32 %v8042, 0.0
        %v8171 = vmax.f32 %v8043, 0.0
        %v8172 = vmax.f32 %v8044, 0.0
        %v8173 = vmax.f32 %v8045, 0.0
        %v8174 = vmax.f32 %v8046, 0.0
        %v8175 = vmax.f32 %v8047, 0.0
        %v8176 = vmax.f32 %v8048, 0.0
        %v8177 = vmax.f32 %v8049, 0.0
        %v8178 = vmax.f32 %v8050, 0.0
        %v8179 = vmax.f32 %v8051, 0.0
        %v8180 = vmax.f32 %v8052, 0.0
        %v8181 = vmax.f32 %v8053, 0.0
        %v8182 = vmax.f32 %v8054, 0.0
        %v8183 = vmax.f32 %v8055, 0.0
        %v8184 = vmax.f32 %v8056, 0.0
        %v8185 = vmax.f32 %v8057, 0.0
        %v8186 = vmax.f32 %v8058, 0.0
        %v8187 = vmax.f32 %v8059, 0.0
        %v8188 = vmax.f32 %v8060, 0.0
        %v8189 = vmax.f32 %v8061, 0.0
        %v8190 = vmax.f32 %v8062, 0.0
        %v8191 = vmax.f32 %v8063, 0.0
        %v8192 = vmax.f32 %v8064, 0.0
        %v8193 = vmax.f32 %v8065, 0.0
        %v8194 = vmax.f32 %v8066, 0.0
        %v8195 = vmax.f32 %v8067, 0.0
        %v8196 = vmax.f32 %v8068, 0.0
        %v8197 = vmax.f32 %v8069, 0.0
        %v8198 = vmax.f32 %v8070, 0.0
        %v8199 = vmax.f32 %v8071, 0.0
        %v8200 = vmax.f32 %v8072, 0.0
        %v8201 = vmax.f32 %v8073, 0.0
        %v8202 = vmax.f32 %v8074, 0.0
        %v8203 = vmax.f32 %v8075, 0.0
        %v8204 = vmax.f32 %v8076, 0.0
        %v8205 = vmax.f32 %v8077, 0.0
        %v8206 = vmax.f32 %v8078, 0.0
        %v8207 = vmax.f32 %v8079, 0.0
        %v8208 = vmax.f32 %v8080, 0.0
        %v8209 = vmax.f32 %v8081, 0.0
        %v8210 = vmax.f32 %v8082, 0.0
        %v8211 = vmax.f32 %v8083, 0.0
        %v8212 = vmax.f32 %v8084, 0.0
        %v8213 = vmax.f32 %v8085, 0.0
        %v8214 = vmax.f32 %v8086, 0.0
        %v8215 = vmax.f32 %v8087, 0.0
        %v8216 = vmax.f32 %v8088, 0.0
        %v8217 = vmax.f32 %v8089, 0.0
        %v8218 = vmax.f32 %v8090, 0.0
        %v8219 = vmax.f32 %v8091, 0.0
        %v8220 = vmax.f32 %v8092, 0.0
        %v8221 = vmax.f32 %v8093, 0.0
        %v8222 = vmax.f32 %v8094, 0.0
        %v8223 = vmax.f32 %v8095, 0.0
        %v8224 = vmax.f32 %v8096, 0.0
        %v8225 = vmax.f32 %v8097, 0.0
        %v8226 = vmax.f32 %v8098, 0.0
        %v8227 = vmax.f32 %v8099, 0.0
        %v8228 = vmax.f32 %v8100, 0.0
        %v8229 = vmax.f32 %v8101, 0.0
        %v8230 = vmax.f32 %v8102, 0.0
        %v8231 = vmax.f32 %v8103, 0.0
        %v8232 = vmax.f32 %v8104, 0.0
        %v8233 = vmax.f32 %v8105, 0.0
        %v8234 = vmax.f32 %v8106, 0.0
        %v8235 = vmax.f32 %v8107, 0.0
        %v8236 = vmax.f32 %v8108, 0.0
        %v8237 = vmax.f32 %v8109, 0.0
        %v8238 = vmax.f32 %v8110, 0.0
        %v8239 = vmax.f32 %v8111, 0.0
        %v8240 = vmax.f32 %v8112, 0.0
        %v8241 = vmax.f32 %v8113, 0.0
        %v8242 = vpack.c.bf16 %v8116, %v8114
        %v8243 = vpack.c.bf16 %v8117, %v8115
        %v8244 = vpack.c.bf16 %v8120, %v8118
        %v8245 = vpack.c.bf16 %v8121, %v8119
        %v8246 = vpack.c.bf16 %v8124, %v8122
        %v8247 = vpack.c.bf16 %v8125, %v8123
        %v8248 = vpack.c.bf16 %v8128, %v8126
        %v8249 = vpack.c.bf16 %v8129, %v8127
        %v8250 = vpack.c.bf16 %v8132, %v8130
        %v8251 = vpack.c.bf16 %v8133, %v8131
        %v8252 = vpack.c.bf16 %v8136, %v8134
        %v8253 = vpack.c.bf16 %v8137, %v8135
        %v8254 = vpack.c.bf16 %v8140, %v8138
        %v8255 = vpack.c.bf16 %v8141, %v8139
        %v8256 = vpack.c.bf16 %v8144, %v8142
        %v8257 = vpack.c.bf16 %v8145, %v8143
        %v8258 = vpack.c.bf16 %v8148, %v8146
        %v8259 = vpack.c.bf16 %v8149, %v8147
        %v8260 = vpack.c.bf16 %v8152, %v8150
        %v8261 = vpack.c.bf16 %v8153, %v8151
        %v8262 = vpack.c.bf16 %v8156, %v8154
        %v8263 = vpack.c.bf16 %v8157, %v8155
        %v8264 = vpack.c.bf16 %v8160, %v8158
        %v8265 = vpack.c.bf16 %v8161, %v8159
        %v8266 = vpack.c.bf16 %v8164, %v8162
        %v8267 = vpack.c.bf16 %v8165, %v8163
        %v8268 = vpack.c.bf16 %v8168, %v8166
        %v8269 = vpack.c.bf16 %v8169, %v8167
        %v8270 = vpack.c.bf16 %v8172, %v8170
        %v8271 = vpack.c.bf16 %v8173, %v8171
        %v8272 = vpack.c.bf16 %v8176, %v8174
        %v8273 = vpack.c.bf16 %v8177, %v8175
        %v8274 = vpack.c.bf16 %v8180, %v8178
        %v8275 = vpack.c.bf16 %v8181, %v8179
        %v8276 = vpack.c.bf16 %v8184, %v8182
        %v8277 = vpack.c.bf16 %v8185, %v8183
        %v8278 = vpack.c.bf16 %v8188, %v8186
        %v8279 = vpack.c.bf16 %v8189, %v8187
        %v8280 = vpack.c.bf16 %v8192, %v8190
        %v8281 = vpack.c.bf16 %v8193, %v8191
        %v8282 = vpack.c.bf16 %v8196, %v8194
        %v8283 = vpack.c.bf16 %v8197, %v8195
        %v8284 = vpack.c.bf16 %v8200, %v8198
        %v8285 = vpack.c.bf16 %v8201, %v8199
        %v8286 = vpack.c.bf16 %v8204, %v8202
        %v8287 = vpack.c.bf16 %v8205, %v8203
        %v8288 = vpack.c.bf16 %v8208, %v8206
        %v8289 = vpack.c.bf16 %v8209, %v8207
        %v8290 = vpack.c.bf16 %v8212, %v8210
        %v8291 = vpack.c.bf16 %v8213, %v8211
        %v8292 = vpack.c.bf16 %v8216, %v8214
        %v8293 = vpack.c.bf16 %v8217, %v8215
        %v8294 = vpack.c.bf16 %v8220, %v8218
        %v8295 = vpack.c.bf16 %v8221, %v8219
        %v8296 = vpack.c.bf16 %v8224, %v8222
        %v8297 = vpack.c.bf16 %v8225, %v8223
        %v8298 = vpack.c.bf16 %v8228, %v8226
        %v8299 = vpack.c.bf16 %v8229, %v8227
        %v8300 = vpack.c.bf16 %v8232, %v8230
        %v8301 = vpack.c.bf16 %v8233, %v8231
        %v8302 = vpack.c.bf16 %v8236, %v8234
        %v8303 = vpack.c.bf16 %v8237, %v8235
        %v8304 = vpack.c.bf16 %v8240, %v8238
        %v8305 = vpack.c.bf16 %v8241, %v8239
        %s8306 = scalar_lea.vmem [#allocation2], 1280
        %v8307 = vld [vmem:[%s8306] sm:$0xff]
        %v8308 = vld [vmem:[%s8306 + $0x8] sm:$0xff]
        %v8309 = vld [vmem:[%s8306 + $0x10] sm:$0xff]
        %v8310 = vld [vmem:[%s8306 + $0x18] sm:$0xff]
        %v8311 = vld [vmem:[%s8306 + $0x20] sm:$0xff]
        %v8312 = vld [vmem:[%s8306 + $0x28] sm:$0xff]
        %v8313 = vld [vmem:[%s8306 + $0x30] sm:$0xff]
        %v8314 = vld [vmem:[%s8306 + $0x38] sm:$0xff]
        %v8315 = vld [vmem:[%s8306 + $0x40] sm:$0xff]
        %v8316 = vld [vmem:[%s8306 + $0x48] sm:$0xff]
        %v8317 = vld [vmem:[%s8306 + $0x50] sm:$0xff]
        %v8318 = vld [vmem:[%s8306 + $0x58] sm:$0xff]
        %v8319 = vld [vmem:[%s8306 + $0x60] sm:$0xff]
        %v8320 = vld [vmem:[%s8306 + $0x68] sm:$0xff]
        %v8321 = vld [vmem:[%s8306 + $0x70] sm:$0xff]
        %v8322 = vld [vmem:[%s8306 + $0x78] sm:$0xff]
        %v8323 = vld [vmem:[%s8306 + $0x80] sm:$0xff]
        %v8324 = vld [vmem:[%s8306 + $0x88] sm:$0xff]
        %v8325 = vld [vmem:[%s8306 + $0x90] sm:$0xff]
        %v8326 = vld [vmem:[%s8306 + $0x98] sm:$0xff]
        %v8327 = vld [vmem:[%s8306 + $0xa0] sm:$0xff]
        %v8328 = vld [vmem:[%s8306 + $0xa8] sm:$0xff]
        %v8329 = vld [vmem:[%s8306 + $0xb0] sm:$0xff]
        %v8330 = vld [vmem:[%s8306 + $0xb8] sm:$0xff]
        %v8331 = vld [vmem:[%s8306 + $0xc0] sm:$0xff]
        %v8332 = vld [vmem:[%s8306 + $0xc8] sm:$0xff]
        %v8333 = vld [vmem:[%s8306 + $0xd0] sm:$0xff]
        %v8334 = vld [vmem:[%s8306 + $0xd8] sm:$0xff]
        %v8335 = vld [vmem:[%s8306 + $0xe0] sm:$0xff]
        %v8336 = vld [vmem:[%s8306 + $0xe8] sm:$0xff]
        %v8337 = vld [vmem:[%s8306 + $0xf0] sm:$0xff]
        %v8338 = vld [vmem:[%s8306 + $0xf8] sm:$0xff]
        %s8339 = scalar_lea.vmem %s4, 6
        %v8340 = vld [vmem:[%s8339] ss:$8 sm:$0x3]
        %v8342 = vperm.slane %v8340, 0
        %v8343 = vperm.slane %v8340, 1
        %v8378 = vunpack.c.l.b16 %v8307
        %v8379 = vunpack.c.h.b16 %v8307
        %v8380 = vunpack.c.l.b16 %v8308
        %v8381 = vunpack.c.h.b16 %v8308
        %v8382 = vunpack.c.l.b16 %v8309
        %v8383 = vunpack.c.h.b16 %v8309
        %v8384 = vunpack.c.l.b16 %v8310
        %v8385 = vunpack.c.h.b16 %v8310
        %v8386 = vunpack.c.l.b16 %v8311
        %v8387 = vunpack.c.h.b16 %v8311
        %v8388 = vunpack.c.l.b16 %v8312
        %v8389 = vunpack.c.h.b16 %v8312
        %v8390 = vunpack.c.l.b16 %v8313
        %v8391 = vunpack.c.h.b16 %v8313
        %v8392 = vunpack.c.l.b16 %v8314
        %v8393 = vunpack.c.h.b16 %v8314
        %v8394 = vunpack.c.l.b16 %v8315
        %v8395 = vunpack.c.h.b16 %v8315
        %v8396 = vunpack.c.l.b16 %v8316
        %v8397 = vunpack.c.h.b16 %v8316
        %v8398 = vunpack.c.l.b16 %v8317
        %v8399 = vunpack.c.h.b16 %v8317
        %v8400 = vunpack.c.l.b16 %v8318
        %v8401 = vunpack.c.h.b16 %v8318
        %v8402 = vunpack.c.l.b16 %v8319
        %v8403 = vunpack.c.h.b16 %v8319
        %v8404 = vunpack.c.l.b16 %v8320
        %v8405 = vunpack.c.h.b16 %v8320
        %v8406 = vunpack.c.l.b16 %v8321
        %v8407 = vunpack.c.h.b16 %v8321
        %v8408 = vunpack.c.l.b16 %v8322
        %v8409 = vunpack.c.h.b16 %v8322
        %v8410 = vunpack.c.l.b16 %v8323
        %v8411 = vunpack.c.h.b16 %v8323
        %v8412 = vunpack.c.l.b16 %v8324
        %v8413 = vunpack.c.h.b16 %v8324
        %v8414 = vunpack.c.l.b16 %v8325
        %v8415 = vunpack.c.h.b16 %v8325
        %v8416 = vunpack.c.l.b16 %v8326
        %v8417 = vunpack.c.h.b16 %v8326
        %v8418 = vunpack.c.l.b16 %v8327
        %v8419 = vunpack.c.h.b16 %v8327
        %v8420 = vunpack.c.l.b16 %v8328
        %v8421 = vunpack.c.h.b16 %v8328
        %v8422 = vunpack.c.l.b16 %v8329
        %v8423 = vunpack.c.h.b16 %v8329
        %v8424 = vunpack.c.l.b16 %v8330
        %v8425 = vunpack.c.h.b16 %v8330
        %v8426 = vunpack.c.l.b16 %v8331
        %v8427 = vunpack.c.h.b16 %v8331
        %v8428 = vunpack.c.l.b16 %v8332
        %v8429 = vunpack.c.h.b16 %v8332
        %v8430 = vunpack.c.l.b16 %v8333
        %v8431 = vunpack.c.h.b16 %v8333
        %v8432 = vunpack.c.l.b16 %v8334
        %v8433 = vunpack.c.h.b16 %v8334
        %v8434 = vunpack.c.l.b16 %v8335
        %v8435 = vunpack.c.h.b16 %v8335
        %v8436 = vunpack.c.l.b16 %v8336
        %v8437 = vunpack.c.h.b16 %v8336
        %v8438 = vunpack.c.l.b16 %v8337
        %v8439 = vunpack.c.h.b16 %v8337
        %v8440 = vunpack.c.l.b16 %v8338
        %v8441 = vunpack.c.h.b16 %v8338
        %v8442 = vpack.c.b16 %v8380, %v8378
        %v8443 = vpack.c.b16 %v8381, %v8379
        %v8444 = vpack.c.b16 %v8384, %v8382
        %v8445 = vpack.c.b16 %v8385, %v8383
        %v8446 = vpack.c.b16 %v8388, %v8386
        %v8447 = vpack.c.b16 %v8389, %v8387
        %v8448 = vpack.c.b16 %v8392, %v8390
        %v8449 = vpack.c.b16 %v8393, %v8391
        %v8450 = vpack.c.b16 %v8396, %v8394
        %v8451 = vpack.c.b16 %v8397, %v8395
        %v8452 = vpack.c.b16 %v8400, %v8398
        %v8453 = vpack.c.b16 %v8401, %v8399
        %v8454 = vpack.c.b16 %v8404, %v8402
        %v8455 = vpack.c.b16 %v8405, %v8403
        %v8456 = vpack.c.b16 %v8408, %v8406
        %v8457 = vpack.c.b16 %v8409, %v8407
        %v8458 = vpack.c.b16 %v8412, %v8410
        %v8459 = vpack.c.b16 %v8413, %v8411
        %v8460 = vpack.c.b16 %v8416, %v8414
        %v8461 = vpack.c.b16 %v8417, %v8415
        %v8462 = vpack.c.b16 %v8420, %v8418
        %v8463 = vpack.c.b16 %v8421, %v8419
        %v8464 = vpack.c.b16 %v8424, %v8422
        %v8465 = vpack.c.b16 %v8425, %v8423
        %v8466 = vpack.c.b16 %v8428, %v8426
        %v8467 = vpack.c.b16 %v8429, %v8427
        %v8468 = vpack.c.b16 %v8432, %v8430
        %v8469 = vpack.c.b16 %v8433, %v8431
        %v8470 = vpack.c.b16 %v8436, %v8434
        %v8471 = vpack.c.b16 %v8437, %v8435
        %v8472 = vpack.c.b16 %v8440, %v8438
        %v8473 = vpack.c.b16 %v8441, %v8439
        %8506 = vmatpush.bf16.msra.mxu0 %v8456
        %8507 = vmatpush.bf16.msra.mxu0 %v8454
        %8508 = vmatpush.bf16.msra.mxu0 %v8452
        %8509 = vmatpush.bf16.msra.mxu0 %v8450
        %8510 = vmatpush.bf16.msra.mxu0 %v8448
        %8511 = vmatpush.bf16.msra.mxu0 %v8446
        %8512 = vmatpush.bf16.msra.mxu0 %v8444
        %8513 = vmatpush.bf16.msra.mxu0 %v8442
        %8514 = vmatmul.bf16.gmra.mxu0 %v8242
        %v8515 = vpop.f32.mrf.mxu0
        %v8516 = vadd.f32 %v8342, %v8515
        %v8517 = vpop.f32.mrf.mxu0
        %v8518 = vadd.f32 %v8342, %v8517
        %8519 = vmatmul.bf16.gmra.mxu0 %v8244
        %v8520 = vpop.f32.mrf.mxu0
        %v8521 = vadd.f32 %v8342, %v8520
        %v8522 = vpop.f32.mrf.mxu0
        %v8523 = vadd.f32 %v8342, %v8522
        %8524 = vmatmul.bf16.gmra.mxu0 %v8246
        %v8525 = vpop.f32.mrf.mxu0
        %v8526 = vadd.f32 %v8342, %v8525
        %v8527 = vpop.f32.mrf.mxu0
        %v8528 = vadd.f32 %v8342, %v8527
        %8529 = vmatmul.bf16.gmra.mxu0 %v8248
        %v8530 = vpop.f32.mrf.mxu0
        %v8531 = vadd.f32 %v8342, %v8530
        %v8532 = vpop.f32.mrf.mxu0
        %v8533 = vadd.f32 %v8342, %v8532
        %8534 = vmatmul.bf16.gmra.mxu0 %v8250
        %v8535 = vpop.f32.mrf.mxu0
        %v8536 = vadd.f32 %v8342, %v8535
        %v8537 = vpop.f32.mrf.mxu0
        %v8538 = vadd.f32 %v8342, %v8537
        %8539 = vmatmul.bf16.gmra.mxu0 %v8252
        %v8540 = vpop.f32.mrf.mxu0
        %v8541 = vadd.f32 %v8342, %v8540
        %v8542 = vpop.f32.mrf.mxu0
        %v8543 = vadd.f32 %v8342, %v8542
        %8544 = vmatmul.bf16.gmra.mxu0 %v8254
        %v8545 = vpop.f32.mrf.mxu0
        %v8546 = vadd.f32 %v8342, %v8545
        %v8547 = vpop.f32.mrf.mxu0
        %v8548 = vadd.f32 %v8342, %v8547
        %8549 = vmatmul.bf16.gmra.mxu0 %v8256
        %v8550 = vpop.f32.mrf.mxu0
        %v8551 = vadd.f32 %v8342, %v8550
        %v8552 = vpop.f32.mrf.mxu0
        %v8553 = vadd.f32 %v8342, %v8552
        %8554 = vmatmul.bf16.gmra.mxu0 %v8258
        %v8555 = vpop.f32.mrf.mxu0
        %v8556 = vadd.f32 %v8342, %v8555
        %v8557 = vpop.f32.mrf.mxu0
        %v8558 = vadd.f32 %v8342, %v8557
        %8559 = vmatmul.bf16.gmra.mxu0 %v8260
        %v8560 = vpop.f32.mrf.mxu0
        %v8561 = vadd.f32 %v8342, %v8560
        %v8562 = vpop.f32.mrf.mxu0
        %v8563 = vadd.f32 %v8342, %v8562
        %8564 = vmatmul.bf16.gmra.mxu0 %v8262
        %v8565 = vpop.f32.mrf.mxu0
        %v8566 = vadd.f32 %v8342, %v8565
        %v8567 = vpop.f32.mrf.mxu0
        %v8568 = vadd.f32 %v8342, %v8567
        %8569 = vmatmul.bf16.gmra.mxu0 %v8264
        %v8570 = vpop.f32.mrf.mxu0
        %v8571 = vadd.f32 %v8342, %v8570
        %v8572 = vpop.f32.mrf.mxu0
        %v8573 = vadd.f32 %v8342, %v8572
        %8574 = vmatmul.bf16.gmra.mxu0 %v8266
        %v8575 = vpop.f32.mrf.mxu0
        %v8576 = vadd.f32 %v8342, %v8575
        %v8577 = vpop.f32.mrf.mxu0
        %v8578 = vadd.f32 %v8342, %v8577
        %8579 = vmatmul.bf16.gmra.mxu0 %v8268
        %v8580 = vpop.f32.mrf.mxu0
        %v8581 = vadd.f32 %v8342, %v8580
        %v8582 = vpop.f32.mrf.mxu0
        %v8583 = vadd.f32 %v8342, %v8582
        %8584 = vmatmul.bf16.gmra.mxu0 %v8270
        %v8585 = vpop.f32.mrf.mxu0
        %v8586 = vadd.f32 %v8342, %v8585
        %v8587 = vpop.f32.mrf.mxu0
        %v8588 = vadd.f32 %v8342, %v8587
        %8589 = vmatmul.bf16.gmra.mxu0 %v8272
        %v8590 = vpop.f32.mrf.mxu0
        %v8591 = vadd.f32 %v8342, %v8590
        %v8592 = vpop.f32.mrf.mxu0
        %v8593 = vadd.f32 %v8342, %v8592
        %8594 = vmatmul.bf16.gmra.mxu0 %v8274
        %v8595 = vpop.f32.mrf.mxu0
        %v8596 = vadd.f32 %v8342, %v8595
        %v8597 = vpop.f32.mrf.mxu0
        %v8598 = vadd.f32 %v8342, %v8597
        %8599 = vmatmul.bf16.gmra.mxu0 %v8276
        %v8600 = vpop.f32.mrf.mxu0
        %v8601 = vadd.f32 %v8342, %v8600
        %v8602 = vpop.f32.mrf.mxu0
        %v8603 = vadd.f32 %v8342, %v8602
        %8604 = vmatmul.bf16.gmra.mxu0 %v8278
        %v8605 = vpop.f32.mrf.mxu0
        %v8606 = vadd.f32 %v8342, %v8605
        %v8607 = vpop.f32.mrf.mxu0
        %v8608 = vadd.f32 %v8342, %v8607
        %8609 = vmatmul.bf16.gmra.mxu0 %v8280
        %v8610 = vpop.f32.mrf.mxu0
        %v8611 = vadd.f32 %v8342, %v8610
        %v8612 = vpop.f32.mrf.mxu0
        %v8613 = vadd.f32 %v8342, %v8612
        %8614 = vmatmul.bf16.gmra.mxu0 %v8282
        %v8615 = vpop.f32.mrf.mxu0
        %v8616 = vadd.f32 %v8342, %v8615
        %v8617 = vpop.f32.mrf.mxu0
        %v8618 = vadd.f32 %v8342, %v8617
        %8619 = vmatmul.bf16.gmra.mxu0 %v8284
        %v8620 = vpop.f32.mrf.mxu0
        %v8621 = vadd.f32 %v8342, %v8620
        %v8622 = vpop.f32.mrf.mxu0
        %v8623 = vadd.f32 %v8342, %v8622
        %8624 = vmatmul.bf16.gmra.mxu0 %v8286
        %v8625 = vpop.f32.mrf.mxu0
        %v8626 = vadd.f32 %v8342, %v8625
        %v8627 = vpop.f32.mrf.mxu0
        %v8628 = vadd.f32 %v8342, %v8627
        %8629 = vmatmul.bf16.gmra.mxu0 %v8288
        %v8630 = vpop.f32.mrf.mxu0
        %v8631 = vadd.f32 %v8342, %v8630
        %v8632 = vpop.f32.mrf.mxu0
        %v8633 = vadd.f32 %v8342, %v8632
        %8634 = vmatmul.bf16.gmra.mxu0 %v8290
        %v8635 = vpop.f32.mrf.mxu0
        %v8636 = vadd.f32 %v8342, %v8635
        %v8637 = vpop.f32.mrf.mxu0
        %v8638 = vadd.f32 %v8342, %v8637
        %8639 = vmatmul.bf16.gmra.mxu0 %v8292
        %v8640 = vpop.f32.mrf.mxu0
        %v8641 = vadd.f32 %v8342, %v8640
        %v8642 = vpop.f32.mrf.mxu0
        %v8643 = vadd.f32 %v8342, %v8642
        %8644 = vmatmul.bf16.gmra.mxu0 %v8294
        %v8645 = vpop.f32.mrf.mxu0
        %v8646 = vadd.f32 %v8342, %v8645
        %v8647 = vpop.f32.mrf.mxu0
        %v8648 = vadd.f32 %v8342, %v8647
        %8649 = vmatmul.bf16.gmra.mxu0 %v8296
        %v8650 = vpop.f32.mrf.mxu0
        %v8651 = vadd.f32 %v8342, %v8650
        %v8652 = vpop.f32.mrf.mxu0
        %v8653 = vadd.f32 %v8342, %v8652
        %8654 = vmatmul.bf16.gmra.mxu0 %v8298
        %v8655 = vpop.f32.mrf.mxu0
        %v8656 = vadd.f32 %v8342, %v8655
        %v8657 = vpop.f32.mrf.mxu0
        %v8658 = vadd.f32 %v8342, %v8657
        %8659 = vmatmul.bf16.gmra.mxu0 %v8300
        %v8660 = vpop.f32.mrf.mxu0
        %v8661 = vadd.f32 %v8342, %v8660
        %v8662 = vpop.f32.mrf.mxu0
        %v8663 = vadd.f32 %v8342, %v8662
        %8664 = vmatmul.bf16.gmra.mxu0 %v8302
        %v8665 = vpop.f32.mrf.mxu0
        %v8666 = vadd.f32 %v8342, %v8665
        %v8667 = vpop.f32.mrf.mxu0
        %v8668 = vadd.f32 %v8342, %v8667
        %8669 = vmatmul.bf16.gmra.mxu0 %v8304
        %v8670 = vpop.f32.mrf.mxu0
        %v8671 = vadd.f32 %v8342, %v8670
        %v8672 = vpop.f32.mrf.mxu0
        %v8673 = vadd.f32 %v8342, %v8672
        %8674 = vdwg.mxu0
        %8675 = vmatpush.bf16.msra.mxu0 %v8472
        %8676 = vmatpush.bf16.msra.mxu0 %v8470
        %8677 = vmatpush.bf16.msra.mxu0 %v8468
        %8678 = vmatpush.bf16.msra.mxu0 %v8466
        %8679 = vmatpush.bf16.msra.mxu0 %v8464
        %8680 = vmatpush.bf16.msra.mxu0 %v8462
        %8681 = vmatpush.bf16.msra.mxu0 %v8460
        %8682 = vmatpush.bf16.msra.mxu0 %v8458
        %8683 = vmatmul.bf16.gmra.mxu0 %v8243
        %v8684 = vpop.f32.mrf.mxu0
        %v8685 = vadd.f32 %v8516, %v8684
        %v8686 = vpop.f32.mrf.mxu0
        %v8687 = vadd.f32 %v8518, %v8686
        %8688 = vmatmul.bf16.gmra.mxu0 %v8245
        %v8689 = vpop.f32.mrf.mxu0
        %v8690 = vadd.f32 %v8521, %v8689
        %v8691 = vpop.f32.mrf.mxu0
        %v8692 = vadd.f32 %v8523, %v8691
        %8693 = vmatmul.bf16.gmra.mxu0 %v8247
        %v8694 = vpop.f32.mrf.mxu0
        %v8695 = vadd.f32 %v8526, %v8694
        %v8696 = vpop.f32.mrf.mxu0
        %v8697 = vadd.f32 %v8528, %v8696
        %8698 = vmatmul.bf16.gmra.mxu0 %v8249
        %v8699 = vpop.f32.mrf.mxu0
        %v8700 = vadd.f32 %v8531, %v8699
        %v8701 = vpop.f32.mrf.mxu0
        %v8702 = vadd.f32 %v8533, %v8701
        %8703 = vmatmul.bf16.gmra.mxu0 %v8251
        %v8704 = vpop.f32.mrf.mxu0
        %v8705 = vadd.f32 %v8536, %v8704
        %v8706 = vpop.f32.mrf.mxu0
        %v8707 = vadd.f32 %v8538, %v8706
        %8708 = vmatmul.bf16.gmra.mxu0 %v8253
        %v8709 = vpop.f32.mrf.mxu0
        %v8710 = vadd.f32 %v8541, %v8709
        %v8711 = vpop.f32.mrf.mxu0
        %v8712 = vadd.f32 %v8543, %v8711
        %8713 = vmatmul.bf16.gmra.mxu0 %v8255
        %v8714 = vpop.f32.mrf.mxu0
        %v8715 = vadd.f32 %v8546, %v8714
        %v8716 = vpop.f32.mrf.mxu0
        %v8717 = vadd.f32 %v8548, %v8716
        %8718 = vmatmul.bf16.gmra.mxu0 %v8257
        %v8719 = vpop.f32.mrf.mxu0
        %v8720 = vadd.f32 %v8551, %v8719
        %v8721 = vpop.f32.mrf.mxu0
        %v8722 = vadd.f32 %v8553, %v8721
        %8723 = vmatmul.bf16.gmra.mxu0 %v8259
        %v8724 = vpop.f32.mrf.mxu0
        %v8725 = vadd.f32 %v8556, %v8724
        %v8726 = vpop.f32.mrf.mxu0
        %v8727 = vadd.f32 %v8558, %v8726
        %8728 = vmatmul.bf16.gmra.mxu0 %v8261
        %v8729 = vpop.f32.mrf.mxu0
        %v8730 = vadd.f32 %v8561, %v8729
        %v8731 = vpop.f32.mrf.mxu0
        %v8732 = vadd.f32 %v8563, %v8731
        %8733 = vmatmul.bf16.gmra.mxu0 %v8263
        %v8734 = vpop.f32.mrf.mxu0
        %v8735 = vadd.f32 %v8566, %v8734
        %v8736 = vpop.f32.mrf.mxu0
        %v8737 = vadd.f32 %v8568, %v8736
        %8738 = vmatmul.bf16.gmra.mxu0 %v8265
        %v8739 = vpop.f32.mrf.mxu0
        %v8740 = vadd.f32 %v8571, %v8739
        %v8741 = vpop.f32.mrf.mxu0
        %v8742 = vadd.f32 %v8573, %v8741
        %8743 = vmatmul.bf16.gmra.mxu0 %v8267
        %v8744 = vpop.f32.mrf.mxu0
        %v8745 = vadd.f32 %v8576, %v8744
        %v8746 = vpop.f32.mrf.mxu0
        %v8747 = vadd.f32 %v8578, %v8746
        %8748 = vmatmul.bf16.gmra.mxu0 %v8269
        %v8749 = vpop.f32.mrf.mxu0
        %v8750 = vadd.f32 %v8581, %v8749
        %v8751 = vpop.f32.mrf.mxu0
        %v8752 = vadd.f32 %v8583, %v8751
        %8753 = vmatmul.bf16.gmra.mxu0 %v8271
        %v8754 = vpop.f32.mrf.mxu0
        %v8755 = vadd.f32 %v8586, %v8754
        %v8756 = vpop.f32.mrf.mxu0
        %v8757 = vadd.f32 %v8588, %v8756
        %8758 = vmatmul.bf16.gmra.mxu0 %v8273
        %v8759 = vpop.f32.mrf.mxu0
        %v8760 = vadd.f32 %v8591, %v8759
        %v8761 = vpop.f32.mrf.mxu0
        %v8762 = vadd.f32 %v8593, %v8761
        %8763 = vmatmul.bf16.gmra.mxu0 %v8275
        %v8764 = vpop.f32.mrf.mxu0
        %v8765 = vadd.f32 %v8596, %v8764
        %v8766 = vpop.f32.mrf.mxu0
        %v8767 = vadd.f32 %v8598, %v8766
        %8768 = vmatmul.bf16.gmra.mxu0 %v8277
        %v8769 = vpop.f32.mrf.mxu0
        %v8770 = vadd.f32 %v8601, %v8769
        %v8771 = vpop.f32.mrf.mxu0
        %v8772 = vadd.f32 %v8603, %v8771
        %8773 = vmatmul.bf16.gmra.mxu0 %v8279
        %v8774 = vpop.f32.mrf.mxu0
        %v8775 = vadd.f32 %v8606, %v8774
        %v8776 = vpop.f32.mrf.mxu0
        %v8777 = vadd.f32 %v8608, %v8776
        %8778 = vmatmul.bf16.gmra.mxu0 %v8281
        %v8779 = vpop.f32.mrf.mxu0
        %v8780 = vadd.f32 %v8611, %v8779
        %v8781 = vpop.f32.mrf.mxu0
        %v8782 = vadd.f32 %v8613, %v8781
        %8783 = vmatmul.bf16.gmra.mxu0 %v8283
        %v8784 = vpop.f32.mrf.mxu0
        %v8785 = vadd.f32 %v8616, %v8784
        %v8786 = vpop.f32.mrf.mxu0
        %v8787 = vadd.f32 %v8618, %v8786
        %8788 = vmatmul.bf16.gmra.mxu0 %v8285
        %v8789 = vpop.f32.mrf.mxu0
        %v8790 = vadd.f32 %v8621, %v8789
        %v8791 = vpop.f32.mrf.mxu0
        %v8792 = vadd.f32 %v8623, %v8791
        %8793 = vmatmul.bf16.gmra.mxu0 %v8287
        %v8794 = vpop.f32.mrf.mxu0
        %v8795 = vadd.f32 %v8626, %v8794
        %v8796 = vpop.f32.mrf.mxu0
        %v8797 = vadd.f32 %v8628, %v8796
        %8798 = vmatmul.bf16.gmra.mxu0 %v8289
        %v8799 = vpop.f32.mrf.mxu0
        %v8800 = vadd.f32 %v8631, %v8799
        %v8801 = vpop.f32.mrf.mxu0
        %v8802 = vadd.f32 %v8633, %v8801
        %8803 = vmatmul.bf16.gmra.mxu0 %v8291
        %v8804 = vpop.f32.mrf.mxu0
        %v8805 = vadd.f32 %v8636, %v8804
        %v8806 = vpop.f32.mrf.mxu0
        %v8807 = vadd.f32 %v8638, %v8806
        %8808 = vmatmul.bf16.gmra.mxu0 %v8293
        %v8809 = vpop.f32.mrf.mxu0
        %v8810 = vadd.f32 %v8641, %v8809
        %v8811 = vpop.f32.mrf.mxu0
        %v8812 = vadd.f32 %v8643, %v8811
        %8813 = vmatmul.bf16.gmra.mxu0 %v8295
        %v8814 = vpop.f32.mrf.mxu0
        %v8815 = vadd.f32 %v8646, %v8814
        %v8816 = vpop.f32.mrf.mxu0
        %v8817 = vadd.f32 %v8648, %v8816
        %8818 = vmatmul.bf16.gmra.mxu0 %v8297
        %v8819 = vpop.f32.mrf.mxu0
        %v8820 = vadd.f32 %v8651, %v8819
        %v8821 = vpop.f32.mrf.mxu0
        %v8822 = vadd.f32 %v8653, %v8821
        %8823 = vmatmul.bf16.gmra.mxu0 %v8299
        %v8824 = vpop.f32.mrf.mxu0
        %v8825 = vadd.f32 %v8656, %v8824
        %v8826 = vpop.f32.mrf.mxu0
        %v8827 = vadd.f32 %v8658, %v8826
        %8828 = vmatmul.bf16.gmra.mxu0 %v8301
        %v8829 = vpop.f32.mrf.mxu0
        %v8830 = vadd.f32 %v8661, %v8829
        %v8831 = vpop.f32.mrf.mxu0
        %v8832 = vadd.f32 %v8663, %v8831
        %8833 = vmatmul.bf16.gmra.mxu0 %v8303
        %v8834 = vpop.f32.mrf.mxu0
        %v8835 = vadd.f32 %v8666, %v8834
        %v8836 = vpop.f32.mrf.mxu0
        %v8837 = vadd.f32 %v8668, %v8836
        %8838 = vmatmul.bf16.gmra.mxu0 %v8305
        %v8839 = vpop.f32.mrf.mxu0
        %v8840 = vadd.f32 %v8671, %v8839
        %v8841 = vpop.f32.mrf.mxu0
        %v8842 = vadd.f32 %v8673, %v8841
        %8843 = vdwg.mxu0
        %8844 = vmatpush.bf16.msra.mxu0 %v8457
        %8845 = vmatpush.bf16.msra.mxu0 %v8455
        %8846 = vmatpush.bf16.msra.mxu0 %v8453
        %8847 = vmatpush.bf16.msra.mxu0 %v8451
        %8848 = vmatpush.bf16.msra.mxu0 %v8449
        %8849 = vmatpush.bf16.msra.mxu0 %v8447
        %8850 = vmatpush.bf16.msra.mxu0 %v8445
        %8851 = vmatpush.bf16.msra.mxu0 %v8443
        %8852 = vmatmul.bf16.gmra.mxu0 %v8242
        %v8853 = vpop.f32.mrf.mxu0
        %v8854 = vadd.f32 %v8343, %v8853
        %v8855 = vpop.f32.mrf.mxu0
        %v8856 = vadd.f32 %v8343, %v8855
        %8857 = vmatmul.bf16.gmra.mxu0 %v8244
        %v8858 = vpop.f32.mrf.mxu0
        %v8859 = vadd.f32 %v8343, %v8858
        %v8860 = vpop.f32.mrf.mxu0
        %v8861 = vadd.f32 %v8343, %v8860
        %8862 = vmatmul.bf16.gmra.mxu0 %v8246
        %v8863 = vpop.f32.mrf.mxu0
        %v8864 = vadd.f32 %v8343, %v8863
        %v8865 = vpop.f32.mrf.mxu0
        %v8866 = vadd.f32 %v8343, %v8865
        %8867 = vmatmul.bf16.gmra.mxu0 %v8248
        %v8868 = vpop.f32.mrf.mxu0
        %v8869 = vadd.f32 %v8343, %v8868
        %v8870 = vpop.f32.mrf.mxu0
        %v8871 = vadd.f32 %v8343, %v8870
        %8872 = vmatmul.bf16.gmra.mxu0 %v8250
        %v8873 = vpop.f32.mrf.mxu0
        %v8874 = vadd.f32 %v8343, %v8873
        %v8875 = vpop.f32.mrf.mxu0
        %v8876 = vadd.f32 %v8343, %v8875
        %8877 = vmatmul.bf16.gmra.mxu0 %v8252
        %v8878 = vpop.f32.mrf.mxu0
        %v8879 = vadd.f32 %v8343, %v8878
        %v8880 = vpop.f32.mrf.mxu0
        %v8881 = vadd.f32 %v8343, %v8880
        %8882 = vmatmul.bf16.gmra.mxu0 %v8254
        %v8883 = vpop.f32.mrf.mxu0
        %v8884 = vadd.f32 %v8343, %v8883
        %v8885 = vpop.f32.mrf.mxu0
        %v8886 = vadd.f32 %v8343, %v8885
        %8887 = vmatmul.bf16.gmra.mxu0 %v8256
        %v8888 = vpop.f32.mrf.mxu0
        %v8889 = vadd.f32 %v8343, %v8888
        %v8890 = vpop.f32.mrf.mxu0
        %v8891 = vadd.f32 %v8343, %v8890
        %8892 = vmatmul.bf16.gmra.mxu0 %v8258
        %v8893 = vpop.f32.mrf.mxu0
        %v8894 = vadd.f32 %v8343, %v8893
        %v8895 = vpop.f32.mrf.mxu0
        %v8896 = vadd.f32 %v8343, %v8895
        %8897 = vmatmul.bf16.gmra.mxu0 %v8260
        %v8898 = vpop.f32.mrf.mxu0
        %v8899 = vadd.f32 %v8343, %v8898
        %v8900 = vpop.f32.mrf.mxu0
        %v8901 = vadd.f32 %v8343, %v8900
        %8902 = vmatmul.bf16.gmra.mxu0 %v8262
        %v8903 = vpop.f32.mrf.mxu0
        %v8904 = vadd.f32 %v8343, %v8903
        %v8905 = vpop.f32.mrf.mxu0
        %v8906 = vadd.f32 %v8343, %v8905
        %8907 = vmatmul.bf16.gmra.mxu0 %v8264
        %v8908 = vpop.f32.mrf.mxu0
        %v8909 = vadd.f32 %v8343, %v8908
        %v8910 = vpop.f32.mrf.mxu0
        %v8911 = vadd.f32 %v8343, %v8910
        %8912 = vmatmul.bf16.gmra.mxu0 %v8266
        %v8913 = vpop.f32.mrf.mxu0
        %v8914 = vadd.f32 %v8343, %v8913
        %v8915 = vpop.f32.mrf.mxu0
        %v8916 = vadd.f32 %v8343, %v8915
        %8917 = vmatmul.bf16.gmra.mxu0 %v8268
        %v8918 = vpop.f32.mrf.mxu0
        %v8919 = vadd.f32 %v8343, %v8918
        %v8920 = vpop.f32.mrf.mxu0
        %v8921 = vadd.f32 %v8343, %v8920
        %8922 = vmatmul.bf16.gmra.mxu0 %v8270
        %v8923 = vpop.f32.mrf.mxu0
        %v8924 = vadd.f32 %v8343, %v8923
        %v8925 = vpop.f32.mrf.mxu0
        %v8926 = vadd.f32 %v8343, %v8925
        %8927 = vmatmul.bf16.gmra.mxu0 %v8272
        %v8928 = vpop.f32.mrf.mxu0
        %v8929 = vadd.f32 %v8343, %v8928
        %v8930 = vpop.f32.mrf.mxu0
        %v8931 = vadd.f32 %v8343, %v8930
        %8932 = vmatmul.bf16.gmra.mxu0 %v8274
        %v8933 = vpop.f32.mrf.mxu0
        %v8934 = vadd.f32 %v8343, %v8933
        %v8935 = vpop.f32.mrf.mxu0
        %v8936 = vadd.f32 %v8343, %v8935
        %8937 = vmatmul.bf16.gmra.mxu0 %v8276
        %v8938 = vpop.f32.mrf.mxu0
        %v8939 = vadd.f32 %v8343, %v8938
        %v8940 = vpop.f32.mrf.mxu0
        %v8941 = vadd.f32 %v8343, %v8940
        %8942 = vmatmul.bf16.gmra.mxu0 %v8278
        %v8943 = vpop.f32.mrf.mxu0
        %v8944 = vadd.f32 %v8343, %v8943
        %v8945 = vpop.f32.mrf.mxu0
        %v8946 = vadd.f32 %v8343, %v8945
        %8947 = vmatmul.bf16.gmra.mxu0 %v8280
        %v8948 = vpop.f32.mrf.mxu0
        %v8949 = vadd.f32 %v8343, %v8948
        %v8950 = vpop.f32.mrf.mxu0
        %v8951 = vadd.f32 %v8343, %v8950
        %8952 = vmatmul.bf16.gmra.mxu0 %v8282
        %v8953 = vpop.f32.mrf.mxu0
        %v8954 = vadd.f32 %v8343, %v8953
        %v8955 = vpop.f32.mrf.mxu0
        %v8956 = vadd.f32 %v8343, %v8955
        %8957 = vmatmul.bf16.gmra.mxu0 %v8284
        %v8958 = vpop.f32.mrf.mxu0
        %v8959 = vadd.f32 %v8343, %v8958
        %v8960 = vpop.f32.mrf.mxu0
        %v8961 = vadd.f32 %v8343, %v8960
        %8962 = vmatmul.bf16.gmra.mxu0 %v8286
        %v8963 = vpop.f32.mrf.mxu0
        %v8964 = vadd.f32 %v8343, %v8963
        %v8965 = vpop.f32.mrf.mxu0
        %v8966 = vadd.f32 %v8343, %v8965
        %8967 = vmatmul.bf16.gmra.mxu0 %v8288
        %v8968 = vpop.f32.mrf.mxu0
        %v8969 = vadd.f32 %v8343, %v8968
        %v8970 = vpop.f32.mrf.mxu0
        %v8971 = vadd.f32 %v8343, %v8970
        %8972 = vmatmul.bf16.gmra.mxu0 %v8290
        %v8973 = vpop.f32.mrf.mxu0
        %v8974 = vadd.f32 %v8343, %v8973
        %v8975 = vpop.f32.mrf.mxu0
        %v8976 = vadd.f32 %v8343, %v8975
        %8977 = vmatmul.bf16.gmra.mxu0 %v8292
        %v8978 = vpop.f32.mrf.mxu0
        %v8979 = vadd.f32 %v8343, %v8978
        %v8980 = vpop.f32.mrf.mxu0
        %v8981 = vadd.f32 %v8343, %v8980
        %8982 = vmatmul.bf16.gmra.mxu0 %v8294
        %v8983 = vpop.f32.mrf.mxu0
        %v8984 = vadd.f32 %v8343, %v8983
        %v8985 = vpop.f32.mrf.mxu0
        %v8986 = vadd.f32 %v8343, %v8985
        %8987 = vmatmul.bf16.gmra.mxu0 %v8296
        %v8988 = vpop.f32.mrf.mxu0
        %v8989 = vadd.f32 %v8343, %v8988
        %v8990 = vpop.f32.mrf.mxu0
        %v8991 = vadd.f32 %v8343, %v8990
        %8992 = vmatmul.bf16.gmra.mxu0 %v8298
        %v8993 = vpop.f32.mrf.mxu0
        %v8994 = vadd.f32 %v8343, %v8993
        %v8995 = vpop.f32.mrf.mxu0
        %v8996 = vadd.f32 %v8343, %v8995
        %8997 = vmatmul.bf16.gmra.mxu0 %v8300
        %v8998 = vpop.f32.mrf.mxu0
        %v8999 = vadd.f32 %v8343, %v8998
        %v9000 = vpop.f32.mrf.mxu0
        %v9001 = vadd.f32 %v8343, %v9000
        %9002 = vmatmul.bf16.gmra.mxu0 %v8302
        %v9003 = vpop.f32.mrf.mxu0
        %v9004 = vadd.f32 %v8343, %v9003
        %v9005 = vpop.f32.mrf.mxu0
        %v9006 = vadd.f32 %v8343, %v9005
        %9007 = vmatmul.bf16.gmra.mxu0 %v8304
        %v9008 = vpop.f32.mrf.mxu0
        %v9009 = vadd.f32 %v8343, %v9008
        %v9010 = vpop.f32.mrf.mxu0
        %v9011 = vadd.f32 %v8343, %v9010
        %9012 = vdwg.mxu0
        %9013 = vmatpush.bf16.msra.mxu0 %v8473
        %9014 = vmatpush.bf16.msra.mxu0 %v8471
        %9015 = vmatpush.bf16.msra.mxu0 %v8469
        %9016 = vmatpush.bf16.msra.mxu0 %v8467
        %9017 = vmatpush.bf16.msra.mxu0 %v8465
        %9018 = vmatpush.bf16.msra.mxu0 %v8463
        %9019 = vmatpush.bf16.msra.mxu0 %v8461
        %9020 = vmatpush.bf16.msra.mxu0 %v8459
        %9021 = vmatmul.bf16.gmra.mxu0 %v8243
        %v9022 = vpop.f32.mrf.mxu0
        %v9023 = vadd.f32 %v8854, %v9022
        %v9024 = vpop.f32.mrf.mxu0
        %v9025 = vadd.f32 %v8856, %v9024
        %9026 = vmatmul.bf16.gmra.mxu0 %v8245
        %v9027 = vpop.f32.mrf.mxu0
        %v9028 = vadd.f32 %v8859, %v9027
        %v9029 = vpop.f32.mrf.mxu0
        %v9030 = vadd.f32 %v8861, %v9029
        %9031 = vmatmul.bf16.gmra.mxu0 %v8247
        %v9032 = vpop.f32.mrf.mxu0
        %v9033 = vadd.f32 %v8864, %v9032
        %v9034 = vpop.f32.mrf.mxu0
        %v9035 = vadd.f32 %v8866, %v9034
        %9036 = vmatmul.bf16.gmra.mxu0 %v8249
        %v9037 = vpop.f32.mrf.mxu0
        %v9038 = vadd.f32 %v8869, %v9037
        %v9039 = vpop.f32.mrf.mxu0
        %v9040 = vadd.f32 %v8871, %v9039
        %9041 = vmatmul.bf16.gmra.mxu0 %v8251
        %v9042 = vpop.f32.mrf.mxu0
        %v9043 = vadd.f32 %v8874, %v9042
        %v9044 = vpop.f32.mrf.mxu0
        %v9045 = vadd.f32 %v8876, %v9044
        %9046 = vmatmul.bf16.gmra.mxu0 %v8253
        %v9047 = vpop.f32.mrf.mxu0
        %v9048 = vadd.f32 %v8879, %v9047
        %v9049 = vpop.f32.mrf.mxu0
        %v9050 = vadd.f32 %v8881, %v9049
        %9051 = vmatmul.bf16.gmra.mxu0 %v8255
        %v9052 = vpop.f32.mrf.mxu0
        %v9053 = vadd.f32 %v8884, %v9052
        %v9054 = vpop.f32.mrf.mxu0
        %v9055 = vadd.f32 %v8886, %v9054
        %9056 = vmatmul.bf16.gmra.mxu0 %v8257
        %v9057 = vpop.f32.mrf.mxu0
        %v9058 = vadd.f32 %v8889, %v9057
        %v9059 = vpop.f32.mrf.mxu0
        %v9060 = vadd.f32 %v8891, %v9059
        %9061 = vmatmul.bf16.gmra.mxu0 %v8259
        %v9062 = vpop.f32.mrf.mxu0
        %v9063 = vadd.f32 %v8894, %v9062
        %v9064 = vpop.f32.mrf.mxu0
        %v9065 = vadd.f32 %v8896, %v9064
        %9066 = vmatmul.bf16.gmra.mxu0 %v8261
        %v9067 = vpop.f32.mrf.mxu0
        %v9068 = vadd.f32 %v8899, %v9067
        %v9069 = vpop.f32.mrf.mxu0
        %v9070 = vadd.f32 %v8901, %v9069
        %9071 = vmatmul.bf16.gmra.mxu0 %v8263
        %v9072 = vpop.f32.mrf.mxu0
        %v9073 = vadd.f32 %v8904, %v9072
        %v9074 = vpop.f32.mrf.mxu0
        %v9075 = vadd.f32 %v8906, %v9074
        %9076 = vmatmul.bf16.gmra.mxu0 %v8265
        %v9077 = vpop.f32.mrf.mxu0
        %v9078 = vadd.f32 %v8909, %v9077
        %v9079 = vpop.f32.mrf.mxu0
        %v9080 = vadd.f32 %v8911, %v9079
        %9081 = vmatmul.bf16.gmra.mxu0 %v8267
        %v9082 = vpop.f32.mrf.mxu0
        %v9083 = vadd.f32 %v8914, %v9082
        %v9084 = vpop.f32.mrf.mxu0
        %v9085 = vadd.f32 %v8916, %v9084
        %9086 = vmatmul.bf16.gmra.mxu0 %v8269
        %v9087 = vpop.f32.mrf.mxu0
        %v9088 = vadd.f32 %v8919, %v9087
        %v9089 = vpop.f32.mrf.mxu0
        %v9090 = vadd.f32 %v8921, %v9089
        %9091 = vmatmul.bf16.gmra.mxu0 %v8271
        %v9092 = vpop.f32.mrf.mxu0
        %v9093 = vadd.f32 %v8924, %v9092
        %v9094 = vpop.f32.mrf.mxu0
        %v9095 = vadd.f32 %v8926, %v9094
        %9096 = vmatmul.bf16.gmra.mxu0 %v8273
        %v9097 = vpop.f32.mrf.mxu0
        %v9098 = vadd.f32 %v8929, %v9097
        %v9099 = vpop.f32.mrf.mxu0
        %v9100 = vadd.f32 %v8931, %v9099
        %9101 = vmatmul.bf16.gmra.mxu0 %v8275
        %v9102 = vpop.f32.mrf.mxu0
        %v9103 = vadd.f32 %v8934, %v9102
        %v9104 = vpop.f32.mrf.mxu0
        %v9105 = vadd.f32 %v8936, %v9104
        %9106 = vmatmul.bf16.gmra.mxu0 %v8277
        %v9107 = vpop.f32.mrf.mxu0
        %v9108 = vadd.f32 %v8939, %v9107
        %v9109 = vpop.f32.mrf.mxu0
        %v9110 = vadd.f32 %v8941, %v9109
        %9111 = vmatmul.bf16.gmra.mxu0 %v8279
        %v9112 = vpop.f32.mrf.mxu0
        %v9113 = vadd.f32 %v8944, %v9112
        %v9114 = vpop.f32.mrf.mxu0
        %v9115 = vadd.f32 %v8946, %v9114
        %9116 = vmatmul.bf16.gmra.mxu0 %v8281
        %v9117 = vpop.f32.mrf.mxu0
        %v9118 = vadd.f32 %v8949, %v9117
        %v9119 = vpop.f32.mrf.mxu0
        %v9120 = vadd.f32 %v8951, %v9119
        %9121 = vmatmul.bf16.gmra.mxu0 %v8283
        %v9122 = vpop.f32.mrf.mxu0
        %v9123 = vadd.f32 %v8954, %v9122
        %v9124 = vpop.f32.mrf.mxu0
        %v9125 = vadd.f32 %v8956, %v9124
        %9126 = vmatmul.bf16.gmra.mxu0 %v8285
        %v9127 = vpop.f32.mrf.mxu0
        %v9128 = vadd.f32 %v8959, %v9127
        %v9129 = vpop.f32.mrf.mxu0
        %v9130 = vadd.f32 %v8961, %v9129
        %9131 = vmatmul.bf16.gmra.mxu0 %v8287
        %v9132 = vpop.f32.mrf.mxu0
        %v9133 = vadd.f32 %v8964, %v9132
        %v9134 = vpop.f32.mrf.mxu0
        %v9135 = vadd.f32 %v8966, %v9134
        %9136 = vmatmul.bf16.gmra.mxu0 %v8289
        %v9137 = vpop.f32.mrf.mxu0
        %v9138 = vadd.f32 %v8969, %v9137
        %v9139 = vpop.f32.mrf.mxu0
        %v9140 = vadd.f32 %v8971, %v9139
        %9141 = vmatmul.bf16.gmra.mxu0 %v8291
        %v9142 = vpop.f32.mrf.mxu0
        %v9143 = vadd.f32 %v8974, %v9142
        %v9144 = vpop.f32.mrf.mxu0
        %v9145 = vadd.f32 %v8976, %v9144
        %9146 = vmatmul.bf16.gmra.mxu0 %v8293
        %v9147 = vpop.f32.mrf.mxu0
        %v9148 = vadd.f32 %v8979, %v9147
        %v9149 = vpop.f32.mrf.mxu0
        %v9150 = vadd.f32 %v8981, %v9149
        %9151 = vmatmul.bf16.gmra.mxu0 %v8295
        %v9152 = vpop.f32.mrf.mxu0
        %v9153 = vadd.f32 %v8984, %v9152
        %v9154 = vpop.f32.mrf.mxu0
        %v9155 = vadd.f32 %v8986, %v9154
        %9156 = vmatmul.bf16.gmra.mxu0 %v8297
        %v9157 = vpop.f32.mrf.mxu0
        %v9158 = vadd.f32 %v8989, %v9157
        %v9159 = vpop.f32.mrf.mxu0
        %v9160 = vadd.f32 %v8991, %v9159
        %9161 = vmatmul.bf16.gmra.mxu0 %v8299
        %v9162 = vpop.f32.mrf.mxu0
        %v9163 = vadd.f32 %v8994, %v9162
        %v9164 = vpop.f32.mrf.mxu0
        %v9165 = vadd.f32 %v8996, %v9164
        %9166 = vmatmul.bf16.gmra.mxu0 %v8301
        %v9167 = vpop.f32.mrf.mxu0
        %v9168 = vadd.f32 %v8999, %v9167
        %v9169 = vpop.f32.mrf.mxu0
        %v9170 = vadd.f32 %v9001, %v9169
        %9171 = vmatmul.bf16.gmra.mxu0 %v8303
        %v9172 = vpop.f32.mrf.mxu0
        %v9173 = vadd.f32 %v9004, %v9172
        %v9174 = vpop.f32.mrf.mxu0
        %v9175 = vadd.f32 %v9006, %v9174
        %9176 = vmatmul.bf16.gmra.mxu0 %v8305
        %v9177 = vpop.f32.mrf.mxu0
        %v9178 = vadd.f32 %v9009, %v9177
        %v9179 = vpop.f32.mrf.mxu0
        %v9180 = vadd.f32 %v9011, %v9179
        %9181 = vdwg.mxu0
        %v9182 = vmax.f32 %v8685, 0.0
        %v9183 = vmax.f32 %v9023, 0.0
        %v9184 = vmax.f32 %v8687, 0.0
        %v9185 = vmax.f32 %v9025, 0.0
        %v9186 = vmax.f32 %v8690, 0.0
        %v9187 = vmax.f32 %v9028, 0.0
        %v9188 = vmax.f32 %v8692, 0.0
        %v9189 = vmax.f32 %v9030, 0.0
        %v9190 = vmax.f32 %v8695, 0.0
        %v9191 = vmax.f32 %v9033, 0.0
        %v9192 = vmax.f32 %v8697, 0.0
        %v9193 = vmax.f32 %v9035, 0.0
        %v9194 = vmax.f32 %v8700, 0.0
        %v9195 = vmax.f32 %v9038, 0.0
        %v9196 = vmax.f32 %v8702, 0.0
        %v9197 = vmax.f32 %v9040, 0.0
        %v9198 = vmax.f32 %v8705, 0.0
        %v9199 = vmax.f32 %v9043, 0.0
        %v9200 = vmax.f32 %v8707, 0.0
        %v9201 = vmax.f32 %v9045, 0.0
        %v9202 = vmax.f32 %v8710, 0.0
        %v9203 = vmax.f32 %v9048, 0.0
        %v9204 = vmax.f32 %v8712, 0.0
        %v9205 = vmax.f32 %v9050, 0.0
        %v9206 = vmax.f32 %v8715, 0.0
        %v9207 = vmax.f32 %v9053, 0.0
        %v9208 = vmax.f32 %v8717, 0.0
        %v9209 = vmax.f32 %v9055, 0.0
        %v9210 = vmax.f32 %v8720, 0.0
        %v9211 = vmax.f32 %v9058, 0.0
        %v9212 = vmax.f32 %v8722, 0.0
        %v9213 = vmax.f32 %v9060, 0.0
        %v9214 = vmax.f32 %v8725, 0.0
        %v9215 = vmax.f32 %v9063, 0.0
        %v9216 = vmax.f32 %v8727, 0.0
        %v9217 = vmax.f32 %v9065, 0.0
        %v9218 = vmax.f32 %v8730, 0.0
        %v9219 = vmax.f32 %v9068, 0.0
        %v9220 = vmax.f32 %v8732, 0.0
        %v9221 = vmax.f32 %v9070, 0.0
        %v9222 = vmax.f32 %v8735, 0.0
        %v9223 = vmax.f32 %v9073, 0.0
        %v9224 = vmax.f32 %v8737, 0.0
        %v9225 = vmax.f32 %v9075, 0.0
        %v9226 = vmax.f32 %v8740, 0.0
        %v9227 = vmax.f32 %v9078, 0.0
        %v9228 = vmax.f32 %v8742, 0.0
        %v9229 = vmax.f32 %v9080, 0.0
        %v9230 = vmax.f32 %v8745, 0.0
        %v9231 = vmax.f32 %v9083, 0.0
        %v9232 = vmax.f32 %v8747, 0.0
        %v9233 = vmax.f32 %v9085, 0.0
        %v9234 = vmax.f32 %v8750, 0.0
        %v9235 = vmax.f32 %v9088, 0.0
        %v9236 = vmax.f32 %v8752, 0.0
        %v9237 = vmax.f32 %v9090, 0.0
        %v9238 = vmax.f32 %v8755, 0.0
        %v9239 = vmax.f32 %v9093, 0.0
        %v9240 = vmax.f32 %v8757, 0.0
        %v9241 = vmax.f32 %v9095, 0.0
        %v9242 = vmax.f32 %v8760, 0.0
        %v9243 = vmax.f32 %v9098, 0.0
        %v9244 = vmax.f32 %v8762, 0.0
        %v9245 = vmax.f32 %v9100, 0.0
        %v9246 = vmax.f32 %v8765, 0.0
        %v9247 = vmax.f32 %v9103, 0.0
        %v9248 = vmax.f32 %v8767, 0.0
        %v9249 = vmax.f32 %v9105, 0.0
        %v9250 = vmax.f32 %v8770, 0.0
        %v9251 = vmax.f32 %v9108, 0.0
        %v9252 = vmax.f32 %v8772, 0.0
        %v9253 = vmax.f32 %v9110, 0.0
        %v9254 = vmax.f32 %v8775, 0.0
        %v9255 = vmax.f32 %v9113, 0.0
        %v9256 = vmax.f32 %v8777, 0.0
        %v9257 = vmax.f32 %v9115, 0.0
        %v9258 = vmax.f32 %v8780, 0.0
        %v9259 = vmax.f32 %v9118, 0.0
        %v9260 = vmax.f32 %v8782, 0.0
        %v9261 = vmax.f32 %v9120, 0.0
        %v9262 = vmax.f32 %v8785, 0.0
        %v9263 = vmax.f32 %v9123, 0.0
        %v9264 = vmax.f32 %v8787, 0.0
        %v9265 = vmax.f32 %v9125, 0.0
        %v9266 = vmax.f32 %v8790, 0.0
        %v9267 = vmax.f32 %v9128, 0.0
        %v9268 = vmax.f32 %v8792, 0.0
        %v9269 = vmax.f32 %v9130, 0.0
        %v9270 = vmax.f32 %v8795, 0.0
        %v9271 = vmax.f32 %v9133, 0.0
        %v9272 = vmax.f32 %v8797, 0.0
        %v9273 = vmax.f32 %v9135, 0.0
        %v9274 = vmax.f32 %v8800, 0.0
        %v9275 = vmax.f32 %v9138, 0.0
        %v9276 = vmax.f32 %v8802, 0.0
        %v9277 = vmax.f32 %v9140, 0.0
        %v9278 = vmax.f32 %v8805, 0.0
        %v9279 = vmax.f32 %v9143, 0.0
        %v9280 = vmax.f32 %v8807, 0.0
        %v9281 = vmax.f32 %v9145, 0.0
        %v9282 = vmax.f32 %v8810, 0.0
        %v9283 = vmax.f32 %v9148, 0.0
        %v9284 = vmax.f32 %v8812, 0.0
        %v9285 = vmax.f32 %v9150, 0.0
        %v9286 = vmax.f32 %v8815, 0.0
        %v9287 = vmax.f32 %v9153, 0.0
        %v9288 = vmax.f32 %v8817, 0.0
        %v9289 = vmax.f32 %v9155, 0.0
        %v9290 = vmax.f32 %v8820, 0.0
        %v9291 = vmax.f32 %v9158, 0.0
        %v9292 = vmax.f32 %v8822, 0.0
        %v9293 = vmax.f32 %v9160, 0.0
        %v9294 = vmax.f32 %v8825, 0.0
        %v9295 = vmax.f32 %v9163, 0.0
        %v9296 = vmax.f32 %v8827, 0.0
        %v9297 = vmax.f32 %v9165, 0.0
        %v9298 = vmax.f32 %v8830, 0.0
        %v9299 = vmax.f32 %v9168, 0.0
        %v9300 = vmax.f32 %v8832, 0.0
        %v9301 = vmax.f32 %v9170, 0.0
        %v9302 = vmax.f32 %v8835, 0.0
        %v9303 = vmax.f32 %v9173, 0.0
        %v9304 = vmax.f32 %v8837, 0.0
        %v9305 = vmax.f32 %v9175, 0.0
        %v9306 = vmax.f32 %v8840, 0.0
        %v9307 = vmax.f32 %v9178, 0.0
        %v9308 = vmax.f32 %v8842, 0.0
        %v9309 = vmax.f32 %v9180, 0.0
        %v9310 = vpack.c.bf16 %v9184, %v9182
        %v9311 = vpack.c.bf16 %v9185, %v9183
        %v9312 = vpack.c.bf16 %v9188, %v9186
        %v9313 = vpack.c.bf16 %v9189, %v9187
        %v9314 = vpack.c.bf16 %v9192, %v9190
        %v9315 = vpack.c.bf16 %v9193, %v9191
        %v9316 = vpack.c.bf16 %v9196, %v9194
        %v9317 = vpack.c.bf16 %v9197, %v9195
        %v9318 = vpack.c.bf16 %v9200, %v9198
        %v9319 = vpack.c.bf16 %v9201, %v9199
        %v9320 = vpack.c.bf16 %v9204, %v9202
        %v9321 = vpack.c.bf16 %v9205, %v9203
        %v9322 = vpack.c.bf16 %v9208, %v9206
        %v9323 = vpack.c.bf16 %v9209, %v9207
        %v9324 = vpack.c.bf16 %v9212, %v9210
        %v9325 = vpack.c.bf16 %v9213, %v9211
        %v9326 = vpack.c.bf16 %v9216, %v9214
        %v9327 = vpack.c.bf16 %v9217, %v9215
        %v9328 = vpack.c.bf16 %v9220, %v9218
        %v9329 = vpack.c.bf16 %v9221, %v9219
        %v9330 = vpack.c.bf16 %v9224, %v9222
        %v9331 = vpack.c.bf16 %v9225, %v9223
        %v9332 = vpack.c.bf16 %v9228, %v9226
        %v9333 = vpack.c.bf16 %v9229, %v9227
        %v9334 = vpack.c.bf16 %v9232, %v9230
        %v9335 = vpack.c.bf16 %v9233, %v9231
        %v9336 = vpack.c.bf16 %v9236, %v9234
        %v9337 = vpack.c.bf16 %v9237, %v9235
        %v9338 = vpack.c.bf16 %v9240, %v9238
        %v9339 = vpack.c.bf16 %v9241, %v9239
        %v9340 = vpack.c.bf16 %v9244, %v9242
        %v9341 = vpack.c.bf16 %v9245, %v9243
        %v9342 = vpack.c.bf16 %v9248, %v9246
        %v9343 = vpack.c.bf16 %v9249, %v9247
        %v9344 = vpack.c.bf16 %v9252, %v9250
        %v9345 = vpack.c.bf16 %v9253, %v9251
        %v9346 = vpack.c.bf16 %v9256, %v9254
        %v9347 = vpack.c.bf16 %v9257, %v9255
        %v9348 = vpack.c.bf16 %v9260, %v9258
        %v9349 = vpack.c.bf16 %v9261, %v9259
        %v9350 = vpack.c.bf16 %v9264, %v9262
        %v9351 = vpack.c.bf16 %v9265, %v9263
        %v9352 = vpack.c.bf16 %v9268, %v9266
        %v9353 = vpack.c.bf16 %v9269, %v9267
        %v9354 = vpack.c.bf16 %v9272, %v9270
        %v9355 = vpack.c.bf16 %v9273, %v9271
        %v9356 = vpack.c.bf16 %v9276, %v9274
        %v9357 = vpack.c.bf16 %v9277, %v9275
        %v9358 = vpack.c.bf16 %v9280, %v9278
        %v9359 = vpack.c.bf16 %v9281, %v9279
        %v9360 = vpack.c.bf16 %v9284, %v9282
        %v9361 = vpack.c.bf16 %v9285, %v9283
        %v9362 = vpack.c.bf16 %v9288, %v9286
        %v9363 = vpack.c.bf16 %v9289, %v9287
        %v9364 = vpack.c.bf16 %v9292, %v9290
        %v9365 = vpack.c.bf16 %v9293, %v9291
        %v9366 = vpack.c.bf16 %v9296, %v9294
        %v9367 = vpack.c.bf16 %v9297, %v9295
        %v9368 = vpack.c.bf16 %v9300, %v9298
        %v9369 = vpack.c.bf16 %v9301, %v9299
        %v9370 = vpack.c.bf16 %v9304, %v9302
        %v9371 = vpack.c.bf16 %v9305, %v9303
        %v9372 = vpack.c.bf16 %v9308, %v9306
        %v9373 = vpack.c.bf16 %v9309, %v9307
        %s9374 = scalar_lea.vmem [#allocation2], 1536
        %v9375 = vld [vmem:[%s9374] sm:$0xff]
        %v9376 = vld [vmem:[%s9374 + $0x8] sm:$0xff]
        %v9377 = vld [vmem:[%s9374 + $0x10] sm:$0xff]
        %v9378 = vld [vmem:[%s9374 + $0x18] sm:$0xff]
        %v9379 = vld [vmem:[%s9374 + $0x20] sm:$0xff]
        %v9380 = vld [vmem:[%s9374 + $0x28] sm:$0xff]
        %v9381 = vld [vmem:[%s9374 + $0x30] sm:$0xff]
        %v9382 = vld [vmem:[%s9374 + $0x38] sm:$0xff]
        %v9383 = vld [vmem:[%s9374 + $0x40] sm:$0xff]
        %v9384 = vld [vmem:[%s9374 + $0x48] sm:$0xff]
        %v9385 = vld [vmem:[%s9374 + $0x50] sm:$0xff]
        %v9386 = vld [vmem:[%s9374 + $0x58] sm:$0xff]
        %v9387 = vld [vmem:[%s9374 + $0x60] sm:$0xff]
        %v9388 = vld [vmem:[%s9374 + $0x68] sm:$0xff]
        %v9389 = vld [vmem:[%s9374 + $0x70] sm:$0xff]
        %v9390 = vld [vmem:[%s9374 + $0x78] sm:$0xff]
        %v9391 = vld [vmem:[%s9374 + $0x80] sm:$0xff]
        %v9392 = vld [vmem:[%s9374 + $0x88] sm:$0xff]
        %v9393 = vld [vmem:[%s9374 + $0x90] sm:$0xff]
        %v9394 = vld [vmem:[%s9374 + $0x98] sm:$0xff]
        %v9395 = vld [vmem:[%s9374 + $0xa0] sm:$0xff]
        %v9396 = vld [vmem:[%s9374 + $0xa8] sm:$0xff]
        %v9397 = vld [vmem:[%s9374 + $0xb0] sm:$0xff]
        %v9398 = vld [vmem:[%s9374 + $0xb8] sm:$0xff]
        %v9399 = vld [vmem:[%s9374 + $0xc0] sm:$0xff]
        %v9400 = vld [vmem:[%s9374 + $0xc8] sm:$0xff]
        %v9401 = vld [vmem:[%s9374 + $0xd0] sm:$0xff]
        %v9402 = vld [vmem:[%s9374 + $0xd8] sm:$0xff]
        %v9403 = vld [vmem:[%s9374 + $0xe0] sm:$0xff]
        %v9404 = vld [vmem:[%s9374 + $0xe8] sm:$0xff]
        %v9405 = vld [vmem:[%s9374 + $0xf0] sm:$0xff]
        %v9406 = vld [vmem:[%s9374 + $0xf8] sm:$0xff]
        %s9407 = scalar_lea.vmem %s4, 7
        %v9408 = vld [vmem:[%s9407] ss:$8 sm:$0x3]
        %v9410 = vperm.slane %v9408, 0
        %v9411 = vperm.slane %v9408, 1
        %v9446 = vunpack.c.l.b16 %v9375
        %v9447 = vunpack.c.h.b16 %v9375
        %v9448 = vunpack.c.l.b16 %v9376
        %v9449 = vunpack.c.h.b16 %v9376
        %v9450 = vunpack.c.l.b16 %v9377
        %v9451 = vunpack.c.h.b16 %v9377
        %v9452 = vunpack.c.l.b16 %v9378
        %v9453 = vunpack.c.h.b16 %v9378
        %v9454 = vunpack.c.l.b16 %v9379
        %v9455 = vunpack.c.h.b16 %v9379
        %v9456 = vunpack.c.l.b16 %v9380
        %v9457 = vunpack.c.h.b16 %v9380
        %v9458 = vunpack.c.l.b16 %v9381
        %v9459 = vunpack.c.h.b16 %v9381
        %v9460 = vunpack.c.l.b16 %v9382
        %v9461 = vunpack.c.h.b16 %v9382
        %v9462 = vunpack.c.l.b16 %v9383
        %v9463 = vunpack.c.h.b16 %v9383
        %v9464 = vunpack.c.l.b16 %v9384
        %v9465 = vunpack.c.h.b16 %v9384
        %v9466 = vunpack.c.l.b16 %v9385
        %v9467 = vunpack.c.h.b16 %v9385
        %v9468 = vunpack.c.l.b16 %v9386
        %v9469 = vunpack.c.h.b16 %v9386
        %v9470 = vunpack.c.l.b16 %v9387
        %v9471 = vunpack.c.h.b16 %v9387
        %v9472 = vunpack.c.l.b16 %v9388
        %v9473 = vunpack.c.h.b16 %v9388
        %v9474 = vunpack.c.l.b16 %v9389
        %v9475 = vunpack.c.h.b16 %v9389
        %v9476 = vunpack.c.l.b16 %v9390
        %v9477 = vunpack.c.h.b16 %v9390
        %v9478 = vunpack.c.l.b16 %v9391
        %v9479 = vunpack.c.h.b16 %v9391
        %v9480 = vunpack.c.l.b16 %v9392
        %v9481 = vunpack.c.h.b16 %v9392
        %v9482 = vunpack.c.l.b16 %v9393
        %v9483 = vunpack.c.h.b16 %v9393
        %v9484 = vunpack.c.l.b16 %v9394
        %v9485 = vunpack.c.h.b16 %v9394
        %v9486 = vunpack.c.l.b16 %v9395
        %v9487 = vunpack.c.h.b16 %v9395
        %v9488 = vunpack.c.l.b16 %v9396
        %v9489 = vunpack.c.h.b16 %v9396
        %v9490 = vunpack.c.l.b16 %v9397
        %v9491 = vunpack.c.h.b16 %v9397
        %v9492 = vunpack.c.l.b16 %v9398
        %v9493 = vunpack.c.h.b16 %v9398
        %v9494 = vunpack.c.l.b16 %v9399
        %v9495 = vunpack.c.h.b16 %v9399
        %v9496 = vunpack.c.l.b16 %v9400
        %v9497 = vunpack.c.h.b16 %v9400
        %v9498 = vunpack.c.l.b16 %v9401
        %v9499 = vunpack.c.h.b16 %v9401
        %v9500 = vunpack.c.l.b16 %v9402
        %v9501 = vunpack.c.h.b16 %v9402
        %v9502 = vunpack.c.l.b16 %v9403
        %v9503 = vunpack.c.h.b16 %v9403
        %v9504 = vunpack.c.l.b16 %v9404
        %v9505 = vunpack.c.h.b16 %v9404
        %v9506 = vunpack.c.l.b16 %v9405
        %v9507 = vunpack.c.h.b16 %v9405
        %v9508 = vunpack.c.l.b16 %v9406
        %v9509 = vunpack.c.h.b16 %v9406
        %v9510 = vpack.c.b16 %v9448, %v9446
        %v9511 = vpack.c.b16 %v9449, %v9447
        %v9512 = vpack.c.b16 %v9452, %v9450
        %v9513 = vpack.c.b16 %v9453, %v9451
        %v9514 = vpack.c.b16 %v9456, %v9454
        %v9515 = vpack.c.b16 %v9457, %v9455
        %v9516 = vpack.c.b16 %v9460, %v9458
        %v9517 = vpack.c.b16 %v9461, %v9459
        %v9518 = vpack.c.b16 %v9464, %v9462
        %v9519 = vpack.c.b16 %v9465, %v9463
        %v9520 = vpack.c.b16 %v9468, %v9466
        %v9521 = vpack.c.b16 %v9469, %v9467
        %v9522 = vpack.c.b16 %v9472, %v9470
        %v9523 = vpack.c.b16 %v9473, %v9471
        %v9524 = vpack.c.b16 %v9476, %v9474
        %v9525 = vpack.c.b16 %v9477, %v9475
        %v9526 = vpack.c.b16 %v9480, %v9478
        %v9527 = vpack.c.b16 %v9481, %v9479
        %v9528 = vpack.c.b16 %v9484, %v9482
        %v9529 = vpack.c.b16 %v9485, %v9483
        %v9530 = vpack.c.b16 %v9488, %v9486
        %v9531 = vpack.c.b16 %v9489, %v9487
        %v9532 = vpack.c.b16 %v9492, %v9490
        %v9533 = vpack.c.b16 %v9493, %v9491
        %v9534 = vpack.c.b16 %v9496, %v9494
        %v9535 = vpack.c.b16 %v9497, %v9495
        %v9536 = vpack.c.b16 %v9500, %v9498
        %v9537 = vpack.c.b16 %v9501, %v9499
        %v9538 = vpack.c.b16 %v9504, %v9502
        %v9539 = vpack.c.b16 %v9505, %v9503
        %v9540 = vpack.c.b16 %v9508, %v9506
        %v9541 = vpack.c.b16 %v9509, %v9507
        %9574 = vmatpush.bf16.msra.mxu0 %v9524
        %9575 = vmatpush.bf16.msra.mxu0 %v9522
        %9576 = vmatpush.bf16.msra.mxu0 %v9520
        %9577 = vmatpush.bf16.msra.mxu0 %v9518
        %9578 = vmatpush.bf16.msra.mxu0 %v9516
        %9579 = vmatpush.bf16.msra.mxu0 %v9514
        %9580 = vmatpush.bf16.msra.mxu0 %v9512
        %9581 = vmatpush.bf16.msra.mxu0 %v9510
        %9582 = vmatmul.bf16.gmra.mxu0 %v9310
        %v9583 = vpop.f32.mrf.mxu0
        %v9584 = vadd.f32 %v9410, %v9583
        %v9585 = vpop.f32.mrf.mxu0
        %v9586 = vadd.f32 %v9410, %v9585
        %9587 = vmatmul.bf16.gmra.mxu0 %v9312
        %v9588 = vpop.f32.mrf.mxu0
        %v9589 = vadd.f32 %v9410, %v9588
        %v9590 = vpop.f32.mrf.mxu0
        %v9591 = vadd.f32 %v9410, %v9590
        %9592 = vmatmul.bf16.gmra.mxu0 %v9314
        %v9593 = vpop.f32.mrf.mxu0
        %v9594 = vadd.f32 %v9410, %v9593
        %v9595 = vpop.f32.mrf.mxu0
        %v9596 = vadd.f32 %v9410, %v9595
        %9597 = vmatmul.bf16.gmra.mxu0 %v9316
        %v9598 = vpop.f32.mrf.mxu0
        %v9599 = vadd.f32 %v9410, %v9598
        %v9600 = vpop.f32.mrf.mxu0
        %v9601 = vadd.f32 %v9410, %v9600
        %9602 = vmatmul.bf16.gmra.mxu0 %v9318
        %v9603 = vpop.f32.mrf.mxu0
        %v9604 = vadd.f32 %v9410, %v9603
        %v9605 = vpop.f32.mrf.mxu0
        %v9606 = vadd.f32 %v9410, %v9605
        %9607 = vmatmul.bf16.gmra.mxu0 %v9320
        %v9608 = vpop.f32.mrf.mxu0
        %v9609 = vadd.f32 %v9410, %v9608
        %v9610 = vpop.f32.mrf.mxu0
        %v9611 = vadd.f32 %v9410, %v9610
        %9612 = vmatmul.bf16.gmra.mxu0 %v9322
        %v9613 = vpop.f32.mrf.mxu0
        %v9614 = vadd.f32 %v9410, %v9613
        %v9615 = vpop.f32.mrf.mxu0
        %v9616 = vadd.f32 %v9410, %v9615
        %9617 = vmatmul.bf16.gmra.mxu0 %v9324
        %v9618 = vpop.f32.mrf.mxu0
        %v9619 = vadd.f32 %v9410, %v9618
        %v9620 = vpop.f32.mrf.mxu0
        %v9621 = vadd.f32 %v9410, %v9620
        %9622 = vmatmul.bf16.gmra.mxu0 %v9326
        %v9623 = vpop.f32.mrf.mxu0
        %v9624 = vadd.f32 %v9410, %v9623
        %v9625 = vpop.f32.mrf.mxu0
        %v9626 = vadd.f32 %v9410, %v9625
        %9627 = vmatmul.bf16.gmra.mxu0 %v9328
        %v9628 = vpop.f32.mrf.mxu0
        %v9629 = vadd.f32 %v9410, %v9628
        %v9630 = vpop.f32.mrf.mxu0
        %v9631 = vadd.f32 %v9410, %v9630
        %9632 = vmatmul.bf16.gmra.mxu0 %v9330
        %v9633 = vpop.f32.mrf.mxu0
        %v9634 = vadd.f32 %v9410, %v9633
        %v9635 = vpop.f32.mrf.mxu0
        %v9636 = vadd.f32 %v9410, %v9635
        %9637 = vmatmul.bf16.gmra.mxu0 %v9332
        %v9638 = vpop.f32.mrf.mxu0
        %v9639 = vadd.f32 %v9410, %v9638
        %v9640 = vpop.f32.mrf.mxu0
        %v9641 = vadd.f32 %v9410, %v9640
        %9642 = vmatmul.bf16.gmra.mxu0 %v9334
        %v9643 = vpop.f32.mrf.mxu0
        %v9644 = vadd.f32 %v9410, %v9643
        %v9645 = vpop.f32.mrf.mxu0
        %v9646 = vadd.f32 %v9410, %v9645
        %9647 = vmatmul.bf16.gmra.mxu0 %v9336
        %v9648 = vpop.f32.mrf.mxu0
        %v9649 = vadd.f32 %v9410, %v9648
        %v9650 = vpop.f32.mrf.mxu0
        %v9651 = vadd.f32 %v9410, %v9650
        %9652 = vmatmul.bf16.gmra.mxu0 %v9338
        %v9653 = vpop.f32.mrf.mxu0
        %v9654 = vadd.f32 %v9410, %v9653
        %v9655 = vpop.f32.mrf.mxu0
        %v9656 = vadd.f32 %v9410, %v9655
        %9657 = vmatmul.bf16.gmra.mxu0 %v9340
        %v9658 = vpop.f32.mrf.mxu0
        %v9659 = vadd.f32 %v9410, %v9658
        %v9660 = vpop.f32.mrf.mxu0
        %v9661 = vadd.f32 %v9410, %v9660
        %9662 = vmatmul.bf16.gmra.mxu0 %v9342
        %v9663 = vpop.f32.mrf.mxu0
        %v9664 = vadd.f32 %v9410, %v9663
        %v9665 = vpop.f32.mrf.mxu0
        %v9666 = vadd.f32 %v9410, %v9665
        %9667 = vmatmul.bf16.gmra.mxu0 %v9344
        %v9668 = vpop.f32.mrf.mxu0
        %v9669 = vadd.f32 %v9410, %v9668
        %v9670 = vpop.f32.mrf.mxu0
        %v9671 = vadd.f32 %v9410, %v9670
        %9672 = vmatmul.bf16.gmra.mxu0 %v9346
        %v9673 = vpop.f32.mrf.mxu0
        %v9674 = vadd.f32 %v9410, %v9673
        %v9675 = vpop.f32.mrf.mxu0
        %v9676 = vadd.f32 %v9410, %v9675
        %9677 = vmatmul.bf16.gmra.mxu0 %v9348
        %v9678 = vpop.f32.mrf.mxu0
        %v9679 = vadd.f32 %v9410, %v9678
        %v9680 = vpop.f32.mrf.mxu0
        %v9681 = vadd.f32 %v9410, %v9680
        %9682 = vmatmul.bf16.gmra.mxu0 %v9350
        %v9683 = vpop.f32.mrf.mxu0
        %v9684 = vadd.f32 %v9410, %v9683
        %v9685 = vpop.f32.mrf.mxu0
        %v9686 = vadd.f32 %v9410, %v9685
        %9687 = vmatmul.bf16.gmra.mxu0 %v9352
        %v9688 = vpop.f32.mrf.mxu0
        %v9689 = vadd.f32 %v9410, %v9688
        %v9690 = vpop.f32.mrf.mxu0
        %v9691 = vadd.f32 %v9410, %v9690
        %9692 = vmatmul.bf16.gmra.mxu0 %v9354
        %v9693 = vpop.f32.mrf.mxu0
        %v9694 = vadd.f32 %v9410, %v9693
        %v9695 = vpop.f32.mrf.mxu0
        %v9696 = vadd.f32 %v9410, %v9695
        %9697 = vmatmul.bf16.gmra.mxu0 %v9356
        %v9698 = vpop.f32.mrf.mxu0
        %v9699 = vadd.f32 %v9410, %v9698
        %v9700 = vpop.f32.mrf.mxu0
        %v9701 = vadd.f32 %v9410, %v9700
        %9702 = vmatmul.bf16.gmra.mxu0 %v9358
        %v9703 = vpop.f32.mrf.mxu0
        %v9704 = vadd.f32 %v9410, %v9703
        %v9705 = vpop.f32.mrf.mxu0
        %v9706 = vadd.f32 %v9410, %v9705
        %9707 = vmatmul.bf16.gmra.mxu0 %v9360
        %v9708 = vpop.f32.mrf.mxu0
        %v9709 = vadd.f32 %v9410, %v9708
        %v9710 = vpop.f32.mrf.mxu0
        %v9711 = vadd.f32 %v9410, %v9710
        %9712 = vmatmul.bf16.gmra.mxu0 %v9362
        %v9713 = vpop.f32.mrf.mxu0
        %v9714 = vadd.f32 %v9410, %v9713
        %v9715 = vpop.f32.mrf.mxu0
        %v9716 = vadd.f32 %v9410, %v9715
        %9717 = vmatmul.bf16.gmra.mxu0 %v9364
        %v9718 = vpop.f32.mrf.mxu0
        %v9719 = vadd.f32 %v9410, %v9718
        %v9720 = vpop.f32.mrf.mxu0
        %v9721 = vadd.f32 %v9410, %v9720
        %9722 = vmatmul.bf16.gmra.mxu0 %v9366
        %v9723 = vpop.f32.mrf.mxu0
        %v9724 = vadd.f32 %v9410, %v9723
        %v9725 = vpop.f32.mrf.mxu0
        %v9726 = vadd.f32 %v9410, %v9725
        %9727 = vmatmul.bf16.gmra.mxu0 %v9368
        %v9728 = vpop.f32.mrf.mxu0
        %v9729 = vadd.f32 %v9410, %v9728
        %v9730 = vpop.f32.mrf.mxu0
        %v9731 = vadd.f32 %v9410, %v9730
        %9732 = vmatmul.bf16.gmra.mxu0 %v9370
        %v9733 = vpop.f32.mrf.mxu0
        %v9734 = vadd.f32 %v9410, %v9733
        %v9735 = vpop.f32.mrf.mxu0
        %v9736 = vadd.f32 %v9410, %v9735
        %9737 = vmatmul.bf16.gmra.mxu0 %v9372
        %v9738 = vpop.f32.mrf.mxu0
        %v9739 = vadd.f32 %v9410, %v9738
        %v9740 = vpop.f32.mrf.mxu0
        %v9741 = vadd.f32 %v9410, %v9740
        %9742 = vdwg.mxu0
        %9743 = vmatpush.bf16.msra.mxu0 %v9540
        %9744 = vmatpush.bf16.msra.mxu0 %v9538
        %9745 = vmatpush.bf16.msra.mxu0 %v9536
        %9746 = vmatpush.bf16.msra.mxu0 %v9534
        %9747 = vmatpush.bf16.msra.mxu0 %v9532
        %9748 = vmatpush.bf16.msra.mxu0 %v9530
        %9749 = vmatpush.bf16.msra.mxu0 %v9528
        %9750 = vmatpush.bf16.msra.mxu0 %v9526
        %9751 = vmatmul.bf16.gmra.mxu0 %v9311
        %v9752 = vpop.f32.mrf.mxu0
        %v9753 = vadd.f32 %v9584, %v9752
        %v9754 = vpop.f32.mrf.mxu0
        %v9755 = vadd.f32 %v9586, %v9754
        %9756 = vmatmul.bf16.gmra.mxu0 %v9313
        %v9757 = vpop.f32.mrf.mxu0
        %v9758 = vadd.f32 %v9589, %v9757
        %v9759 = vpop.f32.mrf.mxu0
        %v9760 = vadd.f32 %v9591, %v9759
        %9761 = vmatmul.bf16.gmra.mxu0 %v9315
        %v9762 = vpop.f32.mrf.mxu0
        %v9763 = vadd.f32 %v9594, %v9762
        %v9764 = vpop.f32.mrf.mxu0
        %v9765 = vadd.f32 %v9596, %v9764
        %9766 = vmatmul.bf16.gmra.mxu0 %v9317
        %v9767 = vpop.f32.mrf.mxu0
        %v9768 = vadd.f32 %v9599, %v9767
        %v9769 = vpop.f32.mrf.mxu0
        %v9770 = vadd.f32 %v9601, %v9769
        %9771 = vmatmul.bf16.gmra.mxu0 %v9319
        %v9772 = vpop.f32.mrf.mxu0
        %v9773 = vadd.f32 %v9604, %v9772
        %v9774 = vpop.f32.mrf.mxu0
        %v9775 = vadd.f32 %v9606, %v9774
        %9776 = vmatmul.bf16.gmra.mxu0 %v9321
        %v9777 = vpop.f32.mrf.mxu0
        %v9778 = vadd.f32 %v9609, %v9777
        %v9779 = vpop.f32.mrf.mxu0
        %v9780 = vadd.f32 %v9611, %v9779
        %9781 = vmatmul.bf16.gmra.mxu0 %v9323
        %v9782 = vpop.f32.mrf.mxu0
        %v9783 = vadd.f32 %v9614, %v9782
        %v9784 = vpop.f32.mrf.mxu0
        %v9785 = vadd.f32 %v9616, %v9784
        %9786 = vmatmul.bf16.gmra.mxu0 %v9325
        %v9787 = vpop.f32.mrf.mxu0
        %v9788 = vadd.f32 %v9619, %v9787
        %v9789 = vpop.f32.mrf.mxu0
        %v9790 = vadd.f32 %v9621, %v9789
        %9791 = vmatmul.bf16.gmra.mxu0 %v9327
        %v9792 = vpop.f32.mrf.mxu0
        %v9793 = vadd.f32 %v9624, %v9792
        %v9794 = vpop.f32.mrf.mxu0
        %v9795 = vadd.f32 %v9626, %v9794
        %9796 = vmatmul.bf16.gmra.mxu0 %v9329
        %v9797 = vpop.f32.mrf.mxu0
        %v9798 = vadd.f32 %v9629, %v9797
        %v9799 = vpop.f32.mrf.mxu0
        %v9800 = vadd.f32 %v9631, %v9799
        %9801 = vmatmul.bf16.gmra.mxu0 %v9331
        %v9802 = vpop.f32.mrf.mxu0
        %v9803 = vadd.f32 %v9634, %v9802
        %v9804 = vpop.f32.mrf.mxu0
        %v9805 = vadd.f32 %v9636, %v9804
        %9806 = vmatmul.bf16.gmra.mxu0 %v9333
        %v9807 = vpop.f32.mrf.mxu0
        %v9808 = vadd.f32 %v9639, %v9807
        %v9809 = vpop.f32.mrf.mxu0
        %v9810 = vadd.f32 %v9641, %v9809
        %9811 = vmatmul.bf16.gmra.mxu0 %v9335
        %v9812 = vpop.f32.mrf.mxu0
        %v9813 = vadd.f32 %v9644, %v9812
        %v9814 = vpop.f32.mrf.mxu0
        %v9815 = vadd.f32 %v9646, %v9814
        %9816 = vmatmul.bf16.gmra.mxu0 %v9337
        %v9817 = vpop.f32.mrf.mxu0
        %v9818 = vadd.f32 %v9649, %v9817
        %v9819 = vpop.f32.mrf.mxu0
        %v9820 = vadd.f32 %v9651, %v9819
        %9821 = vmatmul.bf16.gmra.mxu0 %v9339
        %v9822 = vpop.f32.mrf.mxu0
        %v9823 = vadd.f32 %v9654, %v9822
        %v9824 = vpop.f32.mrf.mxu0
        %v9825 = vadd.f32 %v9656, %v9824
        %9826 = vmatmul.bf16.gmra.mxu0 %v9341
        %v9827 = vpop.f32.mrf.mxu0
        %v9828 = vadd.f32 %v9659, %v9827
        %v9829 = vpop.f32.mrf.mxu0
        %v9830 = vadd.f32 %v9661, %v9829
        %9831 = vmatmul.bf16.gmra.mxu0 %v9343
        %v9832 = vpop.f32.mrf.mxu0
        %v9833 = vadd.f32 %v9664, %v9832
        %v9834 = vpop.f32.mrf.mxu0
        %v9835 = vadd.f32 %v9666, %v9834
        %9836 = vmatmul.bf16.gmra.mxu0 %v9345
        %v9837 = vpop.f32.mrf.mxu0
        %v9838 = vadd.f32 %v9669, %v9837
        %v9839 = vpop.f32.mrf.mxu0
        %v9840 = vadd.f32 %v9671, %v9839
        %9841 = vmatmul.bf16.gmra.mxu0 %v9347
        %v9842 = vpop.f32.mrf.mxu0
        %v9843 = vadd.f32 %v9674, %v9842
        %v9844 = vpop.f32.mrf.mxu0
        %v9845 = vadd.f32 %v9676, %v9844
        %9846 = vmatmul.bf16.gmra.mxu0 %v9349
        %v9847 = vpop.f32.mrf.mxu0
        %v9848 = vadd.f32 %v9679, %v9847
        %v9849 = vpop.f32.mrf.mxu0
        %v9850 = vadd.f32 %v9681, %v9849
        %9851 = vmatmul.bf16.gmra.mxu0 %v9351
        %v9852 = vpop.f32.mrf.mxu0
        %v9853 = vadd.f32 %v9684, %v9852
        %v9854 = vpop.f32.mrf.mxu0
        %v9855 = vadd.f32 %v9686, %v9854
        %9856 = vmatmul.bf16.gmra.mxu0 %v9353
        %v9857 = vpop.f32.mrf.mxu0
        %v9858 = vadd.f32 %v9689, %v9857
        %v9859 = vpop.f32.mrf.mxu0
        %v9860 = vadd.f32 %v9691, %v9859
        %9861 = vmatmul.bf16.gmra.mxu0 %v9355
        %v9862 = vpop.f32.mrf.mxu0
        %v9863 = vadd.f32 %v9694, %v9862
        %v9864 = vpop.f32.mrf.mxu0
        %v9865 = vadd.f32 %v9696, %v9864
        %9866 = vmatmul.bf16.gmra.mxu0 %v9357
        %v9867 = vpop.f32.mrf.mxu0
        %v9868 = vadd.f32 %v9699, %v9867
        %v9869 = vpop.f32.mrf.mxu0
        %v9870 = vadd.f32 %v9701, %v9869
        %9871 = vmatmul.bf16.gmra.mxu0 %v9359
        %v9872 = vpop.f32.mrf.mxu0
        %v9873 = vadd.f32 %v9704, %v9872
        %v9874 = vpop.f32.mrf.mxu0
        %v9875 = vadd.f32 %v9706, %v9874
        %9876 = vmatmul.bf16.gmra.mxu0 %v9361
        %v9877 = vpop.f32.mrf.mxu0
        %v9878 = vadd.f32 %v9709, %v9877
        %v9879 = vpop.f32.mrf.mxu0
        %v9880 = vadd.f32 %v9711, %v9879
        %9881 = vmatmul.bf16.gmra.mxu0 %v9363
        %v9882 = vpop.f32.mrf.mxu0
        %v9883 = vadd.f32 %v9714, %v9882
        %v9884 = vpop.f32.mrf.mxu0
        %v9885 = vadd.f32 %v9716, %v9884
        %9886 = vmatmul.bf16.gmra.mxu0 %v9365
        %v9887 = vpop.f32.mrf.mxu0
        %v9888 = vadd.f32 %v9719, %v9887
        %v9889 = vpop.f32.mrf.mxu0
        %v9890 = vadd.f32 %v9721, %v9889
        %9891 = vmatmul.bf16.gmra.mxu0 %v9367
        %v9892 = vpop.f32.mrf.mxu0
        %v9893 = vadd.f32 %v9724, %v9892
        %v9894 = vpop.f32.mrf.mxu0
        %v9895 = vadd.f32 %v9726, %v9894
        %9896 = vmatmul.bf16.gmra.mxu0 %v9369
        %v9897 = vpop.f32.mrf.mxu0
        %v9898 = vadd.f32 %v9729, %v9897
        %v9899 = vpop.f32.mrf.mxu0
        %v9900 = vadd.f32 %v9731, %v9899
        %9901 = vmatmul.bf16.gmra.mxu0 %v9371
        %v9902 = vpop.f32.mrf.mxu0
        %v9903 = vadd.f32 %v9734, %v9902
        %v9904 = vpop.f32.mrf.mxu0
        %v9905 = vadd.f32 %v9736, %v9904
        %9906 = vmatmul.bf16.gmra.mxu0 %v9373
        %v9907 = vpop.f32.mrf.mxu0
        %v9908 = vadd.f32 %v9739, %v9907
        %v9909 = vpop.f32.mrf.mxu0
        %v9910 = vadd.f32 %v9741, %v9909
        %9911 = vdwg.mxu0
        %9912 = vmatpush.bf16.msra.mxu0 %v9525
        %9913 = vmatpush.bf16.msra.mxu0 %v9523
        %9914 = vmatpush.bf16.msra.mxu0 %v9521
        %9915 = vmatpush.bf16.msra.mxu0 %v9519
        %9916 = vmatpush.bf16.msra.mxu0 %v9517
        %9917 = vmatpush.bf16.msra.mxu0 %v9515
        %9918 = vmatpush.bf16.msra.mxu0 %v9513
        %9919 = vmatpush.bf16.msra.mxu0 %v9511
        %9920 = vmatmul.bf16.gmra.mxu0 %v9310
        %v9921 = vpop.f32.mrf.mxu0
        %v9922 = vadd.f32 %v9411, %v9921
        %v9923 = vpop.f32.mrf.mxu0
        %v9924 = vadd.f32 %v9411, %v9923
        %9925 = vmatmul.bf16.gmra.mxu0 %v9312
        %v9926 = vpop.f32.mrf.mxu0
        %v9927 = vadd.f32 %v9411, %v9926
        %v9928 = vpop.f32.mrf.mxu0
        %v9929 = vadd.f32 %v9411, %v9928
        %9930 = vmatmul.bf16.gmra.mxu0 %v9314
        %v9931 = vpop.f32.mrf.mxu0
        %v9932 = vadd.f32 %v9411, %v9931
        %v9933 = vpop.f32.mrf.mxu0
        %v9934 = vadd.f32 %v9411, %v9933
        %9935 = vmatmul.bf16.gmra.mxu0 %v9316
        %v9936 = vpop.f32.mrf.mxu0
        %v9937 = vadd.f32 %v9411, %v9936
        %v9938 = vpop.f32.mrf.mxu0
        %v9939 = vadd.f32 %v9411, %v9938
        %9940 = vmatmul.bf16.gmra.mxu0 %v9318
        %v9941 = vpop.f32.mrf.mxu0
        %v9942 = vadd.f32 %v9411, %v9941
        %v9943 = vpop.f32.mrf.mxu0
        %v9944 = vadd.f32 %v9411, %v9943
        %9945 = vmatmul.bf16.gmra.mxu0 %v9320
        %v9946 = vpop.f32.mrf.mxu0
        %v9947 = vadd.f32 %v9411, %v9946
        %v9948 = vpop.f32.mrf.mxu0
        %v9949 = vadd.f32 %v9411, %v9948
        %9950 = vmatmul.bf16.gmra.mxu0 %v9322
        %v9951 = vpop.f32.mrf.mxu0
        %v9952 = vadd.f32 %v9411, %v9951
        %v9953 = vpop.f32.mrf.mxu0
        %v9954 = vadd.f32 %v9411, %v9953
        %9955 = vmatmul.bf16.gmra.mxu0 %v9324
        %v9956 = vpop.f32.mrf.mxu0
        %v9957 = vadd.f32 %v9411, %v9956
        %v9958 = vpop.f32.mrf.mxu0
        %v9959 = vadd.f32 %v9411, %v9958
        %9960 = vmatmul.bf16.gmra.mxu0 %v9326
        %v9961 = vpop.f32.mrf.mxu0
        %v9962 = vadd.f32 %v9411, %v9961
        %v9963 = vpop.f32.mrf.mxu0
        %v9964 = vadd.f32 %v9411, %v9963
        %9965 = vmatmul.bf16.gmra.mxu0 %v9328
        %v9966 = vpop.f32.mrf.mxu0
        %v9967 = vadd.f32 %v9411, %v9966
        %v9968 = vpop.f32.mrf.mxu0
        %v9969 = vadd.f32 %v9411, %v9968
        %9970 = vmatmul.bf16.gmra.mxu0 %v9330
        %v9971 = vpop.f32.mrf.mxu0
        %v9972 = vadd.f32 %v9411, %v9971
        %v9973 = vpop.f32.mrf.mxu0
        %v9974 = vadd.f32 %v9411, %v9973
        %9975 = vmatmul.bf16.gmra.mxu0 %v9332
        %v9976 = vpop.f32.mrf.mxu0
        %v9977 = vadd.f32 %v9411, %v9976
        %v9978 = vpop.f32.mrf.mxu0
        %v9979 = vadd.f32 %v9411, %v9978
        %9980 = vmatmul.bf16.gmra.mxu0 %v9334
        %v9981 = vpop.f32.mrf.mxu0
        %v9982 = vadd.f32 %v9411, %v9981
        %v9983 = vpop.f32.mrf.mxu0
        %v9984 = vadd.f32 %v9411, %v9983
        %9985 = vmatmul.bf16.gmra.mxu0 %v9336
        %v9986 = vpop.f32.mrf.mxu0
        %v9987 = vadd.f32 %v9411, %v9986
        %v9988 = vpop.f32.mrf.mxu0
        %v9989 = vadd.f32 %v9411, %v9988
        %9990 = vmatmul.bf16.gmra.mxu0 %v9338
        %v9991 = vpop.f32.mrf.mxu0
        %v9992 = vadd.f32 %v9411, %v9991
        %v9993 = vpop.f32.mrf.mxu0
        %v9994 = vadd.f32 %v9411, %v9993
        %9995 = vmatmul.bf16.gmra.mxu0 %v9340
        %v9996 = vpop.f32.mrf.mxu0
        %v9997 = vadd.f32 %v9411, %v9996
        %v9998 = vpop.f32.mrf.mxu0
        %v9999 = vadd.f32 %v9411, %v9998
        %10000 = vmatmul.bf16.gmra.mxu0 %v9342
        %v10001 = vpop.f32.mrf.mxu0
        %v10002 = vadd.f32 %v9411, %v10001
        %v10003 = vpop.f32.mrf.mxu0
        %v10004 = vadd.f32 %v9411, %v10003
        %10005 = vmatmul.bf16.gmra.mxu0 %v9344
        %v10006 = vpop.f32.mrf.mxu0
        %v10007 = vadd.f32 %v9411, %v10006
        %v10008 = vpop.f32.mrf.mxu0
        %v10009 = vadd.f32 %v9411, %v10008
        %10010 = vmatmul.bf16.gmra.mxu0 %v9346
        %v10011 = vpop.f32.mrf.mxu0
        %v10012 = vadd.f32 %v9411, %v10011
        %v10013 = vpop.f32.mrf.mxu0
        %v10014 = vadd.f32 %v9411, %v10013
        %10015 = vmatmul.bf16.gmra.mxu0 %v9348
        %v10016 = vpop.f32.mrf.mxu0
        %v10017 = vadd.f32 %v9411, %v10016
        %v10018 = vpop.f32.mrf.mxu0
        %v10019 = vadd.f32 %v9411, %v10018
        %10020 = vmatmul.bf16.gmra.mxu0 %v9350
        %v10021 = vpop.f32.mrf.mxu0
        %v10022 = vadd.f32 %v9411, %v10021
        %v10023 = vpop.f32.mrf.mxu0
        %v10024 = vadd.f32 %v9411, %v10023
        %10025 = vmatmul.bf16.gmra.mxu0 %v9352
        %v10026 = vpop.f32.mrf.mxu0
        %v10027 = vadd.f32 %v9411, %v10026
        %v10028 = vpop.f32.mrf.mxu0
        %v10029 = vadd.f32 %v9411, %v10028
        %10030 = vmatmul.bf16.gmra.mxu0 %v9354
        %v10031 = vpop.f32.mrf.mxu0
        %v10032 = vadd.f32 %v9411, %v10031
        %v10033 = vpop.f32.mrf.mxu0
        %v10034 = vadd.f32 %v9411, %v10033
        %10035 = vmatmul.bf16.gmra.mxu0 %v9356
        %v10036 = vpop.f32.mrf.mxu0
        %v10037 = vadd.f32 %v9411, %v10036
        %v10038 = vpop.f32.mrf.mxu0
        %v10039 = vadd.f32 %v9411, %v10038
        %10040 = vmatmul.bf16.gmra.mxu0 %v9358
        %v10041 = vpop.f32.mrf.mxu0
        %v10042 = vadd.f32 %v9411, %v10041
        %v10043 = vpop.f32.mrf.mxu0
        %v10044 = vadd.f32 %v9411, %v10043
        %10045 = vmatmul.bf16.gmra.mxu0 %v9360
        %v10046 = vpop.f32.mrf.mxu0
        %v10047 = vadd.f32 %v9411, %v10046
        %v10048 = vpop.f32.mrf.mxu0
        %v10049 = vadd.f32 %v9411, %v10048
        %10050 = vmatmul.bf16.gmra.mxu0 %v9362
        %v10051 = vpop.f32.mrf.mxu0
        %v10052 = vadd.f32 %v9411, %v10051
        %v10053 = vpop.f32.mrf.mxu0
        %v10054 = vadd.f32 %v9411, %v10053
        %10055 = vmatmul.bf16.gmra.mxu0 %v9364
        %v10056 = vpop.f32.mrf.mxu0
        %v10057 = vadd.f32 %v9411, %v10056
        %v10058 = vpop.f32.mrf.mxu0
        %v10059 = vadd.f32 %v9411, %v10058
        %10060 = vmatmul.bf16.gmra.mxu0 %v9366
        %v10061 = vpop.f32.mrf.mxu0
        %v10062 = vadd.f32 %v9411, %v10061
        %v10063 = vpop.f32.mrf.mxu0
        %v10064 = vadd.f32 %v9411, %v10063
        %10065 = vmatmul.bf16.gmra.mxu0 %v9368
        %v10066 = vpop.f32.mrf.mxu0
        %v10067 = vadd.f32 %v9411, %v10066
        %v10068 = vpop.f32.mrf.mxu0
        %v10069 = vadd.f32 %v9411, %v10068
        %10070 = vmatmul.bf16.gmra.mxu0 %v9370
        %v10071 = vpop.f32.mrf.mxu0
        %v10072 = vadd.f32 %v9411, %v10071
        %v10073 = vpop.f32.mrf.mxu0
        %v10074 = vadd.f32 %v9411, %v10073
        %10075 = vmatmul.bf16.gmra.mxu0 %v9372
        %v10076 = vpop.f32.mrf.mxu0
        %v10077 = vadd.f32 %v9411, %v10076
        %v10078 = vpop.f32.mrf.mxu0
        %v10079 = vadd.f32 %v9411, %v10078
        %10080 = vdwg.mxu0
        %10081 = vmatpush.bf16.msra.mxu0 %v9541
        %10082 = vmatpush.bf16.msra.mxu0 %v9539
        %10083 = vmatpush.bf16.msra.mxu0 %v9537
        %10084 = vmatpush.bf16.msra.mxu0 %v9535
        %10085 = vmatpush.bf16.msra.mxu0 %v9533
        %10086 = vmatpush.bf16.msra.mxu0 %v9531
        %10087 = vmatpush.bf16.msra.mxu0 %v9529
        %10088 = vmatpush.bf16.msra.mxu0 %v9527
        %10089 = vmatmul.bf16.gmra.mxu0 %v9311
        %v10090 = vpop.f32.mrf.mxu0
        %v10091 = vadd.f32 %v9922, %v10090
        %v10092 = vpop.f32.mrf.mxu0
        %v10093 = vadd.f32 %v9924, %v10092
        %10094 = vmatmul.bf16.gmra.mxu0 %v9313
        %v10095 = vpop.f32.mrf.mxu0
        %v10096 = vadd.f32 %v9927, %v10095
        %v10097 = vpop.f32.mrf.mxu0
        %v10098 = vadd.f32 %v9929, %v10097
        %10099 = vmatmul.bf16.gmra.mxu0 %v9315
        %v10100 = vpop.f32.mrf.mxu0
        %v10101 = vadd.f32 %v9932, %v10100
        %v10102 = vpop.f32.mrf.mxu0
        %v10103 = vadd.f32 %v9934, %v10102
        %10104 = vmatmul.bf16.gmra.mxu0 %v9317
        %v10105 = vpop.f32.mrf.mxu0
        %v10106 = vadd.f32 %v9937, %v10105
        %v10107 = vpop.f32.mrf.mxu0
        %v10108 = vadd.f32 %v9939, %v10107
        %10109 = vmatmul.bf16.gmra.mxu0 %v9319
        %v10110 = vpop.f32.mrf.mxu0
        %v10111 = vadd.f32 %v9942, %v10110
        %v10112 = vpop.f32.mrf.mxu0
        %v10113 = vadd.f32 %v9944, %v10112
        %10114 = vmatmul.bf16.gmra.mxu0 %v9321
        %v10115 = vpop.f32.mrf.mxu0
        %v10116 = vadd.f32 %v9947, %v10115
        %v10117 = vpop.f32.mrf.mxu0
        %v10118 = vadd.f32 %v9949, %v10117
        %10119 = vmatmul.bf16.gmra.mxu0 %v9323
        %v10120 = vpop.f32.mrf.mxu0
        %v10121 = vadd.f32 %v9952, %v10120
        %v10122 = vpop.f32.mrf.mxu0
        %v10123 = vadd.f32 %v9954, %v10122
        %10124 = vmatmul.bf16.gmra.mxu0 %v9325
        %v10125 = vpop.f32.mrf.mxu0
        %v10126 = vadd.f32 %v9957, %v10125
        %v10127 = vpop.f32.mrf.mxu0
        %v10128 = vadd.f32 %v9959, %v10127
        %10129 = vmatmul.bf16.gmra.mxu0 %v9327
        %v10130 = vpop.f32.mrf.mxu0
        %v10131 = vadd.f32 %v9962, %v10130
        %v10132 = vpop.f32.mrf.mxu0
        %v10133 = vadd.f32 %v9964, %v10132
        %10134 = vmatmul.bf16.gmra.mxu0 %v9329
        %v10135 = vpop.f32.mrf.mxu0
        %v10136 = vadd.f32 %v9967, %v10135
        %v10137 = vpop.f32.mrf.mxu0
        %v10138 = vadd.f32 %v9969, %v10137
        %10139 = vmatmul.bf16.gmra.mxu0 %v9331
        %v10140 = vpop.f32.mrf.mxu0
        %v10141 = vadd.f32 %v9972, %v10140
        %v10142 = vpop.f32.mrf.mxu0
        %v10143 = vadd.f32 %v9974, %v10142
        %10144 = vmatmul.bf16.gmra.mxu0 %v9333
        %v10145 = vpop.f32.mrf.mxu0
        %v10146 = vadd.f32 %v9977, %v10145
        %v10147 = vpop.f32.mrf.mxu0
        %v10148 = vadd.f32 %v9979, %v10147
        %10149 = vmatmul.bf16.gmra.mxu0 %v9335
        %v10150 = vpop.f32.mrf.mxu0
        %v10151 = vadd.f32 %v9982, %v10150
        %v10152 = vpop.f32.mrf.mxu0
        %v10153 = vadd.f32 %v9984, %v10152
        %10154 = vmatmul.bf16.gmra.mxu0 %v9337
        %v10155 = vpop.f32.mrf.mxu0
        %v10156 = vadd.f32 %v9987, %v10155
        %v10157 = vpop.f32.mrf.mxu0
        %v10158 = vadd.f32 %v9989, %v10157
        %10159 = vmatmul.bf16.gmra.mxu0 %v9339
        %v10160 = vpop.f32.mrf.mxu0
        %v10161 = vadd.f32 %v9992, %v10160
        %v10162 = vpop.f32.mrf.mxu0
        %v10163 = vadd.f32 %v9994, %v10162
        %10164 = vmatmul.bf16.gmra.mxu0 %v9341
        %v10165 = vpop.f32.mrf.mxu0
        %v10166 = vadd.f32 %v9997, %v10165
        %v10167 = vpop.f32.mrf.mxu0
        %v10168 = vadd.f32 %v9999, %v10167
        %10169 = vmatmul.bf16.gmra.mxu0 %v9343
        %v10170 = vpop.f32.mrf.mxu0
        %v10171 = vadd.f32 %v10002, %v10170
        %v10172 = vpop.f32.mrf.mxu0
        %v10173 = vadd.f32 %v10004, %v10172
        %10174 = vmatmul.bf16.gmra.mxu0 %v9345
        %v10175 = vpop.f32.mrf.mxu0
        %v10176 = vadd.f32 %v10007, %v10175
        %v10177 = vpop.f32.mrf.mxu0
        %v10178 = vadd.f32 %v10009, %v10177
        %10179 = vmatmul.bf16.gmra.mxu0 %v9347
        %v10180 = vpop.f32.mrf.mxu0
        %v10181 = vadd.f32 %v10012, %v10180
        %v10182 = vpop.f32.mrf.mxu0
        %v10183 = vadd.f32 %v10014, %v10182
        %10184 = vmatmul.bf16.gmra.mxu0 %v9349
        %v10185 = vpop.f32.mrf.mxu0
        %v10186 = vadd.f32 %v10017, %v10185
        %v10187 = vpop.f32.mrf.mxu0
        %v10188 = vadd.f32 %v10019, %v10187
        %10189 = vmatmul.bf16.gmra.mxu0 %v9351
        %v10190 = vpop.f32.mrf.mxu0
        %v10191 = vadd.f32 %v10022, %v10190
        %v10192 = vpop.f32.mrf.mxu0
        %v10193 = vadd.f32 %v10024, %v10192
        %10194 = vmatmul.bf16.gmra.mxu0 %v9353
        %v10195 = vpop.f32.mrf.mxu0
        %v10196 = vadd.f32 %v10027, %v10195
        %v10197 = vpop.f32.mrf.mxu0
        %v10198 = vadd.f32 %v10029, %v10197
        %10199 = vmatmul.bf16.gmra.mxu0 %v9355
        %v10200 = vpop.f32.mrf.mxu0
        %v10201 = vadd.f32 %v10032, %v10200
        %v10202 = vpop.f32.mrf.mxu0
        %v10203 = vadd.f32 %v10034, %v10202
        %10204 = vmatmul.bf16.gmra.mxu0 %v9357
        %v10205 = vpop.f32.mrf.mxu0
        %v10206 = vadd.f32 %v10037, %v10205
        %v10207 = vpop.f32.mrf.mxu0
        %v10208 = vadd.f32 %v10039, %v10207
        %10209 = vmatmul.bf16.gmra.mxu0 %v9359
        %v10210 = vpop.f32.mrf.mxu0
        %v10211 = vadd.f32 %v10042, %v10210
        %v10212 = vpop.f32.mrf.mxu0
        %v10213 = vadd.f32 %v10044, %v10212
        %10214 = vmatmul.bf16.gmra.mxu0 %v9361
        %v10215 = vpop.f32.mrf.mxu0
        %v10216 = vadd.f32 %v10047, %v10215
        %v10217 = vpop.f32.mrf.mxu0
        %v10218 = vadd.f32 %v10049, %v10217
        %10219 = vmatmul.bf16.gmra.mxu0 %v9363
        %v10220 = vpop.f32.mrf.mxu0
        %v10221 = vadd.f32 %v10052, %v10220
        %v10222 = vpop.f32.mrf.mxu0
        %v10223 = vadd.f32 %v10054, %v10222
        %10224 = vmatmul.bf16.gmra.mxu0 %v9365
        %v10225 = vpop.f32.mrf.mxu0
        %v10226 = vadd.f32 %v10057, %v10225
        %v10227 = vpop.f32.mrf.mxu0
        %v10228 = vadd.f32 %v10059, %v10227
        %10229 = vmatmul.bf16.gmra.mxu0 %v9367
        %v10230 = vpop.f32.mrf.mxu0
        %v10231 = vadd.f32 %v10062, %v10230
        %v10232 = vpop.f32.mrf.mxu0
        %v10233 = vadd.f32 %v10064, %v10232
        %10234 = vmatmul.bf16.gmra.mxu0 %v9369
        %v10235 = vpop.f32.mrf.mxu0
        %v10236 = vadd.f32 %v10067, %v10235
        %v10237 = vpop.f32.mrf.mxu0
        %v10238 = vadd.f32 %v10069, %v10237
        %10239 = vmatmul.bf16.gmra.mxu0 %v9371
        %v10240 = vpop.f32.mrf.mxu0
        %v10241 = vadd.f32 %v10072, %v10240
        %v10242 = vpop.f32.mrf.mxu0
        %v10243 = vadd.f32 %v10074, %v10242
        %10244 = vmatmul.bf16.gmra.mxu0 %v9373
        %v10245 = vpop.f32.mrf.mxu0
        %v10246 = vadd.f32 %v10077, %v10245
        %v10247 = vpop.f32.mrf.mxu0
        %v10248 = vadd.f32 %v10079, %v10247
        %10249 = vdwg.mxu0
        %v10250 = vmax.f32 %v9753, 0.0
        %v10251 = vmax.f32 %v10091, 0.0
        %v10252 = vmax.f32 %v9755, 0.0
        %v10253 = vmax.f32 %v10093, 0.0
        %v10254 = vmax.f32 %v9758, 0.0
        %v10255 = vmax.f32 %v10096, 0.0
        %v10256 = vmax.f32 %v9760, 0.0
        %v10257 = vmax.f32 %v10098, 0.0
        %v10258 = vmax.f32 %v9763, 0.0
        %v10259 = vmax.f32 %v10101, 0.0
        %v10260 = vmax.f32 %v9765, 0.0
        %v10261 = vmax.f32 %v10103, 0.0
        %v10262 = vmax.f32 %v9768, 0.0
        %v10263 = vmax.f32 %v10106, 0.0
        %v10264 = vmax.f32 %v9770, 0.0
        %v10265 = vmax.f32 %v10108, 0.0
        %v10266 = vmax.f32 %v9773, 0.0
        %v10267 = vmax.f32 %v10111, 0.0
        %v10268 = vmax.f32 %v9775, 0.0
        %v10269 = vmax.f32 %v10113, 0.0
        %v10270 = vmax.f32 %v9778, 0.0
        %v10271 = vmax.f32 %v10116, 0.0
        %v10272 = vmax.f32 %v9780, 0.0
        %v10273 = vmax.f32 %v10118, 0.0
        %v10274 = vmax.f32 %v9783, 0.0
        %v10275 = vmax.f32 %v10121, 0.0
        %v10276 = vmax.f32 %v9785, 0.0
        %v10277 = vmax.f32 %v10123, 0.0
        %v10278 = vmax.f32 %v9788, 0.0
        %v10279 = vmax.f32 %v10126, 0.0
        %v10280 = vmax.f32 %v9790, 0.0
        %v10281 = vmax.f32 %v10128, 0.0
        %v10282 = vmax.f32 %v9793, 0.0
        %v10283 = vmax.f32 %v10131, 0.0
        %v10284 = vmax.f32 %v9795, 0.0
        %v10285 = vmax.f32 %v10133, 0.0
        %v10286 = vmax.f32 %v9798, 0.0
        %v10287 = vmax.f32 %v10136, 0.0
        %v10288 = vmax.f32 %v9800, 0.0
        %v10289 = vmax.f32 %v10138, 0.0
        %v10290 = vmax.f32 %v9803, 0.0
        %v10291 = vmax.f32 %v10141, 0.0
        %v10292 = vmax.f32 %v9805, 0.0
        %v10293 = vmax.f32 %v10143, 0.0
        %v10294 = vmax.f32 %v9808, 0.0
        %v10295 = vmax.f32 %v10146, 0.0
        %v10296 = vmax.f32 %v9810, 0.0
        %v10297 = vmax.f32 %v10148, 0.0
        %v10298 = vmax.f32 %v9813, 0.0
        %v10299 = vmax.f32 %v10151, 0.0
        %v10300 = vmax.f32 %v9815, 0.0
        %v10301 = vmax.f32 %v10153, 0.0
        %v10302 = vmax.f32 %v9818, 0.0
        %v10303 = vmax.f32 %v10156, 0.0
        %v10304 = vmax.f32 %v9820, 0.0
        %v10305 = vmax.f32 %v10158, 0.0
        %v10306 = vmax.f32 %v9823, 0.0
        %v10307 = vmax.f32 %v10161, 0.0
        %v10308 = vmax.f32 %v9825, 0.0
        %v10309 = vmax.f32 %v10163, 0.0
        %v10310 = vmax.f32 %v9828, 0.0
        %v10311 = vmax.f32 %v10166, 0.0
        %v10312 = vmax.f32 %v9830, 0.0
        %v10313 = vmax.f32 %v10168, 0.0
        %v10314 = vmax.f32 %v9833, 0.0
        %v10315 = vmax.f32 %v10171, 0.0
        %v10316 = vmax.f32 %v9835, 0.0
        %v10317 = vmax.f32 %v10173, 0.0
        %v10318 = vmax.f32 %v9838, 0.0
        %v10319 = vmax.f32 %v10176, 0.0
        %v10320 = vmax.f32 %v9840, 0.0
        %v10321 = vmax.f32 %v10178, 0.0
        %v10322 = vmax.f32 %v9843, 0.0
        %v10323 = vmax.f32 %v10181, 0.0
        %v10324 = vmax.f32 %v9845, 0.0
        %v10325 = vmax.f32 %v10183, 0.0
        %v10326 = vmax.f32 %v9848, 0.0
        %v10327 = vmax.f32 %v10186, 0.0
        %v10328 = vmax.f32 %v9850, 0.0
        %v10329 = vmax.f32 %v10188, 0.0
        %v10330 = vmax.f32 %v9853, 0.0
        %v10331 = vmax.f32 %v10191, 0.0
        %v10332 = vmax.f32 %v9855, 0.0
        %v10333 = vmax.f32 %v10193, 0.0
        %v10334 = vmax.f32 %v9858, 0.0
        %v10335 = vmax.f32 %v10196, 0.0
        %v10336 = vmax.f32 %v9860, 0.0
        %v10337 = vmax.f32 %v10198, 0.0
        %v10338 = vmax.f32 %v9863, 0.0
        %v10339 = vmax.f32 %v10201, 0.0
        %v10340 = vmax.f32 %v9865, 0.0
        %v10341 = vmax.f32 %v10203, 0.0
        %v10342 = vmax.f32 %v9868, 0.0
        %v10343 = vmax.f32 %v10206, 0.0
        %v10344 = vmax.f32 %v9870, 0.0
        %v10345 = vmax.f32 %v10208, 0.0
        %v10346 = vmax.f32 %v9873, 0.0
        %v10347 = vmax.f32 %v10211, 0.0
        %v10348 = vmax.f32 %v9875, 0.0
        %v10349 = vmax.f32 %v10213, 0.0
        %v10350 = vmax.f32 %v9878, 0.0
        %v10351 = vmax.f32 %v10216, 0.0
        %v10352 = vmax.f32 %v9880, 0.0
        %v10353 = vmax.f32 %v10218, 0.0
        %v10354 = vmax.f32 %v9883, 0.0
        %v10355 = vmax.f32 %v10221, 0.0
        %v10356 = vmax.f32 %v9885, 0.0
        %v10357 = vmax.f32 %v10223, 0.0
        %v10358 = vmax.f32 %v9888, 0.0
        %v10359 = vmax.f32 %v10226, 0.0
        %v10360 = vmax.f32 %v9890, 0.0
        %v10361 = vmax.f32 %v10228, 0.0
        %v10362 = vmax.f32 %v9893, 0.0
        %v10363 = vmax.f32 %v10231, 0.0
        %v10364 = vmax.f32 %v9895, 0.0
        %v10365 = vmax.f32 %v10233, 0.0
        %v10366 = vmax.f32 %v9898, 0.0
        %v10367 = vmax.f32 %v10236, 0.0
        %v10368 = vmax.f32 %v9900, 0.0
        %v10369 = vmax.f32 %v10238, 0.0
        %v10370 = vmax.f32 %v9903, 0.0
        %v10371 = vmax.f32 %v10241, 0.0
        %v10372 = vmax.f32 %v9905, 0.0
        %v10373 = vmax.f32 %v10243, 0.0
        %v10374 = vmax.f32 %v9908, 0.0
        %v10375 = vmax.f32 %v10246, 0.0
        %v10376 = vmax.f32 %v9910, 0.0
        %v10377 = vmax.f32 %v10248, 0.0
        %v10378 = vpack.c.bf16 %v10252, %v10250
        %v10379 = vpack.c.bf16 %v10253, %v10251
        %v10380 = vpack.c.bf16 %v10256, %v10254
        %v10381 = vpack.c.bf16 %v10257, %v10255
        %v10382 = vpack.c.bf16 %v10260, %v10258
        %v10383 = vpack.c.bf16 %v10261, %v10259
        %v10384 = vpack.c.bf16 %v10264, %v10262
        %v10385 = vpack.c.bf16 %v10265, %v10263
        %v10386 = vpack.c.bf16 %v10268, %v10266
        %v10387 = vpack.c.bf16 %v10269, %v10267
        %v10388 = vpack.c.bf16 %v10272, %v10270
        %v10389 = vpack.c.bf16 %v10273, %v10271
        %v10390 = vpack.c.bf16 %v10276, %v10274
        %v10391 = vpack.c.bf16 %v10277, %v10275
        %v10392 = vpack.c.bf16 %v10280, %v10278
        %v10393 = vpack.c.bf16 %v10281, %v10279
        %v10394 = vpack.c.bf16 %v10284, %v10282
        %v10395 = vpack.c.bf16 %v10285, %v10283
        %v10396 = vpack.c.bf16 %v10288, %v10286
        %v10397 = vpack.c.bf16 %v10289, %v10287
        %v10398 = vpack.c.bf16 %v10292, %v10290
        %v10399 = vpack.c.bf16 %v10293, %v10291
        %v10400 = vpack.c.bf16 %v10296, %v10294
        %v10401 = vpack.c.bf16 %v10297, %v10295
        %v10402 = vpack.c.bf16 %v10300, %v10298
        %v10403 = vpack.c.bf16 %v10301, %v10299
        %v10404 = vpack.c.bf16 %v10304, %v10302
        %v10405 = vpack.c.bf16 %v10305, %v10303
        %v10406 = vpack.c.bf16 %v10308, %v10306
        %v10407 = vpack.c.bf16 %v10309, %v10307
        %v10408 = vpack.c.bf16 %v10312, %v10310
        %v10409 = vpack.c.bf16 %v10313, %v10311
        %v10410 = vpack.c.bf16 %v10316, %v10314
        %v10411 = vpack.c.bf16 %v10317, %v10315
        %v10412 = vpack.c.bf16 %v10320, %v10318
        %v10413 = vpack.c.bf16 %v10321, %v10319
        %v10414 = vpack.c.bf16 %v10324, %v10322
        %v10415 = vpack.c.bf16 %v10325, %v10323
        %v10416 = vpack.c.bf16 %v10328, %v10326
        %v10417 = vpack.c.bf16 %v10329, %v10327
        %v10418 = vpack.c.bf16 %v10332, %v10330
        %v10419 = vpack.c.bf16 %v10333, %v10331
        %v10420 = vpack.c.bf16 %v10336, %v10334
        %v10421 = vpack.c.bf16 %v10337, %v10335
        %v10422 = vpack.c.bf16 %v10340, %v10338
        %v10423 = vpack.c.bf16 %v10341, %v10339
        %v10424 = vpack.c.bf16 %v10344, %v10342
        %v10425 = vpack.c.bf16 %v10345, %v10343
        %v10426 = vpack.c.bf16 %v10348, %v10346
        %v10427 = vpack.c.bf16 %v10349, %v10347
        %v10428 = vpack.c.bf16 %v10352, %v10350
        %v10429 = vpack.c.bf16 %v10353, %v10351
        %v10430 = vpack.c.bf16 %v10356, %v10354
        %v10431 = vpack.c.bf16 %v10357, %v10355
        %v10432 = vpack.c.bf16 %v10360, %v10358
        %v10433 = vpack.c.bf16 %v10361, %v10359
        %v10434 = vpack.c.bf16 %v10364, %v10362
        %v10435 = vpack.c.bf16 %v10365, %v10363
        %v10436 = vpack.c.bf16 %v10368, %v10366
        %v10437 = vpack.c.bf16 %v10369, %v10367
        %v10438 = vpack.c.bf16 %v10372, %v10370
        %v10439 = vpack.c.bf16 %v10373, %v10371
        %v10440 = vpack.c.bf16 %v10376, %v10374
        %v10441 = vpack.c.bf16 %v10377, %v10375
        %v10442 = vld [vmem:[%s5] sm:$0xf]
        %v10443 = vld [vmem:[%s5 + $0x4] sm:$0xf]
        %v10444 = vld [vmem:[%s5 + $0x8] sm:$0xf]
        %v10445 = vld [vmem:[%s5 + $0xc] sm:$0xf]
        %v10446 = vld [vmem:[%s5 + $0x10] sm:$0xf]
        %v10447 = vld [vmem:[%s5 + $0x14] sm:$0xf]
        %v10448 = vld [vmem:[%s5 + $0x18] sm:$0xf]
        %v10449 = vld [vmem:[%s5 + $0x1c] sm:$0xf]
        %v10450 = vld [vmem:[%s5 + $0x20] sm:$0xf]
        %v10451 = vld [vmem:[%s5 + $0x24] sm:$0xf]
        %v10452 = vld [vmem:[%s5 + $0x28] sm:$0xf]
        %v10453 = vld [vmem:[%s5 + $0x2c] sm:$0xf]
        %v10454 = vld [vmem:[%s5 + $0x30] sm:$0xf]
        %v10455 = vld [vmem:[%s5 + $0x34] sm:$0xf]
        %v10456 = vld [vmem:[%s5 + $0x38] sm:$0xf]
        %v10457 = vld [vmem:[%s5 + $0x3c] sm:$0xf]
        %v10458 = vld [vmem:[%s5 + $0x40] sm:$0xf]
        %v10459 = vld [vmem:[%s5 + $0x44] sm:$0xf]
        %v10460 = vld [vmem:[%s5 + $0x48] sm:$0xf]
        %v10461 = vld [vmem:[%s5 + $0x4c] sm:$0xf]
        %v10462 = vld [vmem:[%s5 + $0x50] sm:$0xf]
        %v10463 = vld [vmem:[%s5 + $0x54] sm:$0xf]
        %v10464 = vld [vmem:[%s5 + $0x58] sm:$0xf]
        %v10465 = vld [vmem:[%s5 + $0x5c] sm:$0xf]
        %v10466 = vld [vmem:[%s5 + $0x60] sm:$0xf]
        %v10467 = vld [vmem:[%s5 + $0x64] sm:$0xf]
        %v10468 = vld [vmem:[%s5 + $0x68] sm:$0xf]
        %v10469 = vld [vmem:[%s5 + $0x6c] sm:$0xf]
        %v10470 = vld [vmem:[%s5 + $0x70] sm:$0xf]
        %v10471 = vld [vmem:[%s5 + $0x74] sm:$0xf]
        %v10472 = vld [vmem:[%s5 + $0x78] sm:$0xf]
        %v10473 = vld [vmem:[%s5 + $0x7c] sm:$0xf]
        %v10474 = vld [vmem:[%s6] sm:$0x1]
        %v10476 = vperm.slane %v10474, 0
        %v10510 = vunpack.c.l.b16 %v10442
        %v10511 = vunpack.c.l.b16 %v10443
        %v10512 = vunpack.c.l.b16 %v10444
        %v10513 = vunpack.c.l.b16 %v10445
        %v10514 = vunpack.c.l.b16 %v10446
        %v10515 = vunpack.c.l.b16 %v10447
        %v10516 = vunpack.c.l.b16 %v10448
        %v10517 = vunpack.c.l.b16 %v10449
        %v10518 = vunpack.c.l.b16 %v10450
        %v10519 = vunpack.c.l.b16 %v10451
        %v10520 = vunpack.c.l.b16 %v10452
        %v10521 = vunpack.c.l.b16 %v10453
        %v10522 = vunpack.c.l.b16 %v10454
        %v10523 = vunpack.c.l.b16 %v10455
        %v10524 = vunpack.c.l.b16 %v10456
        %v10525 = vunpack.c.l.b16 %v10457
        %v10526 = vunpack.c.l.b16 %v10458
        %v10527 = vunpack.c.l.b16 %v10459
        %v10528 = vunpack.c.l.b16 %v10460
        %v10529 = vunpack.c.l.b16 %v10461
        %v10530 = vunpack.c.l.b16 %v10462
        %v10531 = vunpack.c.l.b16 %v10463
        %v10532 = vunpack.c.l.b16 %v10464
        %v10533 = vunpack.c.l.b16 %v10465
        %v10534 = vunpack.c.l.b16 %v10466
        %v10535 = vunpack.c.l.b16 %v10467
        %v10536 = vunpack.c.l.b16 %v10468
        %v10537 = vunpack.c.l.b16 %v10469
        %v10538 = vunpack.c.l.b16 %v10470
        %v10539 = vunpack.c.l.b16 %v10471
        %v10540 = vunpack.c.l.b16 %v10472
        %v10541 = vunpack.c.l.b16 %v10473
        %v10542 = vpack.c.b16 %v10511, %v10510
        %v10543 = vpack.c.b16 %v10513, %v10512
        %v10544 = vpack.c.b16 %v10515, %v10514
        %v10545 = vpack.c.b16 %v10517, %v10516
        %v10546 = vpack.c.b16 %v10519, %v10518
        %v10547 = vpack.c.b16 %v10521, %v10520
        %v10548 = vpack.c.b16 %v10523, %v10522
        %v10549 = vpack.c.b16 %v10525, %v10524
        %v10550 = vpack.c.b16 %v10527, %v10526
        %v10551 = vpack.c.b16 %v10529, %v10528
        %v10552 = vpack.c.b16 %v10531, %v10530
        %v10553 = vpack.c.b16 %v10533, %v10532
        %v10554 = vpack.c.b16 %v10535, %v10534
        %v10555 = vpack.c.b16 %v10537, %v10536
        %v10556 = vpack.c.b16 %v10539, %v10538
        %v10557 = vpack.c.b16 %v10541, %v10540
        %10574 = vmatpush.bf16.msra.mxu0 %v10549
        %10575 = vmatpush.bf16.msra.mxu0 %v10548
        %10576 = vmatpush.bf16.msra.mxu0 %v10547
        %10577 = vmatpush.bf16.msra.mxu0 %v10546
        %10578 = vmatpush.bf16.msra.mxu0 %v10545
        %10579 = vmatpush.bf16.msra.mxu0 %v10544
        %10580 = vmatpush.bf16.msra.mxu0 %v10543
        %10581 = vmatpush.bf16.msra.mxu0 %v10542
        %10582 = vmatmul.bf16.gmra.mxu0 %v10378
        %v10583 = vpop.f32.mrf.mxu0
        %v10584 = vadd.f32 %v10476, %v10583
        %v10585 = vpop.f32.mrf.mxu0
        %v10586 = vadd.f32 %v10476, %v10585
        %10587 = vmatmul.bf16.gmra.mxu0 %v10380
        %v10588 = vpop.f32.mrf.mxu0
        %v10589 = vadd.f32 %v10476, %v10588
        %v10590 = vpop.f32.mrf.mxu0
        %v10591 = vadd.f32 %v10476, %v10590
        %10592 = vmatmul.bf16.gmra.mxu0 %v10382
        %v10593 = vpop.f32.mrf.mxu0
        %v10594 = vadd.f32 %v10476, %v10593
        %v10595 = vpop.f32.mrf.mxu0
        %v10596 = vadd.f32 %v10476, %v10595
        %10597 = vmatmul.bf16.gmra.mxu0 %v10384
        %v10598 = vpop.f32.mrf.mxu0
        %v10599 = vadd.f32 %v10476, %v10598
        %v10600 = vpop.f32.mrf.mxu0
        %v10601 = vadd.f32 %v10476, %v10600
        %10602 = vmatmul.bf16.gmra.mxu0 %v10386
        %v10603 = vpop.f32.mrf.mxu0
        %v10604 = vadd.f32 %v10476, %v10603
        %v10605 = vpop.f32.mrf.mxu0
        %v10606 = vadd.f32 %v10476, %v10605
        %10607 = vmatmul.bf16.gmra.mxu0 %v10388
        %v10608 = vpop.f32.mrf.mxu0
        %v10609 = vadd.f32 %v10476, %v10608
        %v10610 = vpop.f32.mrf.mxu0
        %v10611 = vadd.f32 %v10476, %v10610
        %10612 = vmatmul.bf16.gmra.mxu0 %v10390
        %v10613 = vpop.f32.mrf.mxu0
        %v10614 = vadd.f32 %v10476, %v10613
        %v10615 = vpop.f32.mrf.mxu0
        %v10616 = vadd.f32 %v10476, %v10615
        %10617 = vmatmul.bf16.gmra.mxu0 %v10392
        %v10618 = vpop.f32.mrf.mxu0
        %v10619 = vadd.f32 %v10476, %v10618
        %v10620 = vpop.f32.mrf.mxu0
        %v10621 = vadd.f32 %v10476, %v10620
        %10622 = vmatmul.bf16.gmra.mxu0 %v10394
        %v10623 = vpop.f32.mrf.mxu0
        %v10624 = vadd.f32 %v10476, %v10623
        %v10625 = vpop.f32.mrf.mxu0
        %v10626 = vadd.f32 %v10476, %v10625
        %10627 = vmatmul.bf16.gmra.mxu0 %v10396
        %v10628 = vpop.f32.mrf.mxu0
        %v10629 = vadd.f32 %v10476, %v10628
        %v10630 = vpop.f32.mrf.mxu0
        %v10631 = vadd.f32 %v10476, %v10630
        %10632 = vmatmul.bf16.gmra.mxu0 %v10398
        %v10633 = vpop.f32.mrf.mxu0
        %v10634 = vadd.f32 %v10476, %v10633
        %v10635 = vpop.f32.mrf.mxu0
        %v10636 = vadd.f32 %v10476, %v10635
        %10637 = vmatmul.bf16.gmra.mxu0 %v10400
        %v10638 = vpop.f32.mrf.mxu0
        %v10639 = vadd.f32 %v10476, %v10638
        %v10640 = vpop.f32.mrf.mxu0
        %v10641 = vadd.f32 %v10476, %v10640
        %10642 = vmatmul.bf16.gmra.mxu0 %v10402
        %v10643 = vpop.f32.mrf.mxu0
        %v10644 = vadd.f32 %v10476, %v10643
        %v10645 = vpop.f32.mrf.mxu0
        %v10646 = vadd.f32 %v10476, %v10645
        %10647 = vmatmul.bf16.gmra.mxu0 %v10404
        %v10648 = vpop.f32.mrf.mxu0
        %v10649 = vadd.f32 %v10476, %v10648
        %v10650 = vpop.f32.mrf.mxu0
        %v10651 = vadd.f32 %v10476, %v10650
        %10652 = vmatmul.bf16.gmra.mxu0 %v10406
        %v10653 = vpop.f32.mrf.mxu0
        %v10654 = vadd.f32 %v10476, %v10653
        %v10655 = vpop.f32.mrf.mxu0
        %v10656 = vadd.f32 %v10476, %v10655
        %10657 = vmatmul.bf16.gmra.mxu0 %v10408
        %v10658 = vpop.f32.mrf.mxu0
        %v10659 = vadd.f32 %v10476, %v10658
        %v10660 = vpop.f32.mrf.mxu0
        %v10661 = vadd.f32 %v10476, %v10660
        %10662 = vmatmul.bf16.gmra.mxu0 %v10410
        %v10663 = vpop.f32.mrf.mxu0
        %v10664 = vadd.f32 %v10476, %v10663
        %v10665 = vpop.f32.mrf.mxu0
        %v10666 = vadd.f32 %v10476, %v10665
        %10667 = vmatmul.bf16.gmra.mxu0 %v10412
        %v10668 = vpop.f32.mrf.mxu0
        %v10669 = vadd.f32 %v10476, %v10668
        %v10670 = vpop.f32.mrf.mxu0
        %v10671 = vadd.f32 %v10476, %v10670
        %10672 = vmatmul.bf16.gmra.mxu0 %v10414
        %v10673 = vpop.f32.mrf.mxu0
        %v10674 = vadd.f32 %v10476, %v10673
        %v10675 = vpop.f32.mrf.mxu0
        %v10676 = vadd.f32 %v10476, %v10675
        %10677 = vmatmul.bf16.gmra.mxu0 %v10416
        %v10678 = vpop.f32.mrf.mxu0
        %v10679 = vadd.f32 %v10476, %v10678
        %v10680 = vpop.f32.mrf.mxu0
        %v10681 = vadd.f32 %v10476, %v10680
        %10682 = vmatmul.bf16.gmra.mxu0 %v10418
        %v10683 = vpop.f32.mrf.mxu0
        %v10684 = vadd.f32 %v10476, %v10683
        %v10685 = vpop.f32.mrf.mxu0
        %v10686 = vadd.f32 %v10476, %v10685
        %10687 = vmatmul.bf16.gmra.mxu0 %v10420
        %v10688 = vpop.f32.mrf.mxu0
        %v10689 = vadd.f32 %v10476, %v10688
        %v10690 = vpop.f32.mrf.mxu0
        %v10691 = vadd.f32 %v10476, %v10690
        %10692 = vmatmul.bf16.gmra.mxu0 %v10422
        %v10693 = vpop.f32.mrf.mxu0
        %v10694 = vadd.f32 %v10476, %v10693
        %v10695 = vpop.f32.mrf.mxu0
        %v10696 = vadd.f32 %v10476, %v10695
        %10697 = vmatmul.bf16.gmra.mxu0 %v10424
        %v10698 = vpop.f32.mrf.mxu0
        %v10699 = vadd.f32 %v10476, %v10698
        %v10700 = vpop.f32.mrf.mxu0
        %v10701 = vadd.f32 %v10476, %v10700
        %10702 = vmatmul.bf16.gmra.mxu0 %v10426
        %v10703 = vpop.f32.mrf.mxu0
        %v10704 = vadd.f32 %v10476, %v10703
        %v10705 = vpop.f32.mrf.mxu0
        %v10706 = vadd.f32 %v10476, %v10705
        %10707 = vmatmul.bf16.gmra.mxu0 %v10428
        %v10708 = vpop.f32.mrf.mxu0
        %v10709 = vadd.f32 %v10476, %v10708
        %v10710 = vpop.f32.mrf.mxu0
        %v10711 = vadd.f32 %v10476, %v10710
        %10712 = vmatmul.bf16.gmra.mxu0 %v10430
        %v10713 = vpop.f32.mrf.mxu0
        %v10714 = vadd.f32 %v10476, %v10713
        %v10715 = vpop.f32.mrf.mxu0
        %v10716 = vadd.f32 %v10476, %v10715
        %10717 = vmatmul.bf16.gmra.mxu0 %v10432
        %v10718 = vpop.f32.mrf.mxu0
        %v10719 = vadd.f32 %v10476, %v10718
        %v10720 = vpop.f32.mrf.mxu0
        %v10721 = vadd.f32 %v10476, %v10720
        %10722 = vmatmul.bf16.gmra.mxu0 %v10434
        %v10723 = vpop.f32.mrf.mxu0
        %v10724 = vadd.f32 %v10476, %v10723
        %v10725 = vpop.f32.mrf.mxu0
        %v10726 = vadd.f32 %v10476, %v10725
        %10727 = vmatmul.bf16.gmra.mxu0 %v10436
        %v10728 = vpop.f32.mrf.mxu0
        %v10729 = vadd.f32 %v10476, %v10728
        %v10730 = vpop.f32.mrf.mxu0
        %v10731 = vadd.f32 %v10476, %v10730
        %10732 = vmatmul.bf16.gmra.mxu0 %v10438
        %v10733 = vpop.f32.mrf.mxu0
        %v10734 = vadd.f32 %v10476, %v10733
        %v10735 = vpop.f32.mrf.mxu0
        %v10736 = vadd.f32 %v10476, %v10735
        %10737 = vmatmul.bf16.gmra.mxu0 %v10440
        %v10738 = vpop.f32.mrf.mxu0
        %v10739 = vadd.f32 %v10476, %v10738
        %v10740 = vpop.f32.mrf.mxu0
        %v10741 = vadd.f32 %v10476, %v10740
        %10742 = vdwg.mxu0
        %10743 = vmatpush.bf16.msra.mxu0 %v10557
        %10744 = vmatpush.bf16.msra.mxu0 %v10556
        %10745 = vmatpush.bf16.msra.mxu0 %v10555
        %10746 = vmatpush.bf16.msra.mxu0 %v10554
        %10747 = vmatpush.bf16.msra.mxu0 %v10553
        %10748 = vmatpush.bf16.msra.mxu0 %v10552
        %10749 = vmatpush.bf16.msra.mxu0 %v10551
        %10750 = vmatpush.bf16.msra.mxu0 %v10550
        %10751 = vmatmul.bf16.gmra.mxu0 %v10379
        %v10752 = vpop.f32.mrf.mxu0
        %v10753 = vadd.f32 %v10584, %v10752
        %v10754 = vpop.f32.mrf.mxu0
        %v10755 = vadd.f32 %v10586, %v10754
        %10756 = vmatmul.bf16.gmra.mxu0 %v10381
        %v10757 = vpop.f32.mrf.mxu0
        %v10758 = vadd.f32 %v10589, %v10757
        %v10759 = vpop.f32.mrf.mxu0
        %v10760 = vadd.f32 %v10591, %v10759
        %10761 = vmatmul.bf16.gmra.mxu0 %v10383
        %v10762 = vpop.f32.mrf.mxu0
        %v10763 = vadd.f32 %v10594, %v10762
        %v10764 = vpop.f32.mrf.mxu0
        %v10765 = vadd.f32 %v10596, %v10764
        %10766 = vmatmul.bf16.gmra.mxu0 %v10385
        %v10767 = vpop.f32.mrf.mxu0
        %v10768 = vadd.f32 %v10599, %v10767
        %v10769 = vpop.f32.mrf.mxu0
        %v10770 = vadd.f32 %v10601, %v10769
        %10771 = vmatmul.bf16.gmra.mxu0 %v10387
        %v10772 = vpop.f32.mrf.mxu0
        %v10773 = vadd.f32 %v10604, %v10772
        %v10774 = vpop.f32.mrf.mxu0
        %v10775 = vadd.f32 %v10606, %v10774
        %10776 = vmatmul.bf16.gmra.mxu0 %v10389
        %v10777 = vpop.f32.mrf.mxu0
        %v10778 = vadd.f32 %v10609, %v10777
        %v10779 = vpop.f32.mrf.mxu0
        %v10780 = vadd.f32 %v10611, %v10779
        %10781 = vmatmul.bf16.gmra.mxu0 %v10391
        %v10782 = vpop.f32.mrf.mxu0
        %v10783 = vadd.f32 %v10614, %v10782
        %v10784 = vpop.f32.mrf.mxu0
        %v10785 = vadd.f32 %v10616, %v10784
        %10786 = vmatmul.bf16.gmra.mxu0 %v10393
        %v10787 = vpop.f32.mrf.mxu0
        %v10788 = vadd.f32 %v10619, %v10787
        %v10789 = vpop.f32.mrf.mxu0
        %v10790 = vadd.f32 %v10621, %v10789
        %10791 = vmatmul.bf16.gmra.mxu0 %v10395
        %v10792 = vpop.f32.mrf.mxu0
        %v10793 = vadd.f32 %v10624, %v10792
        %v10794 = vpop.f32.mrf.mxu0
        %v10795 = vadd.f32 %v10626, %v10794
        %10796 = vmatmul.bf16.gmra.mxu0 %v10397
        %v10797 = vpop.f32.mrf.mxu0
        %v10798 = vadd.f32 %v10629, %v10797
        %v10799 = vpop.f32.mrf.mxu0
        %v10800 = vadd.f32 %v10631, %v10799
        %10801 = vmatmul.bf16.gmra.mxu0 %v10399
        %v10802 = vpop.f32.mrf.mxu0
        %v10803 = vadd.f32 %v10634, %v10802
        %v10804 = vpop.f32.mrf.mxu0
        %v10805 = vadd.f32 %v10636, %v10804
        %10806 = vmatmul.bf16.gmra.mxu0 %v10401
        %v10807 = vpop.f32.mrf.mxu0
        %v10808 = vadd.f32 %v10639, %v10807
        %v10809 = vpop.f32.mrf.mxu0
        %v10810 = vadd.f32 %v10641, %v10809
        %10811 = vmatmul.bf16.gmra.mxu0 %v10403
        %v10812 = vpop.f32.mrf.mxu0
        %v10813 = vadd.f32 %v10644, %v10812
        %v10814 = vpop.f32.mrf.mxu0
        %v10815 = vadd.f32 %v10646, %v10814
        %10816 = vmatmul.bf16.gmra.mxu0 %v10405
        %v10817 = vpop.f32.mrf.mxu0
        %v10818 = vadd.f32 %v10649, %v10817
        %v10819 = vpop.f32.mrf.mxu0
        %v10820 = vadd.f32 %v10651, %v10819
        %10821 = vmatmul.bf16.gmra.mxu0 %v10407
        %v10822 = vpop.f32.mrf.mxu0
        %v10823 = vadd.f32 %v10654, %v10822
        %v10824 = vpop.f32.mrf.mxu0
        %v10825 = vadd.f32 %v10656, %v10824
        %10826 = vmatmul.bf16.gmra.mxu0 %v10409
        %v10827 = vpop.f32.mrf.mxu0
        %v10828 = vadd.f32 %v10659, %v10827
        %v10829 = vpop.f32.mrf.mxu0
        %v10830 = vadd.f32 %v10661, %v10829
        %10831 = vmatmul.bf16.gmra.mxu0 %v10411
        %v10832 = vpop.f32.mrf.mxu0
        %v10833 = vadd.f32 %v10664, %v10832
        %v10834 = vpop.f32.mrf.mxu0
        %v10835 = vadd.f32 %v10666, %v10834
        %10836 = vmatmul.bf16.gmra.mxu0 %v10413
        %v10837 = vpop.f32.mrf.mxu0
        %v10838 = vadd.f32 %v10669, %v10837
        %v10839 = vpop.f32.mrf.mxu0
        %v10840 = vadd.f32 %v10671, %v10839
        %10841 = vmatmul.bf16.gmra.mxu0 %v10415
        %v10842 = vpop.f32.mrf.mxu0
        %v10843 = vadd.f32 %v10674, %v10842
        %v10844 = vpop.f32.mrf.mxu0
        %v10845 = vadd.f32 %v10676, %v10844
        %10846 = vmatmul.bf16.gmra.mxu0 %v10417
        %v10847 = vpop.f32.mrf.mxu0
        %v10848 = vadd.f32 %v10679, %v10847
        %v10849 = vpop.f32.mrf.mxu0
        %v10850 = vadd.f32 %v10681, %v10849
        %10851 = vmatmul.bf16.gmra.mxu0 %v10419
        %v10852 = vpop.f32.mrf.mxu0
        %v10853 = vadd.f32 %v10684, %v10852
        %v10854 = vpop.f32.mrf.mxu0
        %v10855 = vadd.f32 %v10686, %v10854
        %10856 = vmatmul.bf16.gmra.mxu0 %v10421
        %v10857 = vpop.f32.mrf.mxu0
        %v10858 = vadd.f32 %v10689, %v10857
        %v10859 = vpop.f32.mrf.mxu0
        %v10860 = vadd.f32 %v10691, %v10859
        %10861 = vmatmul.bf16.gmra.mxu0 %v10423
        %v10862 = vpop.f32.mrf.mxu0
        %v10863 = vadd.f32 %v10694, %v10862
        %v10864 = vpop.f32.mrf.mxu0
        %v10865 = vadd.f32 %v10696, %v10864
        %10866 = vmatmul.bf16.gmra.mxu0 %v10425
        %v10867 = vpop.f32.mrf.mxu0
        %v10868 = vadd.f32 %v10699, %v10867
        %v10869 = vpop.f32.mrf.mxu0
        %v10870 = vadd.f32 %v10701, %v10869
        %10871 = vmatmul.bf16.gmra.mxu0 %v10427
        %v10872 = vpop.f32.mrf.mxu0
        %v10873 = vadd.f32 %v10704, %v10872
        %v10874 = vpop.f32.mrf.mxu0
        %v10875 = vadd.f32 %v10706, %v10874
        %10876 = vmatmul.bf16.gmra.mxu0 %v10429
        %v10877 = vpop.f32.mrf.mxu0
        %v10878 = vadd.f32 %v10709, %v10877
        %v10879 = vpop.f32.mrf.mxu0
        %v10880 = vadd.f32 %v10711, %v10879
        %10881 = vmatmul.bf16.gmra.mxu0 %v10431
        %v10882 = vpop.f32.mrf.mxu0
        %v10883 = vadd.f32 %v10714, %v10882
        %v10884 = vpop.f32.mrf.mxu0
        %v10885 = vadd.f32 %v10716, %v10884
        %10886 = vmatmul.bf16.gmra.mxu0 %v10433
        %v10887 = vpop.f32.mrf.mxu0
        %v10888 = vadd.f32 %v10719, %v10887
        %v10889 = vpop.f32.mrf.mxu0
        %v10890 = vadd.f32 %v10721, %v10889
        %10891 = vmatmul.bf16.gmra.mxu0 %v10435
        %v10892 = vpop.f32.mrf.mxu0
        %v10893 = vadd.f32 %v10724, %v10892
        %v10894 = vpop.f32.mrf.mxu0
        %v10895 = vadd.f32 %v10726, %v10894
        %10896 = vmatmul.bf16.gmra.mxu0 %v10437
        %v10897 = vpop.f32.mrf.mxu0
        %v10898 = vadd.f32 %v10729, %v10897
        %v10899 = vpop.f32.mrf.mxu0
        %v10900 = vadd.f32 %v10731, %v10899
        %10901 = vmatmul.bf16.gmra.mxu0 %v10439
        %v10902 = vpop.f32.mrf.mxu0
        %v10903 = vadd.f32 %v10734, %v10902
        %v10904 = vpop.f32.mrf.mxu0
        %v10905 = vadd.f32 %v10736, %v10904
        %10906 = vmatmul.bf16.gmra.mxu0 %v10441
        %v10907 = vpop.f32.mrf.mxu0
        %v10908 = vadd.f32 %v10739, %v10907
        %v10909 = vpop.f32.mrf.mxu0
        %v10910 = vadd.f32 %v10741, %v10909
        %10911 = vdwg.mxu0
        %10912 = vst [vmem:[%s289] sm:$0xff] %v10753
        %10913 = vst [vmem:[%s289 + $0x8] sm:$0xff] %v10755
        %10914 = vst [vmem:[%s289 + $0x10] sm:$0xff] %v10758
        %10915 = vst [vmem:[%s289 + $0x18] sm:$0xff] %v10760
        %10916 = vst [vmem:[%s289 + $0x20] sm:$0xff] %v10763
        %10917 = vst [vmem:[%s289 + $0x28] sm:$0xff] %v10765
        %10918 = vst [vmem:[%s289 + $0x30] sm:$0xff] %v10768
        %10919 = vst [vmem:[%s289 + $0x38] sm:$0xff] %v10770
        %10920 = vst [vmem:[%s289 + $0x40] sm:$0xff] %v10773
        %10921 = vst [vmem:[%s289 + $0x48] sm:$0xff] %v10775
        %10922 = vst [vmem:[%s289 + $0x50] sm:$0xff] %v10778
        %10923 = vst [vmem:[%s289 + $0x58] sm:$0xff] %v10780
        %10924 = vst [vmem:[%s289 + $0x60] sm:$0xff] %v10783
        %10925 = vst [vmem:[%s289 + $0x68] sm:$0xff] %v10785
        %10926 = vst [vmem:[%s289 + $0x70] sm:$0xff] %v10788
        %10927 = vst [vmem:[%s289 + $0x78] sm:$0xff] %v10790
        %10928 = vst [vmem:[%s289 + $0x80] sm:$0xff] %v10793
        %10929 = vst [vmem:[%s289 + $0x88] sm:$0xff] %v10795
        %10930 = vst [vmem:[%s289 + $0x90] sm:$0xff] %v10798
        %10931 = vst [vmem:[%s289 + $0x98] sm:$0xff] %v10800
        %10932 = vst [vmem:[%s289 + $0xa0] sm:$0xff] %v10803
        %10933 = vst [vmem:[%s289 + $0xa8] sm:$0xff] %v10805
        %10934 = vst [vmem:[%s289 + $0xb0] sm:$0xff] %v10808
        %10935 = vst [vmem:[%s289 + $0xb8] sm:$0xff] %v10810
        %10936 = vst [vmem:[%s289 + $0xc0] sm:$0xff] %v10813
        %10937 = vst [vmem:[%s289 + $0xc8] sm:$0xff] %v10815
        %10938 = vst [vmem:[%s289 + $0xd0] sm:$0xff] %v10818
        %10939 = vst [vmem:[%s289 + $0xd8] sm:$0xff] %v10820
        %10940 = vst [vmem:[%s289 + $0xe0] sm:$0xff] %v10823
        %10941 = vst [vmem:[%s289 + $0xe8] sm:$0xff] %v10825
        %10942 = vst [vmem:[%s289 + $0xf0] sm:$0xff] %v10828
        %10943 = vst [vmem:[%s289 + $0xf8] sm:$0xff] %v10830
        %10944 = vst [vmem:[%s289 + $0x100] sm:$0xff] %v10833
        %10945 = vst [vmem:[%s289 + $0x108] sm:$0xff] %v10835
        %10946 = vst [vmem:[%s289 + $0x110] sm:$0xff] %v10838
        %10947 = vst [vmem:[%s289 + $0x118] sm:$0xff] %v10840
        %10948 = vst [vmem:[%s289 + $0x120] sm:$0xff] %v10843
        %10949 = vst [vmem:[%s289 + $0x128] sm:$0xff] %v10845
        %10950 = vst [vmem:[%s289 + $0x130] sm:$0xff] %v10848
        %10951 = vst [vmem:[%s289 + $0x138] sm:$0xff] %v10850
        %10952 = vst [vmem:[%s289 + $0x140] sm:$0xff] %v10853
        %10953 = vst [vmem:[%s289 + $0x148] sm:$0xff] %v10855
        %10954 = vst [vmem:[%s289 + $0x150] sm:$0xff] %v10858
        %10955 = vst [vmem:[%s289 + $0x158] sm:$0xff] %v10860
        %10956 = vst [vmem:[%s289 + $0x160] sm:$0xff] %v10863
        %10957 = vst [vmem:[%s289 + $0x168] sm:$0xff] %v10865
        %10958 = vst [vmem:[%s289 + $0x170] sm:$0xff] %v10868
        %10959 = vst [vmem:[%s289 + $0x178] sm:$0xff] %v10870
        %10960 = vst [vmem:[%s289 + $0x180] sm:$0xff] %v10873
        %10961 = vst [vmem:[%s289 + $0x188] sm:$0xff] %v10875
        %10962 = vst [vmem:[%s289 + $0x190] sm:$0xff] %v10878
        %10963 = vst [vmem:[%s289 + $0x198] sm:$0xff] %v10880
        %10964 = vst [vmem:[%s289 + $0x1a0] sm:$0xff] %v10883
        %10965 = vst [vmem:[%s289 + $0x1a8] sm:$0xff] %v10885
        %10966 = vst [vmem:[%s289 + $0x1b0] sm:$0xff] %v10888
        %10967 = vst [vmem:[%s289 + $0x1b8] sm:$0xff] %v10890
        %10968 = vst [vmem:[%s289 + $0x1c0] sm:$0xff] %v10893
        %10969 = vst [vmem:[%s289 + $0x1c8] sm:$0xff] %v10895
        %10970 = vst [vmem:[%s289 + $0x1d0] sm:$0xff] %v10898
        %10971 = vst [vmem:[%s289 + $0x1d8] sm:$0xff] %v10900
        %10972 = vst [vmem:[%s289 + $0x1e0] sm:$0xff] %v10903
        %10973 = vst [vmem:[%s289 + $0x1e8] sm:$0xff] %v10905
        %10974 = vst [vmem:[%s289 + $0x1f0] sm:$0xff] %v10908
        %10975 = vst [vmem:[%s289 + $0x1f8] sm:$0xff] %v10910
        %s10976 = sand.u32 %s182, 1
        %s10977 = scalar_lea.sflag [#allocation4], %s10976
        %s10978 = sand.u32 %s182, 1
        %s10979 = smul.addr %s10978, 512
        %s10980 = scalar_lea.vmem [#allocation5], %s10979
        // Predicated region
        $region53: #{tpu_custom_call.1} parent=47 // pred_check
          %p10981 = pneg %p192
        $region54: #{tpu_custom_call.1} parent=47 // pred_check_branch
          %10983 = sbr.rel (%p10981) target = $region56
        $region55: #{tpu_custom_call.1} parent=47 // pred_region
          %s10984 = smul.u32 64, %s22
          %10986 = vsyncadd %s10977, 0
          %s10987 = smul.addr %s10984, 8
          %s10988 = scalar_lea.hbm %s7, %s10987
          %s10989 = sshll.u32 %s10980, 4
          %s10990 = int_to_ptr.vmem [resolvable:$true] %s10989
          %s10991 = sshll.u32 %s10988, 4
          %s10992 = int_to_ptr.hbm [resolvable:$true] %s10991
          %10997 = dma.vmem_to_hbm [thread:$0]  %s10990, 8192, %s10992, %s10977, 128, 128, 8
        $region56: #{tpu_custom_call.1} parent=47 // pred_fallthru
          _
      $region48: #{tpu_custom_call.1} parent=5 // pred_fallthru
        _
      %p10998 = scmp.le.s32.totalorder 2, %s17
      // Predicated region
      $region57: #{tpu_custom_call.1} parent=5 // pred_check
        %p10999 = pneg %p10998
      $region58: #{tpu_custom_call.1} parent=5 // pred_check_branch
        %11001 = sbr.rel (%p10999) target = $region60
      $region59: #{tpu_custom_call.1} parent=5 // pred_region
        %s11002 = ssub.s32 %s17, 2
        // Predicated region
        $region61: #{tpu_custom_call.1} parent=59 // pred_check
          %p11003 = pneg %p198
        $region62: #{tpu_custom_call.1} parent=59 // pred_check_branch
          %11005 = sbr.rel (%p11003) target = $region64
        $region63: #{tpu_custom_call.1} parent=59 // pred_region
          %s11006 = sand.u32 %s183, 1
          %s11007 = scalar_lea.sflag [#allocation4], %s11006
          %s11008 = sand.u32 %s183, 1
          %s11009 = smul.addr %s11008, 512
          %s11010 = scalar_lea.vmem [#allocation5], %s11009
          %11012 = dma.done %s11007, 8192
        $region64: #{tpu_custom_call.1} parent=59 // pred_fallthru
          _
      $region60: #{tpu_custom_call.1} parent=5 // pred_fallthru
        _
    $region6: #{tpu_custom_call.1} parent=1 // loop_footer
      %s21 = sadd.s32 1, %s17
    $region7: #{tpu_custom_call.1} parent=1 // loop_footer_branch
      %16 = sbr.rel target = $region3
    $region8: #{tpu_custom_call.1} parent=1 // loop_exit
      _
    %11013 = vsyncpa [#allocation3], 1
    %s11014 = scalar_lea.sflag [#allocation3], 1
    %11015 = vsyncpa %s11014, 1
    %11016 = vsyncpa [#allocation4], 1
    %s11017 = scalar_lea.sflag [#allocation4], 1
    %11018 = vsyncpa %s11017, 1

</llo_original>
